<compile_context>
chip_gen: v7x
topology: tpu7x:2x2x1
jax: 0.10.0
libtpu: 0.0.40
codegen_flags: <defaults>
</compile_context>

<pallas_src>
import numpy as np
import jax
import jax.numpy as jnp
from jax import lax
from jax.experimental import pallas as pl
from jax.experimental.pallas import tpu as pltpu


# ---------------------------------------------------------------------------
# Parameter packing (numpy, done ONCE at init - hoisted out of the forward).
#   gate column layout (GG = 16*hid): gate-type major, direction minor:
#     [ i_d0 i_d1 i_d2 i_d3 | f_d0..d3 | g_d0..d3 | o_d0..d3 ]
#   state column layout (HH = 4*hid): [ h_d0 | h_d1 | h_d2 | h_d3 ]
#   whh_big is block-diagonal per direction, so directions never mix.
# ---------------------------------------------------------------------------
def pack_params(params):
    cells = params["cells"]
    C = np.asarray(cells[0][0]).shape[0]
    hid = np.asarray(cells[0][1]).shape[0]
    HH, GG = 4 * hid, 16 * hid
    wih_big = np.zeros((4 * C, GG), np.float32)
    whh_big = np.zeros((HH, GG), np.float32)
    b_big = np.zeros((1, GG), np.float32)
    for d, (wih, whh, b) in enumerate(cells):
        wih, whh, b = np.asarray(wih), np.asarray(whh), np.asarray(b)
        for g in range(4):
            col = g * HH + d * hid
            wih_big[d * C:(d + 1) * C, col:col + hid] = wih[:, g * hid:(g + 1) * hid]
            whh_big[d * hid:(d + 1) * hid, col:col + hid] = whh[:, g * hid:(g + 1) * hid]
            b_big[:, col:col + hid] = b[:, g * hid:(g + 1) * hid]
    return (jnp.asarray(wih_big), jnp.asarray(whh_big), jnp.asarray(b_big),
            jnp.asarray(params["conv_w"], jnp.float32),
            jnp.asarray(params["conv_b"], jnp.float32))


# ---------------------------------------------------------------------------
# Fused kernel: gate projection + 4-direction MD-LSTM scan + 1x1 conv.
# ---------------------------------------------------------------------------
def _make_fused_kernel(H, W, B, hid, out_ch):
    HH, GG = 4 * hid, 16 * hid
    WB = W * B

    def cell(gates, c_ctx):
        i_g = jax.nn.sigmoid(gates[:, 0 * HH:1 * HH])
        f_g = jax.nn.sigmoid(gates[:, 1 * HH:2 * HH])
        g_g = jnp.tanh(gates[:, 2 * HH:3 * HH])
        o_g = jax.nn.sigmoid(gates[:, 3 * HH:4 * HH])
        c_new = f_g * c_ctx + i_g * g_g
        h_new = o_g * jnp.tanh(c_new)
        return h_new, c_new

    def kernel(xcat_ref, wih_ref, b_ref, whh_ref, cw_ref, cb_ref,
               y_ref, gates_ref, h_all_ref, hc_ref):
        # -- 1. hoisted input projection: all rows, all 4 directions at once --
        gates_ref[...] = (jnp.dot(xcat_ref[...], wih_ref[...],
                                  preferred_element_type=jnp.float32)
                          + b_ref[...])

        # -- 2. row 0: serial left->right chain (y_pos context provably 0) ----
        h_p = jnp.zeros((B, HH), jnp.float32)
        c_p = jnp.zeros((B, HH), jnp.float32)
        for j in range(W):                                     # static unroll
            g_j = gates_ref[pl.ds(j * B, B), :]
            g_j = g_j + jnp.dot(0.5 * h_p, whh_ref[...],
                                preferred_element_type=jnp.float32)
            h_p, c_p = cell(g_j, 0.5 * c_p)
            hc_ref[pl.ds(j * B, B), pl.ds(0, HH)] = h_p        # direct stores,
            hc_ref[pl.ds(j * B, B), pl.ds(HH, HH)] = c_p       # no list+concat
            h_all_ref[pl.ds(j * B, B), :] = h_p

        # -- 3. rows 1..H-1: depend only on row i-1 -> vectorized over W*B ----
        def row_body(i, carry):
            hc = hc_ref[...]                                   # (WB, 2*HH)
            rid = lax.broadcasted_iota(jnp.int32, (WB, 1), 0)
            # neighbour j-1 (clamped at 0) and j+1 (clamped at W-1)
            hc_neg = jnp.where(rid < B, hc, pltpu.roll(hc, shift=B, axis=0))
            hc_pos = jnp.where(rid >= (W - 1) * B, hc,
                               pltpu.roll(hc, shift=(W - 1) * B, axis=0))
            hc_ctx = 0.5 * (hc_neg + hc_pos)
            h_ctx = hc_ctx[:, :HH]
            c_ctx = hc_ctx[:, HH:]
            off = pl.multiple_of(i * WB, WB)
            gates = gates_ref[pl.ds(off, WB), :] + jnp.dot(
                h_ctx, whh_ref[...], preferred_element_type=jnp.float32)
            h_new, c_new = cell(gates, c_ctx)
            hc_ref[pl.ds(0, WB), pl.ds(0, HH)] = h_new
            hc_ref[pl.ds(0, WB), pl.ds(HH, HH)] = c_new
            h_all_ref[pl.ds(off, WB), :] = h_new
            return carry

        lax.fori_loop(1, H, row_body, 0)

        # -- 4. fused 1x1 conv epilogue: one matmul, single output store ------
        y_ref[...] = (jnp.dot(h_all_ref[...], cw_ref[...],
                              preferred_element_type=jnp.float32)
                      + cb_ref[...])

    return kernel


def _fused_forward(x_cat, wih_big, b_big, whh_big, conv_w, conv_b,
                   *, H, W, B, hid, out_ch):
    C4 = x_cat.shape[1]
    HH, GG = 4 * hid, 16 * hid
    N = H * W * B
    # Everything (gates ~N*GG*4B, weights, state) fits VMEM comfortably at
    # these shapes (<~3 MiB); for much larger H*W*B*hid fall back to an
    # H-gridded pipelined variant and raise vmem_limit_bytes explicitly.
    return pl.pallas_call(
        _make_fused_kernel(H, W, B, hid, out_ch),
        out_shape=jax.ShapeDtypeStruct((N, out_ch), jnp.float32),
        grid=(1,),
        in_specs=[
            pl.BlockSpec((N, C4), lambda i: (0, 0)),
            pl.BlockSpec((C4, GG), lambda i: (0, 0)),
            pl.BlockSpec((1, GG), lambda i: (0, 0)),
            pl.BlockSpec((HH, GG), lambda i: (0, 0)),
            pl.BlockSpec((HH, out_ch), lambda i: (0, 0)),
            pl.BlockSpec((1, out_ch), lambda i: (0, 0)),
        ],
        out_specs=pl.BlockSpec((N, out_ch), lambda i: (0, 0)),
        scratch_shapes=[
            pltpu.VMEM((N, GG), jnp.float32),          # gates, all rows
            pltpu.VMEM((N, HH), jnp.float32),          # combined h, all rows
            pltpu.VMEM((W * B, 2 * HH), jnp.float32),  # prev-row (h | c)
        ],
        compiler_params=pltpu.CompilerParams(
            dimension_semantics=("arbitrary",)),
    )(x_cat, wih_big, b_big, whh_big, conv_w, conv_b)


# ---------------------------------------------------------------------------
# Full PyraMiDLSTMLayer forward (packed weights are passed in, packed once).
# ---------------------------------------------------------------------------
@jax.jit
def pyramid_lstm_layer(x_nchw, wih_big, whh_big, b_big, conv_w, conv_b):
    B, C, H, W = x_nchw.shape
    hid = whh_big.shape[0] // 4
    out_ch = conv_w.shape[1]

    # (B,C,H,W) -> (H,W,B,C); pack the 4 direction streams (identity, H-flip,
    # W-flip, both) along the channel dim so the kernel never reverse-shuffles.
    x_hwbc = jnp.transpose(x_nchw, (2, 3, 0, 1)).astype(jnp.float32)
    x_cat = jnp.concatenate(
        [x_hwbc, x_hwbc[::-1], x_hwbc[:, ::-1], x_hwbc[::-1, ::-1]], axis=-1)
    x_cat = x_cat.reshape(H * W * B, 4 * C)

    y = _fused_forward(x_cat, wih_big, b_big, whh_big, conv_w, conv_b,
                       H=H, W=W, B=B, hid=hid, out_ch=out_ch)   # (H*W*B, out)
    y = y.reshape(H, W, B, out_ch)
    return jnp.transpose(y, (2, 3, 0, 1))                       # (B,out,H,W)


def init_params(key, in_ch, hid, out_ch):
    ks = jax.random.split(key, 4 * 4 + 2)
    k = 1.0 / np.sqrt(hid)
    cells = []
    idx = 0
    for _ in range(4):
        wih = jax.random.uniform(ks[idx], (in_ch, 4 * hid), jnp.float32, -k, k); idx += 1
        whh = jax.random.uniform(ks[idx], (hid, 4 * hid), jnp.float32, -k, k); idx += 1
        bih = jax.random.uniform(ks[idx], (1, 4 * hid), jnp.float32, -k, k); idx += 1
        bhh = jax.random.uniform(ks[idx], (1, 4 * hid), jnp.float32, -k, k); idx += 1
        cells.append((wih, whh, bih + bhh))
    kc = 1.0 / np.sqrt(4 * hid)
    conv_w = jax.random.uniform(ks[-2], (4 * hid, out_ch), jnp.float32, -kc, kc)
    conv_b = jax.random.uniform(ks[-1], (1, out_ch), jnp.float32, -kc, kc)
    return {"cells": cells, "conv_w": conv_w, "conv_b": conv_b}


# ---------------------------------------------------------------------------
# Pure numpy reference (mirrors the PyTorch loop exactly, incl. in-place reads).
# ---------------------------------------------------------------------------
def _ref_scan_np(x_dir, wih, whh, b):
    H, W, B, C = x_dir.shape
    hid = whh.shape[0]
    h = np.zeros((H, W, B, hid), np.float32)
    c = np.zeros((H, W, B, hid), np.float32)

    def sig(z):
        return 1.0 / (1.0 + np.exp(-z))

    for i in range(H):
        for j in range(W):
            xi = i - 1 if i - 1 > 0 else 0
            yn = j - 1 if j - 1 > 0 else 0
            yp = j + 1 if j + 1 < W else j
            h_ctx = 0.5 * (h[xi, yn] + h[xi, yp])
            c_ctx = 0.5 * (c[xi, yn] + c[xi, yp])
            gates = x_dir[i, j] @ wih + h_ctx @ whh + b
            ig = sig(gates[:, :hid])
            fg = sig(gates[:, hid:2 * hid])
            gg = np.tanh(gates[:, 2 * hid:3 * hid])
            og = sig(gates[:, 3 * hid:])
            c[i, j] = fg * c_ctx + ig * gg
            h[i, j] = og * np.tanh(c[i, j])
    return h


def _ref_layer_np(x_nchw, params):
    B, C, H, W = x_nchw.shape
    out = np.transpose(x_nchw, (2, 3, 0, 1))
    dirs = [out, out[::-1], out[:, ::-1], out[::-1, ::-1]]
    hs = []
    for k, d in enumerate(dirs):
        wih, whh, b = [np.asarray(p) for p in params["cells"][k]]
        hs.append(_ref_scan_np(np.ascontiguousarray(d), wih, whh, b))
    comb = np.concatenate(hs, axis=3)
    y = comb.reshape(H * W * B, -1) @ np.asarray(params["conv_w"]) + np.asarray(params["conv_b"])
    y = y.reshape(H, W, B, -1)
    return np.transpose(y, (2, 3, 0, 1))


if __name__ == "__main__":
    key = jax.random.PRNGKey(0)
    kx, kp = jax.random.split(key)
    B, C, H, W = 2, 4, 16, 16
    hid, out_ch = 32, 8

    x = jax.random.normal(kx, (B, C, H, W), jnp.float32)
    params = init_params(kp, C, hid, out_ch)
    packed = pack_params(params)            # packed ONCE, outside the jit

    y = pyramid_lstm_layer(x, *packed)
    y = jax.block_until_ready(y)
    assert y.shape == (B, out_ch, H, W)

    y_ref = _ref_layer_np(np.asarray(x), params)
    np.testing.assert_allclose(np.asarray(y), y_ref, rtol=2e-3, atol=2e-3)
    print("KERNEL_OK")
</pallas_src>

<mosaic_0001>
module attributes {stable_mosaic.version = 11 : i64} {
  func.func @kernel(%arg0: i32, %arg1: memref<512x16xf32, #tpu.memory_space<vmem>>, %arg2: memref<16x512xf32, #tpu.memory_space<vmem>>, %arg3: memref<1x512xf32, #tpu.memory_space<vmem>>, %arg4: memref<128x512xf32, #tpu.memory_space<vmem>>, %arg5: memref<128x8xf32, #tpu.memory_space<vmem>>, %arg6: memref<1x8xf32, #tpu.memory_space<vmem>>, %arg7: memref<512x8xf32, #tpu.memory_space<vmem>>, %arg8: memref<512x512xf32, #tpu.memory_space<vmem>>, %arg9: memref<512x128xf32, #tpu.memory_space<vmem>>, %arg10: memref<32x256xf32, #tpu.memory_space<vmem>>) attributes {dimension_semantics = [#tpu.dimension_semantics<arbitrary>], iteration_bounds = array<i64: 1>, scalar_prefetch = 0 : i64, scratch_operands = 3 : i64, tpu.core_type = #tpu.core_type<tc>, window_params = [{pipeline_mode = #tpu.pipeline_mode<synchronous>, transform_indices = @transform_0, window_bounds = array<i64: 512, 16>}, {pipeline_mode = #tpu.pipeline_mode<synchronous>, transform_indices = @transform_1, window_bounds = array<i64: 16, 512>}, {pipeline_mode = #tpu.pipeline_mode<synchronous>, transform_indices = @transform_2, window_bounds = array<i64: 1, 512>}, {pipeline_mode = #tpu.pipeline_mode<synchronous>, transform_indices = @transform_3, window_bounds = array<i64: 128, 512>}, {pipeline_mode = #tpu.pipeline_mode<synchronous>, transform_indices = @transform_4, window_bounds = array<i64: 128, 8>}, {pipeline_mode = #tpu.pipeline_mode<synchronous>, transform_indices = @transform_5, window_bounds = array<i64: 1, 8>}, {pipeline_mode = #tpu.pipeline_mode<synchronous>, transform_indices = @transform_6, window_bounds = array<i64: 512, 8>}]} {
    %c0 = arith.constant 0 : index
    %c0_0 = arith.constant 0 : index
    %0 = vector.load %arg1[%c0, %c0_0] : memref<512x16xf32, #tpu.memory_space<vmem>>, vector<512x16xf32>
    %c0_1 = arith.constant 0 : index
    %c0_2 = arith.constant 0 : index
    %1 = vector.load %arg2[%c0_1, %c0_2] : memref<16x512xf32, #tpu.memory_space<vmem>>, vector<16x512xf32>
    %cst = arith.constant dense<0.000000e+00> : vector<512x512xf32>
    %2 = tpu.matmul %0, %1, %cst {dimension_numbers = #tpu.dot_dimension_numbers<[1], [0], [0], [1], [0, 0, 1, 1], [], []>} : vector<512x16xf32>, vector<16x512xf32>, vector<512x512xf32> -> vector<512x512xf32>
    %c0_3 = arith.constant 0 : index
    %c0_4 = arith.constant 0 : index
    %3 = vector.load %arg3[%c0_3, %c0_4] : memref<1x512xf32, #tpu.memory_space<vmem>>, vector<1x512xf32>
    %4 = vector.broadcast %3 : vector<1x512xf32> to vector<512x512xf32>
    %5 = arith.addf %2, %4 : vector<512x512xf32>
    %c0_5 = arith.constant 0 : index
    %c0_6 = arith.constant 0 : index
    %6 = vector.load %arg8[%c0_5, %c0_6] : memref<512x512xf32, #tpu.memory_space<vmem>>, vector<512x512xf32>
    tpu.vector_store %arg8[%c0_5, %c0_6], %5 {strides = array<i32>} : memref<512x512xf32, #tpu.memory_space<vmem>>, vector<512x512xf32>,
    %cst_7 = arith.constant 0.000000e+00 : f32
    %7 = vector.broadcast %cst_7 : f32 to vector<2x128xf32>
    %cst_8 = arith.constant 0.000000e+00 : f32
    %8 = vector.broadcast %cst_8 : f32 to vector<2x128xf32>
    %c0_9 = arith.constant 0 : index
    %c0_10 = arith.constant 0 : index
    %9 = vector.load %arg8[%c0_9, %c0_10] : memref<512x512xf32, #tpu.memory_space<vmem>>, vector<2x512xf32>
    %cst_11 = arith.constant 5.000000e-01 : f32
    %10 = vector.broadcast %cst_11 : f32 to vector<2x128xf32>
    %11 = arith.mulf %10, %7 : vector<2x128xf32>
    %c0_12 = arith.constant 0 : index
    %c0_13 = arith.constant 0 : index
    %12 = vector.load %arg4[%c0_12, %c0_13] : memref<128x512xf32, #tpu.memory_space<vmem>>, vector<128x512xf32>
    %cst_14 = arith.constant dense<0.000000e+00> : vector<2x512xf32>
    %13 = tpu.matmul %11, %12, %cst_14 {dimension_numbers = #tpu.dot_dimension_numbers<[1], [0], [0], [1], [0, 0, 1, 1], [], []>} : vector<2x128xf32>, vector<128x512xf32>, vector<2x512xf32> -> vector<2x512xf32>
    %14 = arith.addf %9, %13 : vector<2x512xf32>
    %cst_15 = arith.constant 5.000000e-01 : f32
    %15 = vector.broadcast %cst_15 : f32 to vector<2x128xf32>
    %16 = arith.mulf %15, %8 : vector<2x128xf32>
    %17 = vector.extract_strided_slice %14 {offsets = [0, 0], sizes = [2, 128], strides = [1, 1]} : vector<2x512xf32> to vector<2x128xf32>
    %18 = arith.negf %17 : vector<2x128xf32>
    %19 = math.exp %18 : vector<2x128xf32>
    %cst_16 = arith.constant 1.000000e+00 : f32
    %20 = vector.broadcast %cst_16 : f32 to vector<2x128xf32>
    %21 = arith.addf %20, %19 : vector<2x128xf32>
    %22 = arith.divf %20, %21 : vector<2x128xf32>
    %23 = vector.extract_strided_slice %14 {offsets = [0, 128], sizes = [2, 128], strides = [1, 1]} : vector<2x512xf32> to vector<2x128xf32>
    %24 = arith.negf %23 : vector<2x128xf32>
    %25 = math.exp %24 : vector<2x128xf32>
    %cst_17 = arith.constant 1.000000e+00 : f32
    %26 = vector.broadcast %cst_17 : f32 to vector<2x128xf32>
    %27 = arith.addf %26, %25 : vector<2x128xf32>
    %28 = arith.divf %26, %27 : vector<2x128xf32>
    %29 = vector.extract_strided_slice %14 {offsets = [0, 256], sizes = [2, 128], strides = [1, 1]} : vector<2x512xf32> to vector<2x128xf32>
    %30 = math.tanh %29 : vector<2x128xf32>
    %31 = vector.extract_strided_slice %14 {offsets = [0, 384], sizes = [2, 128], strides = [1, 1]} : vector<2x512xf32> to vector<2x128xf32>
    %32 = arith.negf %31 : vector<2x128xf32>
    %33 = math.exp %32 : vector<2x128xf32>
    %cst_18 = arith.constant 1.000000e+00 : f32
    %34 = vector.broadcast %cst_18 : f32 to vector<2x128xf32>
    %35 = arith.addf %34, %33 : vector<2x128xf32>
    %36 = arith.divf %34, %35 : vector<2x128xf32>
    %37 = arith.mulf %28, %16 : vector<2x128xf32>
    %38 = arith.mulf %22, %30 : vector<2x128xf32>
    %39 = arith.addf %37, %38 : vector<2x128xf32>
    %40 = math.tanh %39 : vector<2x128xf32>
    %41 = arith.mulf %36, %40 : vector<2x128xf32>
    %c0_19 = arith.constant 0 : index
    %c0_20 = arith.constant 0 : index
    %42 = vector.load %arg10[%c0_19, %c0_20] : memref<32x256xf32, #tpu.memory_space<vmem>>, vector<2x128xf32>
    tpu.vector_store %arg10[%c0_19, %c0_20], %41 {strides = array<i32>} : memref<32x256xf32, #tpu.memory_space<vmem>>, vector<2x128xf32>,
    %c0_21 = arith.constant 0 : index
    %c128 = arith.constant 128 : index
    %43 = vector.load %arg10[%c0_21, %c128] : memref<32x256xf32, #tpu.memory_space<vmem>>, vector<2x128xf32>
    tpu.vector_store %arg10[%c0_21, %c128], %39 {strides = array<i32>} : memref<32x256xf32, #tpu.memory_space<vmem>>, vector<2x128xf32>,
    %c0_22 = arith.constant 0 : index
    %c0_23 = arith.constant 0 : index
    %44 = vector.load %arg9[%c0_22, %c0_23] : memref<512x128xf32, #tpu.memory_space<vmem>>, vector<2x128xf32>
    tpu.vector_store %arg9[%c0_22, %c0_23], %41 {strides = array<i32>} : memref<512x128xf32, #tpu.memory_space<vmem>>, vector<2x128xf32>,
    %c2 = arith.constant 2 : index
    %c0_24 = arith.constant 0 : index
    %45 = vector.load %arg8[%c2, %c0_24] : memref<512x512xf32, #tpu.memory_space<vmem>>, vector<2x512xf32>
    %cst_25 = arith.constant 5.000000e-01 : f32
    %46 = vector.broadcast %cst_25 : f32 to vector<2x128xf32>
    %47 = arith.mulf %46, %41 : vector<2x128xf32>
    %c0_26 = arith.constant 0 : index
    %c0_27 = arith.constant 0 : index
    %48 = vector.load %arg4[%c0_26, %c0_27] : memref<128x512xf32, #tpu.memory_space<vmem>>, vector<128x512xf32>
    %cst_28 = arith.constant dense<0.000000e+00> : vector<2x512xf32>
    %49 = tpu.matmul %47, %48, %cst_28 {dimension_numbers = #tpu.dot_dimension_numbers<[1], [0], [0], [1], [0, 0, 1, 1], [], []>} : vector<2x128xf32>, vector<128x512xf32>, vector<2x512xf32> -> vector<2x512xf32>
    %50 = arith.addf %45, %49 : vector<2x512xf32>
    %cst_29 = arith.constant 5.000000e-01 : f32
    %51 = vector.broadcast %cst_29 : f32 to vector<2x128xf32>
    %52 = arith.mulf %51, %39 : vector<2x128xf32>
    %53 = vector.extract_strided_slice %50 {offsets = [0, 0], sizes = [2, 128], strides = [1, 1]} : vector<2x512xf32> to vector<2x128xf32>
    %54 = arith.negf %53 : vector<2x128xf32>
    %55 = math.exp %54 : vector<2x128xf32>
    %cst_30 = arith.constant 1.000000e+00 : f32
    %56 = vector.broadcast %cst_30 : f32 to vector<2x128xf32>
    %57 = arith.addf %56, %55 : vector<2x128xf32>
    %58 = arith.divf %56, %57 : vector<2x128xf32>
    %59 = vector.extract_strided_slice %50 {offsets = [0, 128], sizes = [2, 128], strides = [1, 1]} : vector<2x512xf32> to vector<2x128xf32>
    %60 = arith.negf %59 : vector<2x128xf32>
    %61 = math.exp %60 : vector<2x128xf32>
    %cst_31 = arith.constant 1.000000e+00 : f32
    %62 = vector.broadcast %cst_31 : f32 to vector<2x128xf32>
    %63 = arith.addf %62, %61 : vector<2x128xf32>
    %64 = arith.divf %62, %63 : vector<2x128xf32>
    %65 = vector.extract_strided_slice %50 {offsets = [0, 256], sizes = [2, 128], strides = [1, 1]} : vector<2x512xf32> to vector<2x128xf32>
    %66 = math.tanh %65 : vector<2x128xf32>
    %67 = vector.extract_strided_slice %50 {offsets = [0, 384], sizes = [2, 128], strides = [1, 1]} : vector<2x512xf32> to vector<2x128xf32>
    %68 = arith.negf %67 : vector<2x128xf32>
    %69 = math.exp %68 : vector<2x128xf32>
    %cst_32 = arith.constant 1.000000e+00 : f32
    %70 = vector.broadcast %cst_32 : f32 to vector<2x128xf32>
    %71 = arith.addf %70, %69 : vector<2x128xf32>
    %72 = arith.divf %70, %71 : vector<2x128xf32>
    %73 = arith.mulf %64, %52 : vector<2x128xf32>
    %74 = arith.mulf %58, %66 : vector<2x128xf32>
    %75 = arith.addf %73, %74 : vector<2x128xf32>
    %76 = math.tanh %75 : vector<2x128xf32>
    %77 = arith.mulf %72, %76 : vector<2x128xf32>
    %c2_33 = arith.constant 2 : index
    %c0_34 = arith.constant 0 : index
    %78 = vector.load %arg10[%c2_33, %c0_34] : memref<32x256xf32, #tpu.memory_space<vmem>>, vector<2x128xf32>
    tpu.vector_store %arg10[%c2_33, %c0_34], %77 {strides = array<i32>} : memref<32x256xf32, #tpu.memory_space<vmem>>, vector<2x128xf32>,
    %c2_35 = arith.constant 2 : index
    %c128_36 = arith.constant 128 : index
    %79 = vector.load %arg10[%c2_35, %c128_36] : memref<32x256xf32, #tpu.memory_space<vmem>>, vector<2x128xf32>
    tpu.vector_store %arg10[%c2_35, %c128_36], %75 {strides = array<i32>} : memref<32x256xf32, #tpu.memory_space<vmem>>, vector<2x128xf32>,
    %c2_37 = arith.constant 2 : index
    %c0_38 = arith.constant 0 : index
    %80 = vector.load %arg9[%c2_37, %c0_38] : memref<512x128xf32, #tpu.memory_space<vmem>>, vector<2x128xf32>
    tpu.vector_store %arg9[%c2_37, %c0_38], %77 {strides = array<i32>} : memref<512x128xf32, #tpu.memory_space<vmem>>, vector<2x128xf32>,
    %c4 = arith.constant 4 : index
    %c0_39 = arith.constant 0 : index
    %81 = vector.load %arg8[%c4, %c0_39] : memref<512x512xf32, #tpu.memory_space<vmem>>, vector<2x512xf32>
    %cst_40 = arith.constant 5.000000e-01 : f32
    %82 = vector.broadcast %cst_40 : f32 to vector<2x128xf32>
    %83 = arith.mulf %82, %77 : vector<2x128xf32>
    %c0_41 = arith.constant 0 : index
    %c0_42 = arith.constant 0 : index
    %84 = vector.load %arg4[%c0_41, %c0_42] : memref<128x512xf32, #tpu.memory_space<vmem>>, vector<128x512xf32>
    %cst_43 = arith.constant dense<0.000000e+00> : vector<2x512xf32>
    %85 = tpu.matmul %83, %84, %cst_43 {dimension_numbers = #tpu.dot_dimension_numbers<[1], [0], [0], [1], [0, 0, 1, 1], [], []>} : vector<2x128xf32>, vector<128x512xf32>, vector<2x512xf32> -> vector<2x512xf32>
    %86 = arith.addf %81, %85 : vector<2x512xf32>
    %cst_44 = arith.constant 5.000000e-01 : f32
    %87 = vector.broadcast %cst_44 : f32 to vector<2x128xf32>
    %88 = arith.mulf %87, %75 : vector<2x128xf32>
    %89 = vector.extract_strided_slice %86 {offsets = [0, 0], sizes = [2, 128], strides = [1, 1]} : vector<2x512xf32> to vector<2x128xf32>
    %90 = arith.negf %89 : vector<2x128xf32>
    %91 = math.exp %90 : vector<2x128xf32>
    %cst_45 = arith.constant 1.000000e+00 : f32
    %92 = vector.broadcast %cst_45 : f32 to vector<2x128xf32>
    %93 = arith.addf %92, %91 : vector<2x128xf32>
    %94 = arith.divf %92, %93 : vector<2x128xf32>
    %95 = vector.extract_strided_slice %86 {offsets = [0, 128], sizes = [2, 128], strides = [1, 1]} : vector<2x512xf32> to vector<2x128xf32>
    %96 = arith.negf %95 : vector<2x128xf32>
    %97 = math.exp %96 : vector<2x128xf32>
    %cst_46 = arith.constant 1.000000e+00 : f32
    %98 = vector.broadcast %cst_46 : f32 to vector<2x128xf32>
    %99 = arith.addf %98, %97 : vector<2x128xf32>
    %100 = arith.divf %98, %99 : vector<2x128xf32>
    %101 = vector.extract_strided_slice %86 {offsets = [0, 256], sizes = [2, 128], strides = [1, 1]} : vector<2x512xf32> to vector<2x128xf32>
    %102 = math.tanh %101 : vector<2x128xf32>
    %103 = vector.extract_strided_slice %86 {offsets = [0, 384], sizes = [2, 128], strides = [1, 1]} : vector<2x512xf32> to vector<2x128xf32>
    %104 = arith.negf %103 : vector<2x128xf32>
    %105 = math.exp %104 : vector<2x128xf32>
    %cst_47 = arith.constant 1.000000e+00 : f32
    %106 = vector.broadcast %cst_47 : f32 to vector<2x128xf32>
    %107 = arith.addf %106, %105 : vector<2x128xf32>
    %108 = arith.divf %106, %107 : vector<2x128xf32>
    %109 = arith.mulf %100, %88 : vector<2x128xf32>
    %110 = arith.mulf %94, %102 : vector<2x128xf32>
    %111 = arith.addf %109, %110 : vector<2x128xf32>
    %112 = math.tanh %111 : vector<2x128xf32>
    %113 = arith.mulf %108, %112 : vector<2x128xf32>
    %c4_48 = arith.constant 4 : index
    %c0_49 = arith.constant 0 : index
    %114 = vector.load %arg10[%c4_48, %c0_49] : memref<32x256xf32, #tpu.memory_space<vmem>>, vector<2x128xf32>
    tpu.vector_store %arg10[%c4_48, %c0_49], %113 {strides = array<i32>} : memref<32x256xf32, #tpu.memory_space<vmem>>, vector<2x128xf32>,
    %c4_50 = arith.constant 4 : index
    %c128_51 = arith.constant 128 : index
    %115 = vector.load %arg10[%c4_50, %c128_51] : memref<32x256xf32, #tpu.memory_space<vmem>>, vector<2x128xf32>
    tpu.vector_store %arg10[%c4_50, %c128_51], %111 {strides = array<i32>} : memref<32x256xf32, #tpu.memory_space<vmem>>, vector<2x128xf32>,
    %c4_52 = arith.constant 4 : index
    %c0_53 = arith.constant 0 : index
    %116 = vector.load %arg9[%c4_52, %c0_53] : memref<512x128xf32, #tpu.memory_space<vmem>>, vector<2x128xf32>
    tpu.vector_store %arg9[%c4_52, %c0_53], %113 {strides = array<i32>} : memref<512x128xf32, #tpu.memory_space<vmem>>, vector<2x128xf32>,
    %c6 = arith.constant 6 : index
    %c0_54 = arith.constant 0 : index
    %117 = vector.load %arg8[%c6, %c0_54] : memref<512x512xf32, #tpu.memory_space<vmem>>, vector<2x512xf32>
    %cst_55 = arith.constant 5.000000e-01 : f32
    %118 = vector.broadcast %cst_55 : f32 to vector<2x128xf32>
    %119 = arith.mulf %118, %113 : vector<2x128xf32>
    %c0_56 = arith.constant 0 : index
    %c0_57 = arith.constant 0 : index
    %120 = vector.load %arg4[%c0_56, %c0_57] : memref<128x512xf32, #tpu.memory_space<vmem>>, vector<128x512xf32>
    %cst_58 = arith.constant dense<0.000000e+00> : vector<2x512xf32>
    %121 = tpu.matmul %119, %120, %cst_58 {dimension_numbers = #tpu.dot_dimension_numbers<[1], [0], [0], [1], [0, 0, 1, 1], [], []>} : vector<2x128xf32>, vector<128x512xf32>, vector<2x512xf32> -> vector<2x512xf32>
    %122 = arith.addf %117, %121 : vector<2x512xf32>
    %cst_59 = arith.constant 5.000000e-01 : f32
    %123 = vector.broadcast %cst_59 : f32 to vector<2x128xf32>
    %124 = arith.mulf %123, %111 : vector<2x128xf32>
    %125 = vector.extract_strided_slice %122 {offsets = [0, 0], sizes = [2, 128], strides = [1, 1]} : vector<2x512xf32> to vector<2x128xf32>
    %126 = arith.negf %125 : vector<2x128xf32>
    %127 = math.exp %126 : vector<2x128xf32>
    %cst_60 = arith.constant 1.000000e+00 : f32
    %128 = vector.broadcast %cst_60 : f32 to vector<2x128xf32>
    %129 = arith.addf %128, %127 : vector<2x128xf32>
    %130 = arith.divf %128, %129 : vector<2x128xf32>
    %131 = vector.extract_strided_slice %122 {offsets = [0, 128], sizes = [2, 128], strides = [1, 1]} : vector<2x512xf32> to vector<2x128xf32>
    %132 = arith.negf %131 : vector<2x128xf32>
    %133 = math.exp %132 : vector<2x128xf32>
    %cst_61 = arith.constant 1.000000e+00 : f32
    %134 = vector.broadcast %cst_61 : f32 to vector<2x128xf32>
    %135 = arith.addf %134, %133 : vector<2x128xf32>
    %136 = arith.divf %134, %135 : vector<2x128xf32>
    %137 = vector.extract_strided_slice %122 {offsets = [0, 256], sizes = [2, 128], strides = [1, 1]} : vector<2x512xf32> to vector<2x128xf32>
    %138 = math.tanh %137 : vector<2x128xf32>
    %139 = vector.extract_strided_slice %122 {offsets = [0, 384], sizes = [2, 128], strides = [1, 1]} : vector<2x512xf32> to vector<2x128xf32>
    %140 = arith.negf %139 : vector<2x128xf32>
    %141 = math.exp %140 : vector<2x128xf32>
    %cst_62 = arith.constant 1.000000e+00 : f32
    %142 = vector.broadcast %cst_62 : f32 to vector<2x128xf32>
    %143 = arith.addf %142, %141 : vector<2x128xf32>
    %144 = arith.divf %142, %143 : vector<2x128xf32>
    %145 = arith.mulf %136, %124 : vector<2x128xf32>
    %146 = arith.mulf %130, %138 : vector<2x128xf32>
    %147 = arith.addf %145, %146 : vector<2x128xf32>
    %148 = math.tanh %147 : vector<2x128xf32>
    %149 = arith.mulf %144, %148 : vector<2x128xf32>
    %c6_63 = arith.constant 6 : index
    %c0_64 = arith.constant 0 : index
    %150 = vector.load %arg10[%c6_63, %c0_64] : memref<32x256xf32, #tpu.memory_space<vmem>>, vector<2x128xf32>
    tpu.vector_store %arg10[%c6_63, %c0_64], %149 {strides = array<i32>} : memref<32x256xf32, #tpu.memory_space<vmem>>, vector<2x128xf32>,
    %c6_65 = arith.constant 6 : index
    %c128_66 = arith.constant 128 : index
    %151 = vector.load %arg10[%c6_65, %c128_66] : memref<32x256xf32, #tpu.memory_space<vmem>>, vector<2x128xf32>
    tpu.vector_store %arg10[%c6_65, %c128_66], %147 {strides = array<i32>} : memref<32x256xf32, #tpu.memory_space<vmem>>, vector<2x128xf32>,
    %c6_67 = arith.constant 6 : index
    %c0_68 = arith.constant 0 : index
    %152 = vector.load %arg9[%c6_67, %c0_68] : memref<512x128xf32, #tpu.memory_space<vmem>>, vector<2x128xf32>
    tpu.vector_store %arg9[%c6_67, %c0_68], %149 {strides = array<i32>} : memref<512x128xf32, #tpu.memory_space<vmem>>, vector<2x128xf32>,
    %c8 = arith.constant 8 : index
    %c0_69 = arith.constant 0 : index
    %153 = vector.load %arg8[%c8, %c0_69] : memref<512x512xf32, #tpu.memory_space<vmem>>, vector<2x512xf32>
    %cst_70 = arith.constant 5.000000e-01 : f32
    %154 = vector.broadcast %cst_70 : f32 to vector<2x128xf32>
    %155 = arith.mulf %154, %149 : vector<2x128xf32>
    %c0_71 = arith.constant 0 : index
    %c0_72 = arith.constant 0 : index
    %156 = vector.load %arg4[%c0_71, %c0_72] : memref<128x512xf32, #tpu.memory_space<vmem>>, vector<128x512xf32>
    %cst_73 = arith.constant dense<0.000000e+00> : vector<2x512xf32>
    %157 = tpu.matmul %155, %156, %cst_73 {dimension_numbers = #tpu.dot_dimension_numbers<[1], [0], [0], [1], [0, 0, 1, 1], [], []>} : vector<2x128xf32>, vector<128x512xf32>, vector<2x512xf32> -> vector<2x512xf32>
    %158 = arith.addf %153, %157 : vector<2x512xf32>
    %cst_74 = arith.constant 5.000000e-01 : f32
    %159 = vector.broadcast %cst_74 : f32 to vector<2x128xf32>
    %160 = arith.mulf %159, %147 : vector<2x128xf32>
    %161 = vector.extract_strided_slice %158 {offsets = [0, 0], sizes = [2, 128], strides = [1, 1]} : vector<2x512xf32> to vector<2x128xf32>
    %162 = arith.negf %161 : vector<2x128xf32>
    %163 = math.exp %162 : vector<2x128xf32>
    %cst_75 = arith.constant 1.000000e+00 : f32
    %164 = vector.broadcast %cst_75 : f32 to vector<2x128xf32>
    %165 = arith.addf %164, %163 : vector<2x128xf32>
    %166 = arith.divf %164, %165 : vector<2x128xf32>
    %167 = vector.extract_strided_slice %158 {offsets = [0, 128], sizes = [2, 128], strides = [1, 1]} : vector<2x512xf32> to vector<2x128xf32>
    %168 = arith.negf %167 : vector<2x128xf32>
    %169 = math.exp %168 : vector<2x128xf32>
    %cst_76 = arith.constant 1.000000e+00 : f32
    %170 = vector.broadcast %cst_76 : f32 to vector<2x128xf32>
    %171 = arith.addf %170, %169 : vector<2x128xf32>
    %172 = arith.divf %170, %171 : vector<2x128xf32>
    %173 = vector.extract_strided_slice %158 {offsets = [0, 256], sizes = [2, 128], strides = [1, 1]} : vector<2x512xf32> to vector<2x128xf32>
    %174 = math.tanh %173 : vector<2x128xf32>
    %175 = vector.extract_strided_slice %158 {offsets = [0, 384], sizes = [2, 128], strides = [1, 1]} : vector<2x512xf32> to vector<2x128xf32>
    %176 = arith.negf %175 : vector<2x128xf32>
    %177 = math.exp %176 : vector<2x128xf32>
    %cst_77 = arith.constant 1.000000e+00 : f32
    %178 = vector.broadcast %cst_77 : f32 to vector<2x128xf32>
    %179 = arith.addf %178, %177 : vector<2x128xf32>
    %180 = arith.divf %178, %179 : vector<2x128xf32>
    %181 = arith.mulf %172, %160 : vector<2x128xf32>
    %182 = arith.mulf %166, %174 : vector<2x128xf32>
    %183 = arith.addf %181, %182 : vector<2x128xf32>
    %184 = math.tanh %183 : vector<2x128xf32>
    %185 = arith.mulf %180, %184 : vector<2x128xf32>
    %c8_78 = arith.constant 8 : index
    %c0_79 = arith.constant 0 : index
    %186 = vector.load %arg10[%c8_78, %c0_79] : memref<32x256xf32, #tpu.memory_space<vmem>>, vector<2x128xf32>
    tpu.vector_store %arg10[%c8_78, %c0_79], %185 {strides = array<i32>} : memref<32x256xf32, #tpu.memory_space<vmem>>, vector<2x128xf32>,
    %c8_80 = arith.constant 8 : index
    %c128_81 = arith.constant 128 : index
    %187 = vector.load %arg10[%c8_80, %c128_81] : memref<32x256xf32, #tpu.memory_space<vmem>>, vector<2x128xf32>
    tpu.vector_store %arg10[%c8_80, %c128_81], %183 {strides = array<i32>} : memref<32x256xf32, #tpu.memory_space<vmem>>, vector<2x128xf32>,
    %c8_82 = arith.constant 8 : index
    %c0_83 = arith.constant 0 : index
    %188 = vector.load %arg9[%c8_82, %c0_83] : memref<512x128xf32, #tpu.memory_space<vmem>>, vector<2x128xf32>
    tpu.vector_store %arg9[%c8_82, %c0_83], %185 {strides = array<i32>} : memref<512x128xf32, #tpu.memory_space<vmem>>, vector<2x128xf32>,
    %c10 = arith.constant 10 : index
    %c0_84 = arith.constant 0 : index
    %189 = vector.load %arg8[%c10, %c0_84] : memref<512x512xf32, #tpu.memory_space<vmem>>, vector<2x512xf32>
    %cst_85 = arith.constant 5.000000e-01 : f32
    %190 = vector.broadcast %cst_85 : f32 to vector<2x128xf32>
    %191 = arith.mulf %190, %185 : vector<2x128xf32>
    %c0_86 = arith.constant 0 : index
    %c0_87 = arith.constant 0 : index
    %192 = vector.load %arg4[%c0_86, %c0_87] : memref<128x512xf32, #tpu.memory_space<vmem>>, vector<128x512xf32>
    %cst_88 = arith.constant dense<0.000000e+00> : vector<2x512xf32>
    %193 = tpu.matmul %191, %192, %cst_88 {dimension_numbers = #tpu.dot_dimension_numbers<[1], [0], [0], [1], [0, 0, 1, 1], [], []>} : vector<2x128xf32>, vector<128x512xf32>, vector<2x512xf32> -> vector<2x512xf32>
    %194 = arith.addf %189, %193 : vector<2x512xf32>
    %cst_89 = arith.constant 5.000000e-01 : f32
    %195 = vector.broadcast %cst_89 : f32 to vector<2x128xf32>
    %196 = arith.mulf %195, %183 : vector<2x128xf32>
    %197 = vector.extract_strided_slice %194 {offsets = [0, 0], sizes = [2, 128], strides = [1, 1]} : vector<2x512xf32> to vector<2x128xf32>
    %198 = arith.negf %197 : vector<2x128xf32>
    %199 = math.exp %198 : vector<2x128xf32>
    %cst_90 = arith.constant 1.000000e+00 : f32
    %200 = vector.broadcast %cst_90 : f32 to vector<2x128xf32>
    %201 = arith.addf %200, %199 : vector<2x128xf32>
    %202 = arith.divf %200, %201 : vector<2x128xf32>
    %203 = vector.extract_strided_slice %194 {offsets = [0, 128], sizes = [2, 128], strides = [1, 1]} : vector<2x512xf32> to vector<2x128xf32>
    %204 = arith.negf %203 : vector<2x128xf32>
    %205 = math.exp %204 : vector<2x128xf32>
    %cst_91 = arith.constant 1.000000e+00 : f32
    %206 = vector.broadcast %cst_91 : f32 to vector<2x128xf32>
    %207 = arith.addf %206, %205 : vector<2x128xf32>
    %208 = arith.divf %206, %207 : vector<2x128xf32>
    %209 = vector.extract_strided_slice %194 {offsets = [0, 256], sizes = [2, 128], strides = [1, 1]} : vector<2x512xf32> to vector<2x128xf32>
    %210 = math.tanh %209 : vector<2x128xf32>
    %211 = vector.extract_strided_slice %194 {offsets = [0, 384], sizes = [2, 128], strides = [1, 1]} : vector<2x512xf32> to vector<2x128xf32>
    %212 = arith.negf %211 : vector<2x128xf32>
    %213 = math.exp %212 : vector<2x128xf32>
    %cst_92 = arith.constant 1.000000e+00 : f32
    %214 = vector.broadcast %cst_92 : f32 to vector<2x128xf32>
    %215 = arith.addf %214, %213 : vector<2x128xf32>
    %216 = arith.divf %214, %215 : vector<2x128xf32>
    %217 = arith.mulf %208, %196 : vector<2x128xf32>
    %218 = arith.mulf %202, %210 : vector<2x128xf32>
    %219 = arith.addf %217, %218 : vector<2x128xf32>
    %220 = math.tanh %219 : vector<2x128xf32>
    %221 = arith.mulf %216, %220 : vector<2x128xf32>
    %c10_93 = arith.constant 10 : index
    %c0_94 = arith.constant 0 : index
    %222 = vector.load %arg10[%c10_93, %c0_94] : memref<32x256xf32, #tpu.memory_space<vmem>>, vector<2x128xf32>
    tpu.vector_store %arg10[%c10_93, %c0_94], %221 {strides = array<i32>} : memref<32x256xf32, #tpu.memory_space<vmem>>, vector<2x128xf32>,
    %c10_95 = arith.constant 10 : index
    %c128_96 = arith.constant 128 : index
    %223 = vector.load %arg10[%c10_95, %c128_96] : memref<32x256xf32, #tpu.memory_space<vmem>>, vector<2x128xf32>
    tpu.vector_store %arg10[%c10_95, %c128_96], %219 {strides = array<i32>} : memref<32x256xf32, #tpu.memory_space<vmem>>, vector<2x128xf32>,
    %c10_97 = arith.constant 10 : index
    %c0_98 = arith.constant 0 : index
    %224 = vector.load %arg9[%c10_97, %c0_98] : memref<512x128xf32, #tpu.memory_space<vmem>>, vector<2x128xf32>
    tpu.vector_store %arg9[%c10_97, %c0_98], %221 {strides = array<i32>} : memref<512x128xf32, #tpu.memory_space<vmem>>, vector<2x128xf32>,
    %c12 = arith.constant 12 : index
    %c0_99 = arith.constant 0 : index
    %225 = vector.load %arg8[%c12, %c0_99] : memref<512x512xf32, #tpu.memory_space<vmem>>, vector<2x512xf32>
    %cst_100 = arith.constant 5.000000e-01 : f32
    %226 = vector.broadcast %cst_100 : f32 to vector<2x128xf32>
    %227 = arith.mulf %226, %221 : vector<2x128xf32>
    %c0_101 = arith.constant 0 : index
    %c0_102 = arith.constant 0 : index
    %228 = vector.load %arg4[%c0_101, %c0_102] : memref<128x512xf32, #tpu.memory_space<vmem>>, vector<128x512xf32>
    %cst_103 = arith.constant dense<0.000000e+00> : vector<2x512xf32>
    %229 = tpu.matmul %227, %228, %cst_103 {dimension_numbers = #tpu.dot_dimension_numbers<[1], [0], [0], [1], [0, 0, 1, 1], [], []>} : vector<2x128xf32>, vector<128x512xf32>, vector<2x512xf32> -> vector<2x512xf32>
    %230 = arith.addf %225, %229 : vector<2x512xf32>
    %cst_104 = arith.constant 5.000000e-01 : f32
    %231 = vector.broadcast %cst_104 : f32 to vector<2x128xf32>
    %232 = arith.mulf %231, %219 : vector<2x128xf32>
    %233 = vector.extract_strided_slice %230 {offsets = [0, 0], sizes = [2, 128], strides = [1, 1]} : vector<2x512xf32> to vector<2x128xf32>
    %234 = arith.negf %233 : vector<2x128xf32>
    %235 = math.exp %234 : vector<2x128xf32>
    %cst_105 = arith.constant 1.000000e+00 : f32
    %236 = vector.broadcast %cst_105 : f32 to vector<2x128xf32>
    %237 = arith.addf %236, %235 : vector<2x128xf32>
    %238 = arith.divf %236, %237 : vector<2x128xf32>
    %239 = vector.extract_strided_slice %230 {offsets = [0, 128], sizes = [2, 128], strides = [1, 1]} : vector<2x512xf32> to vector<2x128xf32>
    %240 = arith.negf %239 : vector<2x128xf32>
    %241 = math.exp %240 : vector<2x128xf32>
    %cst_106 = arith.constant 1.000000e+00 : f32
    %242 = vector.broadcast %cst_106 : f32 to vector<2x128xf32>
    %243 = arith.addf %242, %241 : vector<2x128xf32>
    %244 = arith.divf %242, %243 : vector<2x128xf32>
    %245 = vector.extract_strided_slice %230 {offsets = [0, 256], sizes = [2, 128], strides = [1, 1]} : vector<2x512xf32> to vector<2x128xf32>
    %246 = math.tanh %245 : vector<2x128xf32>
    %247 = vector.extract_strided_slice %230 {offsets = [0, 384], sizes = [2, 128], strides = [1, 1]} : vector<2x512xf32> to vector<2x128xf32>
    %248 = arith.negf %247 : vector<2x128xf32>
    %249 = math.exp %248 : vector<2x128xf32>
    %cst_107 = arith.constant 1.000000e+00 : f32
    %250 = vector.broadcast %cst_107 : f32 to vector<2x128xf32>
    %251 = arith.addf %250, %249 : vector<2x128xf32>
    %252 = arith.divf %250, %251 : vector<2x128xf32>
    %253 = arith.mulf %244, %232 : vector<2x128xf32>
    %254 = arith.mulf %238, %246 : vector<2x128xf32>
    %255 = arith.addf %253, %254 : vector<2x128xf32>
    %256 = math.tanh %255 : vector<2x128xf32>
    %257 = arith.mulf %252, %256 : vector<2x128xf32>
    %c12_108 = arith.constant 12 : index
    %c0_109 = arith.constant 0 : index
    %258 = vector.load %arg10[%c12_108, %c0_109] : memref<32x256xf32, #tpu.memory_space<vmem>>, vector<2x128xf32>
    tpu.vector_store %arg10[%c12_108, %c0_109], %257 {strides = array<i32>} : memref<32x256xf32, #tpu.memory_space<vmem>>, vector<2x128xf32>,
    %c12_110 = arith.constant 12 : index
    %c128_111 = arith.constant 128 : index
    %259 = vector.load %arg10[%c12_110, %c128_111] : memref<32x256xf32, #tpu.memory_space<vmem>>, vector<2x128xf32>
    tpu.vector_store %arg10[%c12_110, %c128_111], %255 {strides = array<i32>} : memref<32x256xf32, #tpu.memory_space<vmem>>, vector<2x128xf32>,
    %c12_112 = arith.constant 12 : index
    %c0_113 = arith.constant 0 : index
    %260 = vector.load %arg9[%c12_112, %c0_113] : memref<512x128xf32, #tpu.memory_space<vmem>>, vector<2x128xf32>
    tpu.vector_store %arg9[%c12_112, %c0_113], %257 {strides = array<i32>} : memref<512x128xf32, #tpu.memory_space<vmem>>, vector<2x128xf32>,
    %c14 = arith.constant 14 : index
    %c0_114 = arith.constant 0 : index
    %261 = vector.load %arg8[%c14, %c0_114] : memref<512x512xf32, #tpu.memory_space<vmem>>, vector<2x512xf32>
    %cst_115 = arith.constant 5.000000e-01 : f32
    %262 = vector.broadcast %cst_115 : f32 to vector<2x128xf32>
    %263 = arith.mulf %262, %257 : vector<2x128xf32>
    %c0_116 = arith.constant 0 : index
    %c0_117 = arith.constant 0 : index
    %264 = vector.load %arg4[%c0_116, %c0_117] : memref<128x512xf32, #tpu.memory_space<vmem>>, vector<128x512xf32>
    %cst_118 = arith.constant dense<0.000000e+00> : vector<2x512xf32>
    %265 = tpu.matmul %263, %264, %cst_118 {dimension_numbers = #tpu.dot_dimension_numbers<[1], [0], [0], [1], [0, 0, 1, 1], [], []>} : vector<2x128xf32>, vector<128x512xf32>, vector<2x512xf32> -> vector<2x512xf32>
    %266 = arith.addf %261, %265 : vector<2x512xf32>
    %cst_119 = arith.constant 5.000000e-01 : f32
    %267 = vector.broadcast %cst_119 : f32 to vector<2x128xf32>
    %268 = arith.mulf %267, %255 : vector<2x128xf32>
    %269 = vector.extract_strided_slice %266 {offsets = [0, 0], sizes = [2, 128], strides = [1, 1]} : vector<2x512xf32> to vector<2x128xf32>
    %270 = arith.negf %269 : vector<2x128xf32>
    %271 = math.exp %270 : vector<2x128xf32>
    %cst_120 = arith.constant 1.000000e+00 : f32
    %272 = vector.broadcast %cst_120 : f32 to vector<2x128xf32>
    %273 = arith.addf %272, %271 : vector<2x128xf32>
    %274 = arith.divf %272, %273 : vector<2x128xf32>
    %275 = vector.extract_strided_slice %266 {offsets = [0, 128], sizes = [2, 128], strides = [1, 1]} : vector<2x512xf32> to vector<2x128xf32>
    %276 = arith.negf %275 : vector<2x128xf32>
    %277 = math.exp %276 : vector<2x128xf32>
    %cst_121 = arith.constant 1.000000e+00 : f32
    %278 = vector.broadcast %cst_121 : f32 to vector<2x128xf32>
    %279 = arith.addf %278, %277 : vector<2x128xf32>
    %280 = arith.divf %278, %279 : vector<2x128xf32>
    %281 = vector.extract_strided_slice %266 {offsets = [0, 256], sizes = [2, 128], strides = [1, 1]} : vector<2x512xf32> to vector<2x128xf32>
    %282 = math.tanh %281 : vector<2x128xf32>
    %283 = vector.extract_strided_slice %266 {offsets = [0, 384], sizes = [2, 128], strides = [1, 1]} : vector<2x512xf32> to vector<2x128xf32>
    %284 = arith.negf %283 : vector<2x128xf32>
    %285 = math.exp %284 : vector<2x128xf32>
    %cst_122 = arith.constant 1.000000e+00 : f32
    %286 = vector.broadcast %cst_122 : f32 to vector<2x128xf32>
    %287 = arith.addf %286, %285 : vector<2x128xf32>
    %288 = arith.divf %286, %287 : vector<2x128xf32>
    %289 = arith.mulf %280, %268 : vector<2x128xf32>
    %290 = arith.mulf %274, %282 : vector<2x128xf32>
    %291 = arith.addf %289, %290 : vector<2x128xf32>
    %292 = math.tanh %291 : vector<2x128xf32>
    %293 = arith.mulf %288, %292 : vector<2x128xf32>
    %c14_123 = arith.constant 14 : index
    %c0_124 = arith.constant 0 : index
    %294 = vector.load %arg10[%c14_123, %c0_124] : memref<32x256xf32, #tpu.memory_space<vmem>>, vector<2x128xf32>
    tpu.vector_store %arg10[%c14_123, %c0_124], %293 {strides = array<i32>} : memref<32x256xf32, #tpu.memory_space<vmem>>, vector<2x128xf32>,
    %c14_125 = arith.constant 14 : index
    %c128_126 = arith.constant 128 : index
    %295 = vector.load %arg10[%c14_125, %c128_126] : memref<32x256xf32, #tpu.memory_space<vmem>>, vector<2x128xf32>
    tpu.vector_store %arg10[%c14_125, %c128_126], %291 {strides = array<i32>} : memref<32x256xf32, #tpu.memory_space<vmem>>, vector<2x128xf32>,
    %c14_127 = arith.constant 14 : index
    %c0_128 = arith.constant 0 : index
    %296 = vector.load %arg9[%c14_127, %c0_128] : memref<512x128xf32, #tpu.memory_space<vmem>>, vector<2x128xf32>
    tpu.vector_store %arg9[%c14_127, %c0_128], %293 {strides = array<i32>} : memref<512x128xf32, #tpu.memory_space<vmem>>, vector<2x128xf32>,
    %c16 = arith.constant 16 : index
    %c0_129 = arith.constant 0 : index
    %297 = vector.load %arg8[%c16, %c0_129] : memref<512x512xf32, #tpu.memory_space<vmem>>, vector<2x512xf32>
    %cst_130 = arith.constant 5.000000e-01 : f32
    %298 = vector.broadcast %cst_130 : f32 to vector<2x128xf32>
    %299 = arith.mulf %298, %293 : vector<2x128xf32>
    %c0_131 = arith.constant 0 : index
    %c0_132 = arith.constant 0 : index
    %300 = vector.load %arg4[%c0_131, %c0_132] : memref<128x512xf32, #tpu.memory_space<vmem>>, vector<128x512xf32>
    %cst_133 = arith.constant dense<0.000000e+00> : vector<2x512xf32>
    %301 = tpu.matmul %299, %300, %cst_133 {dimension_numbers = #tpu.dot_dimension_numbers<[1], [0], [0], [1], [0, 0, 1, 1], [], []>} : vector<2x128xf32>, vector<128x512xf32>, vector<2x512xf32> -> vector<2x512xf32>
    %302 = arith.addf %297, %301 : vector<2x512xf32>
    %cst_134 = arith.constant 5.000000e-01 : f32
    %303 = vector.broadcast %cst_134 : f32 to vector<2x128xf32>
    %304 = arith.mulf %303, %291 : vector<2x128xf32>
    %305 = vector.extract_strided_slice %302 {offsets = [0, 0], sizes = [2, 128], strides = [1, 1]} : vector<2x512xf32> to vector<2x128xf32>
    %306 = arith.negf %305 : vector<2x128xf32>
    %307 = math.exp %306 : vector<2x128xf32>
    %cst_135 = arith.constant 1.000000e+00 : f32
    %308 = vector.broadcast %cst_135 : f32 to vector<2x128xf32>
    %309 = arith.addf %308, %307 : vector<2x128xf32>
    %310 = arith.divf %308, %309 : vector<2x128xf32>
    %311 = vector.extract_strided_slice %302 {offsets = [0, 128], sizes = [2, 128], strides = [1, 1]} : vector<2x512xf32> to vector<2x128xf32>
    %312 = arith.negf %311 : vector<2x128xf32>
    %313 = math.exp %312 : vector<2x128xf32>
    %cst_136 = arith.constant 1.000000e+00 : f32
    %314 = vector.broadcast %cst_136 : f32 to vector<2x128xf32>
    %315 = arith.addf %314, %313 : vector<2x128xf32>
    %316 = arith.divf %314, %315 : vector<2x128xf32>
    %317 = vector.extract_strided_slice %302 {offsets = [0, 256], sizes = [2, 128], strides = [1, 1]} : vector<2x512xf32> to vector<2x128xf32>
    %318 = math.tanh %317 : vector<2x128xf32>
    %319 = vector.extract_strided_slice %302 {offsets = [0, 384], sizes = [2, 128], strides = [1, 1]} : vector<2x512xf32> to vector<2x128xf32>
    %320 = arith.negf %319 : vector<2x128xf32>
    %321 = math.exp %320 : vector<2x128xf32>
    %cst_137 = arith.constant 1.000000e+00 : f32
    %322 = vector.broadcast %cst_137 : f32 to vector<2x128xf32>
    %323 = arith.addf %322, %321 : vector<2x128xf32>
    %324 = arith.divf %322, %323 : vector<2x128xf32>
    %325 = arith.mulf %316, %304 : vector<2x128xf32>
    %326 = arith.mulf %310, %318 : vector<2x128xf32>
    %327 = arith.addf %325, %326 : vector<2x128xf32>
    %328 = math.tanh %327 : vector<2x128xf32>
    %329 = arith.mulf %324, %328 : vector<2x128xf32>
    %c16_138 = arith.constant 16 : index
    %c0_139 = arith.constant 0 : index
    %330 = vector.load %arg10[%c16_138, %c0_139] : memref<32x256xf32, #tpu.memory_space<vmem>>, vector<2x128xf32>
    tpu.vector_store %arg10[%c16_138, %c0_139], %329 {strides = array<i32>} : memref<32x256xf32, #tpu.memory_space<vmem>>, vector<2x128xf32>,
    %c16_140 = arith.constant 16 : index
    %c128_141 = arith.constant 128 : index
    %331 = vector.load %arg10[%c16_140, %c128_141] : memref<32x256xf32, #tpu.memory_space<vmem>>, vector<2x128xf32>
    tpu.vector_store %arg10[%c16_140, %c128_141], %327 {strides = array<i32>} : memref<32x256xf32, #tpu.memory_space<vmem>>, vector<2x128xf32>,
    %c16_142 = arith.constant 16 : index
    %c0_143 = arith.constant 0 : index
    %332 = vector.load %arg9[%c16_142, %c0_143] : memref<512x128xf32, #tpu.memory_space<vmem>>, vector<2x128xf32>
    tpu.vector_store %arg9[%c16_142, %c0_143], %329 {strides = array<i32>} : memref<512x128xf32, #tpu.memory_space<vmem>>, vector<2x128xf32>,
    %c18 = arith.constant 18 : index
    %c0_144 = arith.constant 0 : index
    %333 = vector.load %arg8[%c18, %c0_144] : memref<512x512xf32, #tpu.memory_space<vmem>>, vector<2x512xf32>
    %cst_145 = arith.constant 5.000000e-01 : f32
    %334 = vector.broadcast %cst_145 : f32 to vector<2x128xf32>
    %335 = arith.mulf %334, %329 : vector<2x128xf32>
    %c0_146 = arith.constant 0 : index
    %c0_147 = arith.constant 0 : index
    %336 = vector.load %arg4[%c0_146, %c0_147] : memref<128x512xf32, #tpu.memory_space<vmem>>, vector<128x512xf32>
    %cst_148 = arith.constant dense<0.000000e+00> : vector<2x512xf32>
    %337 = tpu.matmul %335, %336, %cst_148 {dimension_numbers = #tpu.dot_dimension_numbers<[1], [0], [0], [1], [0, 0, 1, 1], [], []>} : vector<2x128xf32>, vector<128x512xf32>, vector<2x512xf32> -> vector<2x512xf32>
    %338 = arith.addf %333, %337 : vector<2x512xf32>
    %cst_149 = arith.constant 5.000000e-01 : f32
    %339 = vector.broadcast %cst_149 : f32 to vector<2x128xf32>
    %340 = arith.mulf %339, %327 : vector<2x128xf32>
    %341 = vector.extract_strided_slice %338 {offsets = [0, 0], sizes = [2, 128], strides = [1, 1]} : vector<2x512xf32> to vector<2x128xf32>
    %342 = arith.negf %341 : vector<2x128xf32>
    %343 = math.exp %342 : vector<2x128xf32>
    %cst_150 = arith.constant 1.000000e+00 : f32
    %344 = vector.broadcast %cst_150 : f32 to vector<2x128xf32>
    %345 = arith.addf %344, %343 : vector<2x128xf32>
    %346 = arith.divf %344, %345 : vector<2x128xf32>
    %347 = vector.extract_strided_slice %338 {offsets = [0, 128], sizes = [2, 128], strides = [1, 1]} : vector<2x512xf32> to vector<2x128xf32>
    %348 = arith.negf %347 : vector<2x128xf32>
    %349 = math.exp %348 : vector<2x128xf32>
    %cst_151 = arith.constant 1.000000e+00 : f32
    %350 = vector.broadcast %cst_151 : f32 to vector<2x128xf32>
    %351 = arith.addf %350, %349 : vector<2x128xf32>
    %352 = arith.divf %350, %351 : vector<2x128xf32>
    %353 = vector.extract_strided_slice %338 {offsets = [0, 256], sizes = [2, 128], strides = [1, 1]} : vector<2x512xf32> to vector<2x128xf32>
    %354 = math.tanh %353 : vector<2x128xf32>
    %355 = vector.extract_strided_slice %338 {offsets = [0, 384], sizes = [2, 128], strides = [1, 1]} : vector<2x512xf32> to vector<2x128xf32>
    %356 = arith.negf %355 : vector<2x128xf32>
    %357 = math.exp %356 : vector<2x128xf32>
    %cst_152 = arith.constant 1.000000e+00 : f32
    %358 = vector.broadcast %cst_152 : f32 to vector<2x128xf32>
    %359 = arith.addf %358, %357 : vector<2x128xf32>
    %360 = arith.divf %358, %359 : vector<2x128xf32>
    %361 = arith.mulf %352, %340 : vector<2x128xf32>
    %362 = arith.mulf %346, %354 : vector<2x128xf32>
    %363 = arith.addf %361, %362 : vector<2x128xf32>
    %364 = math.tanh %363 : vector<2x128xf32>
    %365 = arith.mulf %360, %364 : vector<2x128xf32>
    %c18_153 = arith.constant 18 : index
    %c0_154 = arith.constant 0 : index
    %366 = vector.load %arg10[%c18_153, %c0_154] : memref<32x256xf32, #tpu.memory_space<vmem>>, vector<2x128xf32>
    tpu.vector_store %arg10[%c18_153, %c0_154], %365 {strides = array<i32>} : memref<32x256xf32, #tpu.memory_space<vmem>>, vector<2x128xf32>,
    %c18_155 = arith.constant 18 : index
    %c128_156 = arith.constant 128 : index
    %367 = vector.load %arg10[%c18_155, %c128_156] : memref<32x256xf32, #tpu.memory_space<vmem>>, vector<2x128xf32>
    tpu.vector_store %arg10[%c18_155, %c128_156], %363 {strides = array<i32>} : memref<32x256xf32, #tpu.memory_space<vmem>>, vector<2x128xf32>,
    %c18_157 = arith.constant 18 : index
    %c0_158 = arith.constant 0 : index
    %368 = vector.load %arg9[%c18_157, %c0_158] : memref<512x128xf32, #tpu.memory_space<vmem>>, vector<2x128xf32>
    tpu.vector_store %arg9[%c18_157, %c0_158], %365 {strides = array<i32>} : memref<512x128xf32, #tpu.memory_space<vmem>>, vector<2x128xf32>,
    %c20 = arith.constant 20 : index
    %c0_159 = arith.constant 0 : index
    %369 = vector.load %arg8[%c20, %c0_159] : memref<512x512xf32, #tpu.memory_space<vmem>>, vector<2x512xf32>
    %cst_160 = arith.constant 5.000000e-01 : f32
    %370 = vector.broadcast %cst_160 : f32 to vector<2x128xf32>
    %371 = arith.mulf %370, %365 : vector<2x128xf32>
    %c0_161 = arith.constant 0 : index
    %c0_162 = arith.constant 0 : index
    %372 = vector.load %arg4[%c0_161, %c0_162] : memref<128x512xf32, #tpu.memory_space<vmem>>, vector<128x512xf32>
    %cst_163 = arith.constant dense<0.000000e+00> : vector<2x512xf32>
    %373 = tpu.matmul %371, %372, %cst_163 {dimension_numbers = #tpu.dot_dimension_numbers<[1], [0], [0], [1], [0, 0, 1, 1], [], []>} : vector<2x128xf32>, vector<128x512xf32>, vector<2x512xf32> -> vector<2x512xf32>
    %374 = arith.addf %369, %373 : vector<2x512xf32>
    %cst_164 = arith.constant 5.000000e-01 : f32
    %375 = vector.broadcast %cst_164 : f32 to vector<2x128xf32>
    %376 = arith.mulf %375, %363 : vector<2x128xf32>
    %377 = vector.extract_strided_slice %374 {offsets = [0, 0], sizes = [2, 128], strides = [1, 1]} : vector<2x512xf32> to vector<2x128xf32>
    %378 = arith.negf %377 : vector<2x128xf32>
    %379 = math.exp %378 : vector<2x128xf32>
    %cst_165 = arith.constant 1.000000e+00 : f32
    %380 = vector.broadcast %cst_165 : f32 to vector<2x128xf32>
    %381 = arith.addf %380, %379 : vector<2x128xf32>
    %382 = arith.divf %380, %381 : vector<2x128xf32>
    %383 = vector.extract_strided_slice %374 {offsets = [0, 128], sizes = [2, 128], strides = [1, 1]} : vector<2x512xf32> to vector<2x128xf32>
    %384 = arith.negf %383 : vector<2x128xf32>
    %385 = math.exp %384 : vector<2x128xf32>
    %cst_166 = arith.constant 1.000000e+00 : f32
    %386 = vector.broadcast %cst_166 : f32 to vector<2x128xf32>
    %387 = arith.addf %386, %385 : vector<2x128xf32>
    %388 = arith.divf %386, %387 : vector<2x128xf32>
    %389 = vector.extract_strided_slice %374 {offsets = [0, 256], sizes = [2, 128], strides = [1, 1]} : vector<2x512xf32> to vector<2x128xf32>
    %390 = math.tanh %389 : vector<2x128xf32>
    %391 = vector.extract_strided_slice %374 {offsets = [0, 384], sizes = [2, 128], strides = [1, 1]} : vector<2x512xf32> to vector<2x128xf32>
    %392 = arith.negf %391 : vector<2x128xf32>
    %393 = math.exp %392 : vector<2x128xf32>
    %cst_167 = arith.constant 1.000000e+00 : f32
    %394 = vector.broadcast %cst_167 : f32 to vector<2x128xf32>
    %395 = arith.addf %394, %393 : vector<2x128xf32>
    %396 = arith.divf %394, %395 : vector<2x128xf32>
    %397 = arith.mulf %388, %376 : vector<2x128xf32>
    %398 = arith.mulf %382, %390 : vector<2x128xf32>
    %399 = arith.addf %397, %398 : vector<2x128xf32>
    %400 = math.tanh %399 : vector<2x128xf32>
    %401 = arith.mulf %396, %400 : vector<2x128xf32>
    %c20_168 = arith.constant 20 : index
    %c0_169 = arith.constant 0 : index
    %402 = vector.load %arg10[%c20_168, %c0_169] : memref<32x256xf32, #tpu.memory_space<vmem>>, vector<2x128xf32>
    tpu.vector_store %arg10[%c20_168, %c0_169], %401 {strides = array<i32>} : memref<32x256xf32, #tpu.memory_space<vmem>>, vector<2x128xf32>,
    %c20_170 = arith.constant 20 : index
    %c128_171 = arith.constant 128 : index
    %403 = vector.load %arg10[%c20_170, %c128_171] : memref<32x256xf32, #tpu.memory_space<vmem>>, vector<2x128xf32>
    tpu.vector_store %arg10[%c20_170, %c128_171], %399 {strides = array<i32>} : memref<32x256xf32, #tpu.memory_space<vmem>>, vector<2x128xf32>,
    %c20_172 = arith.constant 20 : index
    %c0_173 = arith.constant 0 : index
    %404 = vector.load %arg9[%c20_172, %c0_173] : memref<512x128xf32, #tpu.memory_space<vmem>>, vector<2x128xf32>
    tpu.vector_store %arg9[%c20_172, %c0_173], %401 {strides = array<i32>} : memref<512x128xf32, #tpu.memory_space<vmem>>, vector<2x128xf32>,
    %c22 = arith.constant 22 : index
    %c0_174 = arith.constant 0 : index
    %405 = vector.load %arg8[%c22, %c0_174] : memref<512x512xf32, #tpu.memory_space<vmem>>, vector<2x512xf32>
    %cst_175 = arith.constant 5.000000e-01 : f32
    %406 = vector.broadcast %cst_175 : f32 to vector<2x128xf32>
    %407 = arith.mulf %406, %401 : vector<2x128xf32>
    %c0_176 = arith.constant 0 : index
    %c0_177 = arith.constant 0 : index
    %408 = vector.load %arg4[%c0_176, %c0_177] : memref<128x512xf32, #tpu.memory_space<vmem>>, vector<128x512xf32>
    %cst_178 = arith.constant dense<0.000000e+00> : vector<2x512xf32>
    %409 = tpu.matmul %407, %408, %cst_178 {dimension_numbers = #tpu.dot_dimension_numbers<[1], [0], [0], [1], [0, 0, 1, 1], [], []>} : vector<2x128xf32>, vector<128x512xf32>, vector<2x512xf32> -> vector<2x512xf32>
    %410 = arith.addf %405, %409 : vector<2x512xf32>
    %cst_179 = arith.constant 5.000000e-01 : f32
    %411 = vector.broadcast %cst_179 : f32 to vector<2x128xf32>
    %412 = arith.mulf %411, %399 : vector<2x128xf32>
    %413 = vector.extract_strided_slice %410 {offsets = [0, 0], sizes = [2, 128], strides = [1, 1]} : vector<2x512xf32> to vector<2x128xf32>
    %414 = arith.negf %413 : vector<2x128xf32>
    %415 = math.exp %414 : vector<2x128xf32>
    %cst_180 = arith.constant 1.000000e+00 : f32
    %416 = vector.broadcast %cst_180 : f32 to vector<2x128xf32>
    %417 = arith.addf %416, %415 : vector<2x128xf32>
    %418 = arith.divf %416, %417 : vector<2x128xf32>
    %419 = vector.extract_strided_slice %410 {offsets = [0, 128], sizes = [2, 128], strides = [1, 1]} : vector<2x512xf32> to vector<2x128xf32>
    %420 = arith.negf %419 : vector<2x128xf32>
    %421 = math.exp %420 : vector<2x128xf32>
    %cst_181 = arith.constant 1.000000e+00 : f32
    %422 = vector.broadcast %cst_181 : f32 to vector<2x128xf32>
    %423 = arith.addf %422, %421 : vector<2x128xf32>
    %424 = arith.divf %422, %423 : vector<2x128xf32>
    %425 = vector.extract_strided_slice %410 {offsets = [0, 256], sizes = [2, 128], strides = [1, 1]} : vector<2x512xf32> to vector<2x128xf32>
    %426 = math.tanh %425 : vector<2x128xf32>
    %427 = vector.extract_strided_slice %410 {offsets = [0, 384], sizes = [2, 128], strides = [1, 1]} : vector<2x512xf32> to vector<2x128xf32>
    %428 = arith.negf %427 : vector<2x128xf32>
    %429 = math.exp %428 : vector<2x128xf32>
    %cst_182 = arith.constant 1.000000e+00 : f32
    %430 = vector.broadcast %cst_182 : f32 to vector<2x128xf32>
    %431 = arith.addf %430, %429 : vector<2x128xf32>
    %432 = arith.divf %430, %431 : vector<2x128xf32>
    %433 = arith.mulf %424, %412 : vector<2x128xf32>
    %434 = arith.mulf %418, %426 : vector<2x128xf32>
    %435 = arith.addf %433, %434 : vector<2x128xf32>
    %436 = math.tanh %435 : vector<2x128xf32>
    %437 = arith.mulf %432, %436 : vector<2x128xf32>
    %c22_183 = arith.constant 22 : index
    %c0_184 = arith.constant 0 : index
    %438 = vector.load %arg10[%c22_183, %c0_184] : memref<32x256xf32, #tpu.memory_space<vmem>>, vector<2x128xf32>
    tpu.vector_store %arg10[%c22_183, %c0_184], %437 {strides = array<i32>} : memref<32x256xf32, #tpu.memory_space<vmem>>, vector<2x128xf32>,
    %c22_185 = arith.constant 22 : index
    %c128_186 = arith.constant 128 : index
    %439 = vector.load %arg10[%c22_185, %c128_186] : memref<32x256xf32, #tpu.memory_space<vmem>>, vector<2x128xf32>
    tpu.vector_store %arg10[%c22_185, %c128_186], %435 {strides = array<i32>} : memref<32x256xf32, #tpu.memory_space<vmem>>, vector<2x128xf32>,
    %c22_187 = arith.constant 22 : index
    %c0_188 = arith.constant 0 : index
    %440 = vector.load %arg9[%c22_187, %c0_188] : memref<512x128xf32, #tpu.memory_space<vmem>>, vector<2x128xf32>
    tpu.vector_store %arg9[%c22_187, %c0_188], %437 {strides = array<i32>} : memref<512x128xf32, #tpu.memory_space<vmem>>, vector<2x128xf32>,
    %c24 = arith.constant 24 : index
    %c0_189 = arith.constant 0 : index
    %441 = vector.load %arg8[%c24, %c0_189] : memref<512x512xf32, #tpu.memory_space<vmem>>, vector<2x512xf32>
    %cst_190 = arith.constant 5.000000e-01 : f32
    %442 = vector.broadcast %cst_190 : f32 to vector<2x128xf32>
    %443 = arith.mulf %442, %437 : vector<2x128xf32>
    %c0_191 = arith.constant 0 : index
    %c0_192 = arith.constant 0 : index
    %444 = vector.load %arg4[%c0_191, %c0_192] : memref<128x512xf32, #tpu.memory_space<vmem>>, vector<128x512xf32>
    %cst_193 = arith.constant dense<0.000000e+00> : vector<2x512xf32>
    %445 = tpu.matmul %443, %444, %cst_193 {dimension_numbers = #tpu.dot_dimension_numbers<[1], [0], [0], [1], [0, 0, 1, 1], [], []>} : vector<2x128xf32>, vector<128x512xf32>, vector<2x512xf32> -> vector<2x512xf32>
    %446 = arith.addf %441, %445 : vector<2x512xf32>
    %cst_194 = arith.constant 5.000000e-01 : f32
    %447 = vector.broadcast %cst_194 : f32 to vector<2x128xf32>
    %448 = arith.mulf %447, %435 : vector<2x128xf32>
    %449 = vector.extract_strided_slice %446 {offsets = [0, 0], sizes = [2, 128], strides = [1, 1]} : vector<2x512xf32> to vector<2x128xf32>
    %450 = arith.negf %449 : vector<2x128xf32>
    %451 = math.exp %450 : vector<2x128xf32>
    %cst_195 = arith.constant 1.000000e+00 : f32
    %452 = vector.broadcast %cst_195 : f32 to vector<2x128xf32>
    %453 = arith.addf %452, %451 : vector<2x128xf32>
    %454 = arith.divf %452, %453 : vector<2x128xf32>
    %455 = vector.extract_strided_slice %446 {offsets = [0, 128], sizes = [2, 128], strides = [1, 1]} : vector<2x512xf32> to vector<2x128xf32>
    %456 = arith.negf %455 : vector<2x128xf32>
    %457 = math.exp %456 : vector<2x128xf32>
    %cst_196 = arith.constant 1.000000e+00 : f32
    %458 = vector.broadcast %cst_196 : f32 to vector<2x128xf32>
    %459 = arith.addf %458, %457 : vector<2x128xf32>
    %460 = arith.divf %458, %459 : vector<2x128xf32>
    %461 = vector.extract_strided_slice %446 {offsets = [0, 256], sizes = [2, 128], strides = [1, 1]} : vector<2x512xf32> to vector<2x128xf32>
    %462 = math.tanh %461 : vector<2x128xf32>
    %463 = vector.extract_strided_slice %446 {offsets = [0, 384], sizes = [2, 128], strides = [1, 1]} : vector<2x512xf32> to vector<2x128xf32>
    %464 = arith.negf %463 : vector<2x128xf32>
    %465 = math.exp %464 : vector<2x128xf32>
    %cst_197 = arith.constant 1.000000e+00 : f32
    %466 = vector.broadcast %cst_197 : f32 to vector<2x128xf32>
    %467 = arith.addf %466, %465 : vector<2x128xf32>
    %468 = arith.divf %466, %467 : vector<2x128xf32>
    %469 = arith.mulf %460, %448 : vector<2x128xf32>
    %470 = arith.mulf %454, %462 : vector<2x128xf32>
    %471 = arith.addf %469, %470 : vector<2x128xf32>
    %472 = math.tanh %471 : vector<2x128xf32>
    %473 = arith.mulf %468, %472 : vector<2x128xf32>
    %c24_198 = arith.constant 24 : index
    %c0_199 = arith.constant 0 : index
    %474 = vector.load %arg10[%c24_198, %c0_199] : memref<32x256xf32, #tpu.memory_space<vmem>>, vector<2x128xf32>
    tpu.vector_store %arg10[%c24_198, %c0_199], %473 {strides = array<i32>} : memref<32x256xf32, #tpu.memory_space<vmem>>, vector<2x128xf32>,
    %c24_200 = arith.constant 24 : index
    %c128_201 = arith.constant 128 : index
    %475 = vector.load %arg10[%c24_200, %c128_201] : memref<32x256xf32, #tpu.memory_space<vmem>>, vector<2x128xf32>
    tpu.vector_store %arg10[%c24_200, %c128_201], %471 {strides = array<i32>} : memref<32x256xf32, #tpu.memory_space<vmem>>, vector<2x128xf32>,
    %c24_202 = arith.constant 24 : index
    %c0_203 = arith.constant 0 : index
    %476 = vector.load %arg9[%c24_202, %c0_203] : memref<512x128xf32, #tpu.memory_space<vmem>>, vector<2x128xf32>
    tpu.vector_store %arg9[%c24_202, %c0_203], %473 {strides = array<i32>} : memref<512x128xf32, #tpu.memory_space<vmem>>, vector<2x128xf32>,
    %c26 = arith.constant 26 : index
    %c0_204 = arith.constant 0 : index
    %477 = vector.load %arg8[%c26, %c0_204] : memref<512x512xf32, #tpu.memory_space<vmem>>, vector<2x512xf32>
    %cst_205 = arith.constant 5.000000e-01 : f32
    %478 = vector.broadcast %cst_205 : f32 to vector<2x128xf32>
    %479 = arith.mulf %478, %473 : vector<2x128xf32>
    %c0_206 = arith.constant 0 : index
    %c0_207 = arith.constant 0 : index
    %480 = vector.load %arg4[%c0_206, %c0_207] : memref<128x512xf32, #tpu.memory_space<vmem>>, vector<128x512xf32>
    %cst_208 = arith.constant dense<0.000000e+00> : vector<2x512xf32>
    %481 = tpu.matmul %479, %480, %cst_208 {dimension_numbers = #tpu.dot_dimension_numbers<[1], [0], [0], [1], [0, 0, 1, 1], [], []>} : vector<2x128xf32>, vector<128x512xf32>, vector<2x512xf32> -> vector<2x512xf32>
    %482 = arith.addf %477, %481 : vector<2x512xf32>
    %cst_209 = arith.constant 5.000000e-01 : f32
    %483 = vector.broadcast %cst_209 : f32 to vector<2x128xf32>
    %484 = arith.mulf %483, %471 : vector<2x128xf32>
    %485 = vector.extract_strided_slice %482 {offsets = [0, 0], sizes = [2, 128], strides = [1, 1]} : vector<2x512xf32> to vector<2x128xf32>
    %486 = arith.negf %485 : vector<2x128xf32>
    %487 = math.exp %486 : vector<2x128xf32>
    %cst_210 = arith.constant 1.000000e+00 : f32
    %488 = vector.broadcast %cst_210 : f32 to vector<2x128xf32>
    %489 = arith.addf %488, %487 : vector<2x128xf32>
    %490 = arith.divf %488, %489 : vector<2x128xf32>
    %491 = vector.extract_strided_slice %482 {offsets = [0, 128], sizes = [2, 128], strides = [1, 1]} : vector<2x512xf32> to vector<2x128xf32>
    %492 = arith.negf %491 : vector<2x128xf32>
    %493 = math.exp %492 : vector<2x128xf32>
    %cst_211 = arith.constant 1.000000e+00 : f32
    %494 = vector.broadcast %cst_211 : f32 to vector<2x128xf32>
    %495 = arith.addf %494, %493 : vector<2x128xf32>
    %496 = arith.divf %494, %495 : vector<2x128xf32>
    %497 = vector.extract_strided_slice %482 {offsets = [0, 256], sizes = [2, 128], strides = [1, 1]} : vector<2x512xf32> to vector<2x128xf32>
    %498 = math.tanh %497 : vector<2x128xf32>
    %499 = vector.extract_strided_slice %482 {offsets = [0, 384], sizes = [2, 128], strides = [1, 1]} : vector<2x512xf32> to vector<2x128xf32>
    %500 = arith.negf %499 : vector<2x128xf32>
    %501 = math.exp %500 : vector<2x128xf32>
    %cst_212 = arith.constant 1.000000e+00 : f32
    %502 = vector.broadcast %cst_212 : f32 to vector<2x128xf32>
    %503 = arith.addf %502, %501 : vector<2x128xf32>
    %504 = arith.divf %502, %503 : vector<2x128xf32>
    %505 = arith.mulf %496, %484 : vector<2x128xf32>
    %506 = arith.mulf %490, %498 : vector<2x128xf32>
    %507 = arith.addf %505, %506 : vector<2x128xf32>
    %508 = math.tanh %507 : vector<2x128xf32>
    %509 = arith.mulf %504, %508 : vector<2x128xf32>
    %c26_213 = arith.constant 26 : index
    %c0_214 = arith.constant 0 : index
    %510 = vector.load %arg10[%c26_213, %c0_214] : memref<32x256xf32, #tpu.memory_space<vmem>>, vector<2x128xf32>
    tpu.vector_store %arg10[%c26_213, %c0_214], %509 {strides = array<i32>} : memref<32x256xf32, #tpu.memory_space<vmem>>, vector<2x128xf32>,
    %c26_215 = arith.constant 26 : index
    %c128_216 = arith.constant 128 : index
    %511 = vector.load %arg10[%c26_215, %c128_216] : memref<32x256xf32, #tpu.memory_space<vmem>>, vector<2x128xf32>
    tpu.vector_store %arg10[%c26_215, %c128_216], %507 {strides = array<i32>} : memref<32x256xf32, #tpu.memory_space<vmem>>, vector<2x128xf32>,
    %c26_217 = arith.constant 26 : index
    %c0_218 = arith.constant 0 : index
    %512 = vector.load %arg9[%c26_217, %c0_218] : memref<512x128xf32, #tpu.memory_space<vmem>>, vector<2x128xf32>
    tpu.vector_store %arg9[%c26_217, %c0_218], %509 {strides = array<i32>} : memref<512x128xf32, #tpu.memory_space<vmem>>, vector<2x128xf32>,
    %c28 = arith.constant 28 : index
    %c0_219 = arith.constant 0 : index
    %513 = vector.load %arg8[%c28, %c0_219] : memref<512x512xf32, #tpu.memory_space<vmem>>, vector<2x512xf32>
    %cst_220 = arith.constant 5.000000e-01 : f32
    %514 = vector.broadcast %cst_220 : f32 to vector<2x128xf32>
    %515 = arith.mulf %514, %509 : vector<2x128xf32>
    %c0_221 = arith.constant 0 : index
    %c0_222 = arith.constant 0 : index
    %516 = vector.load %arg4[%c0_221, %c0_222] : memref<128x512xf32, #tpu.memory_space<vmem>>, vector<128x512xf32>
    %cst_223 = arith.constant dense<0.000000e+00> : vector<2x512xf32>
    %517 = tpu.matmul %515, %516, %cst_223 {dimension_numbers = #tpu.dot_dimension_numbers<[1], [0], [0], [1], [0, 0, 1, 1], [], []>} : vector<2x128xf32>, vector<128x512xf32>, vector<2x512xf32> -> vector<2x512xf32>
    %518 = arith.addf %513, %517 : vector<2x512xf32>
    %cst_224 = arith.constant 5.000000e-01 : f32
    %519 = vector.broadcast %cst_224 : f32 to vector<2x128xf32>
    %520 = arith.mulf %519, %507 : vector<2x128xf32>
    %521 = vector.extract_strided_slice %518 {offsets = [0, 0], sizes = [2, 128], strides = [1, 1]} : vector<2x512xf32> to vector<2x128xf32>
    %522 = arith.negf %521 : vector<2x128xf32>
    %523 = math.exp %522 : vector<2x128xf32>
    %cst_225 = arith.constant 1.000000e+00 : f32
    %524 = vector.broadcast %cst_225 : f32 to vector<2x128xf32>
    %525 = arith.addf %524, %523 : vector<2x128xf32>
    %526 = arith.divf %524, %525 : vector<2x128xf32>
    %527 = vector.extract_strided_slice %518 {offsets = [0, 128], sizes = [2, 128], strides = [1, 1]} : vector<2x512xf32> to vector<2x128xf32>
    %528 = arith.negf %527 : vector<2x128xf32>
    %529 = math.exp %528 : vector<2x128xf32>
    %cst_226 = arith.constant 1.000000e+00 : f32
    %530 = vector.broadcast %cst_226 : f32 to vector<2x128xf32>
    %531 = arith.addf %530, %529 : vector<2x128xf32>
    %532 = arith.divf %530, %531 : vector<2x128xf32>
    %533 = vector.extract_strided_slice %518 {offsets = [0, 256], sizes = [2, 128], strides = [1, 1]} : vector<2x512xf32> to vector<2x128xf32>
    %534 = math.tanh %533 : vector<2x128xf32>
    %535 = vector.extract_strided_slice %518 {offsets = [0, 384], sizes = [2, 128], strides = [1, 1]} : vector<2x512xf32> to vector<2x128xf32>
    %536 = arith.negf %535 : vector<2x128xf32>
    %537 = math.exp %536 : vector<2x128xf32>
    %cst_227 = arith.constant 1.000000e+00 : f32
    %538 = vector.broadcast %cst_227 : f32 to vector<2x128xf32>
    %539 = arith.addf %538, %537 : vector<2x128xf32>
    %540 = arith.divf %538, %539 : vector<2x128xf32>
    %541 = arith.mulf %532, %520 : vector<2x128xf32>
    %542 = arith.mulf %526, %534 : vector<2x128xf32>
    %543 = arith.addf %541, %542 : vector<2x128xf32>
    %544 = math.tanh %543 : vector<2x128xf32>
    %545 = arith.mulf %540, %544 : vector<2x128xf32>
    %c28_228 = arith.constant 28 : index
    %c0_229 = arith.constant 0 : index
    %546 = vector.load %arg10[%c28_228, %c0_229] : memref<32x256xf32, #tpu.memory_space<vmem>>, vector<2x128xf32>
    tpu.vector_store %arg10[%c28_228, %c0_229], %545 {strides = array<i32>} : memref<32x256xf32, #tpu.memory_space<vmem>>, vector<2x128xf32>,
    %c28_230 = arith.constant 28 : index
    %c128_231 = arith.constant 128 : index
    %547 = vector.load %arg10[%c28_230, %c128_231] : memref<32x256xf32, #tpu.memory_space<vmem>>, vector<2x128xf32>
    tpu.vector_store %arg10[%c28_230, %c128_231], %543 {strides = array<i32>} : memref<32x256xf32, #tpu.memory_space<vmem>>, vector<2x128xf32>,
    %c28_232 = arith.constant 28 : index
    %c0_233 = arith.constant 0 : index
    %548 = vector.load %arg9[%c28_232, %c0_233] : memref<512x128xf32, #tpu.memory_space<vmem>>, vector<2x128xf32>
    tpu.vector_store %arg9[%c28_232, %c0_233], %545 {strides = array<i32>} : memref<512x128xf32, #tpu.memory_space<vmem>>, vector<2x128xf32>,
    %c30 = arith.constant 30 : index
    %c0_234 = arith.constant 0 : index
    %549 = vector.load %arg8[%c30, %c0_234] : memref<512x512xf32, #tpu.memory_space<vmem>>, vector<2x512xf32>
    %cst_235 = arith.constant 5.000000e-01 : f32
    %550 = vector.broadcast %cst_235 : f32 to vector<2x128xf32>
    %551 = arith.mulf %550, %545 : vector<2x128xf32>
    %c0_236 = arith.constant 0 : index
    %c0_237 = arith.constant 0 : index
    %552 = vector.load %arg4[%c0_236, %c0_237] : memref<128x512xf32, #tpu.memory_space<vmem>>, vector<128x512xf32>
    %cst_238 = arith.constant dense<0.000000e+00> : vector<2x512xf32>
    %553 = tpu.matmul %551, %552, %cst_238 {dimension_numbers = #tpu.dot_dimension_numbers<[1], [0], [0], [1], [0, 0, 1, 1], [], []>} : vector<2x128xf32>, vector<128x512xf32>, vector<2x512xf32> -> vector<2x512xf32>
    %554 = arith.addf %549, %553 : vector<2x512xf32>
    %cst_239 = arith.constant 5.000000e-01 : f32
    %555 = vector.broadcast %cst_239 : f32 to vector<2x128xf32>
    %556 = arith.mulf %555, %543 : vector<2x128xf32>
    %557 = vector.extract_strided_slice %554 {offsets = [0, 0], sizes = [2, 128], strides = [1, 1]} : vector<2x512xf32> to vector<2x128xf32>
    %558 = arith.negf %557 : vector<2x128xf32>
    %559 = math.exp %558 : vector<2x128xf32>
    %cst_240 = arith.constant 1.000000e+00 : f32
    %560 = vector.broadcast %cst_240 : f32 to vector<2x128xf32>
    %561 = arith.addf %560, %559 : vector<2x128xf32>
    %562 = arith.divf %560, %561 : vector<2x128xf32>
    %563 = vector.extract_strided_slice %554 {offsets = [0, 128], sizes = [2, 128], strides = [1, 1]} : vector<2x512xf32> to vector<2x128xf32>
    %564 = arith.negf %563 : vector<2x128xf32>
    %565 = math.exp %564 : vector<2x128xf32>
    %cst_241 = arith.constant 1.000000e+00 : f32
    %566 = vector.broadcast %cst_241 : f32 to vector<2x128xf32>
    %567 = arith.addf %566, %565 : vector<2x128xf32>
    %568 = arith.divf %566, %567 : vector<2x128xf32>
    %569 = vector.extract_strided_slice %554 {offsets = [0, 256], sizes = [2, 128], strides = [1, 1]} : vector<2x512xf32> to vector<2x128xf32>
    %570 = math.tanh %569 : vector<2x128xf32>
    %571 = vector.extract_strided_slice %554 {offsets = [0, 384], sizes = [2, 128], strides = [1, 1]} : vector<2x512xf32> to vector<2x128xf32>
    %572 = arith.negf %571 : vector<2x128xf32>
    %573 = math.exp %572 : vector<2x128xf32>
    %cst_242 = arith.constant 1.000000e+00 : f32
    %574 = vector.broadcast %cst_242 : f32 to vector<2x128xf32>
    %575 = arith.addf %574, %573 : vector<2x128xf32>
    %576 = arith.divf %574, %575 : vector<2x128xf32>
    %577 = arith.mulf %568, %556 : vector<2x128xf32>
    %578 = arith.mulf %562, %570 : vector<2x128xf32>
    %579 = arith.addf %577, %578 : vector<2x128xf32>
    %580 = math.tanh %579 : vector<2x128xf32>
    %581 = arith.mulf %576, %580 : vector<2x128xf32>
    %c30_243 = arith.constant 30 : index
    %c0_244 = arith.constant 0 : index
    %582 = vector.load %arg10[%c30_243, %c0_244] : memref<32x256xf32, #tpu.memory_space<vmem>>, vector<2x128xf32>
    tpu.vector_store %arg10[%c30_243, %c0_244], %581 {strides = array<i32>} : memref<32x256xf32, #tpu.memory_space<vmem>>, vector<2x128xf32>,
    %c30_245 = arith.constant 30 : index
    %c128_246 = arith.constant 128 : index
    %583 = vector.load %arg10[%c30_245, %c128_246] : memref<32x256xf32, #tpu.memory_space<vmem>>, vector<2x128xf32>
    tpu.vector_store %arg10[%c30_245, %c128_246], %579 {strides = array<i32>} : memref<32x256xf32, #tpu.memory_space<vmem>>, vector<2x128xf32>,
    %c30_247 = arith.constant 30 : index
    %c0_248 = arith.constant 0 : index
    %584 = vector.load %arg9[%c30_247, %c0_248] : memref<512x128xf32, #tpu.memory_space<vmem>>, vector<2x128xf32>
    tpu.vector_store %arg9[%c30_247, %c0_248], %581 {strides = array<i32>} : memref<512x128xf32, #tpu.memory_space<vmem>>, vector<2x128xf32>,
    %c1_i32 = arith.constant 1 : i32
    %c15_i32 = arith.constant 15 : i32
    %585 = arith.addi %c1_i32, %c15_i32 : i32
    %c1_i32_249 = arith.constant 1 : i32
    scf.for %arg11 = %c1_i32 to %585 step %c1_i32_249  : i32 {
      %c0_260 = arith.constant 0 : index
      %c0_261 = arith.constant 0 : index
      %593 = vector.load %arg10[%c0_260, %c0_261] : memref<32x256xf32, #tpu.memory_space<vmem>>, vector<32x256xf32>
      %594 = tpu.iota {dimensions = array<i32: 0>} : vector<32x1xi32>
      %c2_i32 = arith.constant 2 : i32
      %595 = vector.broadcast %c2_i32 : i32 to vector<32x1xi32>
      %596 = arith.cmpi slt, %594, %595 : vector<32x1xi32>
      %c2_i32_262 = arith.constant 2 : i32
      %597 = tpu.dynamic_rotate %593 by %c2_i32_262 dim 0 : vector<32x256xf32>, i32 -> vector<32x256xf32>
      %598 = vector.shape_cast %596 : vector<32x1xi1> to vector<32x1xi1>
      %599 = vector.broadcast %598 : vector<32x1xi1> to vector<32x256xi1>
      %600 = arith.select %599, %593, %597 : vector<32x256xi1>, vector<32x256xf32>
      %c30_i32 = arith.constant 30 : i32
      %601 = vector.broadcast %c30_i32 : i32 to vector<32x1xi32>
      %602 = arith.cmpi sge, %594, %601 : vector<32x1xi32>
      %c30_i32_263 = arith.constant 30 : i32
      %603 = tpu.dynamic_rotate %593 by %c30_i32_263 dim 0 : vector<32x256xf32>, i32 -> vector<32x256xf32>
      %604 = vector.shape_cast %602 : vector<32x1xi1> to vector<32x1xi1>
      %605 = vector.broadcast %604 : vector<32x1xi1> to vector<32x256xi1>
      %606 = arith.select %605, %593, %603 : vector<32x256xi1>, vector<32x256xf32>
      %607 = arith.addf %600, %606 : vector<32x256xf32>
      %cst_264 = arith.constant 5.000000e-01 : f32
      %608 = vector.broadcast %cst_264 : f32 to vector<32x256xf32>
      %609 = arith.mulf %608, %607 : vector<32x256xf32>
      %610 = vector.extract_strided_slice %609 {offsets = [0, 0], sizes = [32, 128], strides = [1, 1]} : vector<32x256xf32> to vector<32x128xf32>
      %611 = vector.extract_strided_slice %609 {offsets = [0, 128], sizes = [32, 128], strides = [1, 1]} : vector<32x256xf32> to vector<32x128xf32>
      %c32_i32 = arith.constant 32 : i32
      %612 = arith.muli %arg11, %c32_i32 : i32
      %613 = tpu.assume_multiple %612, 32 : i32
      %614 = arith.index_cast %613 : i32 to index
      %c0_265 = arith.constant 0 : index
      %615 = vector.load %arg8[%614, %c0_265] : memref<512x512xf32, #tpu.memory_space<vmem>>, vector<32x512xf32>
      %c0_266 = arith.constant 0 : index
      %c0_267 = arith.constant 0 : index
      %616 = vector.load %arg4[%c0_266, %c0_267] : memref<128x512xf32, #tpu.memory_space<vmem>>, vector<128x512xf32>
      %cst_268 = arith.constant dense<0.000000e+00> : vector<32x512xf32>
      %617 = tpu.matmul %610, %616, %cst_268 {dimension_numbers = #tpu.dot_dimension_numbers<[1], [0], [0], [1], [0, 0, 1, 1], [], []>} : vector<32x128xf32>, vector<128x512xf32>, vector<32x512xf32> -> vector<32x512xf32>
      %618 = arith.addf %615, %617 : vector<32x512xf32>
      %619 = vector.extract_strided_slice %618 {offsets = [0, 0], sizes = [32, 128], strides = [1, 1]} : vector<32x512xf32> to vector<32x128xf32>
      %620 = arith.negf %619 : vector<32x128xf32>
      %621 = math.exp %620 : vector<32x128xf32>
      %cst_269 = arith.constant 1.000000e+00 : f32
      %622 = vector.broadcast %cst_269 : f32 to vector<32x128xf32>
      %623 = arith.addf %622, %621 : vector<32x128xf32>
      %624 = arith.divf %622, %623 : vector<32x128xf32>
      %625 = vector.extract_strided_slice %618 {offsets = [0, 128], sizes = [32, 128], strides = [1, 1]} : vector<32x512xf32> to vector<32x128xf32>
      %626 = arith.negf %625 : vector<32x128xf32>
      %627 = math.exp %626 : vector<32x128xf32>
      %cst_270 = arith.constant 1.000000e+00 : f32
      %628 = vector.broadcast %cst_270 : f32 to vector<32x128xf32>
      %629 = arith.addf %628, %627 : vector<32x128xf32>
      %630 = arith.divf %628, %629 : vector<32x128xf32>
      %631 = vector.extract_strided_slice %618 {offsets = [0, 256], sizes = [32, 128], strides = [1, 1]} : vector<32x512xf32> to vector<32x128xf32>
      %632 = math.tanh %631 : vector<32x128xf32>
      %633 = vector.extract_strided_slice %618 {offsets = [0, 384], sizes = [32, 128], strides = [1, 1]} : vector<32x512xf32> to vector<32x128xf32>
      %634 = arith.negf %633 : vector<32x128xf32>
      %635 = math.exp %634 : vector<32x128xf32>
      %cst_271 = arith.constant 1.000000e+00 : f32
      %636 = vector.broadcast %cst_271 : f32 to vector<32x128xf32>
      %637 = arith.addf %636, %635 : vector<32x128xf32>
      %638 = arith.divf %636, %637 : vector<32x128xf32>
      %639 = arith.mulf %630, %611 : vector<32x128xf32>
      %640 = arith.mulf %624, %632 : vector<32x128xf32>
      %641 = arith.addf %639, %640 : vector<32x128xf32>
      %642 = math.tanh %641 : vector<32x128xf32>
      %643 = arith.mulf %638, %642 : vector<32x128xf32>
      %c0_272 = arith.constant 0 : index
      %c0_273 = arith.constant 0 : index
      %644 = vector.load %arg10[%c0_272, %c0_273] : memref<32x256xf32, #tpu.memory_space<vmem>>, vector<32x128xf32>
      tpu.vector_store %arg10[%c0_272, %c0_273], %643 {strides = array<i32>} : memref<32x256xf32, #tpu.memory_space<vmem>>, vector<32x128xf32>,
      %c0_274 = arith.constant 0 : index
      %c128_275 = arith.constant 128 : index
      %645 = vector.load %arg10[%c0_274, %c128_275] : memref<32x256xf32, #tpu.memory_space<vmem>>, vector<32x128xf32>
      tpu.vector_store %arg10[%c0_274, %c128_275], %641 {strides = array<i32>} : memref<32x256xf32, #tpu.memory_space<vmem>>, vector<32x128xf32>,
      %646 = arith.index_cast %613 : i32 to index
      %c0_276 = arith.constant 0 : index
      %647 = vector.load %arg9[%646, %c0_276] : memref<512x128xf32, #tpu.memory_space<vmem>>, vector<32x128xf32>
      tpu.vector_store %arg9[%646, %c0_276], %643 {strides = array<i32>} : memref<512x128xf32, #tpu.memory_space<vmem>>, vector<32x128xf32>,
    }
    %c15_i32_250 = arith.constant 15 : i32
    %c0_251 = arith.constant 0 : index
    %c0_252 = arith.constant 0 : index
    %586 = vector.load %arg9[%c0_251, %c0_252] : memref<512x128xf32, #tpu.memory_space<vmem>>, vector<512x128xf32>
    %c0_253 = arith.constant 0 : index
    %c0_254 = arith.constant 0 : index
    %587 = vector.load %arg5[%c0_253, %c0_254] : memref<128x8xf32, #tpu.memory_space<vmem>>, vector<128x8xf32>
    %cst_255 = arith.constant dense<0.000000e+00> : vector<512x8xf32>
    %588 = tpu.matmul %586, %587, %cst_255 {dimension_numbers = #tpu.dot_dimension_numbers<[1], [0], [0], [1], [0, 0, 1, 1], [], []>} : vector<512x128xf32>, vector<128x8xf32>, vector<512x8xf32> -> vector<512x8xf32>
    %c0_256 = arith.constant 0 : index
    %c0_257 = arith.constant 0 : index
    %589 = vector.load %arg6[%c0_256, %c0_257] : memref<1x8xf32, #tpu.memory_space<vmem>>, vector<1x8xf32>
    %590 = vector.broadcast %589 : vector<1x8xf32> to vector<512x8xf32>
    %591 = arith.addf %588, %590 : vector<512x8xf32>
    %c0_258 = arith.constant 0 : index
    %c0_259 = arith.constant 0 : index
    %592 = vector.load %arg7[%c0_258, %c0_259] : memref<512x8xf32, #tpu.memory_space<vmem>>, vector<512x8xf32>
    tpu.vector_store %arg7[%c0_258, %c0_259], %591 {strides = array<i32>} : memref<512x8xf32, #tpu.memory_space<vmem>>, vector<512x8xf32>,
    return
  }
  func.func @transform_0(%arg0: i32) -> (i32, i32) {
    %c0_i32 = arith.constant 0 : i32
    %c0_i32_0 = arith.constant 0 : i32
    %c0_i32_1 = arith.constant 0 : i32
    return %c0_i32, %c0_i32_0 : i32, i32
  }
  func.func @transform_1(%arg0: i32) -> (i32, i32) {
    %c0_i32 = arith.constant 0 : i32
    %c0_i32_0 = arith.constant 0 : i32
    %c0_i32_1 = arith.constant 0 : i32
    return %c0_i32, %c0_i32_0 : i32, i32
  }
  func.func @transform_2(%arg0: i32) -> (i32, i32) {
    %c0_i32 = arith.constant 0 : i32
    %c0_i32_0 = arith.constant 0 : i32
    %c0_i32_1 = arith.constant 0 : i32
    return %c0_i32, %c0_i32_0 : i32, i32
  }
  func.func @transform_3(%arg0: i32) -> (i32, i32) {
    %c0_i32 = arith.constant 0 : i32
    %c0_i32_0 = arith.constant 0 : i32
    %c0_i32_1 = arith.constant 0 : i32
    return %c0_i32, %c0_i32_0 : i32, i32
  }
  func.func @transform_4(%arg0: i32) -> (i32, i32) {
    %c0_i32 = arith.constant 0 : i32
    %c0_i32_0 = arith.constant 0 : i32
    %c0_i32_1 = arith.constant 0 : i32
    return %c0_i32, %c0_i32_0 : i32, i32
  }
  func.func @transform_5(%arg0: i32) -> (i32, i32) {
    %c0_i32 = arith.constant 0 : i32
    %c0_i32_0 = arith.constant 0 : i32
    %c0_i32_1 = arith.constant 0 : i32
    return %c0_i32, %c0_i32_0 : i32, i32
  }
  func.func @transform_6(%arg0: i32) -> (i32, i32) {
    %c0_i32 = arith.constant 0 : i32
    %c0_i32_0 = arith.constant 0 : i32
    %c0_i32_1 = arith.constant 0 : i32
    return %c0_i32, %c0_i32_0 : i32, i32
  }
}

</mosaic_0001>

<llo_original>
// kernel: pyramid_lstm_layer.1
$region0: #{pyramid_lstm_layer.1}
  #allocation0 [shape = 'u32[]', space=smem, size = 0x4, offset = 0x4, fixed_abs, tag = 'smem constant byte address 0x4 - core index']
  #allocation1 [shape = 'u32[144,128]{1,0:T(1,128)}', space=vmem, size = 0x12000, scoped, tag = 'internal scratch']
  #allocation2 [shape = 'f32[512,512]{1,0:T(8,128)}', space=vmem, size = 0x100000, scoped, tag = 'scratch operand']
  #allocation3 [shape = 'f32[512,128]{1,0:T(8,128)}', space=vmem, size = 0x40000, scoped, tag = 'scratch operand']
  #allocation4 [shape = 'f32[32,256]{1,0:T(8,128)}', space=vmem, size = 0x8000, scoped, tag = 'scratch operand']
  %s0 = inlined_call_operand.vmem [shape: f32[512,16], index: 0, kind: input, shape index: {}]
  %s1 = inlined_call_operand.vmem [shape: f32[16,512], index: 1, kind: input, shape index: {}]
  %s2 = inlined_call_operand.vmem [shape: f32[1,512], index: 2, kind: input, shape index: {}]
  %s3 = inlined_call_operand.vmem [shape: f32[128,512], index: 3, kind: input, shape index: {}]
  %s4 = inlined_call_operand.vmem [shape: f32[128,8], index: 4, kind: input, shape index: {}]
  %s5 = inlined_call_operand.vmem [shape: f32[1,8], index: 5, kind: input, shape index: {}]
  %s6 = inlined_call_operand.vmem [shape: f32[512,8], index: 6, kind: output, shape index: {}]
  %s7 = sld [smem:[#allocation0]]
  $region41: #{pyramid_lstm_layer.1} parent=0
    _
  %s9 = ssub.s32 1, %s7
  %s10 = scalar_select 0, %s9, %s7
  // Predicated region
  $region2: #{pyramid_lstm_layer.1} parent=0 // pred_check
    _
  $region3: #{pyramid_lstm_layer.1} parent=0 // pred_check_branch
    %12 = sbr.rel (0) target = $region5
  $region4: #{pyramid_lstm_layer.1} parent=0 // pred_region
    _
  $region5: #{pyramid_lstm_layer.1} parent=0 // pred_fallthru
    _
  // Predicated region
  $region6: #{pyramid_lstm_layer.1} parent=0 // pred_check
    _
  $region7: #{pyramid_lstm_layer.1} parent=0 // pred_check_branch
    %14 = sbr.rel (0) target = $region9
  $region8: #{pyramid_lstm_layer.1} parent=0 // pred_region
    _
  $region9: #{pyramid_lstm_layer.1} parent=0 // pred_fallthru
    _
  // Predicated region
  $region10: #{pyramid_lstm_layer.1} parent=0 // pred_check
    _
  $region11: #{pyramid_lstm_layer.1} parent=0 // pred_check_branch
    %16 = sbr.rel (0) target = $region13
  $region12: #{pyramid_lstm_layer.1} parent=0 // pred_region
    _
  $region13: #{pyramid_lstm_layer.1} parent=0 // pred_fallthru
    _
  // Predicated region
  $region14: #{pyramid_lstm_layer.1} parent=0 // pred_check
    _
  $region15: #{pyramid_lstm_layer.1} parent=0 // pred_check_branch
    %18 = sbr.rel (0) target = $region17
  $region16: #{pyramid_lstm_layer.1} parent=0 // pred_region
    _
  $region17: #{pyramid_lstm_layer.1} parent=0 // pred_fallthru
    _
  // Predicated region
  $region18: #{pyramid_lstm_layer.1} parent=0 // pred_check
    _
  $region19: #{pyramid_lstm_layer.1} parent=0 // pred_check_branch
    %20 = sbr.rel (0) target = $region21
  $region20: #{pyramid_lstm_layer.1} parent=0 // pred_region
    _
  $region21: #{pyramid_lstm_layer.1} parent=0 // pred_fallthru
    _
  // Predicated region
  $region22: #{pyramid_lstm_layer.1} parent=0 // pred_check
    _
  $region23: #{pyramid_lstm_layer.1} parent=0 // pred_check_branch
    %22 = sbr.rel (0) target = $region25
  $region24: #{pyramid_lstm_layer.1} parent=0 // pred_region
    _
  $region25: #{pyramid_lstm_layer.1} parent=0 // pred_fallthru
    _
  %v23 = vld [vmem:[%s0] sm:$0xff]
  %v24 = vld [vmem:[%s0 + $0x8] sm:$0xff]
  %v25 = vld [vmem:[%s0 + $0x10] sm:$0xff]
  %v26 = vld [vmem:[%s0 + $0x18] sm:$0xff]
  %v27 = vld [vmem:[%s0 + $0x20] sm:$0xff]
  %v28 = vld [vmem:[%s0 + $0x28] sm:$0xff]
  %v29 = vld [vmem:[%s0 + $0x30] sm:$0xff]
  %v30 = vld [vmem:[%s0 + $0x38] sm:$0xff]
  %v31 = vld [vmem:[%s0 + $0x40] sm:$0xff]
  %v32 = vld [vmem:[%s0 + $0x48] sm:$0xff]
  %v33 = vld [vmem:[%s0 + $0x50] sm:$0xff]
  %v34 = vld [vmem:[%s0 + $0x58] sm:$0xff]
  %v35 = vld [vmem:[%s0 + $0x60] sm:$0xff]
  %v36 = vld [vmem:[%s0 + $0x68] sm:$0xff]
  %v37 = vld [vmem:[%s0 + $0x70] sm:$0xff]
  %v38 = vld [vmem:[%s0 + $0x78] sm:$0xff]
  %v39 = vld [vmem:[%s0 + $0x80] sm:$0xff]
  %v40 = vld [vmem:[%s0 + $0x88] sm:$0xff]
  %v41 = vld [vmem:[%s0 + $0x90] sm:$0xff]
  %v42 = vld [vmem:[%s0 + $0x98] sm:$0xff]
  %v43 = vld [vmem:[%s0 + $0xa0] sm:$0xff]
  %v44 = vld [vmem:[%s0 + $0xa8] sm:$0xff]
  %v45 = vld [vmem:[%s0 + $0xb0] sm:$0xff]
  %v46 = vld [vmem:[%s0 + $0xb8] sm:$0xff]
  %v47 = vld [vmem:[%s0 + $0xc0] sm:$0xff]
  %v48 = vld [vmem:[%s0 + $0xc8] sm:$0xff]
  %v49 = vld [vmem:[%s0 + $0xd0] sm:$0xff]
  %v50 = vld [vmem:[%s0 + $0xd8] sm:$0xff]
  %v51 = vld [vmem:[%s0 + $0xe0] sm:$0xff]
  %v52 = vld [vmem:[%s0 + $0xe8] sm:$0xff]
  %v53 = vld [vmem:[%s0 + $0xf0] sm:$0xff]
  %v54 = vld [vmem:[%s0 + $0xf8] sm:$0xff]
  %v55 = vld [vmem:[%s0 + $0x100] sm:$0xff]
  %v56 = vld [vmem:[%s0 + $0x108] sm:$0xff]
  %v57 = vld [vmem:[%s0 + $0x110] sm:$0xff]
  %v58 = vld [vmem:[%s0 + $0x118] sm:$0xff]
  %v59 = vld [vmem:[%s0 + $0x120] sm:$0xff]
  %v60 = vld [vmem:[%s0 + $0x128] sm:$0xff]
  %v61 = vld [vmem:[%s0 + $0x130] sm:$0xff]
  %v62 = vld [vmem:[%s0 + $0x138] sm:$0xff]
  %v63 = vld [vmem:[%s0 + $0x140] sm:$0xff]
  %v64 = vld [vmem:[%s0 + $0x148] sm:$0xff]
  %v65 = vld [vmem:[%s0 + $0x150] sm:$0xff]
  %v66 = vld [vmem:[%s0 + $0x158] sm:$0xff]
  %v67 = vld [vmem:[%s0 + $0x160] sm:$0xff]
  %v68 = vld [vmem:[%s0 + $0x168] sm:$0xff]
  %v69 = vld [vmem:[%s0 + $0x170] sm:$0xff]
  %v70 = vld [vmem:[%s0 + $0x178] sm:$0xff]
  %v71 = vld [vmem:[%s0 + $0x180] sm:$0xff]
  %v72 = vld [vmem:[%s0 + $0x188] sm:$0xff]
  %v73 = vld [vmem:[%s0 + $0x190] sm:$0xff]
  %v74 = vld [vmem:[%s0 + $0x198] sm:$0xff]
  %v75 = vld [vmem:[%s0 + $0x1a0] sm:$0xff]
  %v76 = vld [vmem:[%s0 + $0x1a8] sm:$0xff]
  %v77 = vld [vmem:[%s0 + $0x1b0] sm:$0xff]
  %v78 = vld [vmem:[%s0 + $0x1b8] sm:$0xff]
  %v79 = vld [vmem:[%s0 + $0x1c0] sm:$0xff]
  %v80 = vld [vmem:[%s0 + $0x1c8] sm:$0xff]
  %v81 = vld [vmem:[%s0 + $0x1d0] sm:$0xff]
  %v82 = vld [vmem:[%s0 + $0x1d8] sm:$0xff]
  %v83 = vld [vmem:[%s0 + $0x1e0] sm:$0xff]
  %v84 = vld [vmem:[%s0 + $0x1e8] sm:$0xff]
  %v85 = vld [vmem:[%s0 + $0x1f0] sm:$0xff]
  %v86 = vld [vmem:[%s0 + $0x1f8] sm:$0xff]
  %v87 = vld [vmem:[%s1] sm:$0xff]
  %v88 = vld [vmem:[%s1 + $0x8] sm:$0xff]
  %v89 = vld [vmem:[%s1 + $0x10] sm:$0xff]
  %v90 = vld [vmem:[%s1 + $0x18] sm:$0xff]
  %v91 = vld [vmem:[%s1 + $0x20] sm:$0xff]
  %v92 = vld [vmem:[%s1 + $0x28] sm:$0xff]
  %v93 = vld [vmem:[%s1 + $0x30] sm:$0xff]
  %v94 = vld [vmem:[%s1 + $0x38] sm:$0xff]
  %v95 = vld [vmem:[%s2] sm:$0xf]
  %v97 = vlaneseq
  %v98 = vshrl.u32 %v97, 7
  %v99 = vsub.s32 0, %v98
  %v100 = vrot.slane %v95, %v99
  %v101 = vlaneseq
  %v102 = vshrl.u32 %v101, 7
  %v103 = vsub.s32 1, %v102
  %v104 = vrot.slane %v95, %v103
  %v105 = vlaneseq
  %v106 = vshrl.u32 %v105, 7
  %v107 = vsub.s32 2, %v106
  %v108 = vrot.slane %v95, %v107
  %v109 = vlaneseq
  %v110 = vshrl.u32 %v109, 7
  %v111 = vsub.s32 3, %v110
  %v112 = vrot.slane %v95, %v111
  %vm117 = vcmask 130048
  %v119 = vsel %vm117, %v23, 0
  %v122 = vsel %vm117, %v24, 0
  %v125 = vsel %vm117, %v25, 0
  %v128 = vsel %vm117, %v26, 0
  %v131 = vsel %vm117, %v27, 0
  %v134 = vsel %vm117, %v28, 0
  %v137 = vsel %vm117, %v29, 0
  %v140 = vsel %vm117, %v30, 0
  %v143 = vsel %vm117, %v31, 0
  %v146 = vsel %vm117, %v32, 0
  %v149 = vsel %vm117, %v33, 0
  %v152 = vsel %vm117, %v34, 0
  %v155 = vsel %vm117, %v35, 0
  %v158 = vsel %vm117, %v36, 0
  %v161 = vsel %vm117, %v37, 0
  %v164 = vsel %vm117, %v38, 0
  %v167 = vsel %vm117, %v39, 0
  %v170 = vsel %vm117, %v40, 0
  %v173 = vsel %vm117, %v41, 0
  %v176 = vsel %vm117, %v42, 0
  %v179 = vsel %vm117, %v43, 0
  %v182 = vsel %vm117, %v44, 0
  %v185 = vsel %vm117, %v45, 0
  %v188 = vsel %vm117, %v46, 0
  %v191 = vsel %vm117, %v47, 0
  %v194 = vsel %vm117, %v48, 0
  %v197 = vsel %vm117, %v49, 0
  %v200 = vsel %vm117, %v50, 0
  %v203 = vsel %vm117, %v51, 0
  %v206 = vsel %vm117, %v52, 0
  %v209 = vsel %vm117, %v53, 0
  %v212 = vsel %vm117, %v54, 0
  %v215 = vsel %vm117, %v55, 0
  %v218 = vsel %vm117, %v56, 0
  %v221 = vsel %vm117, %v57, 0
  %v224 = vsel %vm117, %v58, 0
  %v227 = vsel %vm117, %v59, 0
  %v230 = vsel %vm117, %v60, 0
  %v233 = vsel %vm117, %v61, 0
  %v236 = vsel %vm117, %v62, 0
  %v239 = vsel %vm117, %v63, 0
  %v242 = vsel %vm117, %v64, 0
  %v245 = vsel %vm117, %v65, 0
  %v248 = vsel %vm117, %v66, 0
  %v251 = vsel %vm117, %v67, 0
  %v254 = vsel %vm117, %v68, 0
  %v257 = vsel %vm117, %v69, 0
  %v260 = vsel %vm117, %v70, 0
  %v263 = vsel %vm117, %v71, 0
  %v266 = vsel %vm117, %v72, 0
  %v269 = vsel %vm117, %v73, 0
  %v272 = vsel %vm117, %v74, 0
  %v275 = vsel %vm117, %v75, 0
  %v278 = vsel %vm117, %v76, 0
  %v281 = vsel %vm117, %v77, 0
  %v284 = vsel %vm117, %v78, 0
  %v287 = vsel %vm117, %v79, 0
  %v290 = vsel %vm117, %v80, 0
  %v293 = vsel %vm117, %v81, 0
  %v296 = vsel %vm117, %v82, 0
  %v299 = vsel %vm117, %v83, 0
  %v302 = vsel %vm117, %v84, 0
  %v305 = vsel %vm117, %v85, 0
  %v308 = vsel %vm117, %v86, 0
  %310 = vmatprep.subr.mxu0 %v88
  %311 = vmatpush1.msra.mxu0 %v87
  %312 = vmatprep.subr.mxu0 %v92
  %313 = vmatpush1.msra.mxu0 %v91
  %314 = vmatprep.subr.mxu0 0.0
  %315 = vmatpush1.msra.mxu0 0.0
  %316 = vmatprep.subr.mxu0 0.0
  %317 = vmatpush1.msra.mxu0 0.0
  %318 = vmatprep.subr.mxu0 0.0
  %319 = vmatpush1.msra.mxu0 0.0
  %320 = vmatprep.subr.mxu0 0.0
  %321 = vmatpush1.msra.mxu0 0.0
  %322 = vmatprep.subr.mxu0 0.0
  %323 = vmatpush1.msra.mxu0 0.0
  %324 = vmatprep.subr.mxu0 0.0
  %325 = vmatpush1.msra.mxu0 0.0
  %326 = vmatprep.subr.mxu0 0.0
  %327 = vmatpush1.msra.mxu0 0.0
  %328 = vmatprep.subr.mxu0 0.0
  %329 = vmatpush1.msra.mxu0 0.0
  %330 = vmatprep.subr.mxu0 0.0
  %331 = vmatpush1.msra.mxu0 0.0
  %332 = vmatprep.subr.mxu0 0.0
  %333 = vmatpush1.msra.mxu0 0.0
  %334 = vmatprep.subr.mxu0 0.0
  %335 = vmatpush1.msra.mxu0 0.0
  %336 = vmatprep.subr.mxu0 0.0
  %337 = vmatpush1.msra.mxu0 0.0
  %338 = vmatprep.subr.mxu0 0.0
  %339 = vmatpush1.msra.mxu0 0.0
  %340 = vmatprep.subr.mxu0 0.0
  %341 = vmatpush1.msra.mxu0 0.0
  %342 = vmatprep.subr.mxu0 0.0
  %343 = vmatpush1.msra.mxu0 0.0
  %344 = vmatprep.subr.mxu0 0.0
  %345 = vmatpush1.msra.mxu0 0.0
  %346 = vmatprep.subr.mxu0 0.0
  %347 = vmatpush1.msra.mxu0 0.0
  %348 = vmatprep.subr.mxu0 0.0
  %349 = vmatpush1.msra.mxu0 0.0
  %350 = vmatprep.subr.mxu0 0.0
  %351 = vmatpush1.msra.mxu0 0.0
  %352 = vmatprep.subr.mxu0 0.0
  %353 = vmatpush1.msra.mxu0 0.0
  %354 = vmatprep.subr.mxu0 0.0
  %355 = vmatpush1.msra.mxu0 0.0
  %356 = vmatprep.subr.mxu0 0.0
  %357 = vmatpush1.msra.mxu0 0.0
  %358 = vmatprep.subr.mxu0 0.0
  %359 = vmatpush1.msra.mxu0 0.0
  %360 = vmatprep.subr.mxu0 0.0
  %361 = vmatpush1.msra.mxu0 0.0
  %362 = vmatprep.subr.mxu0 0.0
  %363 = vmatpush1.msra.mxu0 0.0
  %364 = vmatprep.subr.mxu0 0.0
  %365 = vmatpush1.msra.mxu0 0.0
  %366 = vmatprep.subr.mxu0 0.0
  %367 = vmatpush1.msra.mxu0 0.0
  %368 = vmatprep.subr.mxu0 0.0
  %369 = vmatpush1.msra.mxu0 0.0
  %370 = vmatprep.subr.mxu0 0.0
  %371 = vmatpush1.msra.mxu0 0.0
  %372 = vmatprep.subr.mxu0 0.0
  %373 = vmatpush1.msra.mxu0 0.0
  %374 = vmatprep.mubr.f32.mxu0 0.0
  %375 = vmatmul.mubr.f32.gmra.mrb[0].mxu0 %v119
  %v376 = vpop.f32.mrb[0].mxu0
  %v377 = vadd.f32 %v100, %v376
  %v378 = vpop.f32.mrb[0].mxu0
  %v379 = vadd.f32 %v104, %v378
  %380 = vmatprep.mubr.f32.mxu0 0.0
  %381 = vmatmul.mubr.f32.gmra.mrb[0].mxu0 %v122
  %v382 = vpop.f32.mrb[0].mxu0
  %v383 = vadd.f32 %v100, %v382
  %v384 = vpop.f32.mrb[0].mxu0
  %v385 = vadd.f32 %v104, %v384
  %386 = vmatprep.mubr.f32.mxu0 0.0
  %387 = vmatmul.mubr.f32.gmra.mrb[0].mxu0 %v125
  %v388 = vpop.f32.mrb[0].mxu0
  %v389 = vadd.f32 %v100, %v388
  %v390 = vpop.f32.mrb[0].mxu0
  %v391 = vadd.f32 %v104, %v390
  %392 = vmatprep.mubr.f32.mxu0 0.0
  %393 = vmatmul.mubr.f32.gmra.mrb[0].mxu0 %v128
  %v394 = vpop.f32.mrb[0].mxu0
  %v395 = vadd.f32 %v100, %v394
  %v396 = vpop.f32.mrb[0].mxu0
  %v397 = vadd.f32 %v104, %v396
  %398 = vmatprep.mubr.f32.mxu0 0.0
  %399 = vmatmul.mubr.f32.gmra.mrb[0].mxu0 %v131
  %v400 = vpop.f32.mrb[0].mxu0
  %v401 = vadd.f32 %v100, %v400
  %v402 = vpop.f32.mrb[0].mxu0
  %v403 = vadd.f32 %v104, %v402
  %404 = vmatprep.mubr.f32.mxu0 0.0
  %405 = vmatmul.mubr.f32.gmra.mrb[0].mxu0 %v134
  %v406 = vpop.f32.mrb[0].mxu0
  %v407 = vadd.f32 %v100, %v406
  %v408 = vpop.f32.mrb[0].mxu0
  %v409 = vadd.f32 %v104, %v408
  %410 = vmatprep.mubr.f32.mxu0 0.0
  %411 = vmatmul.mubr.f32.gmra.mrb[0].mxu0 %v137
  %v412 = vpop.f32.mrb[0].mxu0
  %v413 = vadd.f32 %v100, %v412
  %v414 = vpop.f32.mrb[0].mxu0
  %v415 = vadd.f32 %v104, %v414
  %416 = vmatprep.mubr.f32.mxu0 0.0
  %417 = vmatmul.mubr.f32.gmra.mrb[0].mxu0 %v140
  %v418 = vpop.f32.mrb[0].mxu0
  %v419 = vadd.f32 %v100, %v418
  %v420 = vpop.f32.mrb[0].mxu0
  %v421 = vadd.f32 %v104, %v420
  %422 = vmatprep.mubr.f32.mxu0 0.0
  %423 = vmatmul.mubr.f32.gmra.mrb[0].mxu0 %v143
  %v424 = vpop.f32.mrb[0].mxu0
  %v425 = vadd.f32 %v100, %v424
  %v426 = vpop.f32.mrb[0].mxu0
  %v427 = vadd.f32 %v104, %v426
  %428 = vmatprep.mubr.f32.mxu0 0.0
  %429 = vmatmul.mubr.f32.gmra.mrb[0].mxu0 %v146
  %v430 = vpop.f32.mrb[0].mxu0
  %v431 = vadd.f32 %v100, %v430
  %v432 = vpop.f32.mrb[0].mxu0
  %v433 = vadd.f32 %v104, %v432
  %434 = vmatprep.mubr.f32.mxu0 0.0
  %435 = vmatmul.mubr.f32.gmra.mrb[0].mxu0 %v149
  %v436 = vpop.f32.mrb[0].mxu0
  %v437 = vadd.f32 %v100, %v436
  %v438 = vpop.f32.mrb[0].mxu0
  %v439 = vadd.f32 %v104, %v438
  %440 = vmatprep.mubr.f32.mxu0 0.0
  %441 = vmatmul.mubr.f32.gmra.mrb[0].mxu0 %v152
  %v442 = vpop.f32.mrb[0].mxu0
  %v443 = vadd.f32 %v100, %v442
  %v444 = vpop.f32.mrb[0].mxu0
  %v445 = vadd.f32 %v104, %v444
  %446 = vmatprep.mubr.f32.mxu0 0.0
  %447 = vmatmul.mubr.f32.gmra.mrb[0].mxu0 %v155
  %v448 = vpop.f32.mrb[0].mxu0
  %v449 = vadd.f32 %v100, %v448
  %v450 = vpop.f32.mrb[0].mxu0
  %v451 = vadd.f32 %v104, %v450
  %452 = vmatprep.mubr.f32.mxu0 0.0
  %453 = vmatmul.mubr.f32.gmra.mrb[0].mxu0 %v158
  %v454 = vpop.f32.mrb[0].mxu0
  %v455 = vadd.f32 %v100, %v454
  %v456 = vpop.f32.mrb[0].mxu0
  %v457 = vadd.f32 %v104, %v456
  %458 = vmatprep.mubr.f32.mxu0 0.0
  %459 = vmatmul.mubr.f32.gmra.mrb[0].mxu0 %v161
  %v460 = vpop.f32.mrb[0].mxu0
  %v461 = vadd.f32 %v100, %v460
  %v462 = vpop.f32.mrb[0].mxu0
  %v463 = vadd.f32 %v104, %v462
  %464 = vmatprep.mubr.f32.mxu0 0.0
  %465 = vmatmul.mubr.f32.gmra.mrb[0].mxu0 %v164
  %v466 = vpop.f32.mrb[0].mxu0
  %v467 = vadd.f32 %v100, %v466
  %v468 = vpop.f32.mrb[0].mxu0
  %v469 = vadd.f32 %v104, %v468
  %470 = vmatprep.mubr.f32.mxu0 0.0
  %471 = vmatmul.mubr.f32.gmra.mrb[0].mxu0 %v167
  %v472 = vpop.f32.mrb[0].mxu0
  %v473 = vadd.f32 %v100, %v472
  %v474 = vpop.f32.mrb[0].mxu0
  %v475 = vadd.f32 %v104, %v474
  %476 = vmatprep.mubr.f32.mxu0 0.0
  %477 = vmatmul.mubr.f32.gmra.mrb[0].mxu0 %v170
  %v478 = vpop.f32.mrb[0].mxu0
  %v479 = vadd.f32 %v100, %v478
  %v480 = vpop.f32.mrb[0].mxu0
  %v481 = vadd.f32 %v104, %v480
  %482 = vmatprep.mubr.f32.mxu0 0.0
  %483 = vmatmul.mubr.f32.gmra.mrb[0].mxu0 %v173
  %v484 = vpop.f32.mrb[0].mxu0
  %v485 = vadd.f32 %v100, %v484
  %v486 = vpop.f32.mrb[0].mxu0
  %v487 = vadd.f32 %v104, %v486
  %488 = vmatprep.mubr.f32.mxu0 0.0
  %489 = vmatmul.mubr.f32.gmra.mrb[0].mxu0 %v176
  %v490 = vpop.f32.mrb[0].mxu0
  %v491 = vadd.f32 %v100, %v490
  %v492 = vpop.f32.mrb[0].mxu0
  %v493 = vadd.f32 %v104, %v492
  %494 = vmatprep.mubr.f32.mxu0 0.0
  %495 = vmatmul.mubr.f32.gmra.mrb[0].mxu0 %v179
  %v496 = vpop.f32.mrb[0].mxu0
  %v497 = vadd.f32 %v100, %v496
  %v498 = vpop.f32.mrb[0].mxu0
  %v499 = vadd.f32 %v104, %v498
  %500 = vmatprep.mubr.f32.mxu0 0.0
  %501 = vmatmul.mubr.f32.gmra.mrb[0].mxu0 %v182
  %v502 = vpop.f32.mrb[0].mxu0
  %v503 = vadd.f32 %v100, %v502
  %v504 = vpop.f32.mrb[0].mxu0
  %v505 = vadd.f32 %v104, %v504
  %506 = vmatprep.mubr.f32.mxu0 0.0
  %507 = vmatmul.mubr.f32.gmra.mrb[0].mxu0 %v185
  %v508 = vpop.f32.mrb[0].mxu0
  %v509 = vadd.f32 %v100, %v508
  %v510 = vpop.f32.mrb[0].mxu0
  %v511 = vadd.f32 %v104, %v510
  %512 = vmatprep.mubr.f32.mxu0 0.0
  %513 = vmatmul.mubr.f32.gmra.mrb[0].mxu0 %v188
  %v514 = vpop.f32.mrb[0].mxu0
  %v515 = vadd.f32 %v100, %v514
  %v516 = vpop.f32.mrb[0].mxu0
  %v517 = vadd.f32 %v104, %v516
  %518 = vmatprep.mubr.f32.mxu0 0.0
  %519 = vmatmul.mubr.f32.gmra.mrb[0].mxu0 %v191
  %v520 = vpop.f32.mrb[0].mxu0
  %v521 = vadd.f32 %v100, %v520
  %v522 = vpop.f32.mrb[0].mxu0
  %v523 = vadd.f32 %v104, %v522
  %524 = vmatprep.mubr.f32.mxu0 0.0
  %525 = vmatmul.mubr.f32.gmra.mrb[0].mxu0 %v194
  %v526 = vpop.f32.mrb[0].mxu0
  %v527 = vadd.f32 %v100, %v526
  %v528 = vpop.f32.mrb[0].mxu0
  %v529 = vadd.f32 %v104, %v528
  %530 = vmatprep.mubr.f32.mxu0 0.0
  %531 = vmatmul.mubr.f32.gmra.mrb[0].mxu0 %v197
  %v532 = vpop.f32.mrb[0].mxu0
  %v533 = vadd.f32 %v100, %v532
  %v534 = vpop.f32.mrb[0].mxu0
  %v535 = vadd.f32 %v104, %v534
  %536 = vmatprep.mubr.f32.mxu0 0.0
  %537 = vmatmul.mubr.f32.gmra.mrb[0].mxu0 %v200
  %v538 = vpop.f32.mrb[0].mxu0
  %v539 = vadd.f32 %v100, %v538
  %v540 = vpop.f32.mrb[0].mxu0
  %v541 = vadd.f32 %v104, %v540
  %542 = vmatprep.mubr.f32.mxu0 0.0
  %543 = vmatmul.mubr.f32.gmra.mrb[0].mxu0 %v203
  %v544 = vpop.f32.mrb[0].mxu0
  %v545 = vadd.f32 %v100, %v544
  %v546 = vpop.f32.mrb[0].mxu0
  %v547 = vadd.f32 %v104, %v546
  %548 = vmatprep.mubr.f32.mxu0 0.0
  %549 = vmatmul.mubr.f32.gmra.mrb[0].mxu0 %v206
  %v550 = vpop.f32.mrb[0].mxu0
  %v551 = vadd.f32 %v100, %v550
  %v552 = vpop.f32.mrb[0].mxu0
  %v553 = vadd.f32 %v104, %v552
  %554 = vmatprep.mubr.f32.mxu0 0.0
  %555 = vmatmul.mubr.f32.gmra.mrb[0].mxu0 %v209
  %v556 = vpop.f32.mrb[0].mxu0
  %v557 = vadd.f32 %v100, %v556
  %v558 = vpop.f32.mrb[0].mxu0
  %v559 = vadd.f32 %v104, %v558
  %560 = vmatprep.mubr.f32.mxu0 0.0
  %561 = vmatmul.mubr.f32.gmra.mrb[0].mxu0 %v212
  %v562 = vpop.f32.mrb[0].mxu0
  %v563 = vadd.f32 %v100, %v562
  %v564 = vpop.f32.mrb[0].mxu0
  %v565 = vadd.f32 %v104, %v564
  %566 = vmatprep.mubr.f32.mxu0 0.0
  %567 = vmatmul.mubr.f32.gmra.mrb[0].mxu0 %v215
  %v568 = vpop.f32.mrb[0].mxu0
  %v569 = vadd.f32 %v100, %v568
  %v570 = vpop.f32.mrb[0].mxu0
  %v571 = vadd.f32 %v104, %v570
  %572 = vmatprep.mubr.f32.mxu0 0.0
  %573 = vmatmul.mubr.f32.gmra.mrb[0].mxu0 %v218
  %v574 = vpop.f32.mrb[0].mxu0
  %v575 = vadd.f32 %v100, %v574
  %v576 = vpop.f32.mrb[0].mxu0
  %v577 = vadd.f32 %v104, %v576
  %578 = vmatprep.mubr.f32.mxu0 0.0
  %579 = vmatmul.mubr.f32.gmra.mrb[0].mxu0 %v221
  %v580 = vpop.f32.mrb[0].mxu0
  %v581 = vadd.f32 %v100, %v580
  %v582 = vpop.f32.mrb[0].mxu0
  %v583 = vadd.f32 %v104, %v582
  %584 = vmatprep.mubr.f32.mxu0 0.0
  %585 = vmatmul.mubr.f32.gmra.mrb[0].mxu0 %v224
  %v586 = vpop.f32.mrb[0].mxu0
  %v587 = vadd.f32 %v100, %v586
  %v588 = vpop.f32.mrb[0].mxu0
  %v589 = vadd.f32 %v104, %v588
  %590 = vmatprep.mubr.f32.mxu0 0.0
  %591 = vmatmul.mubr.f32.gmra.mrb[0].mxu0 %v227
  %v592 = vpop.f32.mrb[0].mxu0
  %v593 = vadd.f32 %v100, %v592
  %v594 = vpop.f32.mrb[0].mxu0
  %v595 = vadd.f32 %v104, %v594
  %596 = vmatprep.mubr.f32.mxu0 0.0
  %597 = vmatmul.mubr.f32.gmra.mrb[0].mxu0 %v230
  %v598 = vpop.f32.mrb[0].mxu0
  %v599 = vadd.f32 %v100, %v598
  %v600 = vpop.f32.mrb[0].mxu0
  %v601 = vadd.f32 %v104, %v600
  %602 = vmatprep.mubr.f32.mxu0 0.0
  %603 = vmatmul.mubr.f32.gmra.mrb[0].mxu0 %v233
  %v604 = vpop.f32.mrb[0].mxu0
  %v605 = vadd.f32 %v100, %v604
  %v606 = vpop.f32.mrb[0].mxu0
  %v607 = vadd.f32 %v104, %v606
  %608 = vmatprep.mubr.f32.mxu0 0.0
  %609 = vmatmul.mubr.f32.gmra.mrb[0].mxu0 %v236
  %v610 = vpop.f32.mrb[0].mxu0
  %v611 = vadd.f32 %v100, %v610
  %v612 = vpop.f32.mrb[0].mxu0
  %v613 = vadd.f32 %v104, %v612
  %614 = vmatprep.mubr.f32.mxu0 0.0
  %615 = vmatmul.mubr.f32.gmra.mrb[0].mxu0 %v239
  %v616 = vpop.f32.mrb[0].mxu0
  %v617 = vadd.f32 %v100, %v616
  %v618 = vpop.f32.mrb[0].mxu0
  %v619 = vadd.f32 %v104, %v618
  %620 = vmatprep.mubr.f32.mxu0 0.0
  %621 = vmatmul.mubr.f32.gmra.mrb[0].mxu0 %v242
  %v622 = vpop.f32.mrb[0].mxu0
  %v623 = vadd.f32 %v100, %v622
  %v624 = vpop.f32.mrb[0].mxu0
  %v625 = vadd.f32 %v104, %v624
  %626 = vmatprep.mubr.f32.mxu0 0.0
  %627 = vmatmul.mubr.f32.gmra.mrb[0].mxu0 %v245
  %v628 = vpop.f32.mrb[0].mxu0
  %v629 = vadd.f32 %v100, %v628
  %v630 = vpop.f32.mrb[0].mxu0
  %v631 = vadd.f32 %v104, %v630
  %632 = vmatprep.mubr.f32.mxu0 0.0
  %633 = vmatmul.mubr.f32.gmra.mrb[0].mxu0 %v248
  %v634 = vpop.f32.mrb[0].mxu0
  %v635 = vadd.f32 %v100, %v634
  %v636 = vpop.f32.mrb[0].mxu0
  %v637 = vadd.f32 %v104, %v636
  %638 = vmatprep.mubr.f32.mxu0 0.0
  %639 = vmatmul.mubr.f32.gmra.mrb[0].mxu0 %v251
  %v640 = vpop.f32.mrb[0].mxu0
  %v641 = vadd.f32 %v100, %v640
  %v642 = vpop.f32.mrb[0].mxu0
  %v643 = vadd.f32 %v104, %v642
  %644 = vmatprep.mubr.f32.mxu0 0.0
  %645 = vmatmul.mubr.f32.gmra.mrb[0].mxu0 %v254
  %v646 = vpop.f32.mrb[0].mxu0
  %v647 = vadd.f32 %v100, %v646
  %v648 = vpop.f32.mrb[0].mxu0
  %v649 = vadd.f32 %v104, %v648
  %650 = vmatprep.mubr.f32.mxu0 0.0
  %651 = vmatmul.mubr.f32.gmra.mrb[0].mxu0 %v257
  %v652 = vpop.f32.mrb[0].mxu0
  %v653 = vadd.f32 %v100, %v652
  %v654 = vpop.f32.mrb[0].mxu0
  %v655 = vadd.f32 %v104, %v654
  %656 = vmatprep.mubr.f32.mxu0 0.0
  %657 = vmatmul.mubr.f32.gmra.mrb[0].mxu0 %v260
  %v658 = vpop.f32.mrb[0].mxu0
  %v659 = vadd.f32 %v100, %v658
  %v660 = vpop.f32.mrb[0].mxu0
  %v661 = vadd.f32 %v104, %v660
  %662 = vmatprep.mubr.f32.mxu0 0.0
  %663 = vmatmul.mubr.f32.gmra.mrb[0].mxu0 %v263
  %v664 = vpop.f32.mrb[0].mxu0
  %v665 = vadd.f32 %v100, %v664
  %v666 = vpop.f32.mrb[0].mxu0
  %v667 = vadd.f32 %v104, %v666
  %668 = vmatprep.mubr.f32.mxu0 0.0
  %669 = vmatmul.mubr.f32.gmra.mrb[0].mxu0 %v266
  %v670 = vpop.f32.mrb[0].mxu0
  %v671 = vadd.f32 %v100, %v670
  %v672 = vpop.f32.mrb[0].mxu0
  %v673 = vadd.f32 %v104, %v672
  %674 = vmatprep.mubr.f32.mxu0 0.0
  %675 = vmatmul.mubr.f32.gmra.mrb[0].mxu0 %v269
  %v676 = vpop.f32.mrb[0].mxu0
  %v677 = vadd.f32 %v100, %v676
  %v678 = vpop.f32.mrb[0].mxu0
  %v679 = vadd.f32 %v104, %v678
  %680 = vmatprep.mubr.f32.mxu0 0.0
  %681 = vmatmul.mubr.f32.gmra.mrb[0].mxu0 %v272
  %v682 = vpop.f32.mrb[0].mxu0
  %v683 = vadd.f32 %v100, %v682
  %v684 = vpop.f32.mrb[0].mxu0
  %v685 = vadd.f32 %v104, %v684
  %686 = vmatprep.mubr.f32.mxu0 0.0
  %687 = vmatmul.mubr.f32.gmra.mrb[0].mxu0 %v275
  %v688 = vpop.f32.mrb[0].mxu0
  %v689 = vadd.f32 %v100, %v688
  %v690 = vpop.f32.mrb[0].mxu0
  %v691 = vadd.f32 %v104, %v690
  %692 = vmatprep.mubr.f32.mxu0 0.0
  %693 = vmatmul.mubr.f32.gmra.mrb[0].mxu0 %v278
  %v694 = vpop.f32.mrb[0].mxu0
  %v695 = vadd.f32 %v100, %v694
  %v696 = vpop.f32.mrb[0].mxu0
  %v697 = vadd.f32 %v104, %v696
  %698 = vmatprep.mubr.f32.mxu0 0.0
  %699 = vmatmul.mubr.f32.gmra.mrb[0].mxu0 %v281
  %v700 = vpop.f32.mrb[0].mxu0
  %v701 = vadd.f32 %v100, %v700
  %v702 = vpop.f32.mrb[0].mxu0
  %v703 = vadd.f32 %v104, %v702
  %704 = vmatprep.mubr.f32.mxu0 0.0
  %705 = vmatmul.mubr.f32.gmra.mrb[0].mxu0 %v284
  %v706 = vpop.f32.mrb[0].mxu0
  %v707 = vadd.f32 %v100, %v706
  %v708 = vpop.f32.mrb[0].mxu0
  %v709 = vadd.f32 %v104, %v708
  %710 = vmatprep.mubr.f32.mxu0 0.0
  %711 = vmatmul.mubr.f32.gmra.mrb[0].mxu0 %v287
  %v712 = vpop.f32.mrb[0].mxu0
  %v713 = vadd.f32 %v100, %v712
  %v714 = vpop.f32.mrb[0].mxu0
  %v715 = vadd.f32 %v104, %v714
  %716 = vmatprep.mubr.f32.mxu0 0.0
  %717 = vmatmul.mubr.f32.gmra.mrb[0].mxu0 %v290
  %v718 = vpop.f32.mrb[0].mxu0
  %v719 = vadd.f32 %v100, %v718
  %v720 = vpop.f32.mrb[0].mxu0
  %v721 = vadd.f32 %v104, %v720
  %722 = vmatprep.mubr.f32.mxu0 0.0
  %723 = vmatmul.mubr.f32.gmra.mrb[0].mxu0 %v293
  %v724 = vpop.f32.mrb[0].mxu0
  %v725 = vadd.f32 %v100, %v724
  %v726 = vpop.f32.mrb[0].mxu0
  %v727 = vadd.f32 %v104, %v726
  %728 = vmatprep.mubr.f32.mxu0 0.0
  %729 = vmatmul.mubr.f32.gmra.mrb[0].mxu0 %v296
  %v730 = vpop.f32.mrb[0].mxu0
  %v731 = vadd.f32 %v100, %v730
  %v732 = vpop.f32.mrb[0].mxu0
  %v733 = vadd.f32 %v104, %v732
  %734 = vmatprep.mubr.f32.mxu0 0.0
  %735 = vmatmul.mubr.f32.gmra.mrb[0].mxu0 %v299
  %v736 = vpop.f32.mrb[0].mxu0
  %v737 = vadd.f32 %v100, %v736
  %v738 = vpop.f32.mrb[0].mxu0
  %v739 = vadd.f32 %v104, %v738
  %740 = vmatprep.mubr.f32.mxu0 0.0
  %741 = vmatmul.mubr.f32.gmra.mrb[0].mxu0 %v302
  %v742 = vpop.f32.mrb[0].mxu0
  %v743 = vadd.f32 %v100, %v742
  %v744 = vpop.f32.mrb[0].mxu0
  %v745 = vadd.f32 %v104, %v744
  %746 = vmatprep.mubr.f32.mxu0 0.0
  %747 = vmatmul.mubr.f32.gmra.mrb[0].mxu0 %v305
  %v748 = vpop.f32.mrb[0].mxu0
  %v749 = vadd.f32 %v100, %v748
  %v750 = vpop.f32.mrb[0].mxu0
  %v751 = vadd.f32 %v104, %v750
  %752 = vmatprep.mubr.f32.mxu0 0.0
  %753 = vmatmul.mubr.f32.gmra.mrb[0].mxu0 %v308
  %v754 = vpop.f32.mrb[0].mxu0
  %v755 = vadd.f32 %v100, %v754
  %v756 = vpop.f32.mrb[0].mxu0
  %v757 = vadd.f32 %v104, %v756
  %758 = vdwg.mxu0
  %759 = vmatprep.subr.mxu0 %v90
  %760 = vmatpush1.msra.mxu0 %v89
  %761 = vmatprep.subr.mxu0 %v94
  %762 = vmatpush1.msra.mxu0 %v93
  %763 = vmatprep.subr.mxu0 0.0
  %764 = vmatpush1.msra.mxu0 0.0
  %765 = vmatprep.subr.mxu0 0.0
  %766 = vmatpush1.msra.mxu0 0.0
  %767 = vmatprep.subr.mxu0 0.0
  %768 = vmatpush1.msra.mxu0 0.0
  %769 = vmatprep.subr.mxu0 0.0
  %770 = vmatpush1.msra.mxu0 0.0
  %771 = vmatprep.subr.mxu0 0.0
  %772 = vmatpush1.msra.mxu0 0.0
  %773 = vmatprep.subr.mxu0 0.0
  %774 = vmatpush1.msra.mxu0 0.0
  %775 = vmatprep.subr.mxu0 0.0
  %776 = vmatpush1.msra.mxu0 0.0
  %777 = vmatprep.subr.mxu0 0.0
  %778 = vmatpush1.msra.mxu0 0.0
  %779 = vmatprep.subr.mxu0 0.0
  %780 = vmatpush1.msra.mxu0 0.0
  %781 = vmatprep.subr.mxu0 0.0
  %782 = vmatpush1.msra.mxu0 0.0
  %783 = vmatprep.subr.mxu0 0.0
  %784 = vmatpush1.msra.mxu0 0.0
  %785 = vmatprep.subr.mxu0 0.0
  %786 = vmatpush1.msra.mxu0 0.0
  %787 = vmatprep.subr.mxu0 0.0
  %788 = vmatpush1.msra.mxu0 0.0
  %789 = vmatprep.subr.mxu0 0.0
  %790 = vmatpush1.msra.mxu0 0.0
  %791 = vmatprep.subr.mxu0 0.0
  %792 = vmatpush1.msra.mxu0 0.0
  %793 = vmatprep.subr.mxu0 0.0
  %794 = vmatpush1.msra.mxu0 0.0
  %795 = vmatprep.subr.mxu0 0.0
  %796 = vmatpush1.msra.mxu0 0.0
  %797 = vmatprep.subr.mxu0 0.0
  %798 = vmatpush1.msra.mxu0 0.0
  %799 = vmatprep.subr.mxu0 0.0
  %800 = vmatpush1.msra.mxu0 0.0
  %801 = vmatprep.subr.mxu0 0.0
  %802 = vmatpush1.msra.mxu0 0.0
  %803 = vmatprep.subr.mxu0 0.0
  %804 = vmatpush1.msra.mxu0 0.0
  %805 = vmatprep.subr.mxu0 0.0
  %806 = vmatpush1.msra.mxu0 0.0
  %807 = vmatprep.subr.mxu0 0.0
  %808 = vmatpush1.msra.mxu0 0.0
  %809 = vmatprep.subr.mxu0 0.0
  %810 = vmatpush1.msra.mxu0 0.0
  %811 = vmatprep.subr.mxu0 0.0
  %812 = vmatpush1.msra.mxu0 0.0
  %813 = vmatprep.subr.mxu0 0.0
  %814 = vmatpush1.msra.mxu0 0.0
  %815 = vmatprep.subr.mxu0 0.0
  %816 = vmatpush1.msra.mxu0 0.0
  %817 = vmatprep.subr.mxu0 0.0
  %818 = vmatpush1.msra.mxu0 0.0
  %819 = vmatprep.subr.mxu0 0.0
  %820 = vmatpush1.msra.mxu0 0.0
  %821 = vmatprep.subr.mxu0 0.0
  %822 = vmatpush1.msra.mxu0 0.0
  %823 = vmatprep.mubr.f32.mxu0 0.0
  %824 = vmatmul.mubr.f32.gmra.mrb[0].mxu0 %v119
  %v825 = vpop.f32.mrb[0].mxu0
  %v826 = vadd.f32 %v108, %v825
  %v827 = vpop.f32.mrb[0].mxu0
  %v828 = vadd.f32 %v112, %v827
  %829 = vmatprep.mubr.f32.mxu0 0.0
  %830 = vmatmul.mubr.f32.gmra.mrb[0].mxu0 %v122
  %v831 = vpop.f32.mrb[0].mxu0
  %v832 = vadd.f32 %v108, %v831
  %v833 = vpop.f32.mrb[0].mxu0
  %v834 = vadd.f32 %v112, %v833
  %835 = vmatprep.mubr.f32.mxu0 0.0
  %836 = vmatmul.mubr.f32.gmra.mrb[0].mxu0 %v125
  %v837 = vpop.f32.mrb[0].mxu0
  %v838 = vadd.f32 %v108, %v837
  %v839 = vpop.f32.mrb[0].mxu0
  %v840 = vadd.f32 %v112, %v839
  %841 = vmatprep.mubr.f32.mxu0 0.0
  %842 = vmatmul.mubr.f32.gmra.mrb[0].mxu0 %v128
  %v843 = vpop.f32.mrb[0].mxu0
  %v844 = vadd.f32 %v108, %v843
  %v845 = vpop.f32.mrb[0].mxu0
  %v846 = vadd.f32 %v112, %v845
  %847 = vmatprep.mubr.f32.mxu0 0.0
  %848 = vmatmul.mubr.f32.gmra.mrb[0].mxu0 %v131
  %v849 = vpop.f32.mrb[0].mxu0
  %v850 = vadd.f32 %v108, %v849
  %v851 = vpop.f32.mrb[0].mxu0
  %v852 = vadd.f32 %v112, %v851
  %853 = vmatprep.mubr.f32.mxu0 0.0
  %854 = vmatmul.mubr.f32.gmra.mrb[0].mxu0 %v134
  %v855 = vpop.f32.mrb[0].mxu0
  %v856 = vadd.f32 %v108, %v855
  %v857 = vpop.f32.mrb[0].mxu0
  %v858 = vadd.f32 %v112, %v857
  %859 = vmatprep.mubr.f32.mxu0 0.0
  %860 = vmatmul.mubr.f32.gmra.mrb[0].mxu0 %v137
  %v861 = vpop.f32.mrb[0].mxu0
  %v862 = vadd.f32 %v108, %v861
  %v863 = vpop.f32.mrb[0].mxu0
  %v864 = vadd.f32 %v112, %v863
  %865 = vmatprep.mubr.f32.mxu0 0.0
  %866 = vmatmul.mubr.f32.gmra.mrb[0].mxu0 %v140
  %v867 = vpop.f32.mrb[0].mxu0
  %v868 = vadd.f32 %v108, %v867
  %v869 = vpop.f32.mrb[0].mxu0
  %v870 = vadd.f32 %v112, %v869
  %871 = vmatprep.mubr.f32.mxu0 0.0
  %872 = vmatmul.mubr.f32.gmra.mrb[0].mxu0 %v143
  %v873 = vpop.f32.mrb[0].mxu0
  %v874 = vadd.f32 %v108, %v873
  %v875 = vpop.f32.mrb[0].mxu0
  %v876 = vadd.f32 %v112, %v875
  %877 = vmatprep.mubr.f32.mxu0 0.0
  %878 = vmatmul.mubr.f32.gmra.mrb[0].mxu0 %v146
  %v879 = vpop.f32.mrb[0].mxu0
  %v880 = vadd.f32 %v108, %v879
  %v881 = vpop.f32.mrb[0].mxu0
  %v882 = vadd.f32 %v112, %v881
  %883 = vmatprep.mubr.f32.mxu0 0.0
  %884 = vmatmul.mubr.f32.gmra.mrb[0].mxu0 %v149
  %v885 = vpop.f32.mrb[0].mxu0
  %v886 = vadd.f32 %v108, %v885
  %v887 = vpop.f32.mrb[0].mxu0
  %v888 = vadd.f32 %v112, %v887
  %889 = vmatprep.mubr.f32.mxu0 0.0
  %890 = vmatmul.mubr.f32.gmra.mrb[0].mxu0 %v152
  %v891 = vpop.f32.mrb[0].mxu0
  %v892 = vadd.f32 %v108, %v891
  %v893 = vpop.f32.mrb[0].mxu0
  %v894 = vadd.f32 %v112, %v893
  %895 = vmatprep.mubr.f32.mxu0 0.0
  %896 = vmatmul.mubr.f32.gmra.mrb[0].mxu0 %v155
  %v897 = vpop.f32.mrb[0].mxu0
  %v898 = vadd.f32 %v108, %v897
  %v899 = vpop.f32.mrb[0].mxu0
  %v900 = vadd.f32 %v112, %v899
  %901 = vmatprep.mubr.f32.mxu0 0.0
  %902 = vmatmul.mubr.f32.gmra.mrb[0].mxu0 %v158
  %v903 = vpop.f32.mrb[0].mxu0
  %v904 = vadd.f32 %v108, %v903
  %v905 = vpop.f32.mrb[0].mxu0
  %v906 = vadd.f32 %v112, %v905
  %907 = vmatprep.mubr.f32.mxu0 0.0
  %908 = vmatmul.mubr.f32.gmra.mrb[0].mxu0 %v161
  %v909 = vpop.f32.mrb[0].mxu0
  %v910 = vadd.f32 %v108, %v909
  %v911 = vpop.f32.mrb[0].mxu0
  %v912 = vadd.f32 %v112, %v911
  %913 = vmatprep.mubr.f32.mxu0 0.0
  %914 = vmatmul.mubr.f32.gmra.mrb[0].mxu0 %v164
  %v915 = vpop.f32.mrb[0].mxu0
  %v916 = vadd.f32 %v108, %v915
  %v917 = vpop.f32.mrb[0].mxu0
  %v918 = vadd.f32 %v112, %v917
  %919 = vmatprep.mubr.f32.mxu0 0.0
  %920 = vmatmul.mubr.f32.gmra.mrb[0].mxu0 %v167
  %v921 = vpop.f32.mrb[0].mxu0
  %v922 = vadd.f32 %v108, %v921
  %v923 = vpop.f32.mrb[0].mxu0
  %v924 = vadd.f32 %v112, %v923
  %925 = vmatprep.mubr.f32.mxu0 0.0
  %926 = vmatmul.mubr.f32.gmra.mrb[0].mxu0 %v170
  %v927 = vpop.f32.mrb[0].mxu0
  %v928 = vadd.f32 %v108, %v927
  %v929 = vpop.f32.mrb[0].mxu0
  %v930 = vadd.f32 %v112, %v929
  %931 = vmatprep.mubr.f32.mxu0 0.0
  %932 = vmatmul.mubr.f32.gmra.mrb[0].mxu0 %v173
  %v933 = vpop.f32.mrb[0].mxu0
  %v934 = vadd.f32 %v108, %v933
  %v935 = vpop.f32.mrb[0].mxu0
  %v936 = vadd.f32 %v112, %v935
  %937 = vmatprep.mubr.f32.mxu0 0.0
  %938 = vmatmul.mubr.f32.gmra.mrb[0].mxu0 %v176
  %v939 = vpop.f32.mrb[0].mxu0
  %v940 = vadd.f32 %v108, %v939
  %v941 = vpop.f32.mrb[0].mxu0
  %v942 = vadd.f32 %v112, %v941
  %943 = vmatprep.mubr.f32.mxu0 0.0
  %944 = vmatmul.mubr.f32.gmra.mrb[0].mxu0 %v179
  %v945 = vpop.f32.mrb[0].mxu0
  %v946 = vadd.f32 %v108, %v945
  %v947 = vpop.f32.mrb[0].mxu0
  %v948 = vadd.f32 %v112, %v947
  %949 = vmatprep.mubr.f32.mxu0 0.0
  %950 = vmatmul.mubr.f32.gmra.mrb[0].mxu0 %v182
  %v951 = vpop.f32.mrb[0].mxu0
  %v952 = vadd.f32 %v108, %v951
  %v953 = vpop.f32.mrb[0].mxu0
  %v954 = vadd.f32 %v112, %v953
  %955 = vmatprep.mubr.f32.mxu0 0.0
  %956 = vmatmul.mubr.f32.gmra.mrb[0].mxu0 %v185
  %v957 = vpop.f32.mrb[0].mxu0
  %v958 = vadd.f32 %v108, %v957
  %v959 = vpop.f32.mrb[0].mxu0
  %v960 = vadd.f32 %v112, %v959
  %961 = vmatprep.mubr.f32.mxu0 0.0
  %962 = vmatmul.mubr.f32.gmra.mrb[0].mxu0 %v188
  %v963 = vpop.f32.mrb[0].mxu0
  %v964 = vadd.f32 %v108, %v963
  %v965 = vpop.f32.mrb[0].mxu0
  %v966 = vadd.f32 %v112, %v965
  %967 = vmatprep.mubr.f32.mxu0 0.0
  %968 = vmatmul.mubr.f32.gmra.mrb[0].mxu0 %v191
  %v969 = vpop.f32.mrb[0].mxu0
  %v970 = vadd.f32 %v108, %v969
  %v971 = vpop.f32.mrb[0].mxu0
  %v972 = vadd.f32 %v112, %v971
  %973 = vmatprep.mubr.f32.mxu0 0.0
  %974 = vmatmul.mubr.f32.gmra.mrb[0].mxu0 %v194
  %v975 = vpop.f32.mrb[0].mxu0
  %v976 = vadd.f32 %v108, %v975
  %v977 = vpop.f32.mrb[0].mxu0
  %v978 = vadd.f32 %v112, %v977
  %979 = vmatprep.mubr.f32.mxu0 0.0
  %980 = vmatmul.mubr.f32.gmra.mrb[0].mxu0 %v197
  %v981 = vpop.f32.mrb[0].mxu0
  %v982 = vadd.f32 %v108, %v981
  %v983 = vpop.f32.mrb[0].mxu0
  %v984 = vadd.f32 %v112, %v983
  %985 = vmatprep.mubr.f32.mxu0 0.0
  %986 = vmatmul.mubr.f32.gmra.mrb[0].mxu0 %v200
  %v987 = vpop.f32.mrb[0].mxu0
  %v988 = vadd.f32 %v108, %v987
  %v989 = vpop.f32.mrb[0].mxu0
  %v990 = vadd.f32 %v112, %v989
  %991 = vmatprep.mubr.f32.mxu0 0.0
  %992 = vmatmul.mubr.f32.gmra.mrb[0].mxu0 %v203
  %v993 = vpop.f32.mrb[0].mxu0
  %v994 = vadd.f32 %v108, %v993
  %v995 = vpop.f32.mrb[0].mxu0
  %v996 = vadd.f32 %v112, %v995
  %997 = vmatprep.mubr.f32.mxu0 0.0
  %998 = vmatmul.mubr.f32.gmra.mrb[0].mxu0 %v206
  %v999 = vpop.f32.mrb[0].mxu0
  %v1000 = vadd.f32 %v108, %v999
  %v1001 = vpop.f32.mrb[0].mxu0
  %v1002 = vadd.f32 %v112, %v1001
  %1003 = vmatprep.mubr.f32.mxu0 0.0
  %1004 = vmatmul.mubr.f32.gmra.mrb[0].mxu0 %v209
  %v1005 = vpop.f32.mrb[0].mxu0
  %v1006 = vadd.f32 %v108, %v1005
  %v1007 = vpop.f32.mrb[0].mxu0
  %v1008 = vadd.f32 %v112, %v1007
  %1009 = vmatprep.mubr.f32.mxu0 0.0
  %1010 = vmatmul.mubr.f32.gmra.mrb[0].mxu0 %v212
  %v1011 = vpop.f32.mrb[0].mxu0
  %v1012 = vadd.f32 %v108, %v1011
  %v1013 = vpop.f32.mrb[0].mxu0
  %v1014 = vadd.f32 %v112, %v1013
  %1015 = vmatprep.mubr.f32.mxu0 0.0
  %1016 = vmatmul.mubr.f32.gmra.mrb[0].mxu0 %v215
  %v1017 = vpop.f32.mrb[0].mxu0
  %v1018 = vadd.f32 %v108, %v1017
  %v1019 = vpop.f32.mrb[0].mxu0
  %v1020 = vadd.f32 %v112, %v1019
  %1021 = vmatprep.mubr.f32.mxu0 0.0
  %1022 = vmatmul.mubr.f32.gmra.mrb[0].mxu0 %v218
  %v1023 = vpop.f32.mrb[0].mxu0
  %v1024 = vadd.f32 %v108, %v1023
  %v1025 = vpop.f32.mrb[0].mxu0
  %v1026 = vadd.f32 %v112, %v1025
  %1027 = vmatprep.mubr.f32.mxu0 0.0
  %1028 = vmatmul.mubr.f32.gmra.mrb[0].mxu0 %v221
  %v1029 = vpop.f32.mrb[0].mxu0
  %v1030 = vadd.f32 %v108, %v1029
  %v1031 = vpop.f32.mrb[0].mxu0
  %v1032 = vadd.f32 %v112, %v1031
  %1033 = vmatprep.mubr.f32.mxu0 0.0
  %1034 = vmatmul.mubr.f32.gmra.mrb[0].mxu0 %v224
  %v1035 = vpop.f32.mrb[0].mxu0
  %v1036 = vadd.f32 %v108, %v1035
  %v1037 = vpop.f32.mrb[0].mxu0
  %v1038 = vadd.f32 %v112, %v1037
  %1039 = vmatprep.mubr.f32.mxu0 0.0
  %1040 = vmatmul.mubr.f32.gmra.mrb[0].mxu0 %v227
  %v1041 = vpop.f32.mrb[0].mxu0
  %v1042 = vadd.f32 %v108, %v1041
  %v1043 = vpop.f32.mrb[0].mxu0
  %v1044 = vadd.f32 %v112, %v1043
  %1045 = vmatprep.mubr.f32.mxu0 0.0
  %1046 = vmatmul.mubr.f32.gmra.mrb[0].mxu0 %v230
  %v1047 = vpop.f32.mrb[0].mxu0
  %v1048 = vadd.f32 %v108, %v1047
  %v1049 = vpop.f32.mrb[0].mxu0
  %v1050 = vadd.f32 %v112, %v1049
  %1051 = vmatprep.mubr.f32.mxu0 0.0
  %1052 = vmatmul.mubr.f32.gmra.mrb[0].mxu0 %v233
  %v1053 = vpop.f32.mrb[0].mxu0
  %v1054 = vadd.f32 %v108, %v1053
  %v1055 = vpop.f32.mrb[0].mxu0
  %v1056 = vadd.f32 %v112, %v1055
  %1057 = vmatprep.mubr.f32.mxu0 0.0
  %1058 = vmatmul.mubr.f32.gmra.mrb[0].mxu0 %v236
  %v1059 = vpop.f32.mrb[0].mxu0
  %v1060 = vadd.f32 %v108, %v1059
  %v1061 = vpop.f32.mrb[0].mxu0
  %v1062 = vadd.f32 %v112, %v1061
  %1063 = vmatprep.mubr.f32.mxu0 0.0
  %1064 = vmatmul.mubr.f32.gmra.mrb[0].mxu0 %v239
  %v1065 = vpop.f32.mrb[0].mxu0
  %v1066 = vadd.f32 %v108, %v1065
  %v1067 = vpop.f32.mrb[0].mxu0
  %v1068 = vadd.f32 %v112, %v1067
  %1069 = vmatprep.mubr.f32.mxu0 0.0
  %1070 = vmatmul.mubr.f32.gmra.mrb[0].mxu0 %v242
  %v1071 = vpop.f32.mrb[0].mxu0
  %v1072 = vadd.f32 %v108, %v1071
  %v1073 = vpop.f32.mrb[0].mxu0
  %v1074 = vadd.f32 %v112, %v1073
  %1075 = vmatprep.mubr.f32.mxu0 0.0
  %1076 = vmatmul.mubr.f32.gmra.mrb[0].mxu0 %v245
  %v1077 = vpop.f32.mrb[0].mxu0
  %v1078 = vadd.f32 %v108, %v1077
  %v1079 = vpop.f32.mrb[0].mxu0
  %v1080 = vadd.f32 %v112, %v1079
  %1081 = vmatprep.mubr.f32.mxu0 0.0
  %1082 = vmatmul.mubr.f32.gmra.mrb[0].mxu0 %v248
  %v1083 = vpop.f32.mrb[0].mxu0
  %v1084 = vadd.f32 %v108, %v1083
  %v1085 = vpop.f32.mrb[0].mxu0
  %v1086 = vadd.f32 %v112, %v1085
  %1087 = vmatprep.mubr.f32.mxu0 0.0
  %1088 = vmatmul.mubr.f32.gmra.mrb[0].mxu0 %v251
  %v1089 = vpop.f32.mrb[0].mxu0
  %v1090 = vadd.f32 %v108, %v1089
  %v1091 = vpop.f32.mrb[0].mxu0
  %v1092 = vadd.f32 %v112, %v1091
  %1093 = vmatprep.mubr.f32.mxu0 0.0
  %1094 = vmatmul.mubr.f32.gmra.mrb[0].mxu0 %v254
  %v1095 = vpop.f32.mrb[0].mxu0
  %v1096 = vadd.f32 %v108, %v1095
  %v1097 = vpop.f32.mrb[0].mxu0
  %v1098 = vadd.f32 %v112, %v1097
  %1099 = vmatprep.mubr.f32.mxu0 0.0
  %1100 = vmatmul.mubr.f32.gmra.mrb[0].mxu0 %v257
  %v1101 = vpop.f32.mrb[0].mxu0
  %v1102 = vadd.f32 %v108, %v1101
  %v1103 = vpop.f32.mrb[0].mxu0
  %v1104 = vadd.f32 %v112, %v1103
  %1105 = vmatprep.mubr.f32.mxu0 0.0
  %1106 = vmatmul.mubr.f32.gmra.mrb[0].mxu0 %v260
  %v1107 = vpop.f32.mrb[0].mxu0
  %v1108 = vadd.f32 %v108, %v1107
  %v1109 = vpop.f32.mrb[0].mxu0
  %v1110 = vadd.f32 %v112, %v1109
  %1111 = vmatprep.mubr.f32.mxu0 0.0
  %1112 = vmatmul.mubr.f32.gmra.mrb[0].mxu0 %v263
  %v1113 = vpop.f32.mrb[0].mxu0
  %v1114 = vadd.f32 %v108, %v1113
  %v1115 = vpop.f32.mrb[0].mxu0
  %v1116 = vadd.f32 %v112, %v1115
  %1117 = vmatprep.mubr.f32.mxu0 0.0
  %1118 = vmatmul.mubr.f32.gmra.mrb[0].mxu0 %v266
  %v1119 = vpop.f32.mrb[0].mxu0
  %v1120 = vadd.f32 %v108, %v1119
  %v1121 = vpop.f32.mrb[0].mxu0
  %v1122 = vadd.f32 %v112, %v1121
  %1123 = vmatprep.mubr.f32.mxu0 0.0
  %1124 = vmatmul.mubr.f32.gmra.mrb[0].mxu0 %v269
  %v1125 = vpop.f32.mrb[0].mxu0
  %v1126 = vadd.f32 %v108, %v1125
  %v1127 = vpop.f32.mrb[0].mxu0
  %v1128 = vadd.f32 %v112, %v1127
  %1129 = vmatprep.mubr.f32.mxu0 0.0
  %1130 = vmatmul.mubr.f32.gmra.mrb[0].mxu0 %v272
  %v1131 = vpop.f32.mrb[0].mxu0
  %v1132 = vadd.f32 %v108, %v1131
  %v1133 = vpop.f32.mrb[0].mxu0
  %v1134 = vadd.f32 %v112, %v1133
  %1135 = vmatprep.mubr.f32.mxu0 0.0
  %1136 = vmatmul.mubr.f32.gmra.mrb[0].mxu0 %v275
  %v1137 = vpop.f32.mrb[0].mxu0
  %v1138 = vadd.f32 %v108, %v1137
  %v1139 = vpop.f32.mrb[0].mxu0
  %v1140 = vadd.f32 %v112, %v1139
  %1141 = vmatprep.mubr.f32.mxu0 0.0
  %1142 = vmatmul.mubr.f32.gmra.mrb[0].mxu0 %v278
  %v1143 = vpop.f32.mrb[0].mxu0
  %v1144 = vadd.f32 %v108, %v1143
  %v1145 = vpop.f32.mrb[0].mxu0
  %v1146 = vadd.f32 %v112, %v1145
  %1147 = vmatprep.mubr.f32.mxu0 0.0
  %1148 = vmatmul.mubr.f32.gmra.mrb[0].mxu0 %v281
  %v1149 = vpop.f32.mrb[0].mxu0
  %v1150 = vadd.f32 %v108, %v1149
  %v1151 = vpop.f32.mrb[0].mxu0
  %v1152 = vadd.f32 %v112, %v1151
  %1153 = vmatprep.mubr.f32.mxu0 0.0
  %1154 = vmatmul.mubr.f32.gmra.mrb[0].mxu0 %v284
  %v1155 = vpop.f32.mrb[0].mxu0
  %v1156 = vadd.f32 %v108, %v1155
  %v1157 = vpop.f32.mrb[0].mxu0
  %v1158 = vadd.f32 %v112, %v1157
  %1159 = vmatprep.mubr.f32.mxu0 0.0
  %1160 = vmatmul.mubr.f32.gmra.mrb[0].mxu0 %v287
  %v1161 = vpop.f32.mrb[0].mxu0
  %v1162 = vadd.f32 %v108, %v1161
  %v1163 = vpop.f32.mrb[0].mxu0
  %v1164 = vadd.f32 %v112, %v1163
  %1165 = vmatprep.mubr.f32.mxu0 0.0
  %1166 = vmatmul.mubr.f32.gmra.mrb[0].mxu0 %v290
  %v1167 = vpop.f32.mrb[0].mxu0
  %v1168 = vadd.f32 %v108, %v1167
  %v1169 = vpop.f32.mrb[0].mxu0
  %v1170 = vadd.f32 %v112, %v1169
  %1171 = vmatprep.mubr.f32.mxu0 0.0
  %1172 = vmatmul.mubr.f32.gmra.mrb[0].mxu0 %v293
  %v1173 = vpop.f32.mrb[0].mxu0
  %v1174 = vadd.f32 %v108, %v1173
  %v1175 = vpop.f32.mrb[0].mxu0
  %v1176 = vadd.f32 %v112, %v1175
  %1177 = vmatprep.mubr.f32.mxu0 0.0
  %1178 = vmatmul.mubr.f32.gmra.mrb[0].mxu0 %v296
  %v1179 = vpop.f32.mrb[0].mxu0
  %v1180 = vadd.f32 %v108, %v1179
  %v1181 = vpop.f32.mrb[0].mxu0
  %v1182 = vadd.f32 %v112, %v1181
  %1183 = vmatprep.mubr.f32.mxu0 0.0
  %1184 = vmatmul.mubr.f32.gmra.mrb[0].mxu0 %v299
  %v1185 = vpop.f32.mrb[0].mxu0
  %v1186 = vadd.f32 %v108, %v1185
  %v1187 = vpop.f32.mrb[0].mxu0
  %v1188 = vadd.f32 %v112, %v1187
  %1189 = vmatprep.mubr.f32.mxu0 0.0
  %1190 = vmatmul.mubr.f32.gmra.mrb[0].mxu0 %v302
  %v1191 = vpop.f32.mrb[0].mxu0
  %v1192 = vadd.f32 %v108, %v1191
  %v1193 = vpop.f32.mrb[0].mxu0
  %v1194 = vadd.f32 %v112, %v1193
  %1195 = vmatprep.mubr.f32.mxu0 0.0
  %1196 = vmatmul.mubr.f32.gmra.mrb[0].mxu0 %v305
  %v1197 = vpop.f32.mrb[0].mxu0
  %v1198 = vadd.f32 %v108, %v1197
  %v1199 = vpop.f32.mrb[0].mxu0
  %v1200 = vadd.f32 %v112, %v1199
  %1201 = vmatprep.mubr.f32.mxu0 0.0
  %1202 = vmatmul.mubr.f32.gmra.mrb[0].mxu0 %v308
  %v1203 = vpop.f32.mrb[0].mxu0
  %v1204 = vadd.f32 %v108, %v1203
  %v1205 = vpop.f32.mrb[0].mxu0
  %v1206 = vadd.f32 %v112, %v1205
  %1207 = vdwg.mxu0
  %1208 = vst [vmem:[#allocation2] sm:$0xff] %v377
  %1209 = vst [vmem:[#allocation2 + $0x8] sm:$0xff] %v379
  %1210 = vst [vmem:[#allocation2 + $0x10] sm:$0xff] %v826
  %1211 = vst [vmem:[#allocation2 + $0x18] sm:$0xff] %v828
  %1212 = vst [vmem:[#allocation2 + $0x20] sm:$0xff] %v383
  %1213 = vst [vmem:[#allocation2 + $0x28] sm:$0xff] %v385
  %1214 = vst [vmem:[#allocation2 + $0x30] sm:$0xff] %v832
  %1215 = vst [vmem:[#allocation2 + $0x38] sm:$0xff] %v834
  %1216 = vst [vmem:[#allocation2 + $0x40] sm:$0xff] %v389
  %1217 = vst [vmem:[#allocation2 + $0x48] sm:$0xff] %v391
  %1218 = vst [vmem:[#allocation2 + $0x50] sm:$0xff] %v838
  %1219 = vst [vmem:[#allocation2 + $0x58] sm:$0xff] %v840
  %1220 = vst [vmem:[#allocation2 + $0x60] sm:$0xff] %v395
  %1221 = vst [vmem:[#allocation2 + $0x68] sm:$0xff] %v397
  %1222 = vst [vmem:[#allocation2 + $0x70] sm:$0xff] %v844
  %1223 = vst [vmem:[#allocation2 + $0x78] sm:$0xff] %v846
  %1224 = vst [vmem:[#allocation2 + $0x80] sm:$0xff] %v401
  %1225 = vst [vmem:[#allocation2 + $0x88] sm:$0xff] %v403
  %1226 = vst [vmem:[#allocation2 + $0x90] sm:$0xff] %v850
  %1227 = vst [vmem:[#allocation2 + $0x98] sm:$0xff] %v852
  %1228 = vst [vmem:[#allocation2 + $0xa0] sm:$0xff] %v407
  %1229 = vst [vmem:[#allocation2 + $0xa8] sm:$0xff] %v409
  %1230 = vst [vmem:[#allocation2 + $0xb0] sm:$0xff] %v856
  %1231 = vst [vmem:[#allocation2 + $0xb8] sm:$0xff] %v858
  %1232 = vst [vmem:[#allocation2 + $0xc0] sm:$0xff] %v413
  %1233 = vst [vmem:[#allocation2 + $0xc8] sm:$0xff] %v415
  %1234 = vst [vmem:[#allocation2 + $0xd0] sm:$0xff] %v862
  %1235 = vst [vmem:[#allocation2 + $0xd8] sm:$0xff] %v864
  %1236 = vst [vmem:[#allocation2 + $0xe0] sm:$0xff] %v419
  %1237 = vst [vmem:[#allocation2 + $0xe8] sm:$0xff] %v421
  %1238 = vst [vmem:[#allocation2 + $0xf0] sm:$0xff] %v868
  %1239 = vst [vmem:[#allocation2 + $0xf8] sm:$0xff] %v870
  %1240 = vst [vmem:[#allocation2 + $0x100] sm:$0xff] %v425
  %1241 = vst [vmem:[#allocation2 + $0x108] sm:$0xff] %v427
  %1242 = vst [vmem:[#allocation2 + $0x110] sm:$0xff] %v874
  %1243 = vst [vmem:[#allocation2 + $0x118] sm:$0xff] %v876
  %1244 = vst [vmem:[#allocation2 + $0x120] sm:$0xff] %v431
  %1245 = vst [vmem:[#allocation2 + $0x128] sm:$0xff] %v433
  %1246 = vst [vmem:[#allocation2 + $0x130] sm:$0xff] %v880
  %1247 = vst [vmem:[#allocation2 + $0x138] sm:$0xff] %v882
  %1248 = vst [vmem:[#allocation2 + $0x140] sm:$0xff] %v437
  %1249 = vst [vmem:[#allocation2 + $0x148] sm:$0xff] %v439
  %1250 = vst [vmem:[#allocation2 + $0x150] sm:$0xff] %v886
  %1251 = vst [vmem:[#allocation2 + $0x158] sm:$0xff] %v888
  %1252 = vst [vmem:[#allocation2 + $0x160] sm:$0xff] %v443
  %1253 = vst [vmem:[#allocation2 + $0x168] sm:$0xff] %v445
  %1254 = vst [vmem:[#allocation2 + $0x170] sm:$0xff] %v892
  %1255 = vst [vmem:[#allocation2 + $0x178] sm:$0xff] %v894
  %1256 = vst [vmem:[#allocation2 + $0x180] sm:$0xff] %v449
  %1257 = vst [vmem:[#allocation2 + $0x188] sm:$0xff] %v451
  %1258 = vst [vmem:[#allocation2 + $0x190] sm:$0xff] %v898
  %1259 = vst [vmem:[#allocation2 + $0x198] sm:$0xff] %v900
  %1260 = vst [vmem:[#allocation2 + $0x1a0] sm:$0xff] %v455
  %1261 = vst [vmem:[#allocation2 + $0x1a8] sm:$0xff] %v457
  %1262 = vst [vmem:[#allocation2 + $0x1b0] sm:$0xff] %v904
  %1263 = vst [vmem:[#allocation2 + $0x1b8] sm:$0xff] %v906
  %1264 = vst [vmem:[#allocation2 + $0x1c0] sm:$0xff] %v461
  %1265 = vst [vmem:[#allocation2 + $0x1c8] sm:$0xff] %v463
  %1266 = vst [vmem:[#allocation2 + $0x1d0] sm:$0xff] %v910
  %1267 = vst [vmem:[#allocation2 + $0x1d8] sm:$0xff] %v912
  %1268 = vst [vmem:[#allocation2 + $0x1e0] sm:$0xff] %v467
  %1269 = vst [vmem:[#allocation2 + $0x1e8] sm:$0xff] %v469
  %1270 = vst [vmem:[#allocation2 + $0x1f0] sm:$0xff] %v916
  %1271 = vst [vmem:[#allocation2 + $0x1f8] sm:$0xff] %v918
  %1272 = vst [vmem:[#allocation2 + $0x200] sm:$0xff] %v473
  %1273 = vst [vmem:[#allocation2 + $0x208] sm:$0xff] %v475
  %1274 = vst [vmem:[#allocation2 + $0x210] sm:$0xff] %v922
  %1275 = vst [vmem:[#allocation2 + $0x218] sm:$0xff] %v924
  %1276 = vst [vmem:[#allocation2 + $0x220] sm:$0xff] %v479
  %1277 = vst [vmem:[#allocation2 + $0x228] sm:$0xff] %v481
  %1278 = vst [vmem:[#allocation2 + $0x230] sm:$0xff] %v928
  %1279 = vst [vmem:[#allocation2 + $0x238] sm:$0xff] %v930
  %1280 = vst [vmem:[#allocation2 + $0x240] sm:$0xff] %v485
  %1281 = vst [vmem:[#allocation2 + $0x248] sm:$0xff] %v487
  %1282 = vst [vmem:[#allocation2 + $0x250] sm:$0xff] %v934
  %1283 = vst [vmem:[#allocation2 + $0x258] sm:$0xff] %v936
  %1284 = vst [vmem:[#allocation2 + $0x260] sm:$0xff] %v491
  %1285 = vst [vmem:[#allocation2 + $0x268] sm:$0xff] %v493
  %1286 = vst [vmem:[#allocation2 + $0x270] sm:$0xff] %v940
  %1287 = vst [vmem:[#allocation2 + $0x278] sm:$0xff] %v942
  %1288 = vst [vmem:[#allocation2 + $0x280] sm:$0xff] %v497
  %1289 = vst [vmem:[#allocation2 + $0x288] sm:$0xff] %v499
  %1290 = vst [vmem:[#allocation2 + $0x290] sm:$0xff] %v946
  %1291 = vst [vmem:[#allocation2 + $0x298] sm:$0xff] %v948
  %1292 = vst [vmem:[#allocation2 + $0x2a0] sm:$0xff] %v503
  %1293 = vst [vmem:[#allocation2 + $0x2a8] sm:$0xff] %v505
  %1294 = vst [vmem:[#allocation2 + $0x2b0] sm:$0xff] %v952
  %1295 = vst [vmem:[#allocation2 + $0x2b8] sm:$0xff] %v954
  %1296 = vst [vmem:[#allocation2 + $0x2c0] sm:$0xff] %v509
  %1297 = vst [vmem:[#allocation2 + $0x2c8] sm:$0xff] %v511
  %1298 = vst [vmem:[#allocation2 + $0x2d0] sm:$0xff] %v958
  %1299 = vst [vmem:[#allocation2 + $0x2d8] sm:$0xff] %v960
  %1300 = vst [vmem:[#allocation2 + $0x2e0] sm:$0xff] %v515
  %1301 = vst [vmem:[#allocation2 + $0x2e8] sm:$0xff] %v517
  %1302 = vst [vmem:[#allocation2 + $0x2f0] sm:$0xff] %v964
  %1303 = vst [vmem:[#allocation2 + $0x2f8] sm:$0xff] %v966
  %1304 = vst [vmem:[#allocation2 + $0x300] sm:$0xff] %v521
  %1305 = vst [vmem:[#allocation2 + $0x308] sm:$0xff] %v523
  %1306 = vst [vmem:[#allocation2 + $0x310] sm:$0xff] %v970
  %1307 = vst [vmem:[#allocation2 + $0x318] sm:$0xff] %v972
  %1308 = vst [vmem:[#allocation2 + $0x320] sm:$0xff] %v527
  %1309 = vst [vmem:[#allocation2 + $0x328] sm:$0xff] %v529
  %1310 = vst [vmem:[#allocation2 + $0x330] sm:$0xff] %v976
  %1311 = vst [vmem:[#allocation2 + $0x338] sm:$0xff] %v978
  %1312 = vst [vmem:[#allocation2 + $0x340] sm:$0xff] %v533
  %1313 = vst [vmem:[#allocation2 + $0x348] sm:$0xff] %v535
  %1314 = vst [vmem:[#allocation2 + $0x350] sm:$0xff] %v982
  %1315 = vst [vmem:[#allocation2 + $0x358] sm:$0xff] %v984
  %1316 = vst [vmem:[#allocation2 + $0x360] sm:$0xff] %v539
  %1317 = vst [vmem:[#allocation2 + $0x368] sm:$0xff] %v541
  %1318 = vst [vmem:[#allocation2 + $0x370] sm:$0xff] %v988
  %1319 = vst [vmem:[#allocation2 + $0x378] sm:$0xff] %v990
  %1320 = vst [vmem:[#allocation2 + $0x380] sm:$0xff] %v545
  %1321 = vst [vmem:[#allocation2 + $0x388] sm:$0xff] %v547
  %1322 = vst [vmem:[#allocation2 + $0x390] sm:$0xff] %v994
  %1323 = vst [vmem:[#allocation2 + $0x398] sm:$0xff] %v996
  %1324 = vst [vmem:[#allocation2 + $0x3a0] sm:$0xff] %v551
  %1325 = vst [vmem:[#allocation2 + $0x3a8] sm:$0xff] %v553
  %1326 = vst [vmem:[#allocation2 + $0x3b0] sm:$0xff] %v1000
  %1327 = vst [vmem:[#allocation2 + $0x3b8] sm:$0xff] %v1002
  %1328 = vst [vmem:[#allocation2 + $0x3c0] sm:$0xff] %v557
  %1329 = vst [vmem:[#allocation2 + $0x3c8] sm:$0xff] %v559
  %1330 = vst [vmem:[#allocation2 + $0x3d0] sm:$0xff] %v1006
  %1331 = vst [vmem:[#allocation2 + $0x3d8] sm:$0xff] %v1008
  %1332 = vst [vmem:[#allocation2 + $0x3e0] sm:$0xff] %v563
  %1333 = vst [vmem:[#allocation2 + $0x3e8] sm:$0xff] %v565
  %1334 = vst [vmem:[#allocation2 + $0x3f0] sm:$0xff] %v1012
  %1335 = vst [vmem:[#allocation2 + $0x3f8] sm:$0xff] %v1014
  %1336 = vst [vmem:[#allocation2 + $0x400] sm:$0xff] %v569
  %1337 = vst [vmem:[#allocation2 + $0x408] sm:$0xff] %v571
  %1338 = vst [vmem:[#allocation2 + $0x410] sm:$0xff] %v1018
  %1339 = vst [vmem:[#allocation2 + $0x418] sm:$0xff] %v1020
  %1340 = vst [vmem:[#allocation2 + $0x420] sm:$0xff] %v575
  %1341 = vst [vmem:[#allocation2 + $0x428] sm:$0xff] %v577
  %1342 = vst [vmem:[#allocation2 + $0x430] sm:$0xff] %v1024
  %1343 = vst [vmem:[#allocation2 + $0x438] sm:$0xff] %v1026
  %1344 = vst [vmem:[#allocation2 + $0x440] sm:$0xff] %v581
  %1345 = vst [vmem:[#allocation2 + $0x448] sm:$0xff] %v583
  %1346 = vst [vmem:[#allocation2 + $0x450] sm:$0xff] %v1030
  %1347 = vst [vmem:[#allocation2 + $0x458] sm:$0xff] %v1032
  %1348 = vst [vmem:[#allocation2 + $0x460] sm:$0xff] %v587
  %1349 = vst [vmem:[#allocation2 + $0x468] sm:$0xff] %v589
  %1350 = vst [vmem:[#allocation2 + $0x470] sm:$0xff] %v1036
  %1351 = vst [vmem:[#allocation2 + $0x478] sm:$0xff] %v1038
  %1352 = vst [vmem:[#allocation2 + $0x480] sm:$0xff] %v593
  %1353 = vst [vmem:[#allocation2 + $0x488] sm:$0xff] %v595
  %1354 = vst [vmem:[#allocation2 + $0x490] sm:$0xff] %v1042
  %1355 = vst [vmem:[#allocation2 + $0x498] sm:$0xff] %v1044
  %1356 = vst [vmem:[#allocation2 + $0x4a0] sm:$0xff] %v599
  %1357 = vst [vmem:[#allocation2 + $0x4a8] sm:$0xff] %v601
  %1358 = vst [vmem:[#allocation2 + $0x4b0] sm:$0xff] %v1048
  %1359 = vst [vmem:[#allocation2 + $0x4b8] sm:$0xff] %v1050
  %1360 = vst [vmem:[#allocation2 + $0x4c0] sm:$0xff] %v605
  %1361 = vst [vmem:[#allocation2 + $0x4c8] sm:$0xff] %v607
  %1362 = vst [vmem:[#allocation2 + $0x4d0] sm:$0xff] %v1054
  %1363 = vst [vmem:[#allocation2 + $0x4d8] sm:$0xff] %v1056
  %1364 = vst [vmem:[#allocation2 + $0x4e0] sm:$0xff] %v611
  %1365 = vst [vmem:[#allocation2 + $0x4e8] sm:$0xff] %v613
  %1366 = vst [vmem:[#allocation2 + $0x4f0] sm:$0xff] %v1060
  %1367 = vst [vmem:[#allocation2 + $0x4f8] sm:$0xff] %v1062
  %1368 = vst [vmem:[#allocation2 + $0x500] sm:$0xff] %v617
  %1369 = vst [vmem:[#allocation2 + $0x508] sm:$0xff] %v619
  %1370 = vst [vmem:[#allocation2 + $0x510] sm:$0xff] %v1066
  %1371 = vst [vmem:[#allocation2 + $0x518] sm:$0xff] %v1068
  %1372 = vst [vmem:[#allocation2 + $0x520] sm:$0xff] %v623
  %1373 = vst [vmem:[#allocation2 + $0x528] sm:$0xff] %v625
  %1374 = vst [vmem:[#allocation2 + $0x530] sm:$0xff] %v1072
  %1375 = vst [vmem:[#allocation2 + $0x538] sm:$0xff] %v1074
  %1376 = vst [vmem:[#allocation2 + $0x540] sm:$0xff] %v629
  %1377 = vst [vmem:[#allocation2 + $0x548] sm:$0xff] %v631
  %1378 = vst [vmem:[#allocation2 + $0x550] sm:$0xff] %v1078
  %1379 = vst [vmem:[#allocation2 + $0x558] sm:$0xff] %v1080
  %1380 = vst [vmem:[#allocation2 + $0x560] sm:$0xff] %v635
  %1381 = vst [vmem:[#allocation2 + $0x568] sm:$0xff] %v637
  %1382 = vst [vmem:[#allocation2 + $0x570] sm:$0xff] %v1084
  %1383 = vst [vmem:[#allocation2 + $0x578] sm:$0xff] %v1086
  %1384 = vst [vmem:[#allocation2 + $0x580] sm:$0xff] %v641
  %1385 = vst [vmem:[#allocation2 + $0x588] sm:$0xff] %v643
  %1386 = vst [vmem:[#allocation2 + $0x590] sm:$0xff] %v1090
  %1387 = vst [vmem:[#allocation2 + $0x598] sm:$0xff] %v1092
  %1388 = vst [vmem:[#allocation2 + $0x5a0] sm:$0xff] %v647
  %1389 = vst [vmem:[#allocation2 + $0x5a8] sm:$0xff] %v649
  %1390 = vst [vmem:[#allocation2 + $0x5b0] sm:$0xff] %v1096
  %1391 = vst [vmem:[#allocation2 + $0x5b8] sm:$0xff] %v1098
  %1392 = vst [vmem:[#allocation2 + $0x5c0] sm:$0xff] %v653
  %1393 = vst [vmem:[#allocation2 + $0x5c8] sm:$0xff] %v655
  %1394 = vst [vmem:[#allocation2 + $0x5d0] sm:$0xff] %v1102
  %1395 = vst [vmem:[#allocation2 + $0x5d8] sm:$0xff] %v1104
  %1396 = vst [vmem:[#allocation2 + $0x5e0] sm:$0xff] %v659
  %1397 = vst [vmem:[#allocation2 + $0x5e8] sm:$0xff] %v661
  %1398 = vst [vmem:[#allocation2 + $0x5f0] sm:$0xff] %v1108
  %1399 = vst [vmem:[#allocation2 + $0x5f8] sm:$0xff] %v1110
  %1400 = vst [vmem:[#allocation2 + $0x600] sm:$0xff] %v665
  %1401 = vst [vmem:[#allocation2 + $0x608] sm:$0xff] %v667
  %1402 = vst [vmem:[#allocation2 + $0x610] sm:$0xff] %v1114
  %1403 = vst [vmem:[#allocation2 + $0x618] sm:$0xff] %v1116
  %1404 = vst [vmem:[#allocation2 + $0x620] sm:$0xff] %v671
  %1405 = vst [vmem:[#allocation2 + $0x628] sm:$0xff] %v673
  %1406 = vst [vmem:[#allocation2 + $0x630] sm:$0xff] %v1120
  %1407 = vst [vmem:[#allocation2 + $0x638] sm:$0xff] %v1122
  %1408 = vst [vmem:[#allocation2 + $0x640] sm:$0xff] %v677
  %1409 = vst [vmem:[#allocation2 + $0x648] sm:$0xff] %v679
  %1410 = vst [vmem:[#allocation2 + $0x650] sm:$0xff] %v1126
  %1411 = vst [vmem:[#allocation2 + $0x658] sm:$0xff] %v1128
  %1412 = vst [vmem:[#allocation2 + $0x660] sm:$0xff] %v683
  %1413 = vst [vmem:[#allocation2 + $0x668] sm:$0xff] %v685
  %1414 = vst [vmem:[#allocation2 + $0x670] sm:$0xff] %v1132
  %1415 = vst [vmem:[#allocation2 + $0x678] sm:$0xff] %v1134
  %1416 = vst [vmem:[#allocation2 + $0x680] sm:$0xff] %v689
  %1417 = vst [vmem:[#allocation2 + $0x688] sm:$0xff] %v691
  %1418 = vst [vmem:[#allocation2 + $0x690] sm:$0xff] %v1138
  %1419 = vst [vmem:[#allocation2 + $0x698] sm:$0xff] %v1140
  %1420 = vst [vmem:[#allocation2 + $0x6a0] sm:$0xff] %v695
  %1421 = vst [vmem:[#allocation2 + $0x6a8] sm:$0xff] %v697
  %1422 = vst [vmem:[#allocation2 + $0x6b0] sm:$0xff] %v1144
  %1423 = vst [vmem:[#allocation2 + $0x6b8] sm:$0xff] %v1146
  %1424 = vst [vmem:[#allocation2 + $0x6c0] sm:$0xff] %v701
  %1425 = vst [vmem:[#allocation2 + $0x6c8] sm:$0xff] %v703
  %1426 = vst [vmem:[#allocation2 + $0x6d0] sm:$0xff] %v1150
  %1427 = vst [vmem:[#allocation2 + $0x6d8] sm:$0xff] %v1152
  %1428 = vst [vmem:[#allocation2 + $0x6e0] sm:$0xff] %v707
  %1429 = vst [vmem:[#allocation2 + $0x6e8] sm:$0xff] %v709
  %1430 = vst [vmem:[#allocation2 + $0x6f0] sm:$0xff] %v1156
  %1431 = vst [vmem:[#allocation2 + $0x6f8] sm:$0xff] %v1158
  %1432 = vst [vmem:[#allocation2 + $0x700] sm:$0xff] %v713
  %1433 = vst [vmem:[#allocation2 + $0x708] sm:$0xff] %v715
  %1434 = vst [vmem:[#allocation2 + $0x710] sm:$0xff] %v1162
  %1435 = vst [vmem:[#allocation2 + $0x718] sm:$0xff] %v1164
  %1436 = vst [vmem:[#allocation2 + $0x720] sm:$0xff] %v719
  %1437 = vst [vmem:[#allocation2 + $0x728] sm:$0xff] %v721
  %1438 = vst [vmem:[#allocation2 + $0x730] sm:$0xff] %v1168
  %1439 = vst [vmem:[#allocation2 + $0x738] sm:$0xff] %v1170
  %1440 = vst [vmem:[#allocation2 + $0x740] sm:$0xff] %v725
  %1441 = vst [vmem:[#allocation2 + $0x748] sm:$0xff] %v727
  %1442 = vst [vmem:[#allocation2 + $0x750] sm:$0xff] %v1174
  %1443 = vst [vmem:[#allocation2 + $0x758] sm:$0xff] %v1176
  %1444 = vst [vmem:[#allocation2 + $0x760] sm:$0xff] %v731
  %1445 = vst [vmem:[#allocation2 + $0x768] sm:$0xff] %v733
  %1446 = vst [vmem:[#allocation2 + $0x770] sm:$0xff] %v1180
  %1447 = vst [vmem:[#allocation2 + $0x778] sm:$0xff] %v1182
  %1448 = vst [vmem:[#allocation2 + $0x780] sm:$0xff] %v737
  %1449 = vst [vmem:[#allocation2 + $0x788] sm:$0xff] %v739
  %1450 = vst [vmem:[#allocation2 + $0x790] sm:$0xff] %v1186
  %1451 = vst [vmem:[#allocation2 + $0x798] sm:$0xff] %v1188
  %1452 = vst [vmem:[#allocation2 + $0x7a0] sm:$0xff] %v743
  %1453 = vst [vmem:[#allocation2 + $0x7a8] sm:$0xff] %v745
  %1454 = vst [vmem:[#allocation2 + $0x7b0] sm:$0xff] %v1192
  %1455 = vst [vmem:[#allocation2 + $0x7b8] sm:$0xff] %v1194
  %1456 = vst [vmem:[#allocation2 + $0x7c0] sm:$0xff] %v749
  %1457 = vst [vmem:[#allocation2 + $0x7c8] sm:$0xff] %v751
  %1458 = vst [vmem:[#allocation2 + $0x7d0] sm:$0xff] %v1198
  %1459 = vst [vmem:[#allocation2 + $0x7d8] sm:$0xff] %v1200
  %1460 = vst [vmem:[#allocation2 + $0x7e0] sm:$0xff] %v755
  %1461 = vst [vmem:[#allocation2 + $0x7e8] sm:$0xff] %v757
  %1462 = vst [vmem:[#allocation2 + $0x7f0] sm:$0xff] %v1204
  %1463 = vst [vmem:[#allocation2 + $0x7f8] sm:$0xff] %v1206
  %v1464 = vld [vmem:[#allocation2] sm:$0x3]
  %v1465 = vld [vmem:[#allocation2 + $0x8] sm:$0x3]
  %v1466 = vld [vmem:[#allocation2 + $0x10] sm:$0x3]
  %v1467 = vld [vmem:[#allocation2 + $0x18] sm:$0x3]
  %v1468 = vld [vmem:[%s3] sm:$0xff]
  %v1469 = vld [vmem:[%s3 + $0x8] sm:$0xff]
  %v1470 = vld [vmem:[%s3 + $0x10] sm:$0xff]
  %v1471 = vld [vmem:[%s3 + $0x18] sm:$0xff]
  %v1472 = vld [vmem:[%s3 + $0x20] sm:$0xff]
  %v1473 = vld [vmem:[%s3 + $0x28] sm:$0xff]
  %v1474 = vld [vmem:[%s3 + $0x30] sm:$0xff]
  %v1475 = vld [vmem:[%s3 + $0x38] sm:$0xff]
  %v1476 = vld [vmem:[%s3 + $0x40] sm:$0xff]
  %v1477 = vld [vmem:[%s3 + $0x48] sm:$0xff]
  %v1478 = vld [vmem:[%s3 + $0x50] sm:$0xff]
  %v1479 = vld [vmem:[%s3 + $0x58] sm:$0xff]
  %v1480 = vld [vmem:[%s3 + $0x60] sm:$0xff]
  %v1481 = vld [vmem:[%s3 + $0x68] sm:$0xff]
  %v1482 = vld [vmem:[%s3 + $0x70] sm:$0xff]
  %v1483 = vld [vmem:[%s3 + $0x78] sm:$0xff]
  %v1484 = vld [vmem:[%s3 + $0x80] sm:$0xff]
  %v1485 = vld [vmem:[%s3 + $0x88] sm:$0xff]
  %v1486 = vld [vmem:[%s3 + $0x90] sm:$0xff]
  %v1487 = vld [vmem:[%s3 + $0x98] sm:$0xff]
  %v1488 = vld [vmem:[%s3 + $0xa0] sm:$0xff]
  %v1489 = vld [vmem:[%s3 + $0xa8] sm:$0xff]
  %v1490 = vld [vmem:[%s3 + $0xb0] sm:$0xff]
  %v1491 = vld [vmem:[%s3 + $0xb8] sm:$0xff]
  %v1492 = vld [vmem:[%s3 + $0xc0] sm:$0xff]
  %v1493 = vld [vmem:[%s3 + $0xc8] sm:$0xff]
  %v1494 = vld [vmem:[%s3 + $0xd0] sm:$0xff]
  %v1495 = vld [vmem:[%s3 + $0xd8] sm:$0xff]
  %v1496 = vld [vmem:[%s3 + $0xe0] sm:$0xff]
  %v1497 = vld [vmem:[%s3 + $0xe8] sm:$0xff]
  %v1498 = vld [vmem:[%s3 + $0xf0] sm:$0xff]
  %v1499 = vld [vmem:[%s3 + $0xf8] sm:$0xff]
  %v1500 = vld [vmem:[%s3 + $0x100] sm:$0xff]
  %v1501 = vld [vmem:[%s3 + $0x108] sm:$0xff]
  %v1502 = vld [vmem:[%s3 + $0x110] sm:$0xff]
  %v1503 = vld [vmem:[%s3 + $0x118] sm:$0xff]
  %v1504 = vld [vmem:[%s3 + $0x120] sm:$0xff]
  %v1505 = vld [vmem:[%s3 + $0x128] sm:$0xff]
  %v1506 = vld [vmem:[%s3 + $0x130] sm:$0xff]
  %v1507 = vld [vmem:[%s3 + $0x138] sm:$0xff]
  %v1508 = vld [vmem:[%s3 + $0x140] sm:$0xff]
  %v1509 = vld [vmem:[%s3 + $0x148] sm:$0xff]
  %v1510 = vld [vmem:[%s3 + $0x150] sm:$0xff]
  %v1511 = vld [vmem:[%s3 + $0x158] sm:$0xff]
  %v1512 = vld [vmem:[%s3 + $0x160] sm:$0xff]
  %v1513 = vld [vmem:[%s3 + $0x168] sm:$0xff]
  %v1514 = vld [vmem:[%s3 + $0x170] sm:$0xff]
  %v1515 = vld [vmem:[%s3 + $0x178] sm:$0xff]
  %v1516 = vld [vmem:[%s3 + $0x180] sm:$0xff]
  %v1517 = vld [vmem:[%s3 + $0x188] sm:$0xff]
  %v1518 = vld [vmem:[%s3 + $0x190] sm:$0xff]
  %v1519 = vld [vmem:[%s3 + $0x198] sm:$0xff]
  %v1520 = vld [vmem:[%s3 + $0x1a0] sm:$0xff]
  %v1521 = vld [vmem:[%s3 + $0x1a8] sm:$0xff]
  %v1522 = vld [vmem:[%s3 + $0x1b0] sm:$0xff]
  %v1523 = vld [vmem:[%s3 + $0x1b8] sm:$0xff]
  %v1524 = vld [vmem:[%s3 + $0x1c0] sm:$0xff]
  %v1525 = vld [vmem:[%s3 + $0x1c8] sm:$0xff]
  %v1526 = vld [vmem:[%s3 + $0x1d0] sm:$0xff]
  %v1527 = vld [vmem:[%s3 + $0x1d8] sm:$0xff]
  %v1528 = vld [vmem:[%s3 + $0x1e0] sm:$0xff]
  %v1529 = vld [vmem:[%s3 + $0x1e8] sm:$0xff]
  %v1530 = vld [vmem:[%s3 + $0x1f0] sm:$0xff]
  %v1531 = vld [vmem:[%s3 + $0x1f8] sm:$0xff]
  %1532 = vmatprep.subr.mxu0 %v1469
  %1533 = vmatpush1.msra.mxu0 %v1468
  %1534 = vmatprep.subr.mxu0 %v1473
  %1535 = vmatpush1.msra.mxu0 %v1472
  %1536 = vmatprep.subr.mxu0 %v1477
  %1537 = vmatpush1.msra.mxu0 %v1476
  %1538 = vmatprep.subr.mxu0 %v1481
  %1539 = vmatpush1.msra.mxu0 %v1480
  %1540 = vmatprep.subr.mxu0 %v1485
  %1541 = vmatpush1.msra.mxu0 %v1484
  %1542 = vmatprep.subr.mxu0 %v1489
  %1543 = vmatpush1.msra.mxu0 %v1488
  %1544 = vmatprep.subr.mxu0 %v1493
  %1545 = vmatpush1.msra.mxu0 %v1492
  %1546 = vmatprep.subr.mxu0 %v1497
  %1547 = vmatpush1.msra.mxu0 %v1496
  %1548 = vmatprep.subr.mxu0 %v1501
  %1549 = vmatpush1.msra.mxu0 %v1500
  %1550 = vmatprep.subr.mxu0 %v1505
  %1551 = vmatpush1.msra.mxu0 %v1504
  %1552 = vmatprep.subr.mxu0 %v1509
  %1553 = vmatpush1.msra.mxu0 %v1508
  %1554 = vmatprep.subr.mxu0 %v1513
  %1555 = vmatpush1.msra.mxu0 %v1512
  %1556 = vmatprep.subr.mxu0 %v1517
  %1557 = vmatpush1.msra.mxu0 %v1516
  %1558 = vmatprep.subr.mxu0 %v1521
  %1559 = vmatpush1.msra.mxu0 %v1520
  %1560 = vmatprep.subr.mxu0 %v1525
  %1561 = vmatpush1.msra.mxu0 %v1524
  %1562 = vmatprep.subr.mxu0 %v1529
  %1563 = vmatpush1.msra.mxu0 %v1528
  %1564 = vmatprep.subr.mxu0 0.0
  %1565 = vmatpush1.msra.mxu0 0.0
  %1566 = vmatprep.subr.mxu0 0.0
  %1567 = vmatpush1.msra.mxu0 0.0
  %1568 = vmatprep.subr.mxu0 0.0
  %1569 = vmatpush1.msra.mxu0 0.0
  %1570 = vmatprep.subr.mxu0 0.0
  %1571 = vmatpush1.msra.mxu0 0.0
  %1572 = vmatprep.subr.mxu0 0.0
  %1573 = vmatpush1.msra.mxu0 0.0
  %1574 = vmatprep.subr.mxu0 0.0
  %1575 = vmatpush1.msra.mxu0 0.0
  %1576 = vmatprep.subr.mxu0 0.0
  %1577 = vmatpush1.msra.mxu0 0.0
  %1578 = vmatprep.subr.mxu0 0.0
  %1579 = vmatpush1.msra.mxu0 0.0
  %1580 = vmatprep.subr.mxu0 0.0
  %1581 = vmatpush1.msra.mxu0 0.0
  %1582 = vmatprep.subr.mxu0 0.0
  %1583 = vmatpush1.msra.mxu0 0.0
  %1584 = vmatprep.subr.mxu0 0.0
  %1585 = vmatpush1.msra.mxu0 0.0
  %1586 = vmatprep.subr.mxu0 0.0
  %1587 = vmatpush1.msra.mxu0 0.0
  %1588 = vmatprep.subr.mxu0 0.0
  %1589 = vmatpush1.msra.mxu0 0.0
  %1590 = vmatprep.subr.mxu0 0.0
  %1591 = vmatpush1.msra.mxu0 0.0
  %1592 = vmatprep.subr.mxu0 0.0
  %1593 = vmatpush1.msra.mxu0 0.0
  %1594 = vmatprep.subr.mxu0 0.0
  %1595 = vmatpush1.msra.mxu0 0.0
  %1596 = vmatprep.mubr.f32.mxu0 0.0
  %1597 = vmatmul.mubr.f32.gmra.mrb[0].mxu0 0.0
  %v1598 = vpop.f32.mrb[0].mxu0
  %v1599 = vadd.f32 0.0, %v1598
  %v1600 = vpop.f32.mrb[0].mxu0
  %v1601 = vadd.f32 0.0, %v1600
  %1602 = vdwg.mxu0
  %1603 = vmatprep.subr.mxu0 %v1471
  %1604 = vmatpush1.msra.mxu0 %v1470
  %1605 = vmatprep.subr.mxu0 %v1475
  %1606 = vmatpush1.msra.mxu0 %v1474
  %1607 = vmatprep.subr.mxu0 %v1479
  %1608 = vmatpush1.msra.mxu0 %v1478
  %1609 = vmatprep.subr.mxu0 %v1483
  %1610 = vmatpush1.msra.mxu0 %v1482
  %1611 = vmatprep.subr.mxu0 %v1487
  %1612 = vmatpush1.msra.mxu0 %v1486
  %1613 = vmatprep.subr.mxu0 %v1491
  %1614 = vmatpush1.msra.mxu0 %v1490
  %1615 = vmatprep.subr.mxu0 %v1495
  %1616 = vmatpush1.msra.mxu0 %v1494
  %1617 = vmatprep.subr.mxu0 %v1499
  %1618 = vmatpush1.msra.mxu0 %v1498
  %1619 = vmatprep.subr.mxu0 %v1503
  %1620 = vmatpush1.msra.mxu0 %v1502
  %1621 = vmatprep.subr.mxu0 %v1507
  %1622 = vmatpush1.msra.mxu0 %v1506
  %1623 = vmatprep.subr.mxu0 %v1511
  %1624 = vmatpush1.msra.mxu0 %v1510
  %1625 = vmatprep.subr.mxu0 %v1515
  %1626 = vmatpush1.msra.mxu0 %v1514
  %1627 = vmatprep.subr.mxu0 %v1519
  %1628 = vmatpush1.msra.mxu0 %v1518
  %1629 = vmatprep.subr.mxu0 %v1523
  %1630 = vmatpush1.msra.mxu0 %v1522
  %1631 = vmatprep.subr.mxu0 %v1527
  %1632 = vmatpush1.msra.mxu0 %v1526
  %1633 = vmatprep.subr.mxu0 %v1531
  %1634 = vmatpush1.msra.mxu0 %v1530
  %1635 = vmatprep.subr.mxu0 0.0
  %1636 = vmatpush1.msra.mxu0 0.0
  %1637 = vmatprep.subr.mxu0 0.0
  %1638 = vmatpush1.msra.mxu0 0.0
  %1639 = vmatprep.subr.mxu0 0.0
  %1640 = vmatpush1.msra.mxu0 0.0
  %1641 = vmatprep.subr.mxu0 0.0
  %1642 = vmatpush1.msra.mxu0 0.0
  %1643 = vmatprep.subr.mxu0 0.0
  %1644 = vmatpush1.msra.mxu0 0.0
  %1645 = vmatprep.subr.mxu0 0.0
  %1646 = vmatpush1.msra.mxu0 0.0
  %1647 = vmatprep.subr.mxu0 0.0
  %1648 = vmatpush1.msra.mxu0 0.0
  %1649 = vmatprep.subr.mxu0 0.0
  %1650 = vmatpush1.msra.mxu0 0.0
  %1651 = vmatprep.subr.mxu0 0.0
  %1652 = vmatpush1.msra.mxu0 0.0
  %1653 = vmatprep.subr.mxu0 0.0
  %1654 = vmatpush1.msra.mxu0 0.0
  %1655 = vmatprep.subr.mxu0 0.0
  %1656 = vmatpush1.msra.mxu0 0.0
  %1657 = vmatprep.subr.mxu0 0.0
  %1658 = vmatpush1.msra.mxu0 0.0
  %1659 = vmatprep.subr.mxu0 0.0
  %1660 = vmatpush1.msra.mxu0 0.0
  %1661 = vmatprep.subr.mxu0 0.0
  %1662 = vmatpush1.msra.mxu0 0.0
  %1663 = vmatprep.subr.mxu0 0.0
  %1664 = vmatpush1.msra.mxu0 0.0
  %1665 = vmatprep.subr.mxu0 0.0
  %1666 = vmatpush1.msra.mxu0 0.0
  %1667 = vmatprep.mubr.f32.mxu0 0.0
  %1668 = vmatmul.mubr.f32.gmra.mrb[0].mxu0 0.0
  %v1669 = vpop.f32.mrb[0].mxu0
  %v1670 = vadd.f32 0.0, %v1669
  %v1671 = vpop.f32.mrb[0].mxu0
  %v1672 = vadd.f32 0.0, %v1671
  %1673 = vdwg.mxu0
  %v1674 = vadd.f32 %v1464, %v1599
  %v1675 = vadd.f32 %v1465, %v1601
  %v1676 = vadd.f32 %v1466, %v1670
  %v1677 = vadd.f32 %v1467, %v1672
  %v1678 = vxor.u32 %v1674, 2147483648
  %v1679 = vmul.f32 %v1678, 1.442695
  %v1680 = vpow.pop %v1679
  %v1681 = vadd.f32 %v1680, 1.0
  %v1682 = vrcp.pop %v1681
  %v1683 = vmul.f32 1.0, %v1682
  %v1684 = vxor.u32 %v1675, 2147483648
  %v1685 = vmul.f32 %v1684, 1.442695
  %v1686 = vpow.pop %v1685
  %v1687 = vadd.f32 %v1686, 1.0
  %v1688 = vrcp.pop %v1687
  %v1689 = vmul.f32 1.0, %v1688
  %v1690 = vtanh.pop %v1676
  %v1691 = vxor.u32 %v1677, 2147483648
  %v1692 = vmul.f32 %v1691, 1.442695
  %v1693 = vpow.pop %v1692
  %v1694 = vadd.f32 %v1693, 1.0
  %v1695 = vrcp.pop %v1694
  %v1696 = vmul.f32 1.0, %v1695
  %v1697 = vmul.f32 %v1689, 0.0
  %v1698 = vmul.f32 %v1683, %v1690
  %v1699 = vadd.f32 %v1697, %v1698
  %v1700 = vtanh.pop %v1699
  %v1701 = vmul.f32 %v1696, %v1700
  %1702 = vst [vmem:[#allocation4] sm:$0x3] %v1701
  %1703 = vst [vmem:[#allocation4 + $0x8] sm:$0x3] %v1699
  %1704 = vst [vmem:[#allocation3] sm:$0x3] %v1701
  %v1705 = vld [vmem:[#allocation2] sm:$0xc]
  %v1706 = vld [vmem:[#allocation2 + $0x8] sm:$0xc]
  %v1707 = vld [vmem:[#allocation2 + $0x10] sm:$0xc]
  %v1708 = vld [vmem:[#allocation2 + $0x18] sm:$0xc]
  %v1709 = vmul.f32 %v1701, 0.5
  %v1710 = vld [vmem:[%s3] sm:$0xff]
  %v1711 = vld [vmem:[%s3 + $0x8] sm:$0xff]
  %v1712 = vld [vmem:[%s3 + $0x10] sm:$0xff]
  %v1713 = vld [vmem:[%s3 + $0x18] sm:$0xff]
  %v1714 = vld [vmem:[%s3 + $0x20] sm:$0xff]
  %v1715 = vld [vmem:[%s3 + $0x28] sm:$0xff]
  %v1716 = vld [vmem:[%s3 + $0x30] sm:$0xff]
  %v1717 = vld [vmem:[%s3 + $0x38] sm:$0xff]
  %v1718 = vld [vmem:[%s3 + $0x40] sm:$0xff]
  %v1719 = vld [vmem:[%s3 + $0x48] sm:$0xff]
  %v1720 = vld [vmem:[%s3 + $0x50] sm:$0xff]
  %v1721 = vld [vmem:[%s3 + $0x58] sm:$0xff]
  %v1722 = vld [vmem:[%s3 + $0x60] sm:$0xff]
  %v1723 = vld [vmem:[%s3 + $0x68] sm:$0xff]
  %v1724 = vld [vmem:[%s3 + $0x70] sm:$0xff]
  %v1725 = vld [vmem:[%s3 + $0x78] sm:$0xff]
  %v1726 = vld [vmem:[%s3 + $0x80] sm:$0xff]
  %v1727 = vld [vmem:[%s3 + $0x88] sm:$0xff]
  %v1728 = vld [vmem:[%s3 + $0x90] sm:$0xff]
  %v1729 = vld [vmem:[%s3 + $0x98] sm:$0xff]
  %v1730 = vld [vmem:[%s3 + $0xa0] sm:$0xff]
  %v1731 = vld [vmem:[%s3 + $0xa8] sm:$0xff]
  %v1732 = vld [vmem:[%s3 + $0xb0] sm:$0xff]
  %v1733 = vld [vmem:[%s3 + $0xb8] sm:$0xff]
  %v1734 = vld [vmem:[%s3 + $0xc0] sm:$0xff]
  %v1735 = vld [vmem:[%s3 + $0xc8] sm:$0xff]
  %v1736 = vld [vmem:[%s3 + $0xd0] sm:$0xff]
  %v1737 = vld [vmem:[%s3 + $0xd8] sm:$0xff]
  %v1738 = vld [vmem:[%s3 + $0xe0] sm:$0xff]
  %v1739 = vld [vmem:[%s3 + $0xe8] sm:$0xff]
  %v1740 = vld [vmem:[%s3 + $0xf0] sm:$0xff]
  %v1741 = vld [vmem:[%s3 + $0xf8] sm:$0xff]
  %v1742 = vld [vmem:[%s3 + $0x100] sm:$0xff]
  %v1743 = vld [vmem:[%s3 + $0x108] sm:$0xff]
  %v1744 = vld [vmem:[%s3 + $0x110] sm:$0xff]
  %v1745 = vld [vmem:[%s3 + $0x118] sm:$0xff]
  %v1746 = vld [vmem:[%s3 + $0x120] sm:$0xff]
  %v1747 = vld [vmem:[%s3 + $0x128] sm:$0xff]
  %v1748 = vld [vmem:[%s3 + $0x130] sm:$0xff]
  %v1749 = vld [vmem:[%s3 + $0x138] sm:$0xff]
  %v1750 = vld [vmem:[%s3 + $0x140] sm:$0xff]
  %v1751 = vld [vmem:[%s3 + $0x148] sm:$0xff]
  %v1752 = vld [vmem:[%s3 + $0x150] sm:$0xff]
  %v1753 = vld [vmem:[%s3 + $0x158] sm:$0xff]
  %v1754 = vld [vmem:[%s3 + $0x160] sm:$0xff]
  %v1755 = vld [vmem:[%s3 + $0x168] sm:$0xff]
  %v1756 = vld [vmem:[%s3 + $0x170] sm:$0xff]
  %v1757 = vld [vmem:[%s3 + $0x178] sm:$0xff]
  %v1758 = vld [vmem:[%s3 + $0x180] sm:$0xff]
  %v1759 = vld [vmem:[%s3 + $0x188] sm:$0xff]
  %v1760 = vld [vmem:[%s3 + $0x190] sm:$0xff]
  %v1761 = vld [vmem:[%s3 + $0x198] sm:$0xff]
  %v1762 = vld [vmem:[%s3 + $0x1a0] sm:$0xff]
  %v1763 = vld [vmem:[%s3 + $0x1a8] sm:$0xff]
  %v1764 = vld [vmem:[%s3 + $0x1b0] sm:$0xff]
  %v1765 = vld [vmem:[%s3 + $0x1b8] sm:$0xff]
  %v1766 = vld [vmem:[%s3 + $0x1c0] sm:$0xff]
  %v1767 = vld [vmem:[%s3 + $0x1c8] sm:$0xff]
  %v1768 = vld [vmem:[%s3 + $0x1d0] sm:$0xff]
  %v1769 = vld [vmem:[%s3 + $0x1d8] sm:$0xff]
  %v1770 = vld [vmem:[%s3 + $0x1e0] sm:$0xff]
  %v1771 = vld [vmem:[%s3 + $0x1e8] sm:$0xff]
  %v1772 = vld [vmem:[%s3 + $0x1f0] sm:$0xff]
  %v1773 = vld [vmem:[%s3 + $0x1f8] sm:$0xff]
  %1774 = vmatprep.subr.mxu0 %v1711
  %1775 = vmatpush1.msra.mxu0 %v1710
  %1776 = vmatprep.subr.mxu0 %v1715
  %1777 = vmatpush1.msra.mxu0 %v1714
  %1778 = vmatprep.subr.mxu0 %v1719
  %1779 = vmatpush1.msra.mxu0 %v1718
  %1780 = vmatprep.subr.mxu0 %v1723
  %1781 = vmatpush1.msra.mxu0 %v1722
  %1782 = vmatprep.subr.mxu0 %v1727
  %1783 = vmatpush1.msra.mxu0 %v1726
  %1784 = vmatprep.subr.mxu0 %v1731
  %1785 = vmatpush1.msra.mxu0 %v1730
  %1786 = vmatprep.subr.mxu0 %v1735
  %1787 = vmatpush1.msra.mxu0 %v1734
  %1788 = vmatprep.subr.mxu0 %v1739
  %1789 = vmatpush1.msra.mxu0 %v1738
  %1790 = vmatprep.subr.mxu0 %v1743
  %1791 = vmatpush1.msra.mxu0 %v1742
  %1792 = vmatprep.subr.mxu0 %v1747
  %1793 = vmatpush1.msra.mxu0 %v1746
  %1794 = vmatprep.subr.mxu0 %v1751
  %1795 = vmatpush1.msra.mxu0 %v1750
  %1796 = vmatprep.subr.mxu0 %v1755
  %1797 = vmatpush1.msra.mxu0 %v1754
  %1798 = vmatprep.subr.mxu0 %v1759
  %1799 = vmatpush1.msra.mxu0 %v1758
  %1800 = vmatprep.subr.mxu0 %v1763
  %1801 = vmatpush1.msra.mxu0 %v1762
  %1802 = vmatprep.subr.mxu0 %v1767
  %1803 = vmatpush1.msra.mxu0 %v1766
  %1804 = vmatprep.subr.mxu0 %v1771
  %1805 = vmatpush1.msra.mxu0 %v1770
  %1806 = vmatprep.subr.mxu0 0.0
  %1807 = vmatpush1.msra.mxu0 0.0
  %1808 = vmatprep.subr.mxu0 0.0
  %1809 = vmatpush1.msra.mxu0 0.0
  %1810 = vmatprep.subr.mxu0 0.0
  %1811 = vmatpush1.msra.mxu0 0.0
  %1812 = vmatprep.subr.mxu0 0.0
  %1813 = vmatpush1.msra.mxu0 0.0
  %1814 = vmatprep.subr.mxu0 0.0
  %1815 = vmatpush1.msra.mxu0 0.0
  %1816 = vmatprep.subr.mxu0 0.0
  %1817 = vmatpush1.msra.mxu0 0.0
  %1818 = vmatprep.subr.mxu0 0.0
  %1819 = vmatpush1.msra.mxu0 0.0
  %1820 = vmatprep.subr.mxu0 0.0
  %1821 = vmatpush1.msra.mxu0 0.0
  %1822 = vmatprep.subr.mxu0 0.0
  %1823 = vmatpush1.msra.mxu0 0.0
  %1824 = vmatprep.subr.mxu0 0.0
  %1825 = vmatpush1.msra.mxu0 0.0
  %1826 = vmatprep.subr.mxu0 0.0
  %1827 = vmatpush1.msra.mxu0 0.0
  %1828 = vmatprep.subr.mxu0 0.0
  %1829 = vmatpush1.msra.mxu0 0.0
  %1830 = vmatprep.subr.mxu0 0.0
  %1831 = vmatpush1.msra.mxu0 0.0
  %1832 = vmatprep.subr.mxu0 0.0
  %1833 = vmatpush1.msra.mxu0 0.0
  %1834 = vmatprep.subr.mxu0 0.0
  %1835 = vmatpush1.msra.mxu0 0.0
  %1836 = vmatprep.subr.mxu0 0.0
  %1837 = vmatpush1.msra.mxu0 0.0
  %1838 = vmatprep.mubr.f32.mxu0 0.0
  %1839 = vmatmul.mubr.f32.gmra.mrb[0].mxu0 %v1709
  %v1840 = vpop.f32.mrb[0].mxu0
  %v1841 = vadd.f32 0.0, %v1840
  %v1842 = vpop.f32.mrb[0].mxu0
  %v1843 = vadd.f32 0.0, %v1842
  %1844 = vdwg.mxu0
  %1845 = vmatprep.subr.mxu0 %v1713
  %1846 = vmatpush1.msra.mxu0 %v1712
  %1847 = vmatprep.subr.mxu0 %v1717
  %1848 = vmatpush1.msra.mxu0 %v1716
  %1849 = vmatprep.subr.mxu0 %v1721
  %1850 = vmatpush1.msra.mxu0 %v1720
  %1851 = vmatprep.subr.mxu0 %v1725
  %1852 = vmatpush1.msra.mxu0 %v1724
  %1853 = vmatprep.subr.mxu0 %v1729
  %1854 = vmatpush1.msra.mxu0 %v1728
  %1855 = vmatprep.subr.mxu0 %v1733
  %1856 = vmatpush1.msra.mxu0 %v1732
  %1857 = vmatprep.subr.mxu0 %v1737
  %1858 = vmatpush1.msra.mxu0 %v1736
  %1859 = vmatprep.subr.mxu0 %v1741
  %1860 = vmatpush1.msra.mxu0 %v1740
  %1861 = vmatprep.subr.mxu0 %v1745
  %1862 = vmatpush1.msra.mxu0 %v1744
  %1863 = vmatprep.subr.mxu0 %v1749
  %1864 = vmatpush1.msra.mxu0 %v1748
  %1865 = vmatprep.subr.mxu0 %v1753
  %1866 = vmatpush1.msra.mxu0 %v1752
  %1867 = vmatprep.subr.mxu0 %v1757
  %1868 = vmatpush1.msra.mxu0 %v1756
  %1869 = vmatprep.subr.mxu0 %v1761
  %1870 = vmatpush1.msra.mxu0 %v1760
  %1871 = vmatprep.subr.mxu0 %v1765
  %1872 = vmatpush1.msra.mxu0 %v1764
  %1873 = vmatprep.subr.mxu0 %v1769
  %1874 = vmatpush1.msra.mxu0 %v1768
  %1875 = vmatprep.subr.mxu0 %v1773
  %1876 = vmatpush1.msra.mxu0 %v1772
  %1877 = vmatprep.subr.mxu0 0.0
  %1878 = vmatpush1.msra.mxu0 0.0
  %1879 = vmatprep.subr.mxu0 0.0
  %1880 = vmatpush1.msra.mxu0 0.0
  %1881 = vmatprep.subr.mxu0 0.0
  %1882 = vmatpush1.msra.mxu0 0.0
  %1883 = vmatprep.subr.mxu0 0.0
  %1884 = vmatpush1.msra.mxu0 0.0
  %1885 = vmatprep.subr.mxu0 0.0
  %1886 = vmatpush1.msra.mxu0 0.0
  %1887 = vmatprep.subr.mxu0 0.0
  %1888 = vmatpush1.msra.mxu0 0.0
  %1889 = vmatprep.subr.mxu0 0.0
  %1890 = vmatpush1.msra.mxu0 0.0
  %1891 = vmatprep.subr.mxu0 0.0
  %1892 = vmatpush1.msra.mxu0 0.0
  %1893 = vmatprep.subr.mxu0 0.0
  %1894 = vmatpush1.msra.mxu0 0.0
  %1895 = vmatprep.subr.mxu0 0.0
  %1896 = vmatpush1.msra.mxu0 0.0
  %1897 = vmatprep.subr.mxu0 0.0
  %1898 = vmatpush1.msra.mxu0 0.0
  %1899 = vmatprep.subr.mxu0 0.0
  %1900 = vmatpush1.msra.mxu0 0.0
  %1901 = vmatprep.subr.mxu0 0.0
  %1902 = vmatpush1.msra.mxu0 0.0
  %1903 = vmatprep.subr.mxu0 0.0
  %1904 = vmatpush1.msra.mxu0 0.0
  %1905 = vmatprep.subr.mxu0 0.0
  %1906 = vmatpush1.msra.mxu0 0.0
  %1907 = vmatprep.subr.mxu0 0.0
  %1908 = vmatpush1.msra.mxu0 0.0
  %1909 = vmatprep.mubr.f32.mxu0 0.0
  %1910 = vmatmul.mubr.f32.gmra.mrb[0].mxu0 %v1709
  %v1911 = vpop.f32.mrb[0].mxu0
  %v1912 = vadd.f32 0.0, %v1911
  %v1913 = vpop.f32.mrb[0].mxu0
  %v1914 = vadd.f32 0.0, %v1913
  %1915 = vdwg.mxu0
  %v1920 = vrot.slane %v1841, 6
  %v1921 = vrot.slane %v1843, 6
  %v1922 = vrot.slane %v1912, 6
  %v1923 = vrot.slane %v1914, 6
  %v1928 = vadd.f32 %v1705, %v1920
  %v1929 = vadd.f32 %v1706, %v1921
  %v1930 = vadd.f32 %v1707, %v1922
  %v1931 = vadd.f32 %v1708, %v1923
  %v1932 = vmul.f32 %v1699, 0.5
  %v1933 = vxor.u32 %v1928, 2147483648
  %v1934 = vmul.f32 %v1933, 1.442695
  %v1935 = vpow.pop %v1934
  %v1936 = vadd.f32 %v1935, 1.0
  %v1937 = vrcp.pop %v1936
  %v1938 = vmul.f32 1.0, %v1937
  %v1939 = vxor.u32 %v1929, 2147483648
  %v1940 = vmul.f32 %v1939, 1.442695
  %v1941 = vpow.pop %v1940
  %v1942 = vadd.f32 %v1941, 1.0
  %v1943 = vrcp.pop %v1942
  %v1944 = vmul.f32 1.0, %v1943
  %v1945 = vtanh.pop %v1930
  %v1946 = vxor.u32 %v1931, 2147483648
  %v1947 = vmul.f32 %v1946, 1.442695
  %v1948 = vpow.pop %v1947
  %v1949 = vadd.f32 %v1948, 1.0
  %v1950 = vrcp.pop %v1949
  %v1951 = vmul.f32 1.0, %v1950
  %v1953 = vrot.slane %v1932, 6
  %v1955 = vmul.f32 %v1944, %v1953
  %v1956 = vmul.f32 %v1938, %v1945
  %v1957 = vadd.f32 %v1955, %v1956
  %v1958 = vtanh.pop %v1957
  %v1959 = vmul.f32 %v1951, %v1958
  %1960 = vst [vmem:[#allocation4] sm:$0xc] %v1959
  %1961 = vst [vmem:[#allocation4 + $0x8] sm:$0xc] %v1957
  %1962 = vst [vmem:[#allocation3] sm:$0xc] %v1959
  %v1963 = vld [vmem:[#allocation2] sm:$0x30]
  %v1964 = vld [vmem:[#allocation2 + $0x8] sm:$0x30]
  %v1965 = vld [vmem:[#allocation2 + $0x10] sm:$0x30]
  %v1966 = vld [vmem:[#allocation2 + $0x18] sm:$0x30]
  %v1967 = vmul.f32 %v1959, 0.5
  %v1968 = vld [vmem:[%s3] sm:$0xff]
  %v1969 = vld [vmem:[%s3 + $0x8] sm:$0xff]
  %v1970 = vld [vmem:[%s3 + $0x10] sm:$0xff]
  %v1971 = vld [vmem:[%s3 + $0x18] sm:$0xff]
  %v1972 = vld [vmem:[%s3 + $0x20] sm:$0xff]
  %v1973 = vld [vmem:[%s3 + $0x28] sm:$0xff]
  %v1974 = vld [vmem:[%s3 + $0x30] sm:$0xff]
  %v1975 = vld [vmem:[%s3 + $0x38] sm:$0xff]
  %v1976 = vld [vmem:[%s3 + $0x40] sm:$0xff]
  %v1977 = vld [vmem:[%s3 + $0x48] sm:$0xff]
  %v1978 = vld [vmem:[%s3 + $0x50] sm:$0xff]
  %v1979 = vld [vmem:[%s3 + $0x58] sm:$0xff]
  %v1980 = vld [vmem:[%s3 + $0x60] sm:$0xff]
  %v1981 = vld [vmem:[%s3 + $0x68] sm:$0xff]
  %v1982 = vld [vmem:[%s3 + $0x70] sm:$0xff]
  %v1983 = vld [vmem:[%s3 + $0x78] sm:$0xff]
  %v1984 = vld [vmem:[%s3 + $0x80] sm:$0xff]
  %v1985 = vld [vmem:[%s3 + $0x88] sm:$0xff]
  %v1986 = vld [vmem:[%s3 + $0x90] sm:$0xff]
  %v1987 = vld [vmem:[%s3 + $0x98] sm:$0xff]
  %v1988 = vld [vmem:[%s3 + $0xa0] sm:$0xff]
  %v1989 = vld [vmem:[%s3 + $0xa8] sm:$0xff]
  %v1990 = vld [vmem:[%s3 + $0xb0] sm:$0xff]
  %v1991 = vld [vmem:[%s3 + $0xb8] sm:$0xff]
  %v1992 = vld [vmem:[%s3 + $0xc0] sm:$0xff]
  %v1993 = vld [vmem:[%s3 + $0xc8] sm:$0xff]
  %v1994 = vld [vmem:[%s3 + $0xd0] sm:$0xff]
  %v1995 = vld [vmem:[%s3 + $0xd8] sm:$0xff]
  %v1996 = vld [vmem:[%s3 + $0xe0] sm:$0xff]
  %v1997 = vld [vmem:[%s3 + $0xe8] sm:$0xff]
  %v1998 = vld [vmem:[%s3 + $0xf0] sm:$0xff]
  %v1999 = vld [vmem:[%s3 + $0xf8] sm:$0xff]
  %v2000 = vld [vmem:[%s3 + $0x100] sm:$0xff]
  %v2001 = vld [vmem:[%s3 + $0x108] sm:$0xff]
  %v2002 = vld [vmem:[%s3 + $0x110] sm:$0xff]
  %v2003 = vld [vmem:[%s3 + $0x118] sm:$0xff]
  %v2004 = vld [vmem:[%s3 + $0x120] sm:$0xff]
  %v2005 = vld [vmem:[%s3 + $0x128] sm:$0xff]
  %v2006 = vld [vmem:[%s3 + $0x130] sm:$0xff]
  %v2007 = vld [vmem:[%s3 + $0x138] sm:$0xff]
  %v2008 = vld [vmem:[%s3 + $0x140] sm:$0xff]
  %v2009 = vld [vmem:[%s3 + $0x148] sm:$0xff]
  %v2010 = vld [vmem:[%s3 + $0x150] sm:$0xff]
  %v2011 = vld [vmem:[%s3 + $0x158] sm:$0xff]
  %v2012 = vld [vmem:[%s3 + $0x160] sm:$0xff]
  %v2013 = vld [vmem:[%s3 + $0x168] sm:$0xff]
  %v2014 = vld [vmem:[%s3 + $0x170] sm:$0xff]
  %v2015 = vld [vmem:[%s3 + $0x178] sm:$0xff]
  %v2016 = vld [vmem:[%s3 + $0x180] sm:$0xff]
  %v2017 = vld [vmem:[%s3 + $0x188] sm:$0xff]
  %v2018 = vld [vmem:[%s3 + $0x190] sm:$0xff]
  %v2019 = vld [vmem:[%s3 + $0x198] sm:$0xff]
  %v2020 = vld [vmem:[%s3 + $0x1a0] sm:$0xff]
  %v2021 = vld [vmem:[%s3 + $0x1a8] sm:$0xff]
  %v2022 = vld [vmem:[%s3 + $0x1b0] sm:$0xff]
  %v2023 = vld [vmem:[%s3 + $0x1b8] sm:$0xff]
  %v2024 = vld [vmem:[%s3 + $0x1c0] sm:$0xff]
  %v2025 = vld [vmem:[%s3 + $0x1c8] sm:$0xff]
  %v2026 = vld [vmem:[%s3 + $0x1d0] sm:$0xff]
  %v2027 = vld [vmem:[%s3 + $0x1d8] sm:$0xff]
  %v2028 = vld [vmem:[%s3 + $0x1e0] sm:$0xff]
  %v2029 = vld [vmem:[%s3 + $0x1e8] sm:$0xff]
  %v2030 = vld [vmem:[%s3 + $0x1f0] sm:$0xff]
  %v2031 = vld [vmem:[%s3 + $0x1f8] sm:$0xff]
  %v2033 = vrot.slane %v1967, 2
  %2035 = vmatprep.subr.mxu0 %v1969
  %2036 = vmatpush1.msra.mxu0 %v1968
  %2037 = vmatprep.subr.mxu0 %v1973
  %2038 = vmatpush1.msra.mxu0 %v1972
  %2039 = vmatprep.subr.mxu0 %v1977
  %2040 = vmatpush1.msra.mxu0 %v1976
  %2041 = vmatprep.subr.mxu0 %v1981
  %2042 = vmatpush1.msra.mxu0 %v1980
  %2043 = vmatprep.subr.mxu0 %v1985
  %2044 = vmatpush1.msra.mxu0 %v1984
  %2045 = vmatprep.subr.mxu0 %v1989
  %2046 = vmatpush1.msra.mxu0 %v1988
  %2047 = vmatprep.subr.mxu0 %v1993
  %2048 = vmatpush1.msra.mxu0 %v1992
  %2049 = vmatprep.subr.mxu0 %v1997
  %2050 = vmatpush1.msra.mxu0 %v1996
  %2051 = vmatprep.subr.mxu0 %v2001
  %2052 = vmatpush1.msra.mxu0 %v2000
  %2053 = vmatprep.subr.mxu0 %v2005
  %2054 = vmatpush1.msra.mxu0 %v2004
  %2055 = vmatprep.subr.mxu0 %v2009
  %2056 = vmatpush1.msra.mxu0 %v2008
  %2057 = vmatprep.subr.mxu0 %v2013
  %2058 = vmatpush1.msra.mxu0 %v2012
  %2059 = vmatprep.subr.mxu0 %v2017
  %2060 = vmatpush1.msra.mxu0 %v2016
  %2061 = vmatprep.subr.mxu0 %v2021
  %2062 = vmatpush1.msra.mxu0 %v2020
  %2063 = vmatprep.subr.mxu0 %v2025
  %2064 = vmatpush1.msra.mxu0 %v2024
  %2065 = vmatprep.subr.mxu0 %v2029
  %2066 = vmatpush1.msra.mxu0 %v2028
  %2067 = vmatprep.subr.mxu0 0.0
  %2068 = vmatpush1.msra.mxu0 0.0
  %2069 = vmatprep.subr.mxu0 0.0
  %2070 = vmatpush1.msra.mxu0 0.0
  %2071 = vmatprep.subr.mxu0 0.0
  %2072 = vmatpush1.msra.mxu0 0.0
  %2073 = vmatprep.subr.mxu0 0.0
  %2074 = vmatpush1.msra.mxu0 0.0
  %2075 = vmatprep.subr.mxu0 0.0
  %2076 = vmatpush1.msra.mxu0 0.0
  %2077 = vmatprep.subr.mxu0 0.0
  %2078 = vmatpush1.msra.mxu0 0.0
  %2079 = vmatprep.subr.mxu0 0.0
  %2080 = vmatpush1.msra.mxu0 0.0
  %2081 = vmatprep.subr.mxu0 0.0
  %2082 = vmatpush1.msra.mxu0 0.0
  %2083 = vmatprep.subr.mxu0 0.0
  %2084 = vmatpush1.msra.mxu0 0.0
  %2085 = vmatprep.subr.mxu0 0.0
  %2086 = vmatpush1.msra.mxu0 0.0
  %2087 = vmatprep.subr.mxu0 0.0
  %2088 = vmatpush1.msra.mxu0 0.0
  %2089 = vmatprep.subr.mxu0 0.0
  %2090 = vmatpush1.msra.mxu0 0.0
  %2091 = vmatprep.subr.mxu0 0.0
  %2092 = vmatpush1.msra.mxu0 0.0
  %2093 = vmatprep.subr.mxu0 0.0
  %2094 = vmatpush1.msra.mxu0 0.0
  %2095 = vmatprep.subr.mxu0 0.0
  %2096 = vmatpush1.msra.mxu0 0.0
  %2097 = vmatprep.subr.mxu0 0.0
  %2098 = vmatpush1.msra.mxu0 0.0
  %2099 = vmatprep.mubr.f32.mxu0 0.0
  %2100 = vmatmul.mubr.f32.gmra.mrb[0].mxu0 %v2033
  %v2101 = vpop.f32.mrb[0].mxu0
  %v2102 = vadd.f32 0.0, %v2101
  %v2103 = vpop.f32.mrb[0].mxu0
  %v2104 = vadd.f32 0.0, %v2103
  %2105 = vdwg.mxu0
  %2106 = vmatprep.subr.mxu0 %v1971
  %2107 = vmatpush1.msra.mxu0 %v1970
  %2108 = vmatprep.subr.mxu0 %v1975
  %2109 = vmatpush1.msra.mxu0 %v1974
  %2110 = vmatprep.subr.mxu0 %v1979
  %2111 = vmatpush1.msra.mxu0 %v1978
  %2112 = vmatprep.subr.mxu0 %v1983
  %2113 = vmatpush1.msra.mxu0 %v1982
  %2114 = vmatprep.subr.mxu0 %v1987
  %2115 = vmatpush1.msra.mxu0 %v1986
  %2116 = vmatprep.subr.mxu0 %v1991
  %2117 = vmatpush1.msra.mxu0 %v1990
  %2118 = vmatprep.subr.mxu0 %v1995
  %2119 = vmatpush1.msra.mxu0 %v1994
  %2120 = vmatprep.subr.mxu0 %v1999
  %2121 = vmatpush1.msra.mxu0 %v1998
  %2122 = vmatprep.subr.mxu0 %v2003
  %2123 = vmatpush1.msra.mxu0 %v2002
  %2124 = vmatprep.subr.mxu0 %v2007
  %2125 = vmatpush1.msra.mxu0 %v2006
  %2126 = vmatprep.subr.mxu0 %v2011
  %2127 = vmatpush1.msra.mxu0 %v2010
  %2128 = vmatprep.subr.mxu0 %v2015
  %2129 = vmatpush1.msra.mxu0 %v2014
  %2130 = vmatprep.subr.mxu0 %v2019
  %2131 = vmatpush1.msra.mxu0 %v2018
  %2132 = vmatprep.subr.mxu0 %v2023
  %2133 = vmatpush1.msra.mxu0 %v2022
  %2134 = vmatprep.subr.mxu0 %v2027
  %2135 = vmatpush1.msra.mxu0 %v2026
  %2136 = vmatprep.subr.mxu0 %v2031
  %2137 = vmatpush1.msra.mxu0 %v2030
  %2138 = vmatprep.subr.mxu0 0.0
  %2139 = vmatpush1.msra.mxu0 0.0
  %2140 = vmatprep.subr.mxu0 0.0
  %2141 = vmatpush1.msra.mxu0 0.0
  %2142 = vmatprep.subr.mxu0 0.0
  %2143 = vmatpush1.msra.mxu0 0.0
  %2144 = vmatprep.subr.mxu0 0.0
  %2145 = vmatpush1.msra.mxu0 0.0
  %2146 = vmatprep.subr.mxu0 0.0
  %2147 = vmatpush1.msra.mxu0 0.0
  %2148 = vmatprep.subr.mxu0 0.0
  %2149 = vmatpush1.msra.mxu0 0.0
  %2150 = vmatprep.subr.mxu0 0.0
  %2151 = vmatpush1.msra.mxu0 0.0
  %2152 = vmatprep.subr.mxu0 0.0
  %2153 = vmatpush1.msra.mxu0 0.0
  %2154 = vmatprep.subr.mxu0 0.0
  %2155 = vmatpush1.msra.mxu0 0.0
  %2156 = vmatprep.subr.mxu0 0.0
  %2157 = vmatpush1.msra.mxu0 0.0
  %2158 = vmatprep.subr.mxu0 0.0
  %2159 = vmatpush1.msra.mxu0 0.0
  %2160 = vmatprep.subr.mxu0 0.0
  %2161 = vmatpush1.msra.mxu0 0.0
  %2162 = vmatprep.subr.mxu0 0.0
  %2163 = vmatpush1.msra.mxu0 0.0
  %2164 = vmatprep.subr.mxu0 0.0
  %2165 = vmatpush1.msra.mxu0 0.0
  %2166 = vmatprep.subr.mxu0 0.0
  %2167 = vmatpush1.msra.mxu0 0.0
  %2168 = vmatprep.subr.mxu0 0.0
  %2169 = vmatpush1.msra.mxu0 0.0
  %2170 = vmatprep.mubr.f32.mxu0 0.0
  %2171 = vmatmul.mubr.f32.gmra.mrb[0].mxu0 %v2033
  %v2172 = vpop.f32.mrb[0].mxu0
  %v2173 = vadd.f32 0.0, %v2172
  %v2174 = vpop.f32.mrb[0].mxu0
  %v2175 = vadd.f32 0.0, %v2174
  %2176 = vdwg.mxu0
  %v2181 = vrot.slane %v2102, 4
  %v2182 = vrot.slane %v2104, 4
  %v2183 = vrot.slane %v2173, 4
  %v2184 = vrot.slane %v2175, 4
  %v2189 = vadd.f32 %v1963, %v2181
  %v2190 = vadd.f32 %v1964, %v2182
  %v2191 = vadd.f32 %v1965, %v2183
  %v2192 = vadd.f32 %v1966, %v2184
  %v2193 = vmul.f32 %v1957, 0.5
  %v2194 = vxor.u32 %v2189, 2147483648
  %v2195 = vmul.f32 %v2194, 1.442695
  %v2196 = vpow.pop %v2195
  %v2197 = vadd.f32 %v2196, 1.0
  %v2198 = vrcp.pop %v2197
  %v2199 = vmul.f32 1.0, %v2198
  %v2200 = vxor.u32 %v2190, 2147483648
  %v2201 = vmul.f32 %v2200, 1.442695
  %v2202 = vpow.pop %v2201
  %v2203 = vadd.f32 %v2202, 1.0
  %v2204 = vrcp.pop %v2203
  %v2205 = vmul.f32 1.0, %v2204
  %v2206 = vtanh.pop %v2191
  %v2207 = vxor.u32 %v2192, 2147483648
  %v2208 = vmul.f32 %v2207, 1.442695
  %v2209 = vpow.pop %v2208
  %v2210 = vadd.f32 %v2209, 1.0
  %v2211 = vrcp.pop %v2210
  %v2212 = vmul.f32 1.0, %v2211
  %v2214 = vrot.slane %v2193, 6
  %v2216 = vmul.f32 %v2205, %v2214
  %v2217 = vmul.f32 %v2199, %v2206
  %v2218 = vadd.f32 %v2216, %v2217
  %v2219 = vtanh.pop %v2218
  %v2220 = vmul.f32 %v2212, %v2219
  %2221 = vst [vmem:[#allocation4] sm:$0x30] %v2220
  %2222 = vst [vmem:[#allocation4 + $0x8] sm:$0x30] %v2218
  %2223 = vst [vmem:[#allocation3] sm:$0x30] %v2220
  %v2224 = vld [vmem:[#allocation2] sm:$0xc0]
  %v2225 = vld [vmem:[#allocation2 + $0x8] sm:$0xc0]
  %v2226 = vld [vmem:[#allocation2 + $0x10] sm:$0xc0]
  %v2227 = vld [vmem:[#allocation2 + $0x18] sm:$0xc0]
  %v2228 = vmul.f32 %v2220, 0.5
  %v2229 = vld [vmem:[%s3] sm:$0xff]
  %v2230 = vld [vmem:[%s3 + $0x8] sm:$0xff]
  %v2231 = vld [vmem:[%s3 + $0x10] sm:$0xff]
  %v2232 = vld [vmem:[%s3 + $0x18] sm:$0xff]
  %v2233 = vld [vmem:[%s3 + $0x20] sm:$0xff]
  %v2234 = vld [vmem:[%s3 + $0x28] sm:$0xff]
  %v2235 = vld [vmem:[%s3 + $0x30] sm:$0xff]
  %v2236 = vld [vmem:[%s3 + $0x38] sm:$0xff]
  %v2237 = vld [vmem:[%s3 + $0x40] sm:$0xff]
  %v2238 = vld [vmem:[%s3 + $0x48] sm:$0xff]
  %v2239 = vld [vmem:[%s3 + $0x50] sm:$0xff]
  %v2240 = vld [vmem:[%s3 + $0x58] sm:$0xff]
  %v2241 = vld [vmem:[%s3 + $0x60] sm:$0xff]
  %v2242 = vld [vmem:[%s3 + $0x68] sm:$0xff]
  %v2243 = vld [vmem:[%s3 + $0x70] sm:$0xff]
  %v2244 = vld [vmem:[%s3 + $0x78] sm:$0xff]
  %v2245 = vld [vmem:[%s3 + $0x80] sm:$0xff]
  %v2246 = vld [vmem:[%s3 + $0x88] sm:$0xff]
  %v2247 = vld [vmem:[%s3 + $0x90] sm:$0xff]
  %v2248 = vld [vmem:[%s3 + $0x98] sm:$0xff]
  %v2249 = vld [vmem:[%s3 + $0xa0] sm:$0xff]
  %v2250 = vld [vmem:[%s3 + $0xa8] sm:$0xff]
  %v2251 = vld [vmem:[%s3 + $0xb0] sm:$0xff]
  %v2252 = vld [vmem:[%s3 + $0xb8] sm:$0xff]
  %v2253 = vld [vmem:[%s3 + $0xc0] sm:$0xff]
  %v2254 = vld [vmem:[%s3 + $0xc8] sm:$0xff]
  %v2255 = vld [vmem:[%s3 + $0xd0] sm:$0xff]
  %v2256 = vld [vmem:[%s3 + $0xd8] sm:$0xff]
  %v2257 = vld [vmem:[%s3 + $0xe0] sm:$0xff]
  %v2258 = vld [vmem:[%s3 + $0xe8] sm:$0xff]
  %v2259 = vld [vmem:[%s3 + $0xf0] sm:$0xff]
  %v2260 = vld [vmem:[%s3 + $0xf8] sm:$0xff]
  %v2261 = vld [vmem:[%s3 + $0x100] sm:$0xff]
  %v2262 = vld [vmem:[%s3 + $0x108] sm:$0xff]
  %v2263 = vld [vmem:[%s3 + $0x110] sm:$0xff]
  %v2264 = vld [vmem:[%s3 + $0x118] sm:$0xff]
  %v2265 = vld [vmem:[%s3 + $0x120] sm:$0xff]
  %v2266 = vld [vmem:[%s3 + $0x128] sm:$0xff]
  %v2267 = vld [vmem:[%s3 + $0x130] sm:$0xff]
  %v2268 = vld [vmem:[%s3 + $0x138] sm:$0xff]
  %v2269 = vld [vmem:[%s3 + $0x140] sm:$0xff]
  %v2270 = vld [vmem:[%s3 + $0x148] sm:$0xff]
  %v2271 = vld [vmem:[%s3 + $0x150] sm:$0xff]
  %v2272 = vld [vmem:[%s3 + $0x158] sm:$0xff]
  %v2273 = vld [vmem:[%s3 + $0x160] sm:$0xff]
  %v2274 = vld [vmem:[%s3 + $0x168] sm:$0xff]
  %v2275 = vld [vmem:[%s3 + $0x170] sm:$0xff]
  %v2276 = vld [vmem:[%s3 + $0x178] sm:$0xff]
  %v2277 = vld [vmem:[%s3 + $0x180] sm:$0xff]
  %v2278 = vld [vmem:[%s3 + $0x188] sm:$0xff]
  %v2279 = vld [vmem:[%s3 + $0x190] sm:$0xff]
  %v2280 = vld [vmem:[%s3 + $0x198] sm:$0xff]
  %v2281 = vld [vmem:[%s3 + $0x1a0] sm:$0xff]
  %v2282 = vld [vmem:[%s3 + $0x1a8] sm:$0xff]
  %v2283 = vld [vmem:[%s3 + $0x1b0] sm:$0xff]
  %v2284 = vld [vmem:[%s3 + $0x1b8] sm:$0xff]
  %v2285 = vld [vmem:[%s3 + $0x1c0] sm:$0xff]
  %v2286 = vld [vmem:[%s3 + $0x1c8] sm:$0xff]
  %v2287 = vld [vmem:[%s3 + $0x1d0] sm:$0xff]
  %v2288 = vld [vmem:[%s3 + $0x1d8] sm:$0xff]
  %v2289 = vld [vmem:[%s3 + $0x1e0] sm:$0xff]
  %v2290 = vld [vmem:[%s3 + $0x1e8] sm:$0xff]
  %v2291 = vld [vmem:[%s3 + $0x1f0] sm:$0xff]
  %v2292 = vld [vmem:[%s3 + $0x1f8] sm:$0xff]
  %v2294 = vrot.slane %v2228, 4
  %2296 = vmatprep.subr.mxu0 %v2230
  %2297 = vmatpush1.msra.mxu0 %v2229
  %2298 = vmatprep.subr.mxu0 %v2234
  %2299 = vmatpush1.msra.mxu0 %v2233
  %2300 = vmatprep.subr.mxu0 %v2238
  %2301 = vmatpush1.msra.mxu0 %v2237
  %2302 = vmatprep.subr.mxu0 %v2242
  %2303 = vmatpush1.msra.mxu0 %v2241
  %2304 = vmatprep.subr.mxu0 %v2246
  %2305 = vmatpush1.msra.mxu0 %v2245
  %2306 = vmatprep.subr.mxu0 %v2250
  %2307 = vmatpush1.msra.mxu0 %v2249
  %2308 = vmatprep.subr.mxu0 %v2254
  %2309 = vmatpush1.msra.mxu0 %v2253
  %2310 = vmatprep.subr.mxu0 %v2258
  %2311 = vmatpush1.msra.mxu0 %v2257
  %2312 = vmatprep.subr.mxu0 %v2262
  %2313 = vmatpush1.msra.mxu0 %v2261
  %2314 = vmatprep.subr.mxu0 %v2266
  %2315 = vmatpush1.msra.mxu0 %v2265
  %2316 = vmatprep.subr.mxu0 %v2270
  %2317 = vmatpush1.msra.mxu0 %v2269
  %2318 = vmatprep.subr.mxu0 %v2274
  %2319 = vmatpush1.msra.mxu0 %v2273
  %2320 = vmatprep.subr.mxu0 %v2278
  %2321 = vmatpush1.msra.mxu0 %v2277
  %2322 = vmatprep.subr.mxu0 %v2282
  %2323 = vmatpush1.msra.mxu0 %v2281
  %2324 = vmatprep.subr.mxu0 %v2286
  %2325 = vmatpush1.msra.mxu0 %v2285
  %2326 = vmatprep.subr.mxu0 %v2290
  %2327 = vmatpush1.msra.mxu0 %v2289
  %2328 = vmatprep.subr.mxu0 0.0
  %2329 = vmatpush1.msra.mxu0 0.0
  %2330 = vmatprep.subr.mxu0 0.0
  %2331 = vmatpush1.msra.mxu0 0.0
  %2332 = vmatprep.subr.mxu0 0.0
  %2333 = vmatpush1.msra.mxu0 0.0
  %2334 = vmatprep.subr.mxu0 0.0
  %2335 = vmatpush1.msra.mxu0 0.0
  %2336 = vmatprep.subr.mxu0 0.0
  %2337 = vmatpush1.msra.mxu0 0.0
  %2338 = vmatprep.subr.mxu0 0.0
  %2339 = vmatpush1.msra.mxu0 0.0
  %2340 = vmatprep.subr.mxu0 0.0
  %2341 = vmatpush1.msra.mxu0 0.0
  %2342 = vmatprep.subr.mxu0 0.0
  %2343 = vmatpush1.msra.mxu0 0.0
  %2344 = vmatprep.subr.mxu0 0.0
  %2345 = vmatpush1.msra.mxu0 0.0
  %2346 = vmatprep.subr.mxu0 0.0
  %2347 = vmatpush1.msra.mxu0 0.0
  %2348 = vmatprep.subr.mxu0 0.0
  %2349 = vmatpush1.msra.mxu0 0.0
  %2350 = vmatprep.subr.mxu0 0.0
  %2351 = vmatpush1.msra.mxu0 0.0
  %2352 = vmatprep.subr.mxu0 0.0
  %2353 = vmatpush1.msra.mxu0 0.0
  %2354 = vmatprep.subr.mxu0 0.0
  %2355 = vmatpush1.msra.mxu0 0.0
  %2356 = vmatprep.subr.mxu0 0.0
  %2357 = vmatpush1.msra.mxu0 0.0
  %2358 = vmatprep.subr.mxu0 0.0
  %2359 = vmatpush1.msra.mxu0 0.0
  %2360 = vmatprep.mubr.f32.mxu0 0.0
  %2361 = vmatmul.mubr.f32.gmra.mrb[0].mxu0 %v2294
  %v2362 = vpop.f32.mrb[0].mxu0
  %v2363 = vadd.f32 0.0, %v2362
  %v2364 = vpop.f32.mrb[0].mxu0
  %v2365 = vadd.f32 0.0, %v2364
  %2366 = vdwg.mxu0
  %2367 = vmatprep.subr.mxu0 %v2232
  %2368 = vmatpush1.msra.mxu0 %v2231
  %2369 = vmatprep.subr.mxu0 %v2236
  %2370 = vmatpush1.msra.mxu0 %v2235
  %2371 = vmatprep.subr.mxu0 %v2240
  %2372 = vmatpush1.msra.mxu0 %v2239
  %2373 = vmatprep.subr.mxu0 %v2244
  %2374 = vmatpush1.msra.mxu0 %v2243
  %2375 = vmatprep.subr.mxu0 %v2248
  %2376 = vmatpush1.msra.mxu0 %v2247
  %2377 = vmatprep.subr.mxu0 %v2252
  %2378 = vmatpush1.msra.mxu0 %v2251
  %2379 = vmatprep.subr.mxu0 %v2256
  %2380 = vmatpush1.msra.mxu0 %v2255
  %2381 = vmatprep.subr.mxu0 %v2260
  %2382 = vmatpush1.msra.mxu0 %v2259
  %2383 = vmatprep.subr.mxu0 %v2264
  %2384 = vmatpush1.msra.mxu0 %v2263
  %2385 = vmatprep.subr.mxu0 %v2268
  %2386 = vmatpush1.msra.mxu0 %v2267
  %2387 = vmatprep.subr.mxu0 %v2272
  %2388 = vmatpush1.msra.mxu0 %v2271
  %2389 = vmatprep.subr.mxu0 %v2276
  %2390 = vmatpush1.msra.mxu0 %v2275
  %2391 = vmatprep.subr.mxu0 %v2280
  %2392 = vmatpush1.msra.mxu0 %v2279
  %2393 = vmatprep.subr.mxu0 %v2284
  %2394 = vmatpush1.msra.mxu0 %v2283
  %2395 = vmatprep.subr.mxu0 %v2288
  %2396 = vmatpush1.msra.mxu0 %v2287
  %2397 = vmatprep.subr.mxu0 %v2292
  %2398 = vmatpush1.msra.mxu0 %v2291
  %2399 = vmatprep.subr.mxu0 0.0
  %2400 = vmatpush1.msra.mxu0 0.0
  %2401 = vmatprep.subr.mxu0 0.0
  %2402 = vmatpush1.msra.mxu0 0.0
  %2403 = vmatprep.subr.mxu0 0.0
  %2404 = vmatpush1.msra.mxu0 0.0
  %2405 = vmatprep.subr.mxu0 0.0
  %2406 = vmatpush1.msra.mxu0 0.0
  %2407 = vmatprep.subr.mxu0 0.0
  %2408 = vmatpush1.msra.mxu0 0.0
  %2409 = vmatprep.subr.mxu0 0.0
  %2410 = vmatpush1.msra.mxu0 0.0
  %2411 = vmatprep.subr.mxu0 0.0
  %2412 = vmatpush1.msra.mxu0 0.0
  %2413 = vmatprep.subr.mxu0 0.0
  %2414 = vmatpush1.msra.mxu0 0.0
  %2415 = vmatprep.subr.mxu0 0.0
  %2416 = vmatpush1.msra.mxu0 0.0
  %2417 = vmatprep.subr.mxu0 0.0
  %2418 = vmatpush1.msra.mxu0 0.0
  %2419 = vmatprep.subr.mxu0 0.0
  %2420 = vmatpush1.msra.mxu0 0.0
  %2421 = vmatprep.subr.mxu0 0.0
  %2422 = vmatpush1.msra.mxu0 0.0
  %2423 = vmatprep.subr.mxu0 0.0
  %2424 = vmatpush1.msra.mxu0 0.0
  %2425 = vmatprep.subr.mxu0 0.0
  %2426 = vmatpush1.msra.mxu0 0.0
  %2427 = vmatprep.subr.mxu0 0.0
  %2428 = vmatpush1.msra.mxu0 0.0
  %2429 = vmatprep.subr.mxu0 0.0
  %2430 = vmatpush1.msra.mxu0 0.0
  %2431 = vmatprep.mubr.f32.mxu0 0.0
  %2432 = vmatmul.mubr.f32.gmra.mrb[0].mxu0 %v2294
  %v2433 = vpop.f32.mrb[0].mxu0
  %v2434 = vadd.f32 0.0, %v2433
  %v2435 = vpop.f32.mrb[0].mxu0
  %v2436 = vadd.f32 0.0, %v2435
  %2437 = vdwg.mxu0
  %v2442 = vrot.slane %v2363, 2
  %v2443 = vrot.slane %v2365, 2
  %v2444 = vrot.slane %v2434, 2
  %v2445 = vrot.slane %v2436, 2
  %v2450 = vadd.f32 %v2224, %v2442
  %v2451 = vadd.f32 %v2225, %v2443
  %v2452 = vadd.f32 %v2226, %v2444
  %v2453 = vadd.f32 %v2227, %v2445
  %v2454 = vmul.f32 %v2218, 0.5
  %v2455 = vxor.u32 %v2450, 2147483648
  %v2456 = vmul.f32 %v2455, 1.442695
  %v2457 = vpow.pop %v2456
  %v2458 = vadd.f32 %v2457, 1.0
  %v2459 = vrcp.pop %v2458
  %v2460 = vmul.f32 1.0, %v2459
  %v2461 = vxor.u32 %v2451, 2147483648
  %v2462 = vmul.f32 %v2461, 1.442695
  %v2463 = vpow.pop %v2462
  %v2464 = vadd.f32 %v2463, 1.0
  %v2465 = vrcp.pop %v2464
  %v2466 = vmul.f32 1.0, %v2465
  %v2467 = vtanh.pop %v2452
  %v2468 = vxor.u32 %v2453, 2147483648
  %v2469 = vmul.f32 %v2468, 1.442695
  %v2470 = vpow.pop %v2469
  %v2471 = vadd.f32 %v2470, 1.0
  %v2472 = vrcp.pop %v2471
  %v2473 = vmul.f32 1.0, %v2472
  %v2475 = vrot.slane %v2454, 6
  %v2477 = vmul.f32 %v2466, %v2475
  %v2478 = vmul.f32 %v2460, %v2467
  %v2479 = vadd.f32 %v2477, %v2478
  %v2480 = vtanh.pop %v2479
  %v2481 = vmul.f32 %v2473, %v2480
  %2482 = vst [vmem:[#allocation4] sm:$0xc0] %v2481
  %2483 = vst [vmem:[#allocation4 + $0x8] sm:$0xc0] %v2479
  %2484 = vst [vmem:[#allocation3] sm:$0xc0] %v2481
  %v2485 = vld [vmem:[#allocation2 + $0x20] sm:$0x3]
  %v2486 = vld [vmem:[#allocation2 + $0x28] sm:$0x3]
  %v2487 = vld [vmem:[#allocation2 + $0x30] sm:$0x3]
  %v2488 = vld [vmem:[#allocation2 + $0x38] sm:$0x3]
  %v2489 = vmul.f32 %v2481, 0.5
  %v2490 = vld [vmem:[%s3] sm:$0xff]
  %v2491 = vld [vmem:[%s3 + $0x8] sm:$0xff]
  %v2492 = vld [vmem:[%s3 + $0x10] sm:$0xff]
  %v2493 = vld [vmem:[%s3 + $0x18] sm:$0xff]
  %v2494 = vld [vmem:[%s3 + $0x20] sm:$0xff]
  %v2495 = vld [vmem:[%s3 + $0x28] sm:$0xff]
  %v2496 = vld [vmem:[%s3 + $0x30] sm:$0xff]
  %v2497 = vld [vmem:[%s3 + $0x38] sm:$0xff]
  %v2498 = vld [vmem:[%s3 + $0x40] sm:$0xff]
  %v2499 = vld [vmem:[%s3 + $0x48] sm:$0xff]
  %v2500 = vld [vmem:[%s3 + $0x50] sm:$0xff]
  %v2501 = vld [vmem:[%s3 + $0x58] sm:$0xff]
  %v2502 = vld [vmem:[%s3 + $0x60] sm:$0xff]
  %v2503 = vld [vmem:[%s3 + $0x68] sm:$0xff]
  %v2504 = vld [vmem:[%s3 + $0x70] sm:$0xff]
  %v2505 = vld [vmem:[%s3 + $0x78] sm:$0xff]
  %v2506 = vld [vmem:[%s3 + $0x80] sm:$0xff]
  %v2507 = vld [vmem:[%s3 + $0x88] sm:$0xff]
  %v2508 = vld [vmem:[%s3 + $0x90] sm:$0xff]
  %v2509 = vld [vmem:[%s3 + $0x98] sm:$0xff]
  %v2510 = vld [vmem:[%s3 + $0xa0] sm:$0xff]
  %v2511 = vld [vmem:[%s3 + $0xa8] sm:$0xff]
  %v2512 = vld [vmem:[%s3 + $0xb0] sm:$0xff]
  %v2513 = vld [vmem:[%s3 + $0xb8] sm:$0xff]
  %v2514 = vld [vmem:[%s3 + $0xc0] sm:$0xff]
  %v2515 = vld [vmem:[%s3 + $0xc8] sm:$0xff]
  %v2516 = vld [vmem:[%s3 + $0xd0] sm:$0xff]
  %v2517 = vld [vmem:[%s3 + $0xd8] sm:$0xff]
  %v2518 = vld [vmem:[%s3 + $0xe0] sm:$0xff]
  %v2519 = vld [vmem:[%s3 + $0xe8] sm:$0xff]
  %v2520 = vld [vmem:[%s3 + $0xf0] sm:$0xff]
  %v2521 = vld [vmem:[%s3 + $0xf8] sm:$0xff]
  %v2522 = vld [vmem:[%s3 + $0x100] sm:$0xff]
  %v2523 = vld [vmem:[%s3 + $0x108] sm:$0xff]
  %v2524 = vld [vmem:[%s3 + $0x110] sm:$0xff]
  %v2525 = vld [vmem:[%s3 + $0x118] sm:$0xff]
  %v2526 = vld [vmem:[%s3 + $0x120] sm:$0xff]
  %v2527 = vld [vmem:[%s3 + $0x128] sm:$0xff]
  %v2528 = vld [vmem:[%s3 + $0x130] sm:$0xff]
  %v2529 = vld [vmem:[%s3 + $0x138] sm:$0xff]
  %v2530 = vld [vmem:[%s3 + $0x140] sm:$0xff]
  %v2531 = vld [vmem:[%s3 + $0x148] sm:$0xff]
  %v2532 = vld [vmem:[%s3 + $0x150] sm:$0xff]
  %v2533 = vld [vmem:[%s3 + $0x158] sm:$0xff]
  %v2534 = vld [vmem:[%s3 + $0x160] sm:$0xff]
  %v2535 = vld [vmem:[%s3 + $0x168] sm:$0xff]
  %v2536 = vld [vmem:[%s3 + $0x170] sm:$0xff]
  %v2537 = vld [vmem:[%s3 + $0x178] sm:$0xff]
  %v2538 = vld [vmem:[%s3 + $0x180] sm:$0xff]
  %v2539 = vld [vmem:[%s3 + $0x188] sm:$0xff]
  %v2540 = vld [vmem:[%s3 + $0x190] sm:$0xff]
  %v2541 = vld [vmem:[%s3 + $0x198] sm:$0xff]
  %v2542 = vld [vmem:[%s3 + $0x1a0] sm:$0xff]
  %v2543 = vld [vmem:[%s3 + $0x1a8] sm:$0xff]
  %v2544 = vld [vmem:[%s3 + $0x1b0] sm:$0xff]
  %v2545 = vld [vmem:[%s3 + $0x1b8] sm:$0xff]
  %v2546 = vld [vmem:[%s3 + $0x1c0] sm:$0xff]
  %v2547 = vld [vmem:[%s3 + $0x1c8] sm:$0xff]
  %v2548 = vld [vmem:[%s3 + $0x1d0] sm:$0xff]
  %v2549 = vld [vmem:[%s3 + $0x1d8] sm:$0xff]
  %v2550 = vld [vmem:[%s3 + $0x1e0] sm:$0xff]
  %v2551 = vld [vmem:[%s3 + $0x1e8] sm:$0xff]
  %v2552 = vld [vmem:[%s3 + $0x1f0] sm:$0xff]
  %v2553 = vld [vmem:[%s3 + $0x1f8] sm:$0xff]
  %v2555 = vrot.slane %v2489, 6
  %2557 = vmatprep.subr.mxu0 %v2491
  %2558 = vmatpush1.msra.mxu0 %v2490
  %2559 = vmatprep.subr.mxu0 %v2495
  %2560 = vmatpush1.msra.mxu0 %v2494
  %2561 = vmatprep.subr.mxu0 %v2499
  %2562 = vmatpush1.msra.mxu0 %v2498
  %2563 = vmatprep.subr.mxu0 %v2503
  %2564 = vmatpush1.msra.mxu0 %v2502
  %2565 = vmatprep.subr.mxu0 %v2507
  %2566 = vmatpush1.msra.mxu0 %v2506
  %2567 = vmatprep.subr.mxu0 %v2511
  %2568 = vmatpush1.msra.mxu0 %v2510
  %2569 = vmatprep.subr.mxu0 %v2515
  %2570 = vmatpush1.msra.mxu0 %v2514
  %2571 = vmatprep.subr.mxu0 %v2519
  %2572 = vmatpush1.msra.mxu0 %v2518
  %2573 = vmatprep.subr.mxu0 %v2523
  %2574 = vmatpush1.msra.mxu0 %v2522
  %2575 = vmatprep.subr.mxu0 %v2527
  %2576 = vmatpush1.msra.mxu0 %v2526
  %2577 = vmatprep.subr.mxu0 %v2531
  %2578 = vmatpush1.msra.mxu0 %v2530
  %2579 = vmatprep.subr.mxu0 %v2535
  %2580 = vmatpush1.msra.mxu0 %v2534
  %2581 = vmatprep.subr.mxu0 %v2539
  %2582 = vmatpush1.msra.mxu0 %v2538
  %2583 = vmatprep.subr.mxu0 %v2543
  %2584 = vmatpush1.msra.mxu0 %v2542
  %2585 = vmatprep.subr.mxu0 %v2547
  %2586 = vmatpush1.msra.mxu0 %v2546
  %2587 = vmatprep.subr.mxu0 %v2551
  %2588 = vmatpush1.msra.mxu0 %v2550
  %2589 = vmatprep.subr.mxu0 0.0
  %2590 = vmatpush1.msra.mxu0 0.0
  %2591 = vmatprep.subr.mxu0 0.0
  %2592 = vmatpush1.msra.mxu0 0.0
  %2593 = vmatprep.subr.mxu0 0.0
  %2594 = vmatpush1.msra.mxu0 0.0
  %2595 = vmatprep.subr.mxu0 0.0
  %2596 = vmatpush1.msra.mxu0 0.0
  %2597 = vmatprep.subr.mxu0 0.0
  %2598 = vmatpush1.msra.mxu0 0.0
  %2599 = vmatprep.subr.mxu0 0.0
  %2600 = vmatpush1.msra.mxu0 0.0
  %2601 = vmatprep.subr.mxu0 0.0
  %2602 = vmatpush1.msra.mxu0 0.0
  %2603 = vmatprep.subr.mxu0 0.0
  %2604 = vmatpush1.msra.mxu0 0.0
  %2605 = vmatprep.subr.mxu0 0.0
  %2606 = vmatpush1.msra.mxu0 0.0
  %2607 = vmatprep.subr.mxu0 0.0
  %2608 = vmatpush1.msra.mxu0 0.0
  %2609 = vmatprep.subr.mxu0 0.0
  %2610 = vmatpush1.msra.mxu0 0.0
  %2611 = vmatprep.subr.mxu0 0.0
  %2612 = vmatpush1.msra.mxu0 0.0
  %2613 = vmatprep.subr.mxu0 0.0
  %2614 = vmatpush1.msra.mxu0 0.0
  %2615 = vmatprep.subr.mxu0 0.0
  %2616 = vmatpush1.msra.mxu0 0.0
  %2617 = vmatprep.subr.mxu0 0.0
  %2618 = vmatpush1.msra.mxu0 0.0
  %2619 = vmatprep.subr.mxu0 0.0
  %2620 = vmatpush1.msra.mxu0 0.0
  %2621 = vmatprep.mubr.f32.mxu0 0.0
  %2622 = vmatmul.mubr.f32.gmra.mrb[0].mxu0 %v2555
  %v2623 = vpop.f32.mrb[0].mxu0
  %v2624 = vadd.f32 0.0, %v2623
  %v2625 = vpop.f32.mrb[0].mxu0
  %v2626 = vadd.f32 0.0, %v2625
  %2627 = vdwg.mxu0
  %2628 = vmatprep.subr.mxu0 %v2493
  %2629 = vmatpush1.msra.mxu0 %v2492
  %2630 = vmatprep.subr.mxu0 %v2497
  %2631 = vmatpush1.msra.mxu0 %v2496
  %2632 = vmatprep.subr.mxu0 %v2501
  %2633 = vmatpush1.msra.mxu0 %v2500
  %2634 = vmatprep.subr.mxu0 %v2505
  %2635 = vmatpush1.msra.mxu0 %v2504
  %2636 = vmatprep.subr.mxu0 %v2509
  %2637 = vmatpush1.msra.mxu0 %v2508
  %2638 = vmatprep.subr.mxu0 %v2513
  %2639 = vmatpush1.msra.mxu0 %v2512
  %2640 = vmatprep.subr.mxu0 %v2517
  %2641 = vmatpush1.msra.mxu0 %v2516
  %2642 = vmatprep.subr.mxu0 %v2521
  %2643 = vmatpush1.msra.mxu0 %v2520
  %2644 = vmatprep.subr.mxu0 %v2525
  %2645 = vmatpush1.msra.mxu0 %v2524
  %2646 = vmatprep.subr.mxu0 %v2529
  %2647 = vmatpush1.msra.mxu0 %v2528
  %2648 = vmatprep.subr.mxu0 %v2533
  %2649 = vmatpush1.msra.mxu0 %v2532
  %2650 = vmatprep.subr.mxu0 %v2537
  %2651 = vmatpush1.msra.mxu0 %v2536
  %2652 = vmatprep.subr.mxu0 %v2541
  %2653 = vmatpush1.msra.mxu0 %v2540
  %2654 = vmatprep.subr.mxu0 %v2545
  %2655 = vmatpush1.msra.mxu0 %v2544
  %2656 = vmatprep.subr.mxu0 %v2549
  %2657 = vmatpush1.msra.mxu0 %v2548
  %2658 = vmatprep.subr.mxu0 %v2553
  %2659 = vmatpush1.msra.mxu0 %v2552
  %2660 = vmatprep.subr.mxu0 0.0
  %2661 = vmatpush1.msra.mxu0 0.0
  %2662 = vmatprep.subr.mxu0 0.0
  %2663 = vmatpush1.msra.mxu0 0.0
  %2664 = vmatprep.subr.mxu0 0.0
  %2665 = vmatpush1.msra.mxu0 0.0
  %2666 = vmatprep.subr.mxu0 0.0
  %2667 = vmatpush1.msra.mxu0 0.0
  %2668 = vmatprep.subr.mxu0 0.0
  %2669 = vmatpush1.msra.mxu0 0.0
  %2670 = vmatprep.subr.mxu0 0.0
  %2671 = vmatpush1.msra.mxu0 0.0
  %2672 = vmatprep.subr.mxu0 0.0
  %2673 = vmatpush1.msra.mxu0 0.0
  %2674 = vmatprep.subr.mxu0 0.0
  %2675 = vmatpush1.msra.mxu0 0.0
  %2676 = vmatprep.subr.mxu0 0.0
  %2677 = vmatpush1.msra.mxu0 0.0
  %2678 = vmatprep.subr.mxu0 0.0
  %2679 = vmatpush1.msra.mxu0 0.0
  %2680 = vmatprep.subr.mxu0 0.0
  %2681 = vmatpush1.msra.mxu0 0.0
  %2682 = vmatprep.subr.mxu0 0.0
  %2683 = vmatpush1.msra.mxu0 0.0
  %2684 = vmatprep.subr.mxu0 0.0
  %2685 = vmatpush1.msra.mxu0 0.0
  %2686 = vmatprep.subr.mxu0 0.0
  %2687 = vmatpush1.msra.mxu0 0.0
  %2688 = vmatprep.subr.mxu0 0.0
  %2689 = vmatpush1.msra.mxu0 0.0
  %2690 = vmatprep.subr.mxu0 0.0
  %2691 = vmatpush1.msra.mxu0 0.0
  %2692 = vmatprep.mubr.f32.mxu0 0.0
  %2693 = vmatmul.mubr.f32.gmra.mrb[0].mxu0 %v2555
  %v2694 = vpop.f32.mrb[0].mxu0
  %v2695 = vadd.f32 0.0, %v2694
  %v2696 = vpop.f32.mrb[0].mxu0
  %v2697 = vadd.f32 0.0, %v2696
  %2698 = vdwg.mxu0
  %v2699 = vadd.f32 %v2485, %v2624
  %v2700 = vadd.f32 %v2486, %v2626
  %v2701 = vadd.f32 %v2487, %v2695
  %v2702 = vadd.f32 %v2488, %v2697
  %v2703 = vmul.f32 %v2479, 0.5
  %v2704 = vxor.u32 %v2699, 2147483648
  %v2705 = vmul.f32 %v2704, 1.442695
  %v2706 = vpow.pop %v2705
  %v2707 = vadd.f32 %v2706, 1.0
  %v2708 = vrcp.pop %v2707
  %v2709 = vmul.f32 1.0, %v2708
  %v2710 = vxor.u32 %v2700, 2147483648
  %v2711 = vmul.f32 %v2710, 1.442695
  %v2712 = vpow.pop %v2711
  %v2713 = vadd.f32 %v2712, 1.0
  %v2714 = vrcp.pop %v2713
  %v2715 = vmul.f32 1.0, %v2714
  %v2716 = vtanh.pop %v2701
  %v2717 = vxor.u32 %v2702, 2147483648
  %v2718 = vmul.f32 %v2717, 1.442695
  %v2719 = vpow.pop %v2718
  %v2720 = vadd.f32 %v2719, 1.0
  %v2721 = vrcp.pop %v2720
  %v2722 = vmul.f32 1.0, %v2721
  %v2724 = vrot.slane %v2703, 6
  %v2726 = vmul.f32 %v2715, %v2724
  %v2727 = vmul.f32 %v2709, %v2716
  %v2728 = vadd.f32 %v2726, %v2727
  %v2729 = vtanh.pop %v2728
  %v2730 = vmul.f32 %v2722, %v2729
  %2731 = vst [vmem:[#allocation4 + $0x10] sm:$0x3] %v2730
  %2732 = vst [vmem:[#allocation4 + $0x18] sm:$0x3] %v2728
  %2733 = vst [vmem:[#allocation3 + $0x8] sm:$0x3] %v2730
  %v2734 = vld [vmem:[#allocation2 + $0x20] sm:$0xc]
  %v2735 = vld [vmem:[#allocation2 + $0x28] sm:$0xc]
  %v2736 = vld [vmem:[#allocation2 + $0x30] sm:$0xc]
  %v2737 = vld [vmem:[#allocation2 + $0x38] sm:$0xc]
  %v2738 = vmul.f32 %v2730, 0.5
  %v2739 = vld [vmem:[%s3] sm:$0xff]
  %v2740 = vld [vmem:[%s3 + $0x8] sm:$0xff]
  %v2741 = vld [vmem:[%s3 + $0x10] sm:$0xff]
  %v2742 = vld [vmem:[%s3 + $0x18] sm:$0xff]
  %v2743 = vld [vmem:[%s3 + $0x20] sm:$0xff]
  %v2744 = vld [vmem:[%s3 + $0x28] sm:$0xff]
  %v2745 = vld [vmem:[%s3 + $0x30] sm:$0xff]
  %v2746 = vld [vmem:[%s3 + $0x38] sm:$0xff]
  %v2747 = vld [vmem:[%s3 + $0x40] sm:$0xff]
  %v2748 = vld [vmem:[%s3 + $0x48] sm:$0xff]
  %v2749 = vld [vmem:[%s3 + $0x50] sm:$0xff]
  %v2750 = vld [vmem:[%s3 + $0x58] sm:$0xff]
  %v2751 = vld [vmem:[%s3 + $0x60] sm:$0xff]
  %v2752 = vld [vmem:[%s3 + $0x68] sm:$0xff]
  %v2753 = vld [vmem:[%s3 + $0x70] sm:$0xff]
  %v2754 = vld [vmem:[%s3 + $0x78] sm:$0xff]
  %v2755 = vld [vmem:[%s3 + $0x80] sm:$0xff]
  %v2756 = vld [vmem:[%s3 + $0x88] sm:$0xff]
  %v2757 = vld [vmem:[%s3 + $0x90] sm:$0xff]
  %v2758 = vld [vmem:[%s3 + $0x98] sm:$0xff]
  %v2759 = vld [vmem:[%s3 + $0xa0] sm:$0xff]
  %v2760 = vld [vmem:[%s3 + $0xa8] sm:$0xff]
  %v2761 = vld [vmem:[%s3 + $0xb0] sm:$0xff]
  %v2762 = vld [vmem:[%s3 + $0xb8] sm:$0xff]
  %v2763 = vld [vmem:[%s3 + $0xc0] sm:$0xff]
  %v2764 = vld [vmem:[%s3 + $0xc8] sm:$0xff]
  %v2765 = vld [vmem:[%s3 + $0xd0] sm:$0xff]
  %v2766 = vld [vmem:[%s3 + $0xd8] sm:$0xff]
  %v2767 = vld [vmem:[%s3 + $0xe0] sm:$0xff]
  %v2768 = vld [vmem:[%s3 + $0xe8] sm:$0xff]
  %v2769 = vld [vmem:[%s3 + $0xf0] sm:$0xff]
  %v2770 = vld [vmem:[%s3 + $0xf8] sm:$0xff]
  %v2771 = vld [vmem:[%s3 + $0x100] sm:$0xff]
  %v2772 = vld [vmem:[%s3 + $0x108] sm:$0xff]
  %v2773 = vld [vmem:[%s3 + $0x110] sm:$0xff]
  %v2774 = vld [vmem:[%s3 + $0x118] sm:$0xff]
  %v2775 = vld [vmem:[%s3 + $0x120] sm:$0xff]
  %v2776 = vld [vmem:[%s3 + $0x128] sm:$0xff]
  %v2777 = vld [vmem:[%s3 + $0x130] sm:$0xff]
  %v2778 = vld [vmem:[%s3 + $0x138] sm:$0xff]
  %v2779 = vld [vmem:[%s3 + $0x140] sm:$0xff]
  %v2780 = vld [vmem:[%s3 + $0x148] sm:$0xff]
  %v2781 = vld [vmem:[%s3 + $0x150] sm:$0xff]
  %v2782 = vld [vmem:[%s3 + $0x158] sm:$0xff]
  %v2783 = vld [vmem:[%s3 + $0x160] sm:$0xff]
  %v2784 = vld [vmem:[%s3 + $0x168] sm:$0xff]
  %v2785 = vld [vmem:[%s3 + $0x170] sm:$0xff]
  %v2786 = vld [vmem:[%s3 + $0x178] sm:$0xff]
  %v2787 = vld [vmem:[%s3 + $0x180] sm:$0xff]
  %v2788 = vld [vmem:[%s3 + $0x188] sm:$0xff]
  %v2789 = vld [vmem:[%s3 + $0x190] sm:$0xff]
  %v2790 = vld [vmem:[%s3 + $0x198] sm:$0xff]
  %v2791 = vld [vmem:[%s3 + $0x1a0] sm:$0xff]
  %v2792 = vld [vmem:[%s3 + $0x1a8] sm:$0xff]
  %v2793 = vld [vmem:[%s3 + $0x1b0] sm:$0xff]
  %v2794 = vld [vmem:[%s3 + $0x1b8] sm:$0xff]
  %v2795 = vld [vmem:[%s3 + $0x1c0] sm:$0xff]
  %v2796 = vld [vmem:[%s3 + $0x1c8] sm:$0xff]
  %v2797 = vld [vmem:[%s3 + $0x1d0] sm:$0xff]
  %v2798 = vld [vmem:[%s3 + $0x1d8] sm:$0xff]
  %v2799 = vld [vmem:[%s3 + $0x1e0] sm:$0xff]
  %v2800 = vld [vmem:[%s3 + $0x1e8] sm:$0xff]
  %v2801 = vld [vmem:[%s3 + $0x1f0] sm:$0xff]
  %v2802 = vld [vmem:[%s3 + $0x1f8] sm:$0xff]
  %2803 = vmatprep.subr.mxu0 %v2740
  %2804 = vmatpush1.msra.mxu0 %v2739
  %2805 = vmatprep.subr.mxu0 %v2744
  %2806 = vmatpush1.msra.mxu0 %v2743
  %2807 = vmatprep.subr.mxu0 %v2748
  %2808 = vmatpush1.msra.mxu0 %v2747
  %2809 = vmatprep.subr.mxu0 %v2752
  %2810 = vmatpush1.msra.mxu0 %v2751
  %2811 = vmatprep.subr.mxu0 %v2756
  %2812 = vmatpush1.msra.mxu0 %v2755
  %2813 = vmatprep.subr.mxu0 %v2760
  %2814 = vmatpush1.msra.mxu0 %v2759
  %2815 = vmatprep.subr.mxu0 %v2764
  %2816 = vmatpush1.msra.mxu0 %v2763
  %2817 = vmatprep.subr.mxu0 %v2768
  %2818 = vmatpush1.msra.mxu0 %v2767
  %2819 = vmatprep.subr.mxu0 %v2772
  %2820 = vmatpush1.msra.mxu0 %v2771
  %2821 = vmatprep.subr.mxu0 %v2776
  %2822 = vmatpush1.msra.mxu0 %v2775
  %2823 = vmatprep.subr.mxu0 %v2780
  %2824 = vmatpush1.msra.mxu0 %v2779
  %2825 = vmatprep.subr.mxu0 %v2784
  %2826 = vmatpush1.msra.mxu0 %v2783
  %2827 = vmatprep.subr.mxu0 %v2788
  %2828 = vmatpush1.msra.mxu0 %v2787
  %2829 = vmatprep.subr.mxu0 %v2792
  %2830 = vmatpush1.msra.mxu0 %v2791
  %2831 = vmatprep.subr.mxu0 %v2796
  %2832 = vmatpush1.msra.mxu0 %v2795
  %2833 = vmatprep.subr.mxu0 %v2800
  %2834 = vmatpush1.msra.mxu0 %v2799
  %2835 = vmatprep.subr.mxu0 0.0
  %2836 = vmatpush1.msra.mxu0 0.0
  %2837 = vmatprep.subr.mxu0 0.0
  %2838 = vmatpush1.msra.mxu0 0.0
  %2839 = vmatprep.subr.mxu0 0.0
  %2840 = vmatpush1.msra.mxu0 0.0
  %2841 = vmatprep.subr.mxu0 0.0
  %2842 = vmatpush1.msra.mxu0 0.0
  %2843 = vmatprep.subr.mxu0 0.0
  %2844 = vmatpush1.msra.mxu0 0.0
  %2845 = vmatprep.subr.mxu0 0.0
  %2846 = vmatpush1.msra.mxu0 0.0
  %2847 = vmatprep.subr.mxu0 0.0
  %2848 = vmatpush1.msra.mxu0 0.0
  %2849 = vmatprep.subr.mxu0 0.0
  %2850 = vmatpush1.msra.mxu0 0.0
  %2851 = vmatprep.subr.mxu0 0.0
  %2852 = vmatpush1.msra.mxu0 0.0
  %2853 = vmatprep.subr.mxu0 0.0
  %2854 = vmatpush1.msra.mxu0 0.0
  %2855 = vmatprep.subr.mxu0 0.0
  %2856 = vmatpush1.msra.mxu0 0.0
  %2857 = vmatprep.subr.mxu0 0.0
  %2858 = vmatpush1.msra.mxu0 0.0
  %2859 = vmatprep.subr.mxu0 0.0
  %2860 = vmatpush1.msra.mxu0 0.0
  %2861 = vmatprep.subr.mxu0 0.0
  %2862 = vmatpush1.msra.mxu0 0.0
  %2863 = vmatprep.subr.mxu0 0.0
  %2864 = vmatpush1.msra.mxu0 0.0
  %2865 = vmatprep.subr.mxu0 0.0
  %2866 = vmatpush1.msra.mxu0 0.0
  %2867 = vmatprep.mubr.f32.mxu0 0.0
  %2868 = vmatmul.mubr.f32.gmra.mrb[0].mxu0 %v2738
  %v2869 = vpop.f32.mrb[0].mxu0
  %v2870 = vadd.f32 0.0, %v2869
  %v2871 = vpop.f32.mrb[0].mxu0
  %v2872 = vadd.f32 0.0, %v2871
  %2873 = vdwg.mxu0
  %2874 = vmatprep.subr.mxu0 %v2742
  %2875 = vmatpush1.msra.mxu0 %v2741
  %2876 = vmatprep.subr.mxu0 %v2746
  %2877 = vmatpush1.msra.mxu0 %v2745
  %2878 = vmatprep.subr.mxu0 %v2750
  %2879 = vmatpush1.msra.mxu0 %v2749
  %2880 = vmatprep.subr.mxu0 %v2754
  %2881 = vmatpush1.msra.mxu0 %v2753
  %2882 = vmatprep.subr.mxu0 %v2758
  %2883 = vmatpush1.msra.mxu0 %v2757
  %2884 = vmatprep.subr.mxu0 %v2762
  %2885 = vmatpush1.msra.mxu0 %v2761
  %2886 = vmatprep.subr.mxu0 %v2766
  %2887 = vmatpush1.msra.mxu0 %v2765
  %2888 = vmatprep.subr.mxu0 %v2770
  %2889 = vmatpush1.msra.mxu0 %v2769
  %2890 = vmatprep.subr.mxu0 %v2774
  %2891 = vmatpush1.msra.mxu0 %v2773
  %2892 = vmatprep.subr.mxu0 %v2778
  %2893 = vmatpush1.msra.mxu0 %v2777
  %2894 = vmatprep.subr.mxu0 %v2782
  %2895 = vmatpush1.msra.mxu0 %v2781
  %2896 = vmatprep.subr.mxu0 %v2786
  %2897 = vmatpush1.msra.mxu0 %v2785
  %2898 = vmatprep.subr.mxu0 %v2790
  %2899 = vmatpush1.msra.mxu0 %v2789
  %2900 = vmatprep.subr.mxu0 %v2794
  %2901 = vmatpush1.msra.mxu0 %v2793
  %2902 = vmatprep.subr.mxu0 %v2798
  %2903 = vmatpush1.msra.mxu0 %v2797
  %2904 = vmatprep.subr.mxu0 %v2802
  %2905 = vmatpush1.msra.mxu0 %v2801
  %2906 = vmatprep.subr.mxu0 0.0
  %2907 = vmatpush1.msra.mxu0 0.0
  %2908 = vmatprep.subr.mxu0 0.0
  %2909 = vmatpush1.msra.mxu0 0.0
  %2910 = vmatprep.subr.mxu0 0.0
  %2911 = vmatpush1.msra.mxu0 0.0
  %2912 = vmatprep.subr.mxu0 0.0
  %2913 = vmatpush1.msra.mxu0 0.0
  %2914 = vmatprep.subr.mxu0 0.0
  %2915 = vmatpush1.msra.mxu0 0.0
  %2916 = vmatprep.subr.mxu0 0.0
  %2917 = vmatpush1.msra.mxu0 0.0
  %2918 = vmatprep.subr.mxu0 0.0
  %2919 = vmatpush1.msra.mxu0 0.0
  %2920 = vmatprep.subr.mxu0 0.0
  %2921 = vmatpush1.msra.mxu0 0.0
  %2922 = vmatprep.subr.mxu0 0.0
  %2923 = vmatpush1.msra.mxu0 0.0
  %2924 = vmatprep.subr.mxu0 0.0
  %2925 = vmatpush1.msra.mxu0 0.0
  %2926 = vmatprep.subr.mxu0 0.0
  %2927 = vmatpush1.msra.mxu0 0.0
  %2928 = vmatprep.subr.mxu0 0.0
  %2929 = vmatpush1.msra.mxu0 0.0
  %2930 = vmatprep.subr.mxu0 0.0
  %2931 = vmatpush1.msra.mxu0 0.0
  %2932 = vmatprep.subr.mxu0 0.0
  %2933 = vmatpush1.msra.mxu0 0.0
  %2934 = vmatprep.subr.mxu0 0.0
  %2935 = vmatpush1.msra.mxu0 0.0
  %2936 = vmatprep.subr.mxu0 0.0
  %2937 = vmatpush1.msra.mxu0 0.0
  %2938 = vmatprep.mubr.f32.mxu0 0.0
  %2939 = vmatmul.mubr.f32.gmra.mrb[0].mxu0 %v2738
  %v2940 = vpop.f32.mrb[0].mxu0
  %v2941 = vadd.f32 0.0, %v2940
  %v2942 = vpop.f32.mrb[0].mxu0
  %v2943 = vadd.f32 0.0, %v2942
  %2944 = vdwg.mxu0
  %v2949 = vrot.slane %v2870, 6
  %v2950 = vrot.slane %v2872, 6
  %v2951 = vrot.slane %v2941, 6
  %v2952 = vrot.slane %v2943, 6
  %v2957 = vadd.f32 %v2734, %v2949
  %v2958 = vadd.f32 %v2735, %v2950
  %v2959 = vadd.f32 %v2736, %v2951
  %v2960 = vadd.f32 %v2737, %v2952
  %v2961 = vmul.f32 %v2728, 0.5
  %v2962 = vxor.u32 %v2957, 2147483648
  %v2963 = vmul.f32 %v2962, 1.442695
  %v2964 = vpow.pop %v2963
  %v2965 = vadd.f32 %v2964, 1.0
  %v2966 = vrcp.pop %v2965
  %v2967 = vmul.f32 1.0, %v2966
  %v2968 = vxor.u32 %v2958, 2147483648
  %v2969 = vmul.f32 %v2968, 1.442695
  %v2970 = vpow.pop %v2969
  %v2971 = vadd.f32 %v2970, 1.0
  %v2972 = vrcp.pop %v2971
  %v2973 = vmul.f32 1.0, %v2972
  %v2974 = vtanh.pop %v2959
  %v2975 = vxor.u32 %v2960, 2147483648
  %v2976 = vmul.f32 %v2975, 1.442695
  %v2977 = vpow.pop %v2976
  %v2978 = vadd.f32 %v2977, 1.0
  %v2979 = vrcp.pop %v2978
  %v2980 = vmul.f32 1.0, %v2979
  %v2982 = vrot.slane %v2961, 6
  %v2984 = vmul.f32 %v2973, %v2982
  %v2985 = vmul.f32 %v2967, %v2974
  %v2986 = vadd.f32 %v2984, %v2985
  %v2987 = vtanh.pop %v2986
  %v2988 = vmul.f32 %v2980, %v2987
  %2989 = vst [vmem:[#allocation4 + $0x10] sm:$0xc] %v2988
  %2990 = vst [vmem:[#allocation4 + $0x18] sm:$0xc] %v2986
  %2991 = vst [vmem:[#allocation3 + $0x8] sm:$0xc] %v2988
  %v2992 = vld [vmem:[#allocation2 + $0x20] sm:$0x30]
  %v2993 = vld [vmem:[#allocation2 + $0x28] sm:$0x30]
  %v2994 = vld [vmem:[#allocation2 + $0x30] sm:$0x30]
  %v2995 = vld [vmem:[#allocation2 + $0x38] sm:$0x30]
  %v2996 = vmul.f32 %v2988, 0.5
  %v2997 = vld [vmem:[%s3] sm:$0xff]
  %v2998 = vld [vmem:[%s3 + $0x8] sm:$0xff]
  %v2999 = vld [vmem:[%s3 + $0x10] sm:$0xff]
  %v3000 = vld [vmem:[%s3 + $0x18] sm:$0xff]
  %v3001 = vld [vmem:[%s3 + $0x20] sm:$0xff]
  %v3002 = vld [vmem:[%s3 + $0x28] sm:$0xff]
  %v3003 = vld [vmem:[%s3 + $0x30] sm:$0xff]
  %v3004 = vld [vmem:[%s3 + $0x38] sm:$0xff]
  %v3005 = vld [vmem:[%s3 + $0x40] sm:$0xff]
  %v3006 = vld [vmem:[%s3 + $0x48] sm:$0xff]
  %v3007 = vld [vmem:[%s3 + $0x50] sm:$0xff]
  %v3008 = vld [vmem:[%s3 + $0x58] sm:$0xff]
  %v3009 = vld [vmem:[%s3 + $0x60] sm:$0xff]
  %v3010 = vld [vmem:[%s3 + $0x68] sm:$0xff]
  %v3011 = vld [vmem:[%s3 + $0x70] sm:$0xff]
  %v3012 = vld [vmem:[%s3 + $0x78] sm:$0xff]
  %v3013 = vld [vmem:[%s3 + $0x80] sm:$0xff]
  %v3014 = vld [vmem:[%s3 + $0x88] sm:$0xff]
  %v3015 = vld [vmem:[%s3 + $0x90] sm:$0xff]
  %v3016 = vld [vmem:[%s3 + $0x98] sm:$0xff]
  %v3017 = vld [vmem:[%s3 + $0xa0] sm:$0xff]
  %v3018 = vld [vmem:[%s3 + $0xa8] sm:$0xff]
  %v3019 = vld [vmem:[%s3 + $0xb0] sm:$0xff]
  %v3020 = vld [vmem:[%s3 + $0xb8] sm:$0xff]
  %v3021 = vld [vmem:[%s3 + $0xc0] sm:$0xff]
  %v3022 = vld [vmem:[%s3 + $0xc8] sm:$0xff]
  %v3023 = vld [vmem:[%s3 + $0xd0] sm:$0xff]
  %v3024 = vld [vmem:[%s3 + $0xd8] sm:$0xff]
  %v3025 = vld [vmem:[%s3 + $0xe0] sm:$0xff]
  %v3026 = vld [vmem:[%s3 + $0xe8] sm:$0xff]
  %v3027 = vld [vmem:[%s3 + $0xf0] sm:$0xff]
  %v3028 = vld [vmem:[%s3 + $0xf8] sm:$0xff]
  %v3029 = vld [vmem:[%s3 + $0x100] sm:$0xff]
  %v3030 = vld [vmem:[%s3 + $0x108] sm:$0xff]
  %v3031 = vld [vmem:[%s3 + $0x110] sm:$0xff]
  %v3032 = vld [vmem:[%s3 + $0x118] sm:$0xff]
  %v3033 = vld [vmem:[%s3 + $0x120] sm:$0xff]
  %v3034 = vld [vmem:[%s3 + $0x128] sm:$0xff]
  %v3035 = vld [vmem:[%s3 + $0x130] sm:$0xff]
  %v3036 = vld [vmem:[%s3 + $0x138] sm:$0xff]
  %v3037 = vld [vmem:[%s3 + $0x140] sm:$0xff]
  %v3038 = vld [vmem:[%s3 + $0x148] sm:$0xff]
  %v3039 = vld [vmem:[%s3 + $0x150] sm:$0xff]
  %v3040 = vld [vmem:[%s3 + $0x158] sm:$0xff]
  %v3041 = vld [vmem:[%s3 + $0x160] sm:$0xff]
  %v3042 = vld [vmem:[%s3 + $0x168] sm:$0xff]
  %v3043 = vld [vmem:[%s3 + $0x170] sm:$0xff]
  %v3044 = vld [vmem:[%s3 + $0x178] sm:$0xff]
  %v3045 = vld [vmem:[%s3 + $0x180] sm:$0xff]
  %v3046 = vld [vmem:[%s3 + $0x188] sm:$0xff]
  %v3047 = vld [vmem:[%s3 + $0x190] sm:$0xff]
  %v3048 = vld [vmem:[%s3 + $0x198] sm:$0xff]
  %v3049 = vld [vmem:[%s3 + $0x1a0] sm:$0xff]
  %v3050 = vld [vmem:[%s3 + $0x1a8] sm:$0xff]
  %v3051 = vld [vmem:[%s3 + $0x1b0] sm:$0xff]
  %v3052 = vld [vmem:[%s3 + $0x1b8] sm:$0xff]
  %v3053 = vld [vmem:[%s3 + $0x1c0] sm:$0xff]
  %v3054 = vld [vmem:[%s3 + $0x1c8] sm:$0xff]
  %v3055 = vld [vmem:[%s3 + $0x1d0] sm:$0xff]
  %v3056 = vld [vmem:[%s3 + $0x1d8] sm:$0xff]
  %v3057 = vld [vmem:[%s3 + $0x1e0] sm:$0xff]
  %v3058 = vld [vmem:[%s3 + $0x1e8] sm:$0xff]
  %v3059 = vld [vmem:[%s3 + $0x1f0] sm:$0xff]
  %v3060 = vld [vmem:[%s3 + $0x1f8] sm:$0xff]
  %v3062 = vrot.slane %v2996, 2
  %3064 = vmatprep.subr.mxu0 %v2998
  %3065 = vmatpush1.msra.mxu0 %v2997
  %3066 = vmatprep.subr.mxu0 %v3002
  %3067 = vmatpush1.msra.mxu0 %v3001
  %3068 = vmatprep.subr.mxu0 %v3006
  %3069 = vmatpush1.msra.mxu0 %v3005
  %3070 = vmatprep.subr.mxu0 %v3010
  %3071 = vmatpush1.msra.mxu0 %v3009
  %3072 = vmatprep.subr.mxu0 %v3014
  %3073 = vmatpush1.msra.mxu0 %v3013
  %3074 = vmatprep.subr.mxu0 %v3018
  %3075 = vmatpush1.msra.mxu0 %v3017
  %3076 = vmatprep.subr.mxu0 %v3022
  %3077 = vmatpush1.msra.mxu0 %v3021
  %3078 = vmatprep.subr.mxu0 %v3026
  %3079 = vmatpush1.msra.mxu0 %v3025
  %3080 = vmatprep.subr.mxu0 %v3030
  %3081 = vmatpush1.msra.mxu0 %v3029
  %3082 = vmatprep.subr.mxu0 %v3034
  %3083 = vmatpush1.msra.mxu0 %v3033
  %3084 = vmatprep.subr.mxu0 %v3038
  %3085 = vmatpush1.msra.mxu0 %v3037
  %3086 = vmatprep.subr.mxu0 %v3042
  %3087 = vmatpush1.msra.mxu0 %v3041
  %3088 = vmatprep.subr.mxu0 %v3046
  %3089 = vmatpush1.msra.mxu0 %v3045
  %3090 = vmatprep.subr.mxu0 %v3050
  %3091 = vmatpush1.msra.mxu0 %v3049
  %3092 = vmatprep.subr.mxu0 %v3054
  %3093 = vmatpush1.msra.mxu0 %v3053
  %3094 = vmatprep.subr.mxu0 %v3058
  %3095 = vmatpush1.msra.mxu0 %v3057
  %3096 = vmatprep.subr.mxu0 0.0
  %3097 = vmatpush1.msra.mxu0 0.0
  %3098 = vmatprep.subr.mxu0 0.0
  %3099 = vmatpush1.msra.mxu0 0.0
  %3100 = vmatprep.subr.mxu0 0.0
  %3101 = vmatpush1.msra.mxu0 0.0
  %3102 = vmatprep.subr.mxu0 0.0
  %3103 = vmatpush1.msra.mxu0 0.0
  %3104 = vmatprep.subr.mxu0 0.0
  %3105 = vmatpush1.msra.mxu0 0.0
  %3106 = vmatprep.subr.mxu0 0.0
  %3107 = vmatpush1.msra.mxu0 0.0
  %3108 = vmatprep.subr.mxu0 0.0
  %3109 = vmatpush1.msra.mxu0 0.0
  %3110 = vmatprep.subr.mxu0 0.0
  %3111 = vmatpush1.msra.mxu0 0.0
  %3112 = vmatprep.subr.mxu0 0.0
  %3113 = vmatpush1.msra.mxu0 0.0
  %3114 = vmatprep.subr.mxu0 0.0
  %3115 = vmatpush1.msra.mxu0 0.0
  %3116 = vmatprep.subr.mxu0 0.0
  %3117 = vmatpush1.msra.mxu0 0.0
  %3118 = vmatprep.subr.mxu0 0.0
  %3119 = vmatpush1.msra.mxu0 0.0
  %3120 = vmatprep.subr.mxu0 0.0
  %3121 = vmatpush1.msra.mxu0 0.0
  %3122 = vmatprep.subr.mxu0 0.0
  %3123 = vmatpush1.msra.mxu0 0.0
  %3124 = vmatprep.subr.mxu0 0.0
  %3125 = vmatpush1.msra.mxu0 0.0
  %3126 = vmatprep.subr.mxu0 0.0
  %3127 = vmatpush1.msra.mxu0 0.0
  %3128 = vmatprep.mubr.f32.mxu0 0.0
  %3129 = vmatmul.mubr.f32.gmra.mrb[0].mxu0 %v3062
  %v3130 = vpop.f32.mrb[0].mxu0
  %v3131 = vadd.f32 0.0, %v3130
  %v3132 = vpop.f32.mrb[0].mxu0
  %v3133 = vadd.f32 0.0, %v3132
  %3134 = vdwg.mxu0
  %3135 = vmatprep.subr.mxu0 %v3000
  %3136 = vmatpush1.msra.mxu0 %v2999
  %3137 = vmatprep.subr.mxu0 %v3004
  %3138 = vmatpush1.msra.mxu0 %v3003
  %3139 = vmatprep.subr.mxu0 %v3008
  %3140 = vmatpush1.msra.mxu0 %v3007
  %3141 = vmatprep.subr.mxu0 %v3012
  %3142 = vmatpush1.msra.mxu0 %v3011
  %3143 = vmatprep.subr.mxu0 %v3016
  %3144 = vmatpush1.msra.mxu0 %v3015
  %3145 = vmatprep.subr.mxu0 %v3020
  %3146 = vmatpush1.msra.mxu0 %v3019
  %3147 = vmatprep.subr.mxu0 %v3024
  %3148 = vmatpush1.msra.mxu0 %v3023
  %3149 = vmatprep.subr.mxu0 %v3028
  %3150 = vmatpush1.msra.mxu0 %v3027
  %3151 = vmatprep.subr.mxu0 %v3032
  %3152 = vmatpush1.msra.mxu0 %v3031
  %3153 = vmatprep.subr.mxu0 %v3036
  %3154 = vmatpush1.msra.mxu0 %v3035
  %3155 = vmatprep.subr.mxu0 %v3040
  %3156 = vmatpush1.msra.mxu0 %v3039
  %3157 = vmatprep.subr.mxu0 %v3044
  %3158 = vmatpush1.msra.mxu0 %v3043
  %3159 = vmatprep.subr.mxu0 %v3048
  %3160 = vmatpush1.msra.mxu0 %v3047
  %3161 = vmatprep.subr.mxu0 %v3052
  %3162 = vmatpush1.msra.mxu0 %v3051
  %3163 = vmatprep.subr.mxu0 %v3056
  %3164 = vmatpush1.msra.mxu0 %v3055
  %3165 = vmatprep.subr.mxu0 %v3060
  %3166 = vmatpush1.msra.mxu0 %v3059
  %3167 = vmatprep.subr.mxu0 0.0
  %3168 = vmatpush1.msra.mxu0 0.0
  %3169 = vmatprep.subr.mxu0 0.0
  %3170 = vmatpush1.msra.mxu0 0.0
  %3171 = vmatprep.subr.mxu0 0.0
  %3172 = vmatpush1.msra.mxu0 0.0
  %3173 = vmatprep.subr.mxu0 0.0
  %3174 = vmatpush1.msra.mxu0 0.0
  %3175 = vmatprep.subr.mxu0 0.0
  %3176 = vmatpush1.msra.mxu0 0.0
  %3177 = vmatprep.subr.mxu0 0.0
  %3178 = vmatpush1.msra.mxu0 0.0
  %3179 = vmatprep.subr.mxu0 0.0
  %3180 = vmatpush1.msra.mxu0 0.0
  %3181 = vmatprep.subr.mxu0 0.0
  %3182 = vmatpush1.msra.mxu0 0.0
  %3183 = vmatprep.subr.mxu0 0.0
  %3184 = vmatpush1.msra.mxu0 0.0
  %3185 = vmatprep.subr.mxu0 0.0
  %3186 = vmatpush1.msra.mxu0 0.0
  %3187 = vmatprep.subr.mxu0 0.0
  %3188 = vmatpush1.msra.mxu0 0.0
  %3189 = vmatprep.subr.mxu0 0.0
  %3190 = vmatpush1.msra.mxu0 0.0
  %3191 = vmatprep.subr.mxu0 0.0
  %3192 = vmatpush1.msra.mxu0 0.0
  %3193 = vmatprep.subr.mxu0 0.0
  %3194 = vmatpush1.msra.mxu0 0.0
  %3195 = vmatprep.subr.mxu0 0.0
  %3196 = vmatpush1.msra.mxu0 0.0
  %3197 = vmatprep.subr.mxu0 0.0
  %3198 = vmatpush1.msra.mxu0 0.0
  %3199 = vmatprep.mubr.f32.mxu0 0.0
  %3200 = vmatmul.mubr.f32.gmra.mrb[0].mxu0 %v3062
  %v3201 = vpop.f32.mrb[0].mxu0
  %v3202 = vadd.f32 0.0, %v3201
  %v3203 = vpop.f32.mrb[0].mxu0
  %v3204 = vadd.f32 0.0, %v3203
  %3205 = vdwg.mxu0
  %v3210 = vrot.slane %v3131, 4
  %v3211 = vrot.slane %v3133, 4
  %v3212 = vrot.slane %v3202, 4
  %v3213 = vrot.slane %v3204, 4
  %v3218 = vadd.f32 %v2992, %v3210
  %v3219 = vadd.f32 %v2993, %v3211
  %v3220 = vadd.f32 %v2994, %v3212
  %v3221 = vadd.f32 %v2995, %v3213
  %v3222 = vmul.f32 %v2986, 0.5
  %v3223 = vxor.u32 %v3218, 2147483648
  %v3224 = vmul.f32 %v3223, 1.442695
  %v3225 = vpow.pop %v3224
  %v3226 = vadd.f32 %v3225, 1.0
  %v3227 = vrcp.pop %v3226
  %v3228 = vmul.f32 1.0, %v3227
  %v3229 = vxor.u32 %v3219, 2147483648
  %v3230 = vmul.f32 %v3229, 1.442695
  %v3231 = vpow.pop %v3230
  %v3232 = vadd.f32 %v3231, 1.0
  %v3233 = vrcp.pop %v3232
  %v3234 = vmul.f32 1.0, %v3233
  %v3235 = vtanh.pop %v3220
  %v3236 = vxor.u32 %v3221, 2147483648
  %v3237 = vmul.f32 %v3236, 1.442695
  %v3238 = vpow.pop %v3237
  %v3239 = vadd.f32 %v3238, 1.0
  %v3240 = vrcp.pop %v3239
  %v3241 = vmul.f32 1.0, %v3240
  %v3243 = vrot.slane %v3222, 6
  %v3245 = vmul.f32 %v3234, %v3243
  %v3246 = vmul.f32 %v3228, %v3235
  %v3247 = vadd.f32 %v3245, %v3246
  %v3248 = vtanh.pop %v3247
  %v3249 = vmul.f32 %v3241, %v3248
  %3250 = vst [vmem:[#allocation4 + $0x10] sm:$0x30] %v3249
  %3251 = vst [vmem:[#allocation4 + $0x18] sm:$0x30] %v3247
  %3252 = vst [vmem:[#allocation3 + $0x8] sm:$0x30] %v3249
  %v3253 = vld [vmem:[#allocation2 + $0x20] sm:$0xc0]
  %v3254 = vld [vmem:[#allocation2 + $0x28] sm:$0xc0]
  %v3255 = vld [vmem:[#allocation2 + $0x30] sm:$0xc0]
  %v3256 = vld [vmem:[#allocation2 + $0x38] sm:$0xc0]
  %v3257 = vmul.f32 %v3249, 0.5
  %v3258 = vld [vmem:[%s3] sm:$0xff]
  %v3259 = vld [vmem:[%s3 + $0x8] sm:$0xff]
  %v3260 = vld [vmem:[%s3 + $0x10] sm:$0xff]
  %v3261 = vld [vmem:[%s3 + $0x18] sm:$0xff]
  %v3262 = vld [vmem:[%s3 + $0x20] sm:$0xff]
  %v3263 = vld [vmem:[%s3 + $0x28] sm:$0xff]
  %v3264 = vld [vmem:[%s3 + $0x30] sm:$0xff]
  %v3265 = vld [vmem:[%s3 + $0x38] sm:$0xff]
  %v3266 = vld [vmem:[%s3 + $0x40] sm:$0xff]
  %v3267 = vld [vmem:[%s3 + $0x48] sm:$0xff]
  %v3268 = vld [vmem:[%s3 + $0x50] sm:$0xff]
  %v3269 = vld [vmem:[%s3 + $0x58] sm:$0xff]
  %v3270 = vld [vmem:[%s3 + $0x60] sm:$0xff]
  %v3271 = vld [vmem:[%s3 + $0x68] sm:$0xff]
  %v3272 = vld [vmem:[%s3 + $0x70] sm:$0xff]
  %v3273 = vld [vmem:[%s3 + $0x78] sm:$0xff]
  %v3274 = vld [vmem:[%s3 + $0x80] sm:$0xff]
  %v3275 = vld [vmem:[%s3 + $0x88] sm:$0xff]
  %v3276 = vld [vmem:[%s3 + $0x90] sm:$0xff]
  %v3277 = vld [vmem:[%s3 + $0x98] sm:$0xff]
  %v3278 = vld [vmem:[%s3 + $0xa0] sm:$0xff]
  %v3279 = vld [vmem:[%s3 + $0xa8] sm:$0xff]
  %v3280 = vld [vmem:[%s3 + $0xb0] sm:$0xff]
  %v3281 = vld [vmem:[%s3 + $0xb8] sm:$0xff]
  %v3282 = vld [vmem:[%s3 + $0xc0] sm:$0xff]
  %v3283 = vld [vmem:[%s3 + $0xc8] sm:$0xff]
  %v3284 = vld [vmem:[%s3 + $0xd0] sm:$0xff]
  %v3285 = vld [vmem:[%s3 + $0xd8] sm:$0xff]
  %v3286 = vld [vmem:[%s3 + $0xe0] sm:$0xff]
  %v3287 = vld [vmem:[%s3 + $0xe8] sm:$0xff]
  %v3288 = vld [vmem:[%s3 + $0xf0] sm:$0xff]
  %v3289 = vld [vmem:[%s3 + $0xf8] sm:$0xff]
  %v3290 = vld [vmem:[%s3 + $0x100] sm:$0xff]
  %v3291 = vld [vmem:[%s3 + $0x108] sm:$0xff]
  %v3292 = vld [vmem:[%s3 + $0x110] sm:$0xff]
  %v3293 = vld [vmem:[%s3 + $0x118] sm:$0xff]
  %v3294 = vld [vmem:[%s3 + $0x120] sm:$0xff]
  %v3295 = vld [vmem:[%s3 + $0x128] sm:$0xff]
  %v3296 = vld [vmem:[%s3 + $0x130] sm:$0xff]
  %v3297 = vld [vmem:[%s3 + $0x138] sm:$0xff]
  %v3298 = vld [vmem:[%s3 + $0x140] sm:$0xff]
  %v3299 = vld [vmem:[%s3 + $0x148] sm:$0xff]
  %v3300 = vld [vmem:[%s3 + $0x150] sm:$0xff]
  %v3301 = vld [vmem:[%s3 + $0x158] sm:$0xff]
  %v3302 = vld [vmem:[%s3 + $0x160] sm:$0xff]
  %v3303 = vld [vmem:[%s3 + $0x168] sm:$0xff]
  %v3304 = vld [vmem:[%s3 + $0x170] sm:$0xff]
  %v3305 = vld [vmem:[%s3 + $0x178] sm:$0xff]
  %v3306 = vld [vmem:[%s3 + $0x180] sm:$0xff]
  %v3307 = vld [vmem:[%s3 + $0x188] sm:$0xff]
  %v3308 = vld [vmem:[%s3 + $0x190] sm:$0xff]
  %v3309 = vld [vmem:[%s3 + $0x198] sm:$0xff]
  %v3310 = vld [vmem:[%s3 + $0x1a0] sm:$0xff]
  %v3311 = vld [vmem:[%s3 + $0x1a8] sm:$0xff]
  %v3312 = vld [vmem:[%s3 + $0x1b0] sm:$0xff]
  %v3313 = vld [vmem:[%s3 + $0x1b8] sm:$0xff]
  %v3314 = vld [vmem:[%s3 + $0x1c0] sm:$0xff]
  %v3315 = vld [vmem:[%s3 + $0x1c8] sm:$0xff]
  %v3316 = vld [vmem:[%s3 + $0x1d0] sm:$0xff]
  %v3317 = vld [vmem:[%s3 + $0x1d8] sm:$0xff]
  %v3318 = vld [vmem:[%s3 + $0x1e0] sm:$0xff]
  %v3319 = vld [vmem:[%s3 + $0x1e8] sm:$0xff]
  %v3320 = vld [vmem:[%s3 + $0x1f0] sm:$0xff]
  %v3321 = vld [vmem:[%s3 + $0x1f8] sm:$0xff]
  %v3323 = vrot.slane %v3257, 4
  %3325 = vmatprep.subr.mxu0 %v3259
  %3326 = vmatpush1.msra.mxu0 %v3258
  %3327 = vmatprep.subr.mxu0 %v3263
  %3328 = vmatpush1.msra.mxu0 %v3262
  %3329 = vmatprep.subr.mxu0 %v3267
  %3330 = vmatpush1.msra.mxu0 %v3266
  %3331 = vmatprep.subr.mxu0 %v3271
  %3332 = vmatpush1.msra.mxu0 %v3270
  %3333 = vmatprep.subr.mxu0 %v3275
  %3334 = vmatpush1.msra.mxu0 %v3274
  %3335 = vmatprep.subr.mxu0 %v3279
  %3336 = vmatpush1.msra.mxu0 %v3278
  %3337 = vmatprep.subr.mxu0 %v3283
  %3338 = vmatpush1.msra.mxu0 %v3282
  %3339 = vmatprep.subr.mxu0 %v3287
  %3340 = vmatpush1.msra.mxu0 %v3286
  %3341 = vmatprep.subr.mxu0 %v3291
  %3342 = vmatpush1.msra.mxu0 %v3290
  %3343 = vmatprep.subr.mxu0 %v3295
  %3344 = vmatpush1.msra.mxu0 %v3294
  %3345 = vmatprep.subr.mxu0 %v3299
  %3346 = vmatpush1.msra.mxu0 %v3298
  %3347 = vmatprep.subr.mxu0 %v3303
  %3348 = vmatpush1.msra.mxu0 %v3302
  %3349 = vmatprep.subr.mxu0 %v3307
  %3350 = vmatpush1.msra.mxu0 %v3306
  %3351 = vmatprep.subr.mxu0 %v3311
  %3352 = vmatpush1.msra.mxu0 %v3310
  %3353 = vmatprep.subr.mxu0 %v3315
  %3354 = vmatpush1.msra.mxu0 %v3314
  %3355 = vmatprep.subr.mxu0 %v3319
  %3356 = vmatpush1.msra.mxu0 %v3318
  %3357 = vmatprep.subr.mxu0 0.0
  %3358 = vmatpush1.msra.mxu0 0.0
  %3359 = vmatprep.subr.mxu0 0.0
  %3360 = vmatpush1.msra.mxu0 0.0
  %3361 = vmatprep.subr.mxu0 0.0
  %3362 = vmatpush1.msra.mxu0 0.0
  %3363 = vmatprep.subr.mxu0 0.0
  %3364 = vmatpush1.msra.mxu0 0.0
  %3365 = vmatprep.subr.mxu0 0.0
  %3366 = vmatpush1.msra.mxu0 0.0
  %3367 = vmatprep.subr.mxu0 0.0
  %3368 = vmatpush1.msra.mxu0 0.0
  %3369 = vmatprep.subr.mxu0 0.0
  %3370 = vmatpush1.msra.mxu0 0.0
  %3371 = vmatprep.subr.mxu0 0.0
  %3372 = vmatpush1.msra.mxu0 0.0
  %3373 = vmatprep.subr.mxu0 0.0
  %3374 = vmatpush1.msra.mxu0 0.0
  %3375 = vmatprep.subr.mxu0 0.0
  %3376 = vmatpush1.msra.mxu0 0.0
  %3377 = vmatprep.subr.mxu0 0.0
  %3378 = vmatpush1.msra.mxu0 0.0
  %3379 = vmatprep.subr.mxu0 0.0
  %3380 = vmatpush1.msra.mxu0 0.0
  %3381 = vmatprep.subr.mxu0 0.0
  %3382 = vmatpush1.msra.mxu0 0.0
  %3383 = vmatprep.subr.mxu0 0.0
  %3384 = vmatpush1.msra.mxu0 0.0
  %3385 = vmatprep.subr.mxu0 0.0
  %3386 = vmatpush1.msra.mxu0 0.0
  %3387 = vmatprep.subr.mxu0 0.0
  %3388 = vmatpush1.msra.mxu0 0.0
  %3389 = vmatprep.mubr.f32.mxu0 0.0
  %3390 = vmatmul.mubr.f32.gmra.mrb[0].mxu0 %v3323
  %v3391 = vpop.f32.mrb[0].mxu0
  %v3392 = vadd.f32 0.0, %v3391
  %v3393 = vpop.f32.mrb[0].mxu0
  %v3394 = vadd.f32 0.0, %v3393
  %3395 = vdwg.mxu0
  %3396 = vmatprep.subr.mxu0 %v3261
  %3397 = vmatpush1.msra.mxu0 %v3260
  %3398 = vmatprep.subr.mxu0 %v3265
  %3399 = vmatpush1.msra.mxu0 %v3264
  %3400 = vmatprep.subr.mxu0 %v3269
  %3401 = vmatpush1.msra.mxu0 %v3268
  %3402 = vmatprep.subr.mxu0 %v3273
  %3403 = vmatpush1.msra.mxu0 %v3272
  %3404 = vmatprep.subr.mxu0 %v3277
  %3405 = vmatpush1.msra.mxu0 %v3276
  %3406 = vmatprep.subr.mxu0 %v3281
  %3407 = vmatpush1.msra.mxu0 %v3280
  %3408 = vmatprep.subr.mxu0 %v3285
  %3409 = vmatpush1.msra.mxu0 %v3284
  %3410 = vmatprep.subr.mxu0 %v3289
  %3411 = vmatpush1.msra.mxu0 %v3288
  %3412 = vmatprep.subr.mxu0 %v3293
  %3413 = vmatpush1.msra.mxu0 %v3292
  %3414 = vmatprep.subr.mxu0 %v3297
  %3415 = vmatpush1.msra.mxu0 %v3296
  %3416 = vmatprep.subr.mxu0 %v3301
  %3417 = vmatpush1.msra.mxu0 %v3300
  %3418 = vmatprep.subr.mxu0 %v3305
  %3419 = vmatpush1.msra.mxu0 %v3304
  %3420 = vmatprep.subr.mxu0 %v3309
  %3421 = vmatpush1.msra.mxu0 %v3308
  %3422 = vmatprep.subr.mxu0 %v3313
  %3423 = vmatpush1.msra.mxu0 %v3312
  %3424 = vmatprep.subr.mxu0 %v3317
  %3425 = vmatpush1.msra.mxu0 %v3316
  %3426 = vmatprep.subr.mxu0 %v3321
  %3427 = vmatpush1.msra.mxu0 %v3320
  %3428 = vmatprep.subr.mxu0 0.0
  %3429 = vmatpush1.msra.mxu0 0.0
  %3430 = vmatprep.subr.mxu0 0.0
  %3431 = vmatpush1.msra.mxu0 0.0
  %3432 = vmatprep.subr.mxu0 0.0
  %3433 = vmatpush1.msra.mxu0 0.0
  %3434 = vmatprep.subr.mxu0 0.0
  %3435 = vmatpush1.msra.mxu0 0.0
  %3436 = vmatprep.subr.mxu0 0.0
  %3437 = vmatpush1.msra.mxu0 0.0
  %3438 = vmatprep.subr.mxu0 0.0
  %3439 = vmatpush1.msra.mxu0 0.0
  %3440 = vmatprep.subr.mxu0 0.0
  %3441 = vmatpush1.msra.mxu0 0.0
  %3442 = vmatprep.subr.mxu0 0.0
  %3443 = vmatpush1.msra.mxu0 0.0
  %3444 = vmatprep.subr.mxu0 0.0
  %3445 = vmatpush1.msra.mxu0 0.0
  %3446 = vmatprep.subr.mxu0 0.0
  %3447 = vmatpush1.msra.mxu0 0.0
  %3448 = vmatprep.subr.mxu0 0.0
  %3449 = vmatpush1.msra.mxu0 0.0
  %3450 = vmatprep.subr.mxu0 0.0
  %3451 = vmatpush1.msra.mxu0 0.0
  %3452 = vmatprep.subr.mxu0 0.0
  %3453 = vmatpush1.msra.mxu0 0.0
  %3454 = vmatprep.subr.mxu0 0.0
  %3455 = vmatpush1.msra.mxu0 0.0
  %3456 = vmatprep.subr.mxu0 0.0
  %3457 = vmatpush1.msra.mxu0 0.0
  %3458 = vmatprep.subr.mxu0 0.0
  %3459 = vmatpush1.msra.mxu0 0.0
  %3460 = vmatprep.mubr.f32.mxu0 0.0
  %3461 = vmatmul.mubr.f32.gmra.mrb[0].mxu0 %v3323
  %v3462 = vpop.f32.mrb[0].mxu0
  %v3463 = vadd.f32 0.0, %v3462
  %v3464 = vpop.f32.mrb[0].mxu0
  %v3465 = vadd.f32 0.0, %v3464
  %3466 = vdwg.mxu0
  %v3471 = vrot.slane %v3392, 2
  %v3472 = vrot.slane %v3394, 2
  %v3473 = vrot.slane %v3463, 2
  %v3474 = vrot.slane %v3465, 2
  %v3479 = vadd.f32 %v3253, %v3471
  %v3480 = vadd.f32 %v3254, %v3472
  %v3481 = vadd.f32 %v3255, %v3473
  %v3482 = vadd.f32 %v3256, %v3474
  %v3483 = vmul.f32 %v3247, 0.5
  %v3484 = vxor.u32 %v3479, 2147483648
  %v3485 = vmul.f32 %v3484, 1.442695
  %v3486 = vpow.pop %v3485
  %v3487 = vadd.f32 %v3486, 1.0
  %v3488 = vrcp.pop %v3487
  %v3489 = vmul.f32 1.0, %v3488
  %v3490 = vxor.u32 %v3480, 2147483648
  %v3491 = vmul.f32 %v3490, 1.442695
  %v3492 = vpow.pop %v3491
  %v3493 = vadd.f32 %v3492, 1.0
  %v3494 = vrcp.pop %v3493
  %v3495 = vmul.f32 1.0, %v3494
  %v3496 = vtanh.pop %v3481
  %v3497 = vxor.u32 %v3482, 2147483648
  %v3498 = vmul.f32 %v3497, 1.442695
  %v3499 = vpow.pop %v3498
  %v3500 = vadd.f32 %v3499, 1.0
  %v3501 = vrcp.pop %v3500
  %v3502 = vmul.f32 1.0, %v3501
  %v3504 = vrot.slane %v3483, 6
  %v3506 = vmul.f32 %v3495, %v3504
  %v3507 = vmul.f32 %v3489, %v3496
  %v3508 = vadd.f32 %v3506, %v3507
  %v3509 = vtanh.pop %v3508
  %v3510 = vmul.f32 %v3502, %v3509
  %3511 = vst [vmem:[#allocation4 + $0x10] sm:$0xc0] %v3510
  %3512 = vst [vmem:[#allocation4 + $0x18] sm:$0xc0] %v3508
  %3513 = vst [vmem:[#allocation3 + $0x8] sm:$0xc0] %v3510
  %v3514 = vld [vmem:[#allocation2 + $0x40] sm:$0x3]
  %v3515 = vld [vmem:[#allocation2 + $0x48] sm:$0x3]
  %v3516 = vld [vmem:[#allocation2 + $0x50] sm:$0x3]
  %v3517 = vld [vmem:[#allocation2 + $0x58] sm:$0x3]
  %v3518 = vmul.f32 %v3510, 0.5
  %v3519 = vld [vmem:[%s3] sm:$0xff]
  %v3520 = vld [vmem:[%s3 + $0x8] sm:$0xff]
  %v3521 = vld [vmem:[%s3 + $0x10] sm:$0xff]
  %v3522 = vld [vmem:[%s3 + $0x18] sm:$0xff]
  %v3523 = vld [vmem:[%s3 + $0x20] sm:$0xff]
  %v3524 = vld [vmem:[%s3 + $0x28] sm:$0xff]
  %v3525 = vld [vmem:[%s3 + $0x30] sm:$0xff]
  %v3526 = vld [vmem:[%s3 + $0x38] sm:$0xff]
  %v3527 = vld [vmem:[%s3 + $0x40] sm:$0xff]
  %v3528 = vld [vmem:[%s3 + $0x48] sm:$0xff]
  %v3529 = vld [vmem:[%s3 + $0x50] sm:$0xff]
  %v3530 = vld [vmem:[%s3 + $0x58] sm:$0xff]
  %v3531 = vld [vmem:[%s3 + $0x60] sm:$0xff]
  %v3532 = vld [vmem:[%s3 + $0x68] sm:$0xff]
  %v3533 = vld [vmem:[%s3 + $0x70] sm:$0xff]
  %v3534 = vld [vmem:[%s3 + $0x78] sm:$0xff]
  %v3535 = vld [vmem:[%s3 + $0x80] sm:$0xff]
  %v3536 = vld [vmem:[%s3 + $0x88] sm:$0xff]
  %v3537 = vld [vmem:[%s3 + $0x90] sm:$0xff]
  %v3538 = vld [vmem:[%s3 + $0x98] sm:$0xff]
  %v3539 = vld [vmem:[%s3 + $0xa0] sm:$0xff]
  %v3540 = vld [vmem:[%s3 + $0xa8] sm:$0xff]
  %v3541 = vld [vmem:[%s3 + $0xb0] sm:$0xff]
  %v3542 = vld [vmem:[%s3 + $0xb8] sm:$0xff]
  %v3543 = vld [vmem:[%s3 + $0xc0] sm:$0xff]
  %v3544 = vld [vmem:[%s3 + $0xc8] sm:$0xff]
  %v3545 = vld [vmem:[%s3 + $0xd0] sm:$0xff]
  %v3546 = vld [vmem:[%s3 + $0xd8] sm:$0xff]
  %v3547 = vld [vmem:[%s3 + $0xe0] sm:$0xff]
  %v3548 = vld [vmem:[%s3 + $0xe8] sm:$0xff]
  %v3549 = vld [vmem:[%s3 + $0xf0] sm:$0xff]
  %v3550 = vld [vmem:[%s3 + $0xf8] sm:$0xff]
  %v3551 = vld [vmem:[%s3 + $0x100] sm:$0xff]
  %v3552 = vld [vmem:[%s3 + $0x108] sm:$0xff]
  %v3553 = vld [vmem:[%s3 + $0x110] sm:$0xff]
  %v3554 = vld [vmem:[%s3 + $0x118] sm:$0xff]
  %v3555 = vld [vmem:[%s3 + $0x120] sm:$0xff]
  %v3556 = vld [vmem:[%s3 + $0x128] sm:$0xff]
  %v3557 = vld [vmem:[%s3 + $0x130] sm:$0xff]
  %v3558 = vld [vmem:[%s3 + $0x138] sm:$0xff]
  %v3559 = vld [vmem:[%s3 + $0x140] sm:$0xff]
  %v3560 = vld [vmem:[%s3 + $0x148] sm:$0xff]
  %v3561 = vld [vmem:[%s3 + $0x150] sm:$0xff]
  %v3562 = vld [vmem:[%s3 + $0x158] sm:$0xff]
  %v3563 = vld [vmem:[%s3 + $0x160] sm:$0xff]
  %v3564 = vld [vmem:[%s3 + $0x168] sm:$0xff]
  %v3565 = vld [vmem:[%s3 + $0x170] sm:$0xff]
  %v3566 = vld [vmem:[%s3 + $0x178] sm:$0xff]
  %v3567 = vld [vmem:[%s3 + $0x180] sm:$0xff]
  %v3568 = vld [vmem:[%s3 + $0x188] sm:$0xff]
  %v3569 = vld [vmem:[%s3 + $0x190] sm:$0xff]
  %v3570 = vld [vmem:[%s3 + $0x198] sm:$0xff]
  %v3571 = vld [vmem:[%s3 + $0x1a0] sm:$0xff]
  %v3572 = vld [vmem:[%s3 + $0x1a8] sm:$0xff]
  %v3573 = vld [vmem:[%s3 + $0x1b0] sm:$0xff]
  %v3574 = vld [vmem:[%s3 + $0x1b8] sm:$0xff]
  %v3575 = vld [vmem:[%s3 + $0x1c0] sm:$0xff]
  %v3576 = vld [vmem:[%s3 + $0x1c8] sm:$0xff]
  %v3577 = vld [vmem:[%s3 + $0x1d0] sm:$0xff]
  %v3578 = vld [vmem:[%s3 + $0x1d8] sm:$0xff]
  %v3579 = vld [vmem:[%s3 + $0x1e0] sm:$0xff]
  %v3580 = vld [vmem:[%s3 + $0x1e8] sm:$0xff]
  %v3581 = vld [vmem:[%s3 + $0x1f0] sm:$0xff]
  %v3582 = vld [vmem:[%s3 + $0x1f8] sm:$0xff]
  %v3584 = vrot.slane %v3518, 6
  %3586 = vmatprep.subr.mxu0 %v3520
  %3587 = vmatpush1.msra.mxu0 %v3519
  %3588 = vmatprep.subr.mxu0 %v3524
  %3589 = vmatpush1.msra.mxu0 %v3523
  %3590 = vmatprep.subr.mxu0 %v3528
  %3591 = vmatpush1.msra.mxu0 %v3527
  %3592 = vmatprep.subr.mxu0 %v3532
  %3593 = vmatpush1.msra.mxu0 %v3531
  %3594 = vmatprep.subr.mxu0 %v3536
  %3595 = vmatpush1.msra.mxu0 %v3535
  %3596 = vmatprep.subr.mxu0 %v3540
  %3597 = vmatpush1.msra.mxu0 %v3539
  %3598 = vmatprep.subr.mxu0 %v3544
  %3599 = vmatpush1.msra.mxu0 %v3543
  %3600 = vmatprep.subr.mxu0 %v3548
  %3601 = vmatpush1.msra.mxu0 %v3547
  %3602 = vmatprep.subr.mxu0 %v3552
  %3603 = vmatpush1.msra.mxu0 %v3551
  %3604 = vmatprep.subr.mxu0 %v3556
  %3605 = vmatpush1.msra.mxu0 %v3555
  %3606 = vmatprep.subr.mxu0 %v3560
  %3607 = vmatpush1.msra.mxu0 %v3559
  %3608 = vmatprep.subr.mxu0 %v3564
  %3609 = vmatpush1.msra.mxu0 %v3563
  %3610 = vmatprep.subr.mxu0 %v3568
  %3611 = vmatpush1.msra.mxu0 %v3567
  %3612 = vmatprep.subr.mxu0 %v3572
  %3613 = vmatpush1.msra.mxu0 %v3571
  %3614 = vmatprep.subr.mxu0 %v3576
  %3615 = vmatpush1.msra.mxu0 %v3575
  %3616 = vmatprep.subr.mxu0 %v3580
  %3617 = vmatpush1.msra.mxu0 %v3579
  %3618 = vmatprep.subr.mxu0 0.0
  %3619 = vmatpush1.msra.mxu0 0.0
  %3620 = vmatprep.subr.mxu0 0.0
  %3621 = vmatpush1.msra.mxu0 0.0
  %3622 = vmatprep.subr.mxu0 0.0
  %3623 = vmatpush1.msra.mxu0 0.0
  %3624 = vmatprep.subr.mxu0 0.0
  %3625 = vmatpush1.msra.mxu0 0.0
  %3626 = vmatprep.subr.mxu0 0.0
  %3627 = vmatpush1.msra.mxu0 0.0
  %3628 = vmatprep.subr.mxu0 0.0
  %3629 = vmatpush1.msra.mxu0 0.0
  %3630 = vmatprep.subr.mxu0 0.0
  %3631 = vmatpush1.msra.mxu0 0.0
  %3632 = vmatprep.subr.mxu0 0.0
  %3633 = vmatpush1.msra.mxu0 0.0
  %3634 = vmatprep.subr.mxu0 0.0
  %3635 = vmatpush1.msra.mxu0 0.0
  %3636 = vmatprep.subr.mxu0 0.0
  %3637 = vmatpush1.msra.mxu0 0.0
  %3638 = vmatprep.subr.mxu0 0.0
  %3639 = vmatpush1.msra.mxu0 0.0
  %3640 = vmatprep.subr.mxu0 0.0
  %3641 = vmatpush1.msra.mxu0 0.0
  %3642 = vmatprep.subr.mxu0 0.0
  %3643 = vmatpush1.msra.mxu0 0.0
  %3644 = vmatprep.subr.mxu0 0.0
  %3645 = vmatpush1.msra.mxu0 0.0
  %3646 = vmatprep.subr.mxu0 0.0
  %3647 = vmatpush1.msra.mxu0 0.0
  %3648 = vmatprep.subr.mxu0 0.0
  %3649 = vmatpush1.msra.mxu0 0.0
  %3650 = vmatprep.mubr.f32.mxu0 0.0
  %3651 = vmatmul.mubr.f32.gmra.mrb[0].mxu0 %v3584
  %v3652 = vpop.f32.mrb[0].mxu0
  %v3653 = vadd.f32 0.0, %v3652
  %v3654 = vpop.f32.mrb[0].mxu0
  %v3655 = vadd.f32 0.0, %v3654
  %3656 = vdwg.mxu0
  %3657 = vmatprep.subr.mxu0 %v3522
  %3658 = vmatpush1.msra.mxu0 %v3521
  %3659 = vmatprep.subr.mxu0 %v3526
  %3660 = vmatpush1.msra.mxu0 %v3525
  %3661 = vmatprep.subr.mxu0 %v3530
  %3662 = vmatpush1.msra.mxu0 %v3529
  %3663 = vmatprep.subr.mxu0 %v3534
  %3664 = vmatpush1.msra.mxu0 %v3533
  %3665 = vmatprep.subr.mxu0 %v3538
  %3666 = vmatpush1.msra.mxu0 %v3537
  %3667 = vmatprep.subr.mxu0 %v3542
  %3668 = vmatpush1.msra.mxu0 %v3541
  %3669 = vmatprep.subr.mxu0 %v3546
  %3670 = vmatpush1.msra.mxu0 %v3545
  %3671 = vmatprep.subr.mxu0 %v3550
  %3672 = vmatpush1.msra.mxu0 %v3549
  %3673 = vmatprep.subr.mxu0 %v3554
  %3674 = vmatpush1.msra.mxu0 %v3553
  %3675 = vmatprep.subr.mxu0 %v3558
  %3676 = vmatpush1.msra.mxu0 %v3557
  %3677 = vmatprep.subr.mxu0 %v3562
  %3678 = vmatpush1.msra.mxu0 %v3561
  %3679 = vmatprep.subr.mxu0 %v3566
  %3680 = vmatpush1.msra.mxu0 %v3565
  %3681 = vmatprep.subr.mxu0 %v3570
  %3682 = vmatpush1.msra.mxu0 %v3569
  %3683 = vmatprep.subr.mxu0 %v3574
  %3684 = vmatpush1.msra.mxu0 %v3573
  %3685 = vmatprep.subr.mxu0 %v3578
  %3686 = vmatpush1.msra.mxu0 %v3577
  %3687 = vmatprep.subr.mxu0 %v3582
  %3688 = vmatpush1.msra.mxu0 %v3581
  %3689 = vmatprep.subr.mxu0 0.0
  %3690 = vmatpush1.msra.mxu0 0.0
  %3691 = vmatprep.subr.mxu0 0.0
  %3692 = vmatpush1.msra.mxu0 0.0
  %3693 = vmatprep.subr.mxu0 0.0
  %3694 = vmatpush1.msra.mxu0 0.0
  %3695 = vmatprep.subr.mxu0 0.0
  %3696 = vmatpush1.msra.mxu0 0.0
  %3697 = vmatprep.subr.mxu0 0.0
  %3698 = vmatpush1.msra.mxu0 0.0
  %3699 = vmatprep.subr.mxu0 0.0
  %3700 = vmatpush1.msra.mxu0 0.0
  %3701 = vmatprep.subr.mxu0 0.0
  %3702 = vmatpush1.msra.mxu0 0.0
  %3703 = vmatprep.subr.mxu0 0.0
  %3704 = vmatpush1.msra.mxu0 0.0
  %3705 = vmatprep.subr.mxu0 0.0
  %3706 = vmatpush1.msra.mxu0 0.0
  %3707 = vmatprep.subr.mxu0 0.0
  %3708 = vmatpush1.msra.mxu0 0.0
  %3709 = vmatprep.subr.mxu0 0.0
  %3710 = vmatpush1.msra.mxu0 0.0
  %3711 = vmatprep.subr.mxu0 0.0
  %3712 = vmatpush1.msra.mxu0 0.0
  %3713 = vmatprep.subr.mxu0 0.0
  %3714 = vmatpush1.msra.mxu0 0.0
  %3715 = vmatprep.subr.mxu0 0.0
  %3716 = vmatpush1.msra.mxu0 0.0
  %3717 = vmatprep.subr.mxu0 0.0
  %3718 = vmatpush1.msra.mxu0 0.0
  %3719 = vmatprep.subr.mxu0 0.0
  %3720 = vmatpush1.msra.mxu0 0.0
  %3721 = vmatprep.mubr.f32.mxu0 0.0
  %3722 = vmatmul.mubr.f32.gmra.mrb[0].mxu0 %v3584
  %v3723 = vpop.f32.mrb[0].mxu0
  %v3724 = vadd.f32 0.0, %v3723
  %v3725 = vpop.f32.mrb[0].mxu0
  %v3726 = vadd.f32 0.0, %v3725
  %3727 = vdwg.mxu0
  %v3728 = vadd.f32 %v3514, %v3653
  %v3729 = vadd.f32 %v3515, %v3655
  %v3730 = vadd.f32 %v3516, %v3724
  %v3731 = vadd.f32 %v3517, %v3726
  %v3732 = vmul.f32 %v3508, 0.5
  %v3733 = vxor.u32 %v3728, 2147483648
  %v3734 = vmul.f32 %v3733, 1.442695
  %v3735 = vpow.pop %v3734
  %v3736 = vadd.f32 %v3735, 1.0
  %v3737 = vrcp.pop %v3736
  %v3738 = vmul.f32 1.0, %v3737
  %v3739 = vxor.u32 %v3729, 2147483648
  %v3740 = vmul.f32 %v3739, 1.442695
  %v3741 = vpow.pop %v3740
  %v3742 = vadd.f32 %v3741, 1.0
  %v3743 = vrcp.pop %v3742
  %v3744 = vmul.f32 1.0, %v3743
  %v3745 = vtanh.pop %v3730
  %v3746 = vxor.u32 %v3731, 2147483648
  %v3747 = vmul.f32 %v3746, 1.442695
  %v3748 = vpow.pop %v3747
  %v3749 = vadd.f32 %v3748, 1.0
  %v3750 = vrcp.pop %v3749
  %v3751 = vmul.f32 1.0, %v3750
  %v3753 = vrot.slane %v3732, 6
  %v3755 = vmul.f32 %v3744, %v3753
  %v3756 = vmul.f32 %v3738, %v3745
  %v3757 = vadd.f32 %v3755, %v3756
  %v3758 = vtanh.pop %v3757
  %v3759 = vmul.f32 %v3751, %v3758
  %3760 = vst [vmem:[#allocation4 + $0x20] sm:$0x3] %v3759
  %3761 = vst [vmem:[#allocation4 + $0x28] sm:$0x3] %v3757
  %3762 = vst [vmem:[#allocation3 + $0x10] sm:$0x3] %v3759
  %v3763 = vld [vmem:[#allocation2 + $0x40] sm:$0xc]
  %v3764 = vld [vmem:[#allocation2 + $0x48] sm:$0xc]
  %v3765 = vld [vmem:[#allocation2 + $0x50] sm:$0xc]
  %v3766 = vld [vmem:[#allocation2 + $0x58] sm:$0xc]
  %v3767 = vmul.f32 %v3759, 0.5
  %v3768 = vld [vmem:[%s3] sm:$0xff]
  %v3769 = vld [vmem:[%s3 + $0x8] sm:$0xff]
  %v3770 = vld [vmem:[%s3 + $0x10] sm:$0xff]
  %v3771 = vld [vmem:[%s3 + $0x18] sm:$0xff]
  %v3772 = vld [vmem:[%s3 + $0x20] sm:$0xff]
  %v3773 = vld [vmem:[%s3 + $0x28] sm:$0xff]
  %v3774 = vld [vmem:[%s3 + $0x30] sm:$0xff]
  %v3775 = vld [vmem:[%s3 + $0x38] sm:$0xff]
  %v3776 = vld [vmem:[%s3 + $0x40] sm:$0xff]
  %v3777 = vld [vmem:[%s3 + $0x48] sm:$0xff]
  %v3778 = vld [vmem:[%s3 + $0x50] sm:$0xff]
  %v3779 = vld [vmem:[%s3 + $0x58] sm:$0xff]
  %v3780 = vld [vmem:[%s3 + $0x60] sm:$0xff]
  %v3781 = vld [vmem:[%s3 + $0x68] sm:$0xff]
  %v3782 = vld [vmem:[%s3 + $0x70] sm:$0xff]
  %v3783 = vld [vmem:[%s3 + $0x78] sm:$0xff]
  %v3784 = vld [vmem:[%s3 + $0x80] sm:$0xff]
  %v3785 = vld [vmem:[%s3 + $0x88] sm:$0xff]
  %v3786 = vld [vmem:[%s3 + $0x90] sm:$0xff]
  %v3787 = vld [vmem:[%s3 + $0x98] sm:$0xff]
  %v3788 = vld [vmem:[%s3 + $0xa0] sm:$0xff]
  %v3789 = vld [vmem:[%s3 + $0xa8] sm:$0xff]
  %v3790 = vld [vmem:[%s3 + $0xb0] sm:$0xff]
  %v3791 = vld [vmem:[%s3 + $0xb8] sm:$0xff]
  %v3792 = vld [vmem:[%s3 + $0xc0] sm:$0xff]
  %v3793 = vld [vmem:[%s3 + $0xc8] sm:$0xff]
  %v3794 = vld [vmem:[%s3 + $0xd0] sm:$0xff]
  %v3795 = vld [vmem:[%s3 + $0xd8] sm:$0xff]
  %v3796 = vld [vmem:[%s3 + $0xe0] sm:$0xff]
  %v3797 = vld [vmem:[%s3 + $0xe8] sm:$0xff]
  %v3798 = vld [vmem:[%s3 + $0xf0] sm:$0xff]
  %v3799 = vld [vmem:[%s3 + $0xf8] sm:$0xff]
  %v3800 = vld [vmem:[%s3 + $0x100] sm:$0xff]
  %v3801 = vld [vmem:[%s3 + $0x108] sm:$0xff]
  %v3802 = vld [vmem:[%s3 + $0x110] sm:$0xff]
  %v3803 = vld [vmem:[%s3 + $0x118] sm:$0xff]
  %v3804 = vld [vmem:[%s3 + $0x120] sm:$0xff]
  %v3805 = vld [vmem:[%s3 + $0x128] sm:$0xff]
  %v3806 = vld [vmem:[%s3 + $0x130] sm:$0xff]
  %v3807 = vld [vmem:[%s3 + $0x138] sm:$0xff]
  %v3808 = vld [vmem:[%s3 + $0x140] sm:$0xff]
  %v3809 = vld [vmem:[%s3 + $0x148] sm:$0xff]
  %v3810 = vld [vmem:[%s3 + $0x150] sm:$0xff]
  %v3811 = vld [vmem:[%s3 + $0x158] sm:$0xff]
  %v3812 = vld [vmem:[%s3 + $0x160] sm:$0xff]
  %v3813 = vld [vmem:[%s3 + $0x168] sm:$0xff]
  %v3814 = vld [vmem:[%s3 + $0x170] sm:$0xff]
  %v3815 = vld [vmem:[%s3 + $0x178] sm:$0xff]
  %v3816 = vld [vmem:[%s3 + $0x180] sm:$0xff]
  %v3817 = vld [vmem:[%s3 + $0x188] sm:$0xff]
  %v3818 = vld [vmem:[%s3 + $0x190] sm:$0xff]
  %v3819 = vld [vmem:[%s3 + $0x198] sm:$0xff]
  %v3820 = vld [vmem:[%s3 + $0x1a0] sm:$0xff]
  %v3821 = vld [vmem:[%s3 + $0x1a8] sm:$0xff]
  %v3822 = vld [vmem:[%s3 + $0x1b0] sm:$0xff]
  %v3823 = vld [vmem:[%s3 + $0x1b8] sm:$0xff]
  %v3824 = vld [vmem:[%s3 + $0x1c0] sm:$0xff]
  %v3825 = vld [vmem:[%s3 + $0x1c8] sm:$0xff]
  %v3826 = vld [vmem:[%s3 + $0x1d0] sm:$0xff]
  %v3827 = vld [vmem:[%s3 + $0x1d8] sm:$0xff]
  %v3828 = vld [vmem:[%s3 + $0x1e0] sm:$0xff]
  %v3829 = vld [vmem:[%s3 + $0x1e8] sm:$0xff]
  %v3830 = vld [vmem:[%s3 + $0x1f0] sm:$0xff]
  %v3831 = vld [vmem:[%s3 + $0x1f8] sm:$0xff]
  %3832 = vmatprep.subr.mxu0 %v3769
  %3833 = vmatpush1.msra.mxu0 %v3768
  %3834 = vmatprep.subr.mxu0 %v3773
  %3835 = vmatpush1.msra.mxu0 %v3772
  %3836 = vmatprep.subr.mxu0 %v3777
  %3837 = vmatpush1.msra.mxu0 %v3776
  %3838 = vmatprep.subr.mxu0 %v3781
  %3839 = vmatpush1.msra.mxu0 %v3780
  %3840 = vmatprep.subr.mxu0 %v3785
  %3841 = vmatpush1.msra.mxu0 %v3784
  %3842 = vmatprep.subr.mxu0 %v3789
  %3843 = vmatpush1.msra.mxu0 %v3788
  %3844 = vmatprep.subr.mxu0 %v3793
  %3845 = vmatpush1.msra.mxu0 %v3792
  %3846 = vmatprep.subr.mxu0 %v3797
  %3847 = vmatpush1.msra.mxu0 %v3796
  %3848 = vmatprep.subr.mxu0 %v3801
  %3849 = vmatpush1.msra.mxu0 %v3800
  %3850 = vmatprep.subr.mxu0 %v3805
  %3851 = vmatpush1.msra.mxu0 %v3804
  %3852 = vmatprep.subr.mxu0 %v3809
  %3853 = vmatpush1.msra.mxu0 %v3808
  %3854 = vmatprep.subr.mxu0 %v3813
  %3855 = vmatpush1.msra.mxu0 %v3812
  %3856 = vmatprep.subr.mxu0 %v3817
  %3857 = vmatpush1.msra.mxu0 %v3816
  %3858 = vmatprep.subr.mxu0 %v3821
  %3859 = vmatpush1.msra.mxu0 %v3820
  %3860 = vmatprep.subr.mxu0 %v3825
  %3861 = vmatpush1.msra.mxu0 %v3824
  %3862 = vmatprep.subr.mxu0 %v3829
  %3863 = vmatpush1.msra.mxu0 %v3828
  %3864 = vmatprep.subr.mxu0 0.0
  %3865 = vmatpush1.msra.mxu0 0.0
  %3866 = vmatprep.subr.mxu0 0.0
  %3867 = vmatpush1.msra.mxu0 0.0
  %3868 = vmatprep.subr.mxu0 0.0
  %3869 = vmatpush1.msra.mxu0 0.0
  %3870 = vmatprep.subr.mxu0 0.0
  %3871 = vmatpush1.msra.mxu0 0.0
  %3872 = vmatprep.subr.mxu0 0.0
  %3873 = vmatpush1.msra.mxu0 0.0
  %3874 = vmatprep.subr.mxu0 0.0
  %3875 = vmatpush1.msra.mxu0 0.0
  %3876 = vmatprep.subr.mxu0 0.0
  %3877 = vmatpush1.msra.mxu0 0.0
  %3878 = vmatprep.subr.mxu0 0.0
  %3879 = vmatpush1.msra.mxu0 0.0
  %3880 = vmatprep.subr.mxu0 0.0
  %3881 = vmatpush1.msra.mxu0 0.0
  %3882 = vmatprep.subr.mxu0 0.0
  %3883 = vmatpush1.msra.mxu0 0.0
  %3884 = vmatprep.subr.mxu0 0.0
  %3885 = vmatpush1.msra.mxu0 0.0
  %3886 = vmatprep.subr.mxu0 0.0
  %3887 = vmatpush1.msra.mxu0 0.0
  %3888 = vmatprep.subr.mxu0 0.0
  %3889 = vmatpush1.msra.mxu0 0.0
  %3890 = vmatprep.subr.mxu0 0.0
  %3891 = vmatpush1.msra.mxu0 0.0
  %3892 = vmatprep.subr.mxu0 0.0
  %3893 = vmatpush1.msra.mxu0 0.0
  %3894 = vmatprep.subr.mxu0 0.0
  %3895 = vmatpush1.msra.mxu0 0.0
  %3896 = vmatprep.mubr.f32.mxu0 0.0
  %3897 = vmatmul.mubr.f32.gmra.mrb[0].mxu0 %v3767
  %v3898 = vpop.f32.mrb[0].mxu0
  %v3899 = vadd.f32 0.0, %v3898
  %v3900 = vpop.f32.mrb[0].mxu0
  %v3901 = vadd.f32 0.0, %v3900
  %3902 = vdwg.mxu0
  %3903 = vmatprep.subr.mxu0 %v3771
  %3904 = vmatpush1.msra.mxu0 %v3770
  %3905 = vmatprep.subr.mxu0 %v3775
  %3906 = vmatpush1.msra.mxu0 %v3774
  %3907 = vmatprep.subr.mxu0 %v3779
  %3908 = vmatpush1.msra.mxu0 %v3778
  %3909 = vmatprep.subr.mxu0 %v3783
  %3910 = vmatpush1.msra.mxu0 %v3782
  %3911 = vmatprep.subr.mxu0 %v3787
  %3912 = vmatpush1.msra.mxu0 %v3786
  %3913 = vmatprep.subr.mxu0 %v3791
  %3914 = vmatpush1.msra.mxu0 %v3790
  %3915 = vmatprep.subr.mxu0 %v3795
  %3916 = vmatpush1.msra.mxu0 %v3794
  %3917 = vmatprep.subr.mxu0 %v3799
  %3918 = vmatpush1.msra.mxu0 %v3798
  %3919 = vmatprep.subr.mxu0 %v3803
  %3920 = vmatpush1.msra.mxu0 %v3802
  %3921 = vmatprep.subr.mxu0 %v3807
  %3922 = vmatpush1.msra.mxu0 %v3806
  %3923 = vmatprep.subr.mxu0 %v3811
  %3924 = vmatpush1.msra.mxu0 %v3810
  %3925 = vmatprep.subr.mxu0 %v3815
  %3926 = vmatpush1.msra.mxu0 %v3814
  %3927 = vmatprep.subr.mxu0 %v3819
  %3928 = vmatpush1.msra.mxu0 %v3818
  %3929 = vmatprep.subr.mxu0 %v3823
  %3930 = vmatpush1.msra.mxu0 %v3822
  %3931 = vmatprep.subr.mxu0 %v3827
  %3932 = vmatpush1.msra.mxu0 %v3826
  %3933 = vmatprep.subr.mxu0 %v3831
  %3934 = vmatpush1.msra.mxu0 %v3830
  %3935 = vmatprep.subr.mxu0 0.0
  %3936 = vmatpush1.msra.mxu0 0.0
  %3937 = vmatprep.subr.mxu0 0.0
  %3938 = vmatpush1.msra.mxu0 0.0
  %3939 = vmatprep.subr.mxu0 0.0
  %3940 = vmatpush1.msra.mxu0 0.0
  %3941 = vmatprep.subr.mxu0 0.0
  %3942 = vmatpush1.msra.mxu0 0.0
  %3943 = vmatprep.subr.mxu0 0.0
  %3944 = vmatpush1.msra.mxu0 0.0
  %3945 = vmatprep.subr.mxu0 0.0
  %3946 = vmatpush1.msra.mxu0 0.0
  %3947 = vmatprep.subr.mxu0 0.0
  %3948 = vmatpush1.msra.mxu0 0.0
  %3949 = vmatprep.subr.mxu0 0.0
  %3950 = vmatpush1.msra.mxu0 0.0
  %3951 = vmatprep.subr.mxu0 0.0
  %3952 = vmatpush1.msra.mxu0 0.0
  %3953 = vmatprep.subr.mxu0 0.0
  %3954 = vmatpush1.msra.mxu0 0.0
  %3955 = vmatprep.subr.mxu0 0.0
  %3956 = vmatpush1.msra.mxu0 0.0
  %3957 = vmatprep.subr.mxu0 0.0
  %3958 = vmatpush1.msra.mxu0 0.0
  %3959 = vmatprep.subr.mxu0 0.0
  %3960 = vmatpush1.msra.mxu0 0.0
  %3961 = vmatprep.subr.mxu0 0.0
  %3962 = vmatpush1.msra.mxu0 0.0
  %3963 = vmatprep.subr.mxu0 0.0
  %3964 = vmatpush1.msra.mxu0 0.0
  %3965 = vmatprep.subr.mxu0 0.0
  %3966 = vmatpush1.msra.mxu0 0.0
  %3967 = vmatprep.mubr.f32.mxu0 0.0
  %3968 = vmatmul.mubr.f32.gmra.mrb[0].mxu0 %v3767
  %v3969 = vpop.f32.mrb[0].mxu0
  %v3970 = vadd.f32 0.0, %v3969
  %v3971 = vpop.f32.mrb[0].mxu0
  %v3972 = vadd.f32 0.0, %v3971
  %3973 = vdwg.mxu0
  %v3978 = vrot.slane %v3899, 6
  %v3979 = vrot.slane %v3901, 6
  %v3980 = vrot.slane %v3970, 6
  %v3981 = vrot.slane %v3972, 6
  %v3986 = vadd.f32 %v3763, %v3978
  %v3987 = vadd.f32 %v3764, %v3979
  %v3988 = vadd.f32 %v3765, %v3980
  %v3989 = vadd.f32 %v3766, %v3981
  %v3990 = vmul.f32 %v3757, 0.5
  %v3991 = vxor.u32 %v3986, 2147483648
  %v3992 = vmul.f32 %v3991, 1.442695
  %v3993 = vpow.pop %v3992
  %v3994 = vadd.f32 %v3993, 1.0
  %v3995 = vrcp.pop %v3994
  %v3996 = vmul.f32 1.0, %v3995
  %v3997 = vxor.u32 %v3987, 2147483648
  %v3998 = vmul.f32 %v3997, 1.442695
  %v3999 = vpow.pop %v3998
  %v4000 = vadd.f32 %v3999, 1.0
  %v4001 = vrcp.pop %v4000
  %v4002 = vmul.f32 1.0, %v4001
  %v4003 = vtanh.pop %v3988
  %v4004 = vxor.u32 %v3989, 2147483648
  %v4005 = vmul.f32 %v4004, 1.442695
  %v4006 = vpow.pop %v4005
  %v4007 = vadd.f32 %v4006, 1.0
  %v4008 = vrcp.pop %v4007
  %v4009 = vmul.f32 1.0, %v4008
  %v4011 = vrot.slane %v3990, 6
  %v4013 = vmul.f32 %v4002, %v4011
  %v4014 = vmul.f32 %v3996, %v4003
  %v4015 = vadd.f32 %v4013, %v4014
  %v4016 = vtanh.pop %v4015
  %v4017 = vmul.f32 %v4009, %v4016
  %4018 = vst [vmem:[#allocation4 + $0x20] sm:$0xc] %v4017
  %4019 = vst [vmem:[#allocation4 + $0x28] sm:$0xc] %v4015
  %4020 = vst [vmem:[#allocation3 + $0x10] sm:$0xc] %v4017
  %v4021 = vld [vmem:[#allocation2 + $0x40] sm:$0x30]
  %v4022 = vld [vmem:[#allocation2 + $0x48] sm:$0x30]
  %v4023 = vld [vmem:[#allocation2 + $0x50] sm:$0x30]
  %v4024 = vld [vmem:[#allocation2 + $0x58] sm:$0x30]
  %v4025 = vmul.f32 %v4017, 0.5
  %v4026 = vld [vmem:[%s3] sm:$0xff]
  %v4027 = vld [vmem:[%s3 + $0x8] sm:$0xff]
  %v4028 = vld [vmem:[%s3 + $0x10] sm:$0xff]
  %v4029 = vld [vmem:[%s3 + $0x18] sm:$0xff]
  %v4030 = vld [vmem:[%s3 + $0x20] sm:$0xff]
  %v4031 = vld [vmem:[%s3 + $0x28] sm:$0xff]
  %v4032 = vld [vmem:[%s3 + $0x30] sm:$0xff]
  %v4033 = vld [vmem:[%s3 + $0x38] sm:$0xff]
  %v4034 = vld [vmem:[%s3 + $0x40] sm:$0xff]
  %v4035 = vld [vmem:[%s3 + $0x48] sm:$0xff]
  %v4036 = vld [vmem:[%s3 + $0x50] sm:$0xff]
  %v4037 = vld [vmem:[%s3 + $0x58] sm:$0xff]
  %v4038 = vld [vmem:[%s3 + $0x60] sm:$0xff]
  %v4039 = vld [vmem:[%s3 + $0x68] sm:$0xff]
  %v4040 = vld [vmem:[%s3 + $0x70] sm:$0xff]
  %v4041 = vld [vmem:[%s3 + $0x78] sm:$0xff]
  %v4042 = vld [vmem:[%s3 + $0x80] sm:$0xff]
  %v4043 = vld [vmem:[%s3 + $0x88] sm:$0xff]
  %v4044 = vld [vmem:[%s3 + $0x90] sm:$0xff]
  %v4045 = vld [vmem:[%s3 + $0x98] sm:$0xff]
  %v4046 = vld [vmem:[%s3 + $0xa0] sm:$0xff]
  %v4047 = vld [vmem:[%s3 + $0xa8] sm:$0xff]
  %v4048 = vld [vmem:[%s3 + $0xb0] sm:$0xff]
  %v4049 = vld [vmem:[%s3 + $0xb8] sm:$0xff]
  %v4050 = vld [vmem:[%s3 + $0xc0] sm:$0xff]
  %v4051 = vld [vmem:[%s3 + $0xc8] sm:$0xff]
  %v4052 = vld [vmem:[%s3 + $0xd0] sm:$0xff]
  %v4053 = vld [vmem:[%s3 + $0xd8] sm:$0xff]
  %v4054 = vld [vmem:[%s3 + $0xe0] sm:$0xff]
  %v4055 = vld [vmem:[%s3 + $0xe8] sm:$0xff]
  %v4056 = vld [vmem:[%s3 + $0xf0] sm:$0xff]
  %v4057 = vld [vmem:[%s3 + $0xf8] sm:$0xff]
  %v4058 = vld [vmem:[%s3 + $0x100] sm:$0xff]
  %v4059 = vld [vmem:[%s3 + $0x108] sm:$0xff]
  %v4060 = vld [vmem:[%s3 + $0x110] sm:$0xff]
  %v4061 = vld [vmem:[%s3 + $0x118] sm:$0xff]
  %v4062 = vld [vmem:[%s3 + $0x120] sm:$0xff]
  %v4063 = vld [vmem:[%s3 + $0x128] sm:$0xff]
  %v4064 = vld [vmem:[%s3 + $0x130] sm:$0xff]
  %v4065 = vld [vmem:[%s3 + $0x138] sm:$0xff]
  %v4066 = vld [vmem:[%s3 + $0x140] sm:$0xff]
  %v4067 = vld [vmem:[%s3 + $0x148] sm:$0xff]
  %v4068 = vld [vmem:[%s3 + $0x150] sm:$0xff]
  %v4069 = vld [vmem:[%s3 + $0x158] sm:$0xff]
  %v4070 = vld [vmem:[%s3 + $0x160] sm:$0xff]
  %v4071 = vld [vmem:[%s3 + $0x168] sm:$0xff]
  %v4072 = vld [vmem:[%s3 + $0x170] sm:$0xff]
  %v4073 = vld [vmem:[%s3 + $0x178] sm:$0xff]
  %v4074 = vld [vmem:[%s3 + $0x180] sm:$0xff]
  %v4075 = vld [vmem:[%s3 + $0x188] sm:$0xff]
  %v4076 = vld [vmem:[%s3 + $0x190] sm:$0xff]
  %v4077 = vld [vmem:[%s3 + $0x198] sm:$0xff]
  %v4078 = vld [vmem:[%s3 + $0x1a0] sm:$0xff]
  %v4079 = vld [vmem:[%s3 + $0x1a8] sm:$0xff]
  %v4080 = vld [vmem:[%s3 + $0x1b0] sm:$0xff]
  %v4081 = vld [vmem:[%s3 + $0x1b8] sm:$0xff]
  %v4082 = vld [vmem:[%s3 + $0x1c0] sm:$0xff]
  %v4083 = vld [vmem:[%s3 + $0x1c8] sm:$0xff]
  %v4084 = vld [vmem:[%s3 + $0x1d0] sm:$0xff]
  %v4085 = vld [vmem:[%s3 + $0x1d8] sm:$0xff]
  %v4086 = vld [vmem:[%s3 + $0x1e0] sm:$0xff]
  %v4087 = vld [vmem:[%s3 + $0x1e8] sm:$0xff]
  %v4088 = vld [vmem:[%s3 + $0x1f0] sm:$0xff]
  %v4089 = vld [vmem:[%s3 + $0x1f8] sm:$0xff]
  %v4091 = vrot.slane %v4025, 2
  %4093 = vmatprep.subr.mxu0 %v4027
  %4094 = vmatpush1.msra.mxu0 %v4026
  %4095 = vmatprep.subr.mxu0 %v4031
  %4096 = vmatpush1.msra.mxu0 %v4030
  %4097 = vmatprep.subr.mxu0 %v4035
  %4098 = vmatpush1.msra.mxu0 %v4034
  %4099 = vmatprep.subr.mxu0 %v4039
  %4100 = vmatpush1.msra.mxu0 %v4038
  %4101 = vmatprep.subr.mxu0 %v4043
  %4102 = vmatpush1.msra.mxu0 %v4042
  %4103 = vmatprep.subr.mxu0 %v4047
  %4104 = vmatpush1.msra.mxu0 %v4046
  %4105 = vmatprep.subr.mxu0 %v4051
  %4106 = vmatpush1.msra.mxu0 %v4050
  %4107 = vmatprep.subr.mxu0 %v4055
  %4108 = vmatpush1.msra.mxu0 %v4054
  %4109 = vmatprep.subr.mxu0 %v4059
  %4110 = vmatpush1.msra.mxu0 %v4058
  %4111 = vmatprep.subr.mxu0 %v4063
  %4112 = vmatpush1.msra.mxu0 %v4062
  %4113 = vmatprep.subr.mxu0 %v4067
  %4114 = vmatpush1.msra.mxu0 %v4066
  %4115 = vmatprep.subr.mxu0 %v4071
  %4116 = vmatpush1.msra.mxu0 %v4070
  %4117 = vmatprep.subr.mxu0 %v4075
  %4118 = vmatpush1.msra.mxu0 %v4074
  %4119 = vmatprep.subr.mxu0 %v4079
  %4120 = vmatpush1.msra.mxu0 %v4078
  %4121 = vmatprep.subr.mxu0 %v4083
  %4122 = vmatpush1.msra.mxu0 %v4082
  %4123 = vmatprep.subr.mxu0 %v4087
  %4124 = vmatpush1.msra.mxu0 %v4086
  %4125 = vmatprep.subr.mxu0 0.0
  %4126 = vmatpush1.msra.mxu0 0.0
  %4127 = vmatprep.subr.mxu0 0.0
  %4128 = vmatpush1.msra.mxu0 0.0
  %4129 = vmatprep.subr.mxu0 0.0
  %4130 = vmatpush1.msra.mxu0 0.0
  %4131 = vmatprep.subr.mxu0 0.0
  %4132 = vmatpush1.msra.mxu0 0.0
  %4133 = vmatprep.subr.mxu0 0.0
  %4134 = vmatpush1.msra.mxu0 0.0
  %4135 = vmatprep.subr.mxu0 0.0
  %4136 = vmatpush1.msra.mxu0 0.0
  %4137 = vmatprep.subr.mxu0 0.0
  %4138 = vmatpush1.msra.mxu0 0.0
  %4139 = vmatprep.subr.mxu0 0.0
  %4140 = vmatpush1.msra.mxu0 0.0
  %4141 = vmatprep.subr.mxu0 0.0
  %4142 = vmatpush1.msra.mxu0 0.0
  %4143 = vmatprep.subr.mxu0 0.0
  %4144 = vmatpush1.msra.mxu0 0.0
  %4145 = vmatprep.subr.mxu0 0.0
  %4146 = vmatpush1.msra.mxu0 0.0
  %4147 = vmatprep.subr.mxu0 0.0
  %4148 = vmatpush1.msra.mxu0 0.0
  %4149 = vmatprep.subr.mxu0 0.0
  %4150 = vmatpush1.msra.mxu0 0.0
  %4151 = vmatprep.subr.mxu0 0.0
  %4152 = vmatpush1.msra.mxu0 0.0
  %4153 = vmatprep.subr.mxu0 0.0
  %4154 = vmatpush1.msra.mxu0 0.0
  %4155 = vmatprep.subr.mxu0 0.0
  %4156 = vmatpush1.msra.mxu0 0.0
  %4157 = vmatprep.mubr.f32.mxu0 0.0
  %4158 = vmatmul.mubr.f32.gmra.mrb[0].mxu0 %v4091
  %v4159 = vpop.f32.mrb[0].mxu0
  %v4160 = vadd.f32 0.0, %v4159
  %v4161 = vpop.f32.mrb[0].mxu0
  %v4162 = vadd.f32 0.0, %v4161
  %4163 = vdwg.mxu0
  %4164 = vmatprep.subr.mxu0 %v4029
  %4165 = vmatpush1.msra.mxu0 %v4028
  %4166 = vmatprep.subr.mxu0 %v4033
  %4167 = vmatpush1.msra.mxu0 %v4032
  %4168 = vmatprep.subr.mxu0 %v4037
  %4169 = vmatpush1.msra.mxu0 %v4036
  %4170 = vmatprep.subr.mxu0 %v4041
  %4171 = vmatpush1.msra.mxu0 %v4040
  %4172 = vmatprep.subr.mxu0 %v4045
  %4173 = vmatpush1.msra.mxu0 %v4044
  %4174 = vmatprep.subr.mxu0 %v4049
  %4175 = vmatpush1.msra.mxu0 %v4048
  %4176 = vmatprep.subr.mxu0 %v4053
  %4177 = vmatpush1.msra.mxu0 %v4052
  %4178 = vmatprep.subr.mxu0 %v4057
  %4179 = vmatpush1.msra.mxu0 %v4056
  %4180 = vmatprep.subr.mxu0 %v4061
  %4181 = vmatpush1.msra.mxu0 %v4060
  %4182 = vmatprep.subr.mxu0 %v4065
  %4183 = vmatpush1.msra.mxu0 %v4064
  %4184 = vmatprep.subr.mxu0 %v4069
  %4185 = vmatpush1.msra.mxu0 %v4068
  %4186 = vmatprep.subr.mxu0 %v4073
  %4187 = vmatpush1.msra.mxu0 %v4072
  %4188 = vmatprep.subr.mxu0 %v4077
  %4189 = vmatpush1.msra.mxu0 %v4076
  %4190 = vmatprep.subr.mxu0 %v4081
  %4191 = vmatpush1.msra.mxu0 %v4080
  %4192 = vmatprep.subr.mxu0 %v4085
  %4193 = vmatpush1.msra.mxu0 %v4084
  %4194 = vmatprep.subr.mxu0 %v4089
  %4195 = vmatpush1.msra.mxu0 %v4088
  %4196 = vmatprep.subr.mxu0 0.0
  %4197 = vmatpush1.msra.mxu0 0.0
  %4198 = vmatprep.subr.mxu0 0.0
  %4199 = vmatpush1.msra.mxu0 0.0
  %4200 = vmatprep.subr.mxu0 0.0
  %4201 = vmatpush1.msra.mxu0 0.0
  %4202 = vmatprep.subr.mxu0 0.0
  %4203 = vmatpush1.msra.mxu0 0.0
  %4204 = vmatprep.subr.mxu0 0.0
  %4205 = vmatpush1.msra.mxu0 0.0
  %4206 = vmatprep.subr.mxu0 0.0
  %4207 = vmatpush1.msra.mxu0 0.0
  %4208 = vmatprep.subr.mxu0 0.0
  %4209 = vmatpush1.msra.mxu0 0.0
  %4210 = vmatprep.subr.mxu0 0.0
  %4211 = vmatpush1.msra.mxu0 0.0
  %4212 = vmatprep.subr.mxu0 0.0
  %4213 = vmatpush1.msra.mxu0 0.0
  %4214 = vmatprep.subr.mxu0 0.0
  %4215 = vmatpush1.msra.mxu0 0.0
  %4216 = vmatprep.subr.mxu0 0.0
  %4217 = vmatpush1.msra.mxu0 0.0
  %4218 = vmatprep.subr.mxu0 0.0
  %4219 = vmatpush1.msra.mxu0 0.0
  %4220 = vmatprep.subr.mxu0 0.0
  %4221 = vmatpush1.msra.mxu0 0.0
  %4222 = vmatprep.subr.mxu0 0.0
  %4223 = vmatpush1.msra.mxu0 0.0
  %4224 = vmatprep.subr.mxu0 0.0
  %4225 = vmatpush1.msra.mxu0 0.0
  %4226 = vmatprep.subr.mxu0 0.0
  %4227 = vmatpush1.msra.mxu0 0.0
  %4228 = vmatprep.mubr.f32.mxu0 0.0
  %4229 = vmatmul.mubr.f32.gmra.mrb[0].mxu0 %v4091
  %v4230 = vpop.f32.mrb[0].mxu0
  %v4231 = vadd.f32 0.0, %v4230
  %v4232 = vpop.f32.mrb[0].mxu0
  %v4233 = vadd.f32 0.0, %v4232
  %4234 = vdwg.mxu0
  %v4239 = vrot.slane %v4160, 4
  %v4240 = vrot.slane %v4162, 4
  %v4241 = vrot.slane %v4231, 4
  %v4242 = vrot.slane %v4233, 4
  %v4247 = vadd.f32 %v4021, %v4239
  %v4248 = vadd.f32 %v4022, %v4240
  %v4249 = vadd.f32 %v4023, %v4241
  %v4250 = vadd.f32 %v4024, %v4242
  %v4251 = vmul.f32 %v4015, 0.5
  %v4252 = vxor.u32 %v4247, 2147483648
  %v4253 = vmul.f32 %v4252, 1.442695
  %v4254 = vpow.pop %v4253
  %v4255 = vadd.f32 %v4254, 1.0
  %v4256 = vrcp.pop %v4255
  %v4257 = vmul.f32 1.0, %v4256
  %v4258 = vxor.u32 %v4248, 2147483648
  %v4259 = vmul.f32 %v4258, 1.442695
  %v4260 = vpow.pop %v4259
  %v4261 = vadd.f32 %v4260, 1.0
  %v4262 = vrcp.pop %v4261
  %v4263 = vmul.f32 1.0, %v4262
  %v4264 = vtanh.pop %v4249
  %v4265 = vxor.u32 %v4250, 2147483648
  %v4266 = vmul.f32 %v4265, 1.442695
  %v4267 = vpow.pop %v4266
  %v4268 = vadd.f32 %v4267, 1.0
  %v4269 = vrcp.pop %v4268
  %v4270 = vmul.f32 1.0, %v4269
  %v4272 = vrot.slane %v4251, 6
  %v4274 = vmul.f32 %v4263, %v4272
  %v4275 = vmul.f32 %v4257, %v4264
  %v4276 = vadd.f32 %v4274, %v4275
  %v4277 = vtanh.pop %v4276
  %v4278 = vmul.f32 %v4270, %v4277
  %4279 = vst [vmem:[#allocation4 + $0x20] sm:$0x30] %v4278
  %4280 = vst [vmem:[#allocation4 + $0x28] sm:$0x30] %v4276
  %4281 = vst [vmem:[#allocation3 + $0x10] sm:$0x30] %v4278
  %v4282 = vld [vmem:[#allocation2 + $0x40] sm:$0xc0]
  %v4283 = vld [vmem:[#allocation2 + $0x48] sm:$0xc0]
  %v4284 = vld [vmem:[#allocation2 + $0x50] sm:$0xc0]
  %v4285 = vld [vmem:[#allocation2 + $0x58] sm:$0xc0]
  %v4286 = vmul.f32 %v4278, 0.5
  %v4287 = vld [vmem:[%s3] sm:$0xff]
  %v4288 = vld [vmem:[%s3 + $0x8] sm:$0xff]
  %v4289 = vld [vmem:[%s3 + $0x10] sm:$0xff]
  %v4290 = vld [vmem:[%s3 + $0x18] sm:$0xff]
  %v4291 = vld [vmem:[%s3 + $0x20] sm:$0xff]
  %v4292 = vld [vmem:[%s3 + $0x28] sm:$0xff]
  %v4293 = vld [vmem:[%s3 + $0x30] sm:$0xff]
  %v4294 = vld [vmem:[%s3 + $0x38] sm:$0xff]
  %v4295 = vld [vmem:[%s3 + $0x40] sm:$0xff]
  %v4296 = vld [vmem:[%s3 + $0x48] sm:$0xff]
  %v4297 = vld [vmem:[%s3 + $0x50] sm:$0xff]
  %v4298 = vld [vmem:[%s3 + $0x58] sm:$0xff]
  %v4299 = vld [vmem:[%s3 + $0x60] sm:$0xff]
  %v4300 = vld [vmem:[%s3 + $0x68] sm:$0xff]
  %v4301 = vld [vmem:[%s3 + $0x70] sm:$0xff]
  %v4302 = vld [vmem:[%s3 + $0x78] sm:$0xff]
  %v4303 = vld [vmem:[%s3 + $0x80] sm:$0xff]
  %v4304 = vld [vmem:[%s3 + $0x88] sm:$0xff]
  %v4305 = vld [vmem:[%s3 + $0x90] sm:$0xff]
  %v4306 = vld [vmem:[%s3 + $0x98] sm:$0xff]
  %v4307 = vld [vmem:[%s3 + $0xa0] sm:$0xff]
  %v4308 = vld [vmem:[%s3 + $0xa8] sm:$0xff]
  %v4309 = vld [vmem:[%s3 + $0xb0] sm:$0xff]
  %v4310 = vld [vmem:[%s3 + $0xb8] sm:$0xff]
  %v4311 = vld [vmem:[%s3 + $0xc0] sm:$0xff]
  %v4312 = vld [vmem:[%s3 + $0xc8] sm:$0xff]
  %v4313 = vld [vmem:[%s3 + $0xd0] sm:$0xff]
  %v4314 = vld [vmem:[%s3 + $0xd8] sm:$0xff]
  %v4315 = vld [vmem:[%s3 + $0xe0] sm:$0xff]
  %v4316 = vld [vmem:[%s3 + $0xe8] sm:$0xff]
  %v4317 = vld [vmem:[%s3 + $0xf0] sm:$0xff]
  %v4318 = vld [vmem:[%s3 + $0xf8] sm:$0xff]
  %v4319 = vld [vmem:[%s3 + $0x100] sm:$0xff]
  %v4320 = vld [vmem:[%s3 + $0x108] sm:$0xff]
  %v4321 = vld [vmem:[%s3 + $0x110] sm:$0xff]
  %v4322 = vld [vmem:[%s3 + $0x118] sm:$0xff]
  %v4323 = vld [vmem:[%s3 + $0x120] sm:$0xff]
  %v4324 = vld [vmem:[%s3 + $0x128] sm:$0xff]
  %v4325 = vld [vmem:[%s3 + $0x130] sm:$0xff]
  %v4326 = vld [vmem:[%s3 + $0x138] sm:$0xff]
  %v4327 = vld [vmem:[%s3 + $0x140] sm:$0xff]
  %v4328 = vld [vmem:[%s3 + $0x148] sm:$0xff]
  %v4329 = vld [vmem:[%s3 + $0x150] sm:$0xff]
  %v4330 = vld [vmem:[%s3 + $0x158] sm:$0xff]
  %v4331 = vld [vmem:[%s3 + $0x160] sm:$0xff]
  %v4332 = vld [vmem:[%s3 + $0x168] sm:$0xff]
  %v4333 = vld [vmem:[%s3 + $0x170] sm:$0xff]
  %v4334 = vld [vmem:[%s3 + $0x178] sm:$0xff]
  %v4335 = vld [vmem:[%s3 + $0x180] sm:$0xff]
  %v4336 = vld [vmem:[%s3 + $0x188] sm:$0xff]
  %v4337 = vld [vmem:[%s3 + $0x190] sm:$0xff]
  %v4338 = vld [vmem:[%s3 + $0x198] sm:$0xff]
  %v4339 = vld [vmem:[%s3 + $0x1a0] sm:$0xff]
  %v4340 = vld [vmem:[%s3 + $0x1a8] sm:$0xff]
  %v4341 = vld [vmem:[%s3 + $0x1b0] sm:$0xff]
  %v4342 = vld [vmem:[%s3 + $0x1b8] sm:$0xff]
  %v4343 = vld [vmem:[%s3 + $0x1c0] sm:$0xff]
  %v4344 = vld [vmem:[%s3 + $0x1c8] sm:$0xff]
  %v4345 = vld [vmem:[%s3 + $0x1d0] sm:$0xff]
  %v4346 = vld [vmem:[%s3 + $0x1d8] sm:$0xff]
  %v4347 = vld [vmem:[%s3 + $0x1e0] sm:$0xff]
  %v4348 = vld [vmem:[%s3 + $0x1e8] sm:$0xff]
  %v4349 = vld [vmem:[%s3 + $0x1f0] sm:$0xff]
  %v4350 = vld [vmem:[%s3 + $0x1f8] sm:$0xff]
  %v4352 = vrot.slane %v4286, 4
  %4354 = vmatprep.subr.mxu0 %v4288
  %4355 = vmatpush1.msra.mxu0 %v4287
  %4356 = vmatprep.subr.mxu0 %v4292
  %4357 = vmatpush1.msra.mxu0 %v4291
  %4358 = vmatprep.subr.mxu0 %v4296
  %4359 = vmatpush1.msra.mxu0 %v4295
  %4360 = vmatprep.subr.mxu0 %v4300
  %4361 = vmatpush1.msra.mxu0 %v4299
  %4362 = vmatprep.subr.mxu0 %v4304
  %4363 = vmatpush1.msra.mxu0 %v4303
  %4364 = vmatprep.subr.mxu0 %v4308
  %4365 = vmatpush1.msra.mxu0 %v4307
  %4366 = vmatprep.subr.mxu0 %v4312
  %4367 = vmatpush1.msra.mxu0 %v4311
  %4368 = vmatprep.subr.mxu0 %v4316
  %4369 = vmatpush1.msra.mxu0 %v4315
  %4370 = vmatprep.subr.mxu0 %v4320
  %4371 = vmatpush1.msra.mxu0 %v4319
  %4372 = vmatprep.subr.mxu0 %v4324
  %4373 = vmatpush1.msra.mxu0 %v4323
  %4374 = vmatprep.subr.mxu0 %v4328
  %4375 = vmatpush1.msra.mxu0 %v4327
  %4376 = vmatprep.subr.mxu0 %v4332
  %4377 = vmatpush1.msra.mxu0 %v4331
  %4378 = vmatprep.subr.mxu0 %v4336
  %4379 = vmatpush1.msra.mxu0 %v4335
  %4380 = vmatprep.subr.mxu0 %v4340
  %4381 = vmatpush1.msra.mxu0 %v4339
  %4382 = vmatprep.subr.mxu0 %v4344
  %4383 = vmatpush1.msra.mxu0 %v4343
  %4384 = vmatprep.subr.mxu0 %v4348
  %4385 = vmatpush1.msra.mxu0 %v4347
  %4386 = vmatprep.subr.mxu0 0.0
  %4387 = vmatpush1.msra.mxu0 0.0
  %4388 = vmatprep.subr.mxu0 0.0
  %4389 = vmatpush1.msra.mxu0 0.0
  %4390 = vmatprep.subr.mxu0 0.0
  %4391 = vmatpush1.msra.mxu0 0.0
  %4392 = vmatprep.subr.mxu0 0.0
  %4393 = vmatpush1.msra.mxu0 0.0
  %4394 = vmatprep.subr.mxu0 0.0
  %4395 = vmatpush1.msra.mxu0 0.0
  %4396 = vmatprep.subr.mxu0 0.0
  %4397 = vmatpush1.msra.mxu0 0.0
  %4398 = vmatprep.subr.mxu0 0.0
  %4399 = vmatpush1.msra.mxu0 0.0
  %4400 = vmatprep.subr.mxu0 0.0
  %4401 = vmatpush1.msra.mxu0 0.0
  %4402 = vmatprep.subr.mxu0 0.0
  %4403 = vmatpush1.msra.mxu0 0.0
  %4404 = vmatprep.subr.mxu0 0.0
  %4405 = vmatpush1.msra.mxu0 0.0
  %4406 = vmatprep.subr.mxu0 0.0
  %4407 = vmatpush1.msra.mxu0 0.0
  %4408 = vmatprep.subr.mxu0 0.0
  %4409 = vmatpush1.msra.mxu0 0.0
  %4410 = vmatprep.subr.mxu0 0.0
  %4411 = vmatpush1.msra.mxu0 0.0
  %4412 = vmatprep.subr.mxu0 0.0
  %4413 = vmatpush1.msra.mxu0 0.0
  %4414 = vmatprep.subr.mxu0 0.0
  %4415 = vmatpush1.msra.mxu0 0.0
  %4416 = vmatprep.subr.mxu0 0.0
  %4417 = vmatpush1.msra.mxu0 0.0
  %4418 = vmatprep.mubr.f32.mxu0 0.0
  %4419 = vmatmul.mubr.f32.gmra.mrb[0].mxu0 %v4352
  %v4420 = vpop.f32.mrb[0].mxu0
  %v4421 = vadd.f32 0.0, %v4420
  %v4422 = vpop.f32.mrb[0].mxu0
  %v4423 = vadd.f32 0.0, %v4422
  %4424 = vdwg.mxu0
  %4425 = vmatprep.subr.mxu0 %v4290
  %4426 = vmatpush1.msra.mxu0 %v4289
  %4427 = vmatprep.subr.mxu0 %v4294
  %4428 = vmatpush1.msra.mxu0 %v4293
  %4429 = vmatprep.subr.mxu0 %v4298
  %4430 = vmatpush1.msra.mxu0 %v4297
  %4431 = vmatprep.subr.mxu0 %v4302
  %4432 = vmatpush1.msra.mxu0 %v4301
  %4433 = vmatprep.subr.mxu0 %v4306
  %4434 = vmatpush1.msra.mxu0 %v4305
  %4435 = vmatprep.subr.mxu0 %v4310
  %4436 = vmatpush1.msra.mxu0 %v4309
  %4437 = vmatprep.subr.mxu0 %v4314
  %4438 = vmatpush1.msra.mxu0 %v4313
  %4439 = vmatprep.subr.mxu0 %v4318
  %4440 = vmatpush1.msra.mxu0 %v4317
  %4441 = vmatprep.subr.mxu0 %v4322
  %4442 = vmatpush1.msra.mxu0 %v4321
  %4443 = vmatprep.subr.mxu0 %v4326
  %4444 = vmatpush1.msra.mxu0 %v4325
  %4445 = vmatprep.subr.mxu0 %v4330
  %4446 = vmatpush1.msra.mxu0 %v4329
  %4447 = vmatprep.subr.mxu0 %v4334
  %4448 = vmatpush1.msra.mxu0 %v4333
  %4449 = vmatprep.subr.mxu0 %v4338
  %4450 = vmatpush1.msra.mxu0 %v4337
  %4451 = vmatprep.subr.mxu0 %v4342
  %4452 = vmatpush1.msra.mxu0 %v4341
  %4453 = vmatprep.subr.mxu0 %v4346
  %4454 = vmatpush1.msra.mxu0 %v4345
  %4455 = vmatprep.subr.mxu0 %v4350
  %4456 = vmatpush1.msra.mxu0 %v4349
  %4457 = vmatprep.subr.mxu0 0.0
  %4458 = vmatpush1.msra.mxu0 0.0
  %4459 = vmatprep.subr.mxu0 0.0
  %4460 = vmatpush1.msra.mxu0 0.0
  %4461 = vmatprep.subr.mxu0 0.0
  %4462 = vmatpush1.msra.mxu0 0.0
  %4463 = vmatprep.subr.mxu0 0.0
  %4464 = vmatpush1.msra.mxu0 0.0
  %4465 = vmatprep.subr.mxu0 0.0
  %4466 = vmatpush1.msra.mxu0 0.0
  %4467 = vmatprep.subr.mxu0 0.0
  %4468 = vmatpush1.msra.mxu0 0.0
  %4469 = vmatprep.subr.mxu0 0.0
  %4470 = vmatpush1.msra.mxu0 0.0
  %4471 = vmatprep.subr.mxu0 0.0
  %4472 = vmatpush1.msra.mxu0 0.0
  %4473 = vmatprep.subr.mxu0 0.0
  %4474 = vmatpush1.msra.mxu0 0.0
  %4475 = vmatprep.subr.mxu0 0.0
  %4476 = vmatpush1.msra.mxu0 0.0
  %4477 = vmatprep.subr.mxu0 0.0
  %4478 = vmatpush1.msra.mxu0 0.0
  %4479 = vmatprep.subr.mxu0 0.0
  %4480 = vmatpush1.msra.mxu0 0.0
  %4481 = vmatprep.subr.mxu0 0.0
  %4482 = vmatpush1.msra.mxu0 0.0
  %4483 = vmatprep.subr.mxu0 0.0
  %4484 = vmatpush1.msra.mxu0 0.0
  %4485 = vmatprep.subr.mxu0 0.0
  %4486 = vmatpush1.msra.mxu0 0.0
  %4487 = vmatprep.subr.mxu0 0.0
  %4488 = vmatpush1.msra.mxu0 0.0
  %4489 = vmatprep.mubr.f32.mxu0 0.0
  %4490 = vmatmul.mubr.f32.gmra.mrb[0].mxu0 %v4352
  %v4491 = vpop.f32.mrb[0].mxu0
  %v4492 = vadd.f32 0.0, %v4491
  %v4493 = vpop.f32.mrb[0].mxu0
  %v4494 = vadd.f32 0.0, %v4493
  %4495 = vdwg.mxu0
  %v4500 = vrot.slane %v4421, 2
  %v4501 = vrot.slane %v4423, 2
  %v4502 = vrot.slane %v4492, 2
  %v4503 = vrot.slane %v4494, 2
  %v4508 = vadd.f32 %v4282, %v4500
  %v4509 = vadd.f32 %v4283, %v4501
  %v4510 = vadd.f32 %v4284, %v4502
  %v4511 = vadd.f32 %v4285, %v4503
  %v4512 = vmul.f32 %v4276, 0.5
  %v4513 = vxor.u32 %v4508, 2147483648
  %v4514 = vmul.f32 %v4513, 1.442695
  %v4515 = vpow.pop %v4514
  %v4516 = vadd.f32 %v4515, 1.0
  %v4517 = vrcp.pop %v4516
  %v4518 = vmul.f32 1.0, %v4517
  %v4519 = vxor.u32 %v4509, 2147483648
  %v4520 = vmul.f32 %v4519, 1.442695
  %v4521 = vpow.pop %v4520
  %v4522 = vadd.f32 %v4521, 1.0
  %v4523 = vrcp.pop %v4522
  %v4524 = vmul.f32 1.0, %v4523
  %v4525 = vtanh.pop %v4510
  %v4526 = vxor.u32 %v4511, 2147483648
  %v4527 = vmul.f32 %v4526, 1.442695
  %v4528 = vpow.pop %v4527
  %v4529 = vadd.f32 %v4528, 1.0
  %v4530 = vrcp.pop %v4529
  %v4531 = vmul.f32 1.0, %v4530
  %v4533 = vrot.slane %v4512, 6
  %v4535 = vmul.f32 %v4524, %v4533
  %v4536 = vmul.f32 %v4518, %v4525
  %v4537 = vadd.f32 %v4535, %v4536
  %v4538 = vtanh.pop %v4537
  %v4539 = vmul.f32 %v4531, %v4538
  %4540 = vst [vmem:[#allocation4 + $0x20] sm:$0xc0] %v4539
  %4541 = vst [vmem:[#allocation4 + $0x28] sm:$0xc0] %v4537
  %4542 = vst [vmem:[#allocation3 + $0x10] sm:$0xc0] %v4539
  %v4543 = vld [vmem:[#allocation2 + $0x60] sm:$0x3]
  %v4544 = vld [vmem:[#allocation2 + $0x68] sm:$0x3]
  %v4545 = vld [vmem:[#allocation2 + $0x70] sm:$0x3]
  %v4546 = vld [vmem:[#allocation2 + $0x78] sm:$0x3]
  %v4547 = vmul.f32 %v4539, 0.5
  %v4548 = vld [vmem:[%s3] sm:$0xff]
  %v4549 = vld [vmem:[%s3 + $0x8] sm:$0xff]
  %v4550 = vld [vmem:[%s3 + $0x10] sm:$0xff]
  %v4551 = vld [vmem:[%s3 + $0x18] sm:$0xff]
  %v4552 = vld [vmem:[%s3 + $0x20] sm:$0xff]
  %v4553 = vld [vmem:[%s3 + $0x28] sm:$0xff]
  %v4554 = vld [vmem:[%s3 + $0x30] sm:$0xff]
  %v4555 = vld [vmem:[%s3 + $0x38] sm:$0xff]
  %v4556 = vld [vmem:[%s3 + $0x40] sm:$0xff]
  %v4557 = vld [vmem:[%s3 + $0x48] sm:$0xff]
  %v4558 = vld [vmem:[%s3 + $0x50] sm:$0xff]
  %v4559 = vld [vmem:[%s3 + $0x58] sm:$0xff]
  %v4560 = vld [vmem:[%s3 + $0x60] sm:$0xff]
  %v4561 = vld [vmem:[%s3 + $0x68] sm:$0xff]
  %v4562 = vld [vmem:[%s3 + $0x70] sm:$0xff]
  %v4563 = vld [vmem:[%s3 + $0x78] sm:$0xff]
  %v4564 = vld [vmem:[%s3 + $0x80] sm:$0xff]
  %v4565 = vld [vmem:[%s3 + $0x88] sm:$0xff]
  %v4566 = vld [vmem:[%s3 + $0x90] sm:$0xff]
  %v4567 = vld [vmem:[%s3 + $0x98] sm:$0xff]
  %v4568 = vld [vmem:[%s3 + $0xa0] sm:$0xff]
  %v4569 = vld [vmem:[%s3 + $0xa8] sm:$0xff]
  %v4570 = vld [vmem:[%s3 + $0xb0] sm:$0xff]
  %v4571 = vld [vmem:[%s3 + $0xb8] sm:$0xff]
  %v4572 = vld [vmem:[%s3 + $0xc0] sm:$0xff]
  %v4573 = vld [vmem:[%s3 + $0xc8] sm:$0xff]
  %v4574 = vld [vmem:[%s3 + $0xd0] sm:$0xff]
  %v4575 = vld [vmem:[%s3 + $0xd8] sm:$0xff]
  %v4576 = vld [vmem:[%s3 + $0xe0] sm:$0xff]
  %v4577 = vld [vmem:[%s3 + $0xe8] sm:$0xff]
  %v4578 = vld [vmem:[%s3 + $0xf0] sm:$0xff]
  %v4579 = vld [vmem:[%s3 + $0xf8] sm:$0xff]
  %v4580 = vld [vmem:[%s3 + $0x100] sm:$0xff]
  %v4581 = vld [vmem:[%s3 + $0x108] sm:$0xff]
  %v4582 = vld [vmem:[%s3 + $0x110] sm:$0xff]
  %v4583 = vld [vmem:[%s3 + $0x118] sm:$0xff]
  %v4584 = vld [vmem:[%s3 + $0x120] sm:$0xff]
  %v4585 = vld [vmem:[%s3 + $0x128] sm:$0xff]
  %v4586 = vld [vmem:[%s3 + $0x130] sm:$0xff]
  %v4587 = vld [vmem:[%s3 + $0x138] sm:$0xff]
  %v4588 = vld [vmem:[%s3 + $0x140] sm:$0xff]
  %v4589 = vld [vmem:[%s3 + $0x148] sm:$0xff]
  %v4590 = vld [vmem:[%s3 + $0x150] sm:$0xff]
  %v4591 = vld [vmem:[%s3 + $0x158] sm:$0xff]
  %v4592 = vld [vmem:[%s3 + $0x160] sm:$0xff]
  %v4593 = vld [vmem:[%s3 + $0x168] sm:$0xff]
  %v4594 = vld [vmem:[%s3 + $0x170] sm:$0xff]
  %v4595 = vld [vmem:[%s3 + $0x178] sm:$0xff]
  %v4596 = vld [vmem:[%s3 + $0x180] sm:$0xff]
  %v4597 = vld [vmem:[%s3 + $0x188] sm:$0xff]
  %v4598 = vld [vmem:[%s3 + $0x190] sm:$0xff]
  %v4599 = vld [vmem:[%s3 + $0x198] sm:$0xff]
  %v4600 = vld [vmem:[%s3 + $0x1a0] sm:$0xff]
  %v4601 = vld [vmem:[%s3 + $0x1a8] sm:$0xff]
  %v4602 = vld [vmem:[%s3 + $0x1b0] sm:$0xff]
  %v4603 = vld [vmem:[%s3 + $0x1b8] sm:$0xff]
  %v4604 = vld [vmem:[%s3 + $0x1c0] sm:$0xff]
  %v4605 = vld [vmem:[%s3 + $0x1c8] sm:$0xff]
  %v4606 = vld [vmem:[%s3 + $0x1d0] sm:$0xff]
  %v4607 = vld [vmem:[%s3 + $0x1d8] sm:$0xff]
  %v4608 = vld [vmem:[%s3 + $0x1e0] sm:$0xff]
  %v4609 = vld [vmem:[%s3 + $0x1e8] sm:$0xff]
  %v4610 = vld [vmem:[%s3 + $0x1f0] sm:$0xff]
  %v4611 = vld [vmem:[%s3 + $0x1f8] sm:$0xff]
  %v4613 = vrot.slane %v4547, 6
  %4615 = vmatprep.subr.mxu0 %v4549
  %4616 = vmatpush1.msra.mxu0 %v4548
  %4617 = vmatprep.subr.mxu0 %v4553
  %4618 = vmatpush1.msra.mxu0 %v4552
  %4619 = vmatprep.subr.mxu0 %v4557
  %4620 = vmatpush1.msra.mxu0 %v4556
  %4621 = vmatprep.subr.mxu0 %v4561
  %4622 = vmatpush1.msra.mxu0 %v4560
  %4623 = vmatprep.subr.mxu0 %v4565
  %4624 = vmatpush1.msra.mxu0 %v4564
  %4625 = vmatprep.subr.mxu0 %v4569
  %4626 = vmatpush1.msra.mxu0 %v4568
  %4627 = vmatprep.subr.mxu0 %v4573
  %4628 = vmatpush1.msra.mxu0 %v4572
  %4629 = vmatprep.subr.mxu0 %v4577
  %4630 = vmatpush1.msra.mxu0 %v4576
  %4631 = vmatprep.subr.mxu0 %v4581
  %4632 = vmatpush1.msra.mxu0 %v4580
  %4633 = vmatprep.subr.mxu0 %v4585
  %4634 = vmatpush1.msra.mxu0 %v4584
  %4635 = vmatprep.subr.mxu0 %v4589
  %4636 = vmatpush1.msra.mxu0 %v4588
  %4637 = vmatprep.subr.mxu0 %v4593
  %4638 = vmatpush1.msra.mxu0 %v4592
  %4639 = vmatprep.subr.mxu0 %v4597
  %4640 = vmatpush1.msra.mxu0 %v4596
  %4641 = vmatprep.subr.mxu0 %v4601
  %4642 = vmatpush1.msra.mxu0 %v4600
  %4643 = vmatprep.subr.mxu0 %v4605
  %4644 = vmatpush1.msra.mxu0 %v4604
  %4645 = vmatprep.subr.mxu0 %v4609
  %4646 = vmatpush1.msra.mxu0 %v4608
  %4647 = vmatprep.subr.mxu0 0.0
  %4648 = vmatpush1.msra.mxu0 0.0
  %4649 = vmatprep.subr.mxu0 0.0
  %4650 = vmatpush1.msra.mxu0 0.0
  %4651 = vmatprep.subr.mxu0 0.0
  %4652 = vmatpush1.msra.mxu0 0.0
  %4653 = vmatprep.subr.mxu0 0.0
  %4654 = vmatpush1.msra.mxu0 0.0
  %4655 = vmatprep.subr.mxu0 0.0
  %4656 = vmatpush1.msra.mxu0 0.0
  %4657 = vmatprep.subr.mxu0 0.0
  %4658 = vmatpush1.msra.mxu0 0.0
  %4659 = vmatprep.subr.mxu0 0.0
  %4660 = vmatpush1.msra.mxu0 0.0
  %4661 = vmatprep.subr.mxu0 0.0
  %4662 = vmatpush1.msra.mxu0 0.0
  %4663 = vmatprep.subr.mxu0 0.0
  %4664 = vmatpush1.msra.mxu0 0.0
  %4665 = vmatprep.subr.mxu0 0.0
  %4666 = vmatpush1.msra.mxu0 0.0
  %4667 = vmatprep.subr.mxu0 0.0
  %4668 = vmatpush1.msra.mxu0 0.0
  %4669 = vmatprep.subr.mxu0 0.0
  %4670 = vmatpush1.msra.mxu0 0.0
  %4671 = vmatprep.subr.mxu0 0.0
  %4672 = vmatpush1.msra.mxu0 0.0
  %4673 = vmatprep.subr.mxu0 0.0
  %4674 = vmatpush1.msra.mxu0 0.0
  %4675 = vmatprep.subr.mxu0 0.0
  %4676 = vmatpush1.msra.mxu0 0.0
  %4677 = vmatprep.subr.mxu0 0.0
  %4678 = vmatpush1.msra.mxu0 0.0
  %4679 = vmatprep.mubr.f32.mxu0 0.0
  %4680 = vmatmul.mubr.f32.gmra.mrb[0].mxu0 %v4613
  %v4681 = vpop.f32.mrb[0].mxu0
  %v4682 = vadd.f32 0.0, %v4681
  %v4683 = vpop.f32.mrb[0].mxu0
  %v4684 = vadd.f32 0.0, %v4683
  %4685 = vdwg.mxu0
  %4686 = vmatprep.subr.mxu0 %v4551
  %4687 = vmatpush1.msra.mxu0 %v4550
  %4688 = vmatprep.subr.mxu0 %v4555
  %4689 = vmatpush1.msra.mxu0 %v4554
  %4690 = vmatprep.subr.mxu0 %v4559
  %4691 = vmatpush1.msra.mxu0 %v4558
  %4692 = vmatprep.subr.mxu0 %v4563
  %4693 = vmatpush1.msra.mxu0 %v4562
  %4694 = vmatprep.subr.mxu0 %v4567
  %4695 = vmatpush1.msra.mxu0 %v4566
  %4696 = vmatprep.subr.mxu0 %v4571
  %4697 = vmatpush1.msra.mxu0 %v4570
  %4698 = vmatprep.subr.mxu0 %v4575
  %4699 = vmatpush1.msra.mxu0 %v4574
  %4700 = vmatprep.subr.mxu0 %v4579
  %4701 = vmatpush1.msra.mxu0 %v4578
  %4702 = vmatprep.subr.mxu0 %v4583
  %4703 = vmatpush1.msra.mxu0 %v4582
  %4704 = vmatprep.subr.mxu0 %v4587
  %4705 = vmatpush1.msra.mxu0 %v4586
  %4706 = vmatprep.subr.mxu0 %v4591
  %4707 = vmatpush1.msra.mxu0 %v4590
  %4708 = vmatprep.subr.mxu0 %v4595
  %4709 = vmatpush1.msra.mxu0 %v4594
  %4710 = vmatprep.subr.mxu0 %v4599
  %4711 = vmatpush1.msra.mxu0 %v4598
  %4712 = vmatprep.subr.mxu0 %v4603
  %4713 = vmatpush1.msra.mxu0 %v4602
  %4714 = vmatprep.subr.mxu0 %v4607
  %4715 = vmatpush1.msra.mxu0 %v4606
  %4716 = vmatprep.subr.mxu0 %v4611
  %4717 = vmatpush1.msra.mxu0 %v4610
  %4718 = vmatprep.subr.mxu0 0.0
  %4719 = vmatpush1.msra.mxu0 0.0
  %4720 = vmatprep.subr.mxu0 0.0
  %4721 = vmatpush1.msra.mxu0 0.0
  %4722 = vmatprep.subr.mxu0 0.0
  %4723 = vmatpush1.msra.mxu0 0.0
  %4724 = vmatprep.subr.mxu0 0.0
  %4725 = vmatpush1.msra.mxu0 0.0
  %4726 = vmatprep.subr.mxu0 0.0
  %4727 = vmatpush1.msra.mxu0 0.0
  %4728 = vmatprep.subr.mxu0 0.0
  %4729 = vmatpush1.msra.mxu0 0.0
  %4730 = vmatprep.subr.mxu0 0.0
  %4731 = vmatpush1.msra.mxu0 0.0
  %4732 = vmatprep.subr.mxu0 0.0
  %4733 = vmatpush1.msra.mxu0 0.0
  %4734 = vmatprep.subr.mxu0 0.0
  %4735 = vmatpush1.msra.mxu0 0.0
  %4736 = vmatprep.subr.mxu0 0.0
  %4737 = vmatpush1.msra.mxu0 0.0
  %4738 = vmatprep.subr.mxu0 0.0
  %4739 = vmatpush1.msra.mxu0 0.0
  %4740 = vmatprep.subr.mxu0 0.0
  %4741 = vmatpush1.msra.mxu0 0.0
  %4742 = vmatprep.subr.mxu0 0.0
  %4743 = vmatpush1.msra.mxu0 0.0
  %4744 = vmatprep.subr.mxu0 0.0
  %4745 = vmatpush1.msra.mxu0 0.0
  %4746 = vmatprep.subr.mxu0 0.0
  %4747 = vmatpush1.msra.mxu0 0.0
  %4748 = vmatprep.subr.mxu0 0.0
  %4749 = vmatpush1.msra.mxu0 0.0
  %4750 = vmatprep.mubr.f32.mxu0 0.0
  %4751 = vmatmul.mubr.f32.gmra.mrb[0].mxu0 %v4613
  %v4752 = vpop.f32.mrb[0].mxu0
  %v4753 = vadd.f32 0.0, %v4752
  %v4754 = vpop.f32.mrb[0].mxu0
  %v4755 = vadd.f32 0.0, %v4754
  %4756 = vdwg.mxu0
  %v4757 = vadd.f32 %v4543, %v4682
  %v4758 = vadd.f32 %v4544, %v4684
  %v4759 = vadd.f32 %v4545, %v4753
  %v4760 = vadd.f32 %v4546, %v4755
  %v4761 = vmul.f32 %v4537, 0.5
  %v4762 = vxor.u32 %v4757, 2147483648
  %v4763 = vmul.f32 %v4762, 1.442695
  %v4764 = vpow.pop %v4763
  %v4765 = vadd.f32 %v4764, 1.0
  %v4766 = vrcp.pop %v4765
  %v4767 = vmul.f32 1.0, %v4766
  %v4768 = vxor.u32 %v4758, 2147483648
  %v4769 = vmul.f32 %v4768, 1.442695
  %v4770 = vpow.pop %v4769
  %v4771 = vadd.f32 %v4770, 1.0
  %v4772 = vrcp.pop %v4771
  %v4773 = vmul.f32 1.0, %v4772
  %v4774 = vtanh.pop %v4759
  %v4775 = vxor.u32 %v4760, 2147483648
  %v4776 = vmul.f32 %v4775, 1.442695
  %v4777 = vpow.pop %v4776
  %v4778 = vadd.f32 %v4777, 1.0
  %v4779 = vrcp.pop %v4778
  %v4780 = vmul.f32 1.0, %v4779
  %v4782 = vrot.slane %v4761, 6
  %v4784 = vmul.f32 %v4773, %v4782
  %v4785 = vmul.f32 %v4767, %v4774
  %v4786 = vadd.f32 %v4784, %v4785
  %v4787 = vtanh.pop %v4786
  %v4788 = vmul.f32 %v4780, %v4787
  %4789 = vst [vmem:[#allocation4 + $0x30] sm:$0x3] %v4788
  %4790 = vst [vmem:[#allocation4 + $0x38] sm:$0x3] %v4786
  %4791 = vst [vmem:[#allocation3 + $0x18] sm:$0x3] %v4788
  %v4792 = vld [vmem:[#allocation2 + $0x60] sm:$0xc]
  %v4793 = vld [vmem:[#allocation2 + $0x68] sm:$0xc]
  %v4794 = vld [vmem:[#allocation2 + $0x70] sm:$0xc]
  %v4795 = vld [vmem:[#allocation2 + $0x78] sm:$0xc]
  %v4796 = vmul.f32 %v4788, 0.5
  %v4797 = vld [vmem:[%s3] sm:$0xff]
  %v4798 = vld [vmem:[%s3 + $0x8] sm:$0xff]
  %v4799 = vld [vmem:[%s3 + $0x10] sm:$0xff]
  %v4800 = vld [vmem:[%s3 + $0x18] sm:$0xff]
  %v4801 = vld [vmem:[%s3 + $0x20] sm:$0xff]
  %v4802 = vld [vmem:[%s3 + $0x28] sm:$0xff]
  %v4803 = vld [vmem:[%s3 + $0x30] sm:$0xff]
  %v4804 = vld [vmem:[%s3 + $0x38] sm:$0xff]
  %v4805 = vld [vmem:[%s3 + $0x40] sm:$0xff]
  %v4806 = vld [vmem:[%s3 + $0x48] sm:$0xff]
  %v4807 = vld [vmem:[%s3 + $0x50] sm:$0xff]
  %v4808 = vld [vmem:[%s3 + $0x58] sm:$0xff]
  %v4809 = vld [vmem:[%s3 + $0x60] sm:$0xff]
  %v4810 = vld [vmem:[%s3 + $0x68] sm:$0xff]
  %v4811 = vld [vmem:[%s3 + $0x70] sm:$0xff]
  %v4812 = vld [vmem:[%s3 + $0x78] sm:$0xff]
  %v4813 = vld [vmem:[%s3 + $0x80] sm:$0xff]
  %v4814 = vld [vmem:[%s3 + $0x88] sm:$0xff]
  %v4815 = vld [vmem:[%s3 + $0x90] sm:$0xff]
  %v4816 = vld [vmem:[%s3 + $0x98] sm:$0xff]
  %v4817 = vld [vmem:[%s3 + $0xa0] sm:$0xff]
  %v4818 = vld [vmem:[%s3 + $0xa8] sm:$0xff]
  %v4819 = vld [vmem:[%s3 + $0xb0] sm:$0xff]
  %v4820 = vld [vmem:[%s3 + $0xb8] sm:$0xff]
  %v4821 = vld [vmem:[%s3 + $0xc0] sm:$0xff]
  %v4822 = vld [vmem:[%s3 + $0xc8] sm:$0xff]
  %v4823 = vld [vmem:[%s3 + $0xd0] sm:$0xff]
  %v4824 = vld [vmem:[%s3 + $0xd8] sm:$0xff]
  %v4825 = vld [vmem:[%s3 + $0xe0] sm:$0xff]
  %v4826 = vld [vmem:[%s3 + $0xe8] sm:$0xff]
  %v4827 = vld [vmem:[%s3 + $0xf0] sm:$0xff]
  %v4828 = vld [vmem:[%s3 + $0xf8] sm:$0xff]
  %v4829 = vld [vmem:[%s3 + $0x100] sm:$0xff]
  %v4830 = vld [vmem:[%s3 + $0x108] sm:$0xff]
  %v4831 = vld [vmem:[%s3 + $0x110] sm:$0xff]
  %v4832 = vld [vmem:[%s3 + $0x118] sm:$0xff]
  %v4833 = vld [vmem:[%s3 + $0x120] sm:$0xff]
  %v4834 = vld [vmem:[%s3 + $0x128] sm:$0xff]
  %v4835 = vld [vmem:[%s3 + $0x130] sm:$0xff]
  %v4836 = vld [vmem:[%s3 + $0x138] sm:$0xff]
  %v4837 = vld [vmem:[%s3 + $0x140] sm:$0xff]
  %v4838 = vld [vmem:[%s3 + $0x148] sm:$0xff]
  %v4839 = vld [vmem:[%s3 + $0x150] sm:$0xff]
  %v4840 = vld [vmem:[%s3 + $0x158] sm:$0xff]
  %v4841 = vld [vmem:[%s3 + $0x160] sm:$0xff]
  %v4842 = vld [vmem:[%s3 + $0x168] sm:$0xff]
  %v4843 = vld [vmem:[%s3 + $0x170] sm:$0xff]
  %v4844 = vld [vmem:[%s3 + $0x178] sm:$0xff]
  %v4845 = vld [vmem:[%s3 + $0x180] sm:$0xff]
  %v4846 = vld [vmem:[%s3 + $0x188] sm:$0xff]
  %v4847 = vld [vmem:[%s3 + $0x190] sm:$0xff]
  %v4848 = vld [vmem:[%s3 + $0x198] sm:$0xff]
  %v4849 = vld [vmem:[%s3 + $0x1a0] sm:$0xff]
  %v4850 = vld [vmem:[%s3 + $0x1a8] sm:$0xff]
  %v4851 = vld [vmem:[%s3 + $0x1b0] sm:$0xff]
  %v4852 = vld [vmem:[%s3 + $0x1b8] sm:$0xff]
  %v4853 = vld [vmem:[%s3 + $0x1c0] sm:$0xff]
  %v4854 = vld [vmem:[%s3 + $0x1c8] sm:$0xff]
  %v4855 = vld [vmem:[%s3 + $0x1d0] sm:$0xff]
  %v4856 = vld [vmem:[%s3 + $0x1d8] sm:$0xff]
  %v4857 = vld [vmem:[%s3 + $0x1e0] sm:$0xff]
  %v4858 = vld [vmem:[%s3 + $0x1e8] sm:$0xff]
  %v4859 = vld [vmem:[%s3 + $0x1f0] sm:$0xff]
  %v4860 = vld [vmem:[%s3 + $0x1f8] sm:$0xff]
  %4861 = vmatprep.subr.mxu0 %v4798
  %4862 = vmatpush1.msra.mxu0 %v4797
  %4863 = vmatprep.subr.mxu0 %v4802
  %4864 = vmatpush1.msra.mxu0 %v4801
  %4865 = vmatprep.subr.mxu0 %v4806
  %4866 = vmatpush1.msra.mxu0 %v4805
  %4867 = vmatprep.subr.mxu0 %v4810
  %4868 = vmatpush1.msra.mxu0 %v4809
  %4869 = vmatprep.subr.mxu0 %v4814
  %4870 = vmatpush1.msra.mxu0 %v4813
  %4871 = vmatprep.subr.mxu0 %v4818
  %4872 = vmatpush1.msra.mxu0 %v4817
  %4873 = vmatprep.subr.mxu0 %v4822
  %4874 = vmatpush1.msra.mxu0 %v4821
  %4875 = vmatprep.subr.mxu0 %v4826
  %4876 = vmatpush1.msra.mxu0 %v4825
  %4877 = vmatprep.subr.mxu0 %v4830
  %4878 = vmatpush1.msra.mxu0 %v4829
  %4879 = vmatprep.subr.mxu0 %v4834
  %4880 = vmatpush1.msra.mxu0 %v4833
  %4881 = vmatprep.subr.mxu0 %v4838
  %4882 = vmatpush1.msra.mxu0 %v4837
  %4883 = vmatprep.subr.mxu0 %v4842
  %4884 = vmatpush1.msra.mxu0 %v4841
  %4885 = vmatprep.subr.mxu0 %v4846
  %4886 = vmatpush1.msra.mxu0 %v4845
  %4887 = vmatprep.subr.mxu0 %v4850
  %4888 = vmatpush1.msra.mxu0 %v4849
  %4889 = vmatprep.subr.mxu0 %v4854
  %4890 = vmatpush1.msra.mxu0 %v4853
  %4891 = vmatprep.subr.mxu0 %v4858
  %4892 = vmatpush1.msra.mxu0 %v4857
  %4893 = vmatprep.subr.mxu0 0.0
  %4894 = vmatpush1.msra.mxu0 0.0
  %4895 = vmatprep.subr.mxu0 0.0
  %4896 = vmatpush1.msra.mxu0 0.0
  %4897 = vmatprep.subr.mxu0 0.0
  %4898 = vmatpush1.msra.mxu0 0.0
  %4899 = vmatprep.subr.mxu0 0.0
  %4900 = vmatpush1.msra.mxu0 0.0
  %4901 = vmatprep.subr.mxu0 0.0
  %4902 = vmatpush1.msra.mxu0 0.0
  %4903 = vmatprep.subr.mxu0 0.0
  %4904 = vmatpush1.msra.mxu0 0.0
  %4905 = vmatprep.subr.mxu0 0.0
  %4906 = vmatpush1.msra.mxu0 0.0
  %4907 = vmatprep.subr.mxu0 0.0
  %4908 = vmatpush1.msra.mxu0 0.0
  %4909 = vmatprep.subr.mxu0 0.0
  %4910 = vmatpush1.msra.mxu0 0.0
  %4911 = vmatprep.subr.mxu0 0.0
  %4912 = vmatpush1.msra.mxu0 0.0
  %4913 = vmatprep.subr.mxu0 0.0
  %4914 = vmatpush1.msra.mxu0 0.0
  %4915 = vmatprep.subr.mxu0 0.0
  %4916 = vmatpush1.msra.mxu0 0.0
  %4917 = vmatprep.subr.mxu0 0.0
  %4918 = vmatpush1.msra.mxu0 0.0
  %4919 = vmatprep.subr.mxu0 0.0
  %4920 = vmatpush1.msra.mxu0 0.0
  %4921 = vmatprep.subr.mxu0 0.0
  %4922 = vmatpush1.msra.mxu0 0.0
  %4923 = vmatprep.subr.mxu0 0.0
  %4924 = vmatpush1.msra.mxu0 0.0
  %4925 = vmatprep.mubr.f32.mxu0 0.0
  %4926 = vmatmul.mubr.f32.gmra.mrb[0].mxu0 %v4796
  %v4927 = vpop.f32.mrb[0].mxu0
  %v4928 = vadd.f32 0.0, %v4927
  %v4929 = vpop.f32.mrb[0].mxu0
  %v4930 = vadd.f32 0.0, %v4929
  %4931 = vdwg.mxu0
  %4932 = vmatprep.subr.mxu0 %v4800
  %4933 = vmatpush1.msra.mxu0 %v4799
  %4934 = vmatprep.subr.mxu0 %v4804
  %4935 = vmatpush1.msra.mxu0 %v4803
  %4936 = vmatprep.subr.mxu0 %v4808
  %4937 = vmatpush1.msra.mxu0 %v4807
  %4938 = vmatprep.subr.mxu0 %v4812
  %4939 = vmatpush1.msra.mxu0 %v4811
  %4940 = vmatprep.subr.mxu0 %v4816
  %4941 = vmatpush1.msra.mxu0 %v4815
  %4942 = vmatprep.subr.mxu0 %v4820
  %4943 = vmatpush1.msra.mxu0 %v4819
  %4944 = vmatprep.subr.mxu0 %v4824
  %4945 = vmatpush1.msra.mxu0 %v4823
  %4946 = vmatprep.subr.mxu0 %v4828
  %4947 = vmatpush1.msra.mxu0 %v4827
  %4948 = vmatprep.subr.mxu0 %v4832
  %4949 = vmatpush1.msra.mxu0 %v4831
  %4950 = vmatprep.subr.mxu0 %v4836
  %4951 = vmatpush1.msra.mxu0 %v4835
  %4952 = vmatprep.subr.mxu0 %v4840
  %4953 = vmatpush1.msra.mxu0 %v4839
  %4954 = vmatprep.subr.mxu0 %v4844
  %4955 = vmatpush1.msra.mxu0 %v4843
  %4956 = vmatprep.subr.mxu0 %v4848
  %4957 = vmatpush1.msra.mxu0 %v4847
  %4958 = vmatprep.subr.mxu0 %v4852
  %4959 = vmatpush1.msra.mxu0 %v4851
  %4960 = vmatprep.subr.mxu0 %v4856
  %4961 = vmatpush1.msra.mxu0 %v4855
  %4962 = vmatprep.subr.mxu0 %v4860
  %4963 = vmatpush1.msra.mxu0 %v4859
  %4964 = vmatprep.subr.mxu0 0.0
  %4965 = vmatpush1.msra.mxu0 0.0
  %4966 = vmatprep.subr.mxu0 0.0
  %4967 = vmatpush1.msra.mxu0 0.0
  %4968 = vmatprep.subr.mxu0 0.0
  %4969 = vmatpush1.msra.mxu0 0.0
  %4970 = vmatprep.subr.mxu0 0.0
  %4971 = vmatpush1.msra.mxu0 0.0
  %4972 = vmatprep.subr.mxu0 0.0
  %4973 = vmatpush1.msra.mxu0 0.0
  %4974 = vmatprep.subr.mxu0 0.0
  %4975 = vmatpush1.msra.mxu0 0.0
  %4976 = vmatprep.subr.mxu0 0.0
  %4977 = vmatpush1.msra.mxu0 0.0
  %4978 = vmatprep.subr.mxu0 0.0
  %4979 = vmatpush1.msra.mxu0 0.0
  %4980 = vmatprep.subr.mxu0 0.0
  %4981 = vmatpush1.msra.mxu0 0.0
  %4982 = vmatprep.subr.mxu0 0.0
  %4983 = vmatpush1.msra.mxu0 0.0
  %4984 = vmatprep.subr.mxu0 0.0
  %4985 = vmatpush1.msra.mxu0 0.0
  %4986 = vmatprep.subr.mxu0 0.0
  %4987 = vmatpush1.msra.mxu0 0.0
  %4988 = vmatprep.subr.mxu0 0.0
  %4989 = vmatpush1.msra.mxu0 0.0
  %4990 = vmatprep.subr.mxu0 0.0
  %4991 = vmatpush1.msra.mxu0 0.0
  %4992 = vmatprep.subr.mxu0 0.0
  %4993 = vmatpush1.msra.mxu0 0.0
  %4994 = vmatprep.subr.mxu0 0.0
  %4995 = vmatpush1.msra.mxu0 0.0
  %4996 = vmatprep.mubr.f32.mxu0 0.0
  %4997 = vmatmul.mubr.f32.gmra.mrb[0].mxu0 %v4796
  %v4998 = vpop.f32.mrb[0].mxu0
  %v4999 = vadd.f32 0.0, %v4998
  %v5000 = vpop.f32.mrb[0].mxu0
  %v5001 = vadd.f32 0.0, %v5000
  %5002 = vdwg.mxu0
  %v5007 = vrot.slane %v4928, 6
  %v5008 = vrot.slane %v4930, 6
  %v5009 = vrot.slane %v4999, 6
  %v5010 = vrot.slane %v5001, 6
  %v5015 = vadd.f32 %v4792, %v5007
  %v5016 = vadd.f32 %v4793, %v5008
  %v5017 = vadd.f32 %v4794, %v5009
  %v5018 = vadd.f32 %v4795, %v5010
  %v5019 = vmul.f32 %v4786, 0.5
  %v5020 = vxor.u32 %v5015, 2147483648
  %v5021 = vmul.f32 %v5020, 1.442695
  %v5022 = vpow.pop %v5021
  %v5023 = vadd.f32 %v5022, 1.0
  %v5024 = vrcp.pop %v5023
  %v5025 = vmul.f32 1.0, %v5024
  %v5026 = vxor.u32 %v5016, 2147483648
  %v5027 = vmul.f32 %v5026, 1.442695
  %v5028 = vpow.pop %v5027
  %v5029 = vadd.f32 %v5028, 1.0
  %v5030 = vrcp.pop %v5029
  %v5031 = vmul.f32 1.0, %v5030
  %v5032 = vtanh.pop %v5017
  %v5033 = vxor.u32 %v5018, 2147483648
  %v5034 = vmul.f32 %v5033, 1.442695
  %v5035 = vpow.pop %v5034
  %v5036 = vadd.f32 %v5035, 1.0
  %v5037 = vrcp.pop %v5036
  %v5038 = vmul.f32 1.0, %v5037
  %v5040 = vrot.slane %v5019, 6
  %v5042 = vmul.f32 %v5031, %v5040
  %v5043 = vmul.f32 %v5025, %v5032
  %v5044 = vadd.f32 %v5042, %v5043
  %v5045 = vtanh.pop %v5044
  %v5046 = vmul.f32 %v5038, %v5045
  %5047 = vst [vmem:[#allocation4 + $0x30] sm:$0xc] %v5046
  %5048 = vst [vmem:[#allocation4 + $0x38] sm:$0xc] %v5044
  %5049 = vst [vmem:[#allocation3 + $0x18] sm:$0xc] %v5046
  %v5050 = vld [vmem:[#allocation2 + $0x60] sm:$0x30]
  %v5051 = vld [vmem:[#allocation2 + $0x68] sm:$0x30]
  %v5052 = vld [vmem:[#allocation2 + $0x70] sm:$0x30]
  %v5053 = vld [vmem:[#allocation2 + $0x78] sm:$0x30]
  %v5054 = vmul.f32 %v5046, 0.5
  %v5055 = vld [vmem:[%s3] sm:$0xff]
  %v5056 = vld [vmem:[%s3 + $0x8] sm:$0xff]
  %v5057 = vld [vmem:[%s3 + $0x10] sm:$0xff]
  %v5058 = vld [vmem:[%s3 + $0x18] sm:$0xff]
  %v5059 = vld [vmem:[%s3 + $0x20] sm:$0xff]
  %v5060 = vld [vmem:[%s3 + $0x28] sm:$0xff]
  %v5061 = vld [vmem:[%s3 + $0x30] sm:$0xff]
  %v5062 = vld [vmem:[%s3 + $0x38] sm:$0xff]
  %v5063 = vld [vmem:[%s3 + $0x40] sm:$0xff]
  %v5064 = vld [vmem:[%s3 + $0x48] sm:$0xff]
  %v5065 = vld [vmem:[%s3 + $0x50] sm:$0xff]
  %v5066 = vld [vmem:[%s3 + $0x58] sm:$0xff]
  %v5067 = vld [vmem:[%s3 + $0x60] sm:$0xff]
  %v5068 = vld [vmem:[%s3 + $0x68] sm:$0xff]
  %v5069 = vld [vmem:[%s3 + $0x70] sm:$0xff]
  %v5070 = vld [vmem:[%s3 + $0x78] sm:$0xff]
  %v5071 = vld [vmem:[%s3 + $0x80] sm:$0xff]
  %v5072 = vld [vmem:[%s3 + $0x88] sm:$0xff]
  %v5073 = vld [vmem:[%s3 + $0x90] sm:$0xff]
  %v5074 = vld [vmem:[%s3 + $0x98] sm:$0xff]
  %v5075 = vld [vmem:[%s3 + $0xa0] sm:$0xff]
  %v5076 = vld [vmem:[%s3 + $0xa8] sm:$0xff]
  %v5077 = vld [vmem:[%s3 + $0xb0] sm:$0xff]
  %v5078 = vld [vmem:[%s3 + $0xb8] sm:$0xff]
  %v5079 = vld [vmem:[%s3 + $0xc0] sm:$0xff]
  %v5080 = vld [vmem:[%s3 + $0xc8] sm:$0xff]
  %v5081 = vld [vmem:[%s3 + $0xd0] sm:$0xff]
  %v5082 = vld [vmem:[%s3 + $0xd8] sm:$0xff]
  %v5083 = vld [vmem:[%s3 + $0xe0] sm:$0xff]
  %v5084 = vld [vmem:[%s3 + $0xe8] sm:$0xff]
  %v5085 = vld [vmem:[%s3 + $0xf0] sm:$0xff]
  %v5086 = vld [vmem:[%s3 + $0xf8] sm:$0xff]
  %v5087 = vld [vmem:[%s3 + $0x100] sm:$0xff]
  %v5088 = vld [vmem:[%s3 + $0x108] sm:$0xff]
  %v5089 = vld [vmem:[%s3 + $0x110] sm:$0xff]
  %v5090 = vld [vmem:[%s3 + $0x118] sm:$0xff]
  %v5091 = vld [vmem:[%s3 + $0x120] sm:$0xff]
  %v5092 = vld [vmem:[%s3 + $0x128] sm:$0xff]
  %v5093 = vld [vmem:[%s3 + $0x130] sm:$0xff]
  %v5094 = vld [vmem:[%s3 + $0x138] sm:$0xff]
  %v5095 = vld [vmem:[%s3 + $0x140] sm:$0xff]
  %v5096 = vld [vmem:[%s3 + $0x148] sm:$0xff]
  %v5097 = vld [vmem:[%s3 + $0x150] sm:$0xff]
  %v5098 = vld [vmem:[%s3 + $0x158] sm:$0xff]
  %v5099 = vld [vmem:[%s3 + $0x160] sm:$0xff]
  %v5100 = vld [vmem:[%s3 + $0x168] sm:$0xff]
  %v5101 = vld [vmem:[%s3 + $0x170] sm:$0xff]
  %v5102 = vld [vmem:[%s3 + $0x178] sm:$0xff]
  %v5103 = vld [vmem:[%s3 + $0x180] sm:$0xff]
  %v5104 = vld [vmem:[%s3 + $0x188] sm:$0xff]
  %v5105 = vld [vmem:[%s3 + $0x190] sm:$0xff]
  %v5106 = vld [vmem:[%s3 + $0x198] sm:$0xff]
  %v5107 = vld [vmem:[%s3 + $0x1a0] sm:$0xff]
  %v5108 = vld [vmem:[%s3 + $0x1a8] sm:$0xff]
  %v5109 = vld [vmem:[%s3 + $0x1b0] sm:$0xff]
  %v5110 = vld [vmem:[%s3 + $0x1b8] sm:$0xff]
  %v5111 = vld [vmem:[%s3 + $0x1c0] sm:$0xff]
  %v5112 = vld [vmem:[%s3 + $0x1c8] sm:$0xff]
  %v5113 = vld [vmem:[%s3 + $0x1d0] sm:$0xff]
  %v5114 = vld [vmem:[%s3 + $0x1d8] sm:$0xff]
  %v5115 = vld [vmem:[%s3 + $0x1e0] sm:$0xff]
  %v5116 = vld [vmem:[%s3 + $0x1e8] sm:$0xff]
  %v5117 = vld [vmem:[%s3 + $0x1f0] sm:$0xff]
  %v5118 = vld [vmem:[%s3 + $0x1f8] sm:$0xff]
  %v5120 = vrot.slane %v5054, 2
  %5122 = vmatprep.subr.mxu0 %v5056
  %5123 = vmatpush1.msra.mxu0 %v5055
  %5124 = vmatprep.subr.mxu0 %v5060
  %5125 = vmatpush1.msra.mxu0 %v5059
  %5126 = vmatprep.subr.mxu0 %v5064
  %5127 = vmatpush1.msra.mxu0 %v5063
  %5128 = vmatprep.subr.mxu0 %v5068
  %5129 = vmatpush1.msra.mxu0 %v5067
  %5130 = vmatprep.subr.mxu0 %v5072
  %5131 = vmatpush1.msra.mxu0 %v5071
  %5132 = vmatprep.subr.mxu0 %v5076
  %5133 = vmatpush1.msra.mxu0 %v5075
  %5134 = vmatprep.subr.mxu0 %v5080
  %5135 = vmatpush1.msra.mxu0 %v5079
  %5136 = vmatprep.subr.mxu0 %v5084
  %5137 = vmatpush1.msra.mxu0 %v5083
  %5138 = vmatprep.subr.mxu0 %v5088
  %5139 = vmatpush1.msra.mxu0 %v5087
  %5140 = vmatprep.subr.mxu0 %v5092
  %5141 = vmatpush1.msra.mxu0 %v5091
  %5142 = vmatprep.subr.mxu0 %v5096
  %5143 = vmatpush1.msra.mxu0 %v5095
  %5144 = vmatprep.subr.mxu0 %v5100
  %5145 = vmatpush1.msra.mxu0 %v5099
  %5146 = vmatprep.subr.mxu0 %v5104
  %5147 = vmatpush1.msra.mxu0 %v5103
  %5148 = vmatprep.subr.mxu0 %v5108
  %5149 = vmatpush1.msra.mxu0 %v5107
  %5150 = vmatprep.subr.mxu0 %v5112
  %5151 = vmatpush1.msra.mxu0 %v5111
  %5152 = vmatprep.subr.mxu0 %v5116
  %5153 = vmatpush1.msra.mxu0 %v5115
  %5154 = vmatprep.subr.mxu0 0.0
  %5155 = vmatpush1.msra.mxu0 0.0
  %5156 = vmatprep.subr.mxu0 0.0
  %5157 = vmatpush1.msra.mxu0 0.0
  %5158 = vmatprep.subr.mxu0 0.0
  %5159 = vmatpush1.msra.mxu0 0.0
  %5160 = vmatprep.subr.mxu0 0.0
  %5161 = vmatpush1.msra.mxu0 0.0
  %5162 = vmatprep.subr.mxu0 0.0
  %5163 = vmatpush1.msra.mxu0 0.0
  %5164 = vmatprep.subr.mxu0 0.0
  %5165 = vmatpush1.msra.mxu0 0.0
  %5166 = vmatprep.subr.mxu0 0.0
  %5167 = vmatpush1.msra.mxu0 0.0
  %5168 = vmatprep.subr.mxu0 0.0
  %5169 = vmatpush1.msra.mxu0 0.0
  %5170 = vmatprep.subr.mxu0 0.0
  %5171 = vmatpush1.msra.mxu0 0.0
  %5172 = vmatprep.subr.mxu0 0.0
  %5173 = vmatpush1.msra.mxu0 0.0
  %5174 = vmatprep.subr.mxu0 0.0
  %5175 = vmatpush1.msra.mxu0 0.0
  %5176 = vmatprep.subr.mxu0 0.0
  %5177 = vmatpush1.msra.mxu0 0.0
  %5178 = vmatprep.subr.mxu0 0.0
  %5179 = vmatpush1.msra.mxu0 0.0
  %5180 = vmatprep.subr.mxu0 0.0
  %5181 = vmatpush1.msra.mxu0 0.0
  %5182 = vmatprep.subr.mxu0 0.0
  %5183 = vmatpush1.msra.mxu0 0.0
  %5184 = vmatprep.subr.mxu0 0.0
  %5185 = vmatpush1.msra.mxu0 0.0
  %5186 = vmatprep.mubr.f32.mxu0 0.0
  %5187 = vmatmul.mubr.f32.gmra.mrb[0].mxu0 %v5120
  %v5188 = vpop.f32.mrb[0].mxu0
  %v5189 = vadd.f32 0.0, %v5188
  %v5190 = vpop.f32.mrb[0].mxu0
  %v5191 = vadd.f32 0.0, %v5190
  %5192 = vdwg.mxu0
  %5193 = vmatprep.subr.mxu0 %v5058
  %5194 = vmatpush1.msra.mxu0 %v5057
  %5195 = vmatprep.subr.mxu0 %v5062
  %5196 = vmatpush1.msra.mxu0 %v5061
  %5197 = vmatprep.subr.mxu0 %v5066
  %5198 = vmatpush1.msra.mxu0 %v5065
  %5199 = vmatprep.subr.mxu0 %v5070
  %5200 = vmatpush1.msra.mxu0 %v5069
  %5201 = vmatprep.subr.mxu0 %v5074
  %5202 = vmatpush1.msra.mxu0 %v5073
  %5203 = vmatprep.subr.mxu0 %v5078
  %5204 = vmatpush1.msra.mxu0 %v5077
  %5205 = vmatprep.subr.mxu0 %v5082
  %5206 = vmatpush1.msra.mxu0 %v5081
  %5207 = vmatprep.subr.mxu0 %v5086
  %5208 = vmatpush1.msra.mxu0 %v5085
  %5209 = vmatprep.subr.mxu0 %v5090
  %5210 = vmatpush1.msra.mxu0 %v5089
  %5211 = vmatprep.subr.mxu0 %v5094
  %5212 = vmatpush1.msra.mxu0 %v5093
  %5213 = vmatprep.subr.mxu0 %v5098
  %5214 = vmatpush1.msra.mxu0 %v5097
  %5215 = vmatprep.subr.mxu0 %v5102
  %5216 = vmatpush1.msra.mxu0 %v5101
  %5217 = vmatprep.subr.mxu0 %v5106
  %5218 = vmatpush1.msra.mxu0 %v5105
  %5219 = vmatprep.subr.mxu0 %v5110
  %5220 = vmatpush1.msra.mxu0 %v5109
  %5221 = vmatprep.subr.mxu0 %v5114
  %5222 = vmatpush1.msra.mxu0 %v5113
  %5223 = vmatprep.subr.mxu0 %v5118
  %5224 = vmatpush1.msra.mxu0 %v5117
  %5225 = vmatprep.subr.mxu0 0.0
  %5226 = vmatpush1.msra.mxu0 0.0
  %5227 = vmatprep.subr.mxu0 0.0
  %5228 = vmatpush1.msra.mxu0 0.0
  %5229 = vmatprep.subr.mxu0 0.0
  %5230 = vmatpush1.msra.mxu0 0.0
  %5231 = vmatprep.subr.mxu0 0.0
  %5232 = vmatpush1.msra.mxu0 0.0
  %5233 = vmatprep.subr.mxu0 0.0
  %5234 = vmatpush1.msra.mxu0 0.0
  %5235 = vmatprep.subr.mxu0 0.0
  %5236 = vmatpush1.msra.mxu0 0.0
  %5237 = vmatprep.subr.mxu0 0.0
  %5238 = vmatpush1.msra.mxu0 0.0
  %5239 = vmatprep.subr.mxu0 0.0
  %5240 = vmatpush1.msra.mxu0 0.0
  %5241 = vmatprep.subr.mxu0 0.0
  %5242 = vmatpush1.msra.mxu0 0.0
  %5243 = vmatprep.subr.mxu0 0.0
  %5244 = vmatpush1.msra.mxu0 0.0
  %5245 = vmatprep.subr.mxu0 0.0
  %5246 = vmatpush1.msra.mxu0 0.0
  %5247 = vmatprep.subr.mxu0 0.0
  %5248 = vmatpush1.msra.mxu0 0.0
  %5249 = vmatprep.subr.mxu0 0.0
  %5250 = vmatpush1.msra.mxu0 0.0
  %5251 = vmatprep.subr.mxu0 0.0
  %5252 = vmatpush1.msra.mxu0 0.0
  %5253 = vmatprep.subr.mxu0 0.0
  %5254 = vmatpush1.msra.mxu0 0.0
  %5255 = vmatprep.subr.mxu0 0.0
  %5256 = vmatpush1.msra.mxu0 0.0
  %5257 = vmatprep.mubr.f32.mxu0 0.0
  %5258 = vmatmul.mubr.f32.gmra.mrb[0].mxu0 %v5120
  %v5259 = vpop.f32.mrb[0].mxu0
  %v5260 = vadd.f32 0.0, %v5259
  %v5261 = vpop.f32.mrb[0].mxu0
  %v5262 = vadd.f32 0.0, %v5261
  %5263 = vdwg.mxu0
  %v5268 = vrot.slane %v5189, 4
  %v5269 = vrot.slane %v5191, 4
  %v5270 = vrot.slane %v5260, 4
  %v5271 = vrot.slane %v5262, 4
  %v5276 = vadd.f32 %v5050, %v5268
  %v5277 = vadd.f32 %v5051, %v5269
  %v5278 = vadd.f32 %v5052, %v5270
  %v5279 = vadd.f32 %v5053, %v5271
  %v5280 = vmul.f32 %v5044, 0.5
  %v5281 = vxor.u32 %v5276, 2147483648
  %v5282 = vmul.f32 %v5281, 1.442695
  %v5283 = vpow.pop %v5282
  %v5284 = vadd.f32 %v5283, 1.0
  %v5285 = vrcp.pop %v5284
  %v5286 = vmul.f32 1.0, %v5285
  %v5287 = vxor.u32 %v5277, 2147483648
  %v5288 = vmul.f32 %v5287, 1.442695
  %v5289 = vpow.pop %v5288
  %v5290 = vadd.f32 %v5289, 1.0
  %v5291 = vrcp.pop %v5290
  %v5292 = vmul.f32 1.0, %v5291
  %v5293 = vtanh.pop %v5278
  %v5294 = vxor.u32 %v5279, 2147483648
  %v5295 = vmul.f32 %v5294, 1.442695
  %v5296 = vpow.pop %v5295
  %v5297 = vadd.f32 %v5296, 1.0
  %v5298 = vrcp.pop %v5297
  %v5299 = vmul.f32 1.0, %v5298
  %v5301 = vrot.slane %v5280, 6
  %v5303 = vmul.f32 %v5292, %v5301
  %v5304 = vmul.f32 %v5286, %v5293
  %v5305 = vadd.f32 %v5303, %v5304
  %v5306 = vtanh.pop %v5305
  %v5307 = vmul.f32 %v5299, %v5306
  %5308 = vst [vmem:[#allocation4 + $0x30] sm:$0x30] %v5307
  %5309 = vst [vmem:[#allocation4 + $0x38] sm:$0x30] %v5305
  %5310 = vst [vmem:[#allocation3 + $0x18] sm:$0x30] %v5307
  %v5311 = vld [vmem:[#allocation2 + $0x60] sm:$0xc0]
  %v5312 = vld [vmem:[#allocation2 + $0x68] sm:$0xc0]
  %v5313 = vld [vmem:[#allocation2 + $0x70] sm:$0xc0]
  %v5314 = vld [vmem:[#allocation2 + $0x78] sm:$0xc0]
  %v5315 = vmul.f32 %v5307, 0.5
  %v5316 = vld [vmem:[%s3] sm:$0xff]
  %v5317 = vld [vmem:[%s3 + $0x8] sm:$0xff]
  %v5318 = vld [vmem:[%s3 + $0x10] sm:$0xff]
  %v5319 = vld [vmem:[%s3 + $0x18] sm:$0xff]
  %v5320 = vld [vmem:[%s3 + $0x20] sm:$0xff]
  %v5321 = vld [vmem:[%s3 + $0x28] sm:$0xff]
  %v5322 = vld [vmem:[%s3 + $0x30] sm:$0xff]
  %v5323 = vld [vmem:[%s3 + $0x38] sm:$0xff]
  %v5324 = vld [vmem:[%s3 + $0x40] sm:$0xff]
  %v5325 = vld [vmem:[%s3 + $0x48] sm:$0xff]
  %v5326 = vld [vmem:[%s3 + $0x50] sm:$0xff]
  %v5327 = vld [vmem:[%s3 + $0x58] sm:$0xff]
  %v5328 = vld [vmem:[%s3 + $0x60] sm:$0xff]
  %v5329 = vld [vmem:[%s3 + $0x68] sm:$0xff]
  %v5330 = vld [vmem:[%s3 + $0x70] sm:$0xff]
  %v5331 = vld [vmem:[%s3 + $0x78] sm:$0xff]
  %v5332 = vld [vmem:[%s3 + $0x80] sm:$0xff]
  %v5333 = vld [vmem:[%s3 + $0x88] sm:$0xff]
  %v5334 = vld [vmem:[%s3 + $0x90] sm:$0xff]
  %v5335 = vld [vmem:[%s3 + $0x98] sm:$0xff]
  %v5336 = vld [vmem:[%s3 + $0xa0] sm:$0xff]
  %v5337 = vld [vmem:[%s3 + $0xa8] sm:$0xff]
  %v5338 = vld [vmem:[%s3 + $0xb0] sm:$0xff]
  %v5339 = vld [vmem:[%s3 + $0xb8] sm:$0xff]
  %v5340 = vld [vmem:[%s3 + $0xc0] sm:$0xff]
  %v5341 = vld [vmem:[%s3 + $0xc8] sm:$0xff]
  %v5342 = vld [vmem:[%s3 + $0xd0] sm:$0xff]
  %v5343 = vld [vmem:[%s3 + $0xd8] sm:$0xff]
  %v5344 = vld [vmem:[%s3 + $0xe0] sm:$0xff]
  %v5345 = vld [vmem:[%s3 + $0xe8] sm:$0xff]
  %v5346 = vld [vmem:[%s3 + $0xf0] sm:$0xff]
  %v5347 = vld [vmem:[%s3 + $0xf8] sm:$0xff]
  %v5348 = vld [vmem:[%s3 + $0x100] sm:$0xff]
  %v5349 = vld [vmem:[%s3 + $0x108] sm:$0xff]
  %v5350 = vld [vmem:[%s3 + $0x110] sm:$0xff]
  %v5351 = vld [vmem:[%s3 + $0x118] sm:$0xff]
  %v5352 = vld [vmem:[%s3 + $0x120] sm:$0xff]
  %v5353 = vld [vmem:[%s3 + $0x128] sm:$0xff]
  %v5354 = vld [vmem:[%s3 + $0x130] sm:$0xff]
  %v5355 = vld [vmem:[%s3 + $0x138] sm:$0xff]
  %v5356 = vld [vmem:[%s3 + $0x140] sm:$0xff]
  %v5357 = vld [vmem:[%s3 + $0x148] sm:$0xff]
  %v5358 = vld [vmem:[%s3 + $0x150] sm:$0xff]
  %v5359 = vld [vmem:[%s3 + $0x158] sm:$0xff]
  %v5360 = vld [vmem:[%s3 + $0x160] sm:$0xff]
  %v5361 = vld [vmem:[%s3 + $0x168] sm:$0xff]
  %v5362 = vld [vmem:[%s3 + $0x170] sm:$0xff]
  %v5363 = vld [vmem:[%s3 + $0x178] sm:$0xff]
  %v5364 = vld [vmem:[%s3 + $0x180] sm:$0xff]
  %v5365 = vld [vmem:[%s3 + $0x188] sm:$0xff]
  %v5366 = vld [vmem:[%s3 + $0x190] sm:$0xff]
  %v5367 = vld [vmem:[%s3 + $0x198] sm:$0xff]
  %v5368 = vld [vmem:[%s3 + $0x1a0] sm:$0xff]
  %v5369 = vld [vmem:[%s3 + $0x1a8] sm:$0xff]
  %v5370 = vld [vmem:[%s3 + $0x1b0] sm:$0xff]
  %v5371 = vld [vmem:[%s3 + $0x1b8] sm:$0xff]
  %v5372 = vld [vmem:[%s3 + $0x1c0] sm:$0xff]
  %v5373 = vld [vmem:[%s3 + $0x1c8] sm:$0xff]
  %v5374 = vld [vmem:[%s3 + $0x1d0] sm:$0xff]
  %v5375 = vld [vmem:[%s3 + $0x1d8] sm:$0xff]
  %v5376 = vld [vmem:[%s3 + $0x1e0] sm:$0xff]
  %v5377 = vld [vmem:[%s3 + $0x1e8] sm:$0xff]
  %v5378 = vld [vmem:[%s3 + $0x1f0] sm:$0xff]
  %v5379 = vld [vmem:[%s3 + $0x1f8] sm:$0xff]
  %v5381 = vrot.slane %v5315, 4
  %5383 = vmatprep.subr.mxu0 %v5317
  %5384 = vmatpush1.msra.mxu0 %v5316
  %5385 = vmatprep.subr.mxu0 %v5321
  %5386 = vmatpush1.msra.mxu0 %v5320
  %5387 = vmatprep.subr.mxu0 %v5325
  %5388 = vmatpush1.msra.mxu0 %v5324
  %5389 = vmatprep.subr.mxu0 %v5329
  %5390 = vmatpush1.msra.mxu0 %v5328
  %5391 = vmatprep.subr.mxu0 %v5333
  %5392 = vmatpush1.msra.mxu0 %v5332
  %5393 = vmatprep.subr.mxu0 %v5337
  %5394 = vmatpush1.msra.mxu0 %v5336
  %5395 = vmatprep.subr.mxu0 %v5341
  %5396 = vmatpush1.msra.mxu0 %v5340
  %5397 = vmatprep.subr.mxu0 %v5345
  %5398 = vmatpush1.msra.mxu0 %v5344
  %5399 = vmatprep.subr.mxu0 %v5349
  %5400 = vmatpush1.msra.mxu0 %v5348
  %5401 = vmatprep.subr.mxu0 %v5353
  %5402 = vmatpush1.msra.mxu0 %v5352
  %5403 = vmatprep.subr.mxu0 %v5357
  %5404 = vmatpush1.msra.mxu0 %v5356
  %5405 = vmatprep.subr.mxu0 %v5361
  %5406 = vmatpush1.msra.mxu0 %v5360
  %5407 = vmatprep.subr.mxu0 %v5365
  %5408 = vmatpush1.msra.mxu0 %v5364
  %5409 = vmatprep.subr.mxu0 %v5369
  %5410 = vmatpush1.msra.mxu0 %v5368
  %5411 = vmatprep.subr.mxu0 %v5373
  %5412 = vmatpush1.msra.mxu0 %v5372
  %5413 = vmatprep.subr.mxu0 %v5377
  %5414 = vmatpush1.msra.mxu0 %v5376
  %5415 = vmatprep.subr.mxu0 0.0
  %5416 = vmatpush1.msra.mxu0 0.0
  %5417 = vmatprep.subr.mxu0 0.0
  %5418 = vmatpush1.msra.mxu0 0.0
  %5419 = vmatprep.subr.mxu0 0.0
  %5420 = vmatpush1.msra.mxu0 0.0
  %5421 = vmatprep.subr.mxu0 0.0
  %5422 = vmatpush1.msra.mxu0 0.0
  %5423 = vmatprep.subr.mxu0 0.0
  %5424 = vmatpush1.msra.mxu0 0.0
  %5425 = vmatprep.subr.mxu0 0.0
  %5426 = vmatpush1.msra.mxu0 0.0
  %5427 = vmatprep.subr.mxu0 0.0
  %5428 = vmatpush1.msra.mxu0 0.0
  %5429 = vmatprep.subr.mxu0 0.0
  %5430 = vmatpush1.msra.mxu0 0.0
  %5431 = vmatprep.subr.mxu0 0.0
  %5432 = vmatpush1.msra.mxu0 0.0
  %5433 = vmatprep.subr.mxu0 0.0
  %5434 = vmatpush1.msra.mxu0 0.0
  %5435 = vmatprep.subr.mxu0 0.0
  %5436 = vmatpush1.msra.mxu0 0.0
  %5437 = vmatprep.subr.mxu0 0.0
  %5438 = vmatpush1.msra.mxu0 0.0
  %5439 = vmatprep.subr.mxu0 0.0
  %5440 = vmatpush1.msra.mxu0 0.0
  %5441 = vmatprep.subr.mxu0 0.0
  %5442 = vmatpush1.msra.mxu0 0.0
  %5443 = vmatprep.subr.mxu0 0.0
  %5444 = vmatpush1.msra.mxu0 0.0
  %5445 = vmatprep.subr.mxu0 0.0
  %5446 = vmatpush1.msra.mxu0 0.0
  %5447 = vmatprep.mubr.f32.mxu0 0.0
  %5448 = vmatmul.mubr.f32.gmra.mrb[0].mxu0 %v5381
  %v5449 = vpop.f32.mrb[0].mxu0
  %v5450 = vadd.f32 0.0, %v5449
  %v5451 = vpop.f32.mrb[0].mxu0
  %v5452 = vadd.f32 0.0, %v5451
  %5453 = vdwg.mxu0
  %5454 = vmatprep.subr.mxu0 %v5319
  %5455 = vmatpush1.msra.mxu0 %v5318
  %5456 = vmatprep.subr.mxu0 %v5323
  %5457 = vmatpush1.msra.mxu0 %v5322
  %5458 = vmatprep.subr.mxu0 %v5327
  %5459 = vmatpush1.msra.mxu0 %v5326
  %5460 = vmatprep.subr.mxu0 %v5331
  %5461 = vmatpush1.msra.mxu0 %v5330
  %5462 = vmatprep.subr.mxu0 %v5335
  %5463 = vmatpush1.msra.mxu0 %v5334
  %5464 = vmatprep.subr.mxu0 %v5339
  %5465 = vmatpush1.msra.mxu0 %v5338
  %5466 = vmatprep.subr.mxu0 %v5343
  %5467 = vmatpush1.msra.mxu0 %v5342
  %5468 = vmatprep.subr.mxu0 %v5347
  %5469 = vmatpush1.msra.mxu0 %v5346
  %5470 = vmatprep.subr.mxu0 %v5351
  %5471 = vmatpush1.msra.mxu0 %v5350
  %5472 = vmatprep.subr.mxu0 %v5355
  %5473 = vmatpush1.msra.mxu0 %v5354
  %5474 = vmatprep.subr.mxu0 %v5359
  %5475 = vmatpush1.msra.mxu0 %v5358
  %5476 = vmatprep.subr.mxu0 %v5363
  %5477 = vmatpush1.msra.mxu0 %v5362
  %5478 = vmatprep.subr.mxu0 %v5367
  %5479 = vmatpush1.msra.mxu0 %v5366
  %5480 = vmatprep.subr.mxu0 %v5371
  %5481 = vmatpush1.msra.mxu0 %v5370
  %5482 = vmatprep.subr.mxu0 %v5375
  %5483 = vmatpush1.msra.mxu0 %v5374
  %5484 = vmatprep.subr.mxu0 %v5379
  %5485 = vmatpush1.msra.mxu0 %v5378
  %5486 = vmatprep.subr.mxu0 0.0
  %5487 = vmatpush1.msra.mxu0 0.0
  %5488 = vmatprep.subr.mxu0 0.0
  %5489 = vmatpush1.msra.mxu0 0.0
  %5490 = vmatprep.subr.mxu0 0.0
  %5491 = vmatpush1.msra.mxu0 0.0
  %5492 = vmatprep.subr.mxu0 0.0
  %5493 = vmatpush1.msra.mxu0 0.0
  %5494 = vmatprep.subr.mxu0 0.0
  %5495 = vmatpush1.msra.mxu0 0.0
  %5496 = vmatprep.subr.mxu0 0.0
  %5497 = vmatpush1.msra.mxu0 0.0
  %5498 = vmatprep.subr.mxu0 0.0
  %5499 = vmatpush1.msra.mxu0 0.0
  %5500 = vmatprep.subr.mxu0 0.0
  %5501 = vmatpush1.msra.mxu0 0.0
  %5502 = vmatprep.subr.mxu0 0.0
  %5503 = vmatpush1.msra.mxu0 0.0
  %5504 = vmatprep.subr.mxu0 0.0
  %5505 = vmatpush1.msra.mxu0 0.0
  %5506 = vmatprep.subr.mxu0 0.0
  %5507 = vmatpush1.msra.mxu0 0.0
  %5508 = vmatprep.subr.mxu0 0.0
  %5509 = vmatpush1.msra.mxu0 0.0
  %5510 = vmatprep.subr.mxu0 0.0
  %5511 = vmatpush1.msra.mxu0 0.0
  %5512 = vmatprep.subr.mxu0 0.0
  %5513 = vmatpush1.msra.mxu0 0.0
  %5514 = vmatprep.subr.mxu0 0.0
  %5515 = vmatpush1.msra.mxu0 0.0
  %5516 = vmatprep.subr.mxu0 0.0
  %5517 = vmatpush1.msra.mxu0 0.0
  %5518 = vmatprep.mubr.f32.mxu0 0.0
  %5519 = vmatmul.mubr.f32.gmra.mrb[0].mxu0 %v5381
  %v5520 = vpop.f32.mrb[0].mxu0
  %v5521 = vadd.f32 0.0, %v5520
  %v5522 = vpop.f32.mrb[0].mxu0
  %v5523 = vadd.f32 0.0, %v5522
  %5524 = vdwg.mxu0
  %v5529 = vrot.slane %v5450, 2
  %v5530 = vrot.slane %v5452, 2
  %v5531 = vrot.slane %v5521, 2
  %v5532 = vrot.slane %v5523, 2
  %v5537 = vadd.f32 %v5311, %v5529
  %v5538 = vadd.f32 %v5312, %v5530
  %v5539 = vadd.f32 %v5313, %v5531
  %v5540 = vadd.f32 %v5314, %v5532
  %v5541 = vmul.f32 %v5305, 0.5
  %v5542 = vxor.u32 %v5537, 2147483648
  %v5543 = vmul.f32 %v5542, 1.442695
  %v5544 = vpow.pop %v5543
  %v5545 = vadd.f32 %v5544, 1.0
  %v5546 = vrcp.pop %v5545
  %v5547 = vmul.f32 1.0, %v5546
  %v5548 = vxor.u32 %v5538, 2147483648
  %v5549 = vmul.f32 %v5548, 1.442695
  %v5550 = vpow.pop %v5549
  %v5551 = vadd.f32 %v5550, 1.0
  %v5552 = vrcp.pop %v5551
  %v5553 = vmul.f32 1.0, %v5552
  %v5554 = vtanh.pop %v5539
  %v5555 = vxor.u32 %v5540, 2147483648
  %v5556 = vmul.f32 %v5555, 1.442695
  %v5557 = vpow.pop %v5556
  %v5558 = vadd.f32 %v5557, 1.0
  %v5559 = vrcp.pop %v5558
  %v5560 = vmul.f32 1.0, %v5559
  %v5562 = vrot.slane %v5541, 6
  %v5564 = vmul.f32 %v5553, %v5562
  %v5565 = vmul.f32 %v5547, %v5554
  %v5566 = vadd.f32 %v5564, %v5565
  %v5567 = vtanh.pop %v5566
  %v5568 = vmul.f32 %v5560, %v5567
  %5569 = vst [vmem:[#allocation4 + $0x30] sm:$0xc0] %v5568
  %5570 = vst [vmem:[#allocation4 + $0x38] sm:$0xc0] %v5566
  %5571 = vst [vmem:[#allocation3 + $0x18] sm:$0xc0] %v5568
  loop: start=1, step=1, limit=16
  $region26: #{pyramid_lstm_layer.1} parent=0 // loop_pre_header
    _
  $region27: #{pyramid_lstm_layer.1} parent=0 // loop_header
    %s5573 = sphi 1, %s5577
    %p5574 = scmp.ge.s32.totalorder %s5573, 16
  $region28: #{pyramid_lstm_layer.1} parent=0 // loop_header_branch
    %5576 = sbr.rel (%p5574) target = $region32
  $region29: #{pyramid_lstm_layer.1} parent=0 // loop_body
    %v5578 = vld [vmem:[#allocation4] sm:$0xff]
    %v5579 = vld [vmem:[#allocation4 + $0x8] sm:$0xff]
    %v5580 = vld [vmem:[#allocation4 + $0x10] sm:$0xff]
    %v5581 = vld [vmem:[#allocation4 + $0x18] sm:$0xff]
    %v5582 = vld [vmem:[#allocation4 + $0x20] sm:$0xff]
    %v5583 = vld [vmem:[#allocation4 + $0x28] sm:$0xff]
    %v5584 = vld [vmem:[#allocation4 + $0x30] sm:$0xff]
    %v5585 = vld [vmem:[#allocation4 + $0x38] sm:$0xff]
    %v5586 = vlaneseq
    %v5587 = vshrl.u32 %v5586, 7
    %v5588 = vadd.s32 %v5587, 8
    %v5589 = vadd.s32 %v5587, 16
    %v5590 = vadd.s32 %v5587, 24
    %vm5591 = vcmp.lt.s32.totalorder %v5587, 2
    %vm5592 = vcmp.lt.s32.totalorder %v5588, 2
    %vm5593 = vcmp.lt.s32.totalorder %v5589, 2
    %vm5594 = vcmp.lt.s32.totalorder %v5590, 2
    %v5595 = vrot.slane %v5578, 6
    %v5596 = vrot.slane %v5579, 6
    %v5597 = vrot.slane %v5580, 6
    %v5598 = vrot.slane %v5581, 6
    %v5599 = vrot.slane %v5582, 6
    %v5600 = vrot.slane %v5583, 6
    %v5601 = vrot.slane %v5584, 6
    %v5602 = vrot.slane %v5585, 6
    %v5603 = vsel %vm5591, %v5599, %v5601
    %v5604 = vsel %vm5591, %v5600, %v5602
    %v5605 = vsel %vm5591, %v5597, %v5599
    %v5606 = vsel %vm5591, %v5598, %v5600
    %v5607 = vsel %vm5591, %v5595, %v5597
    %v5608 = vsel %vm5591, %v5596, %v5598
    %v5609 = vsel %vm5591, %v5601, %v5595
    %v5610 = vsel %vm5591, %v5602, %v5596
    %v5611 = vsel %vm5591, 1, 0
    %v5612 = vsel %vm5592, 1, 0
    %v5613 = vsel %vm5593, 1, 0
    %v5614 = vsel %vm5594, 1, 0
    %vm5615 = vcmp.eq.s32.totalorder %v5611, 1
    %vm5616 = vcmp.eq.s32.totalorder %v5612, 1
    %vm5617 = vcmp.eq.s32.totalorder %v5613, 1
    %vm5618 = vcmp.eq.s32.totalorder %v5614, 1
    %v5619 = vsel %vm5615, %v5578, %v5609
    %v5620 = vsel %vm5615, %v5579, %v5610
    %v5621 = vsel %vm5616, %v5580, %v5607
    %v5622 = vsel %vm5616, %v5581, %v5608
    %v5623 = vsel %vm5617, %v5582, %v5605
    %v5624 = vsel %vm5617, %v5583, %v5606
    %v5625 = vsel %vm5618, %v5584, %v5603
    %v5626 = vsel %vm5618, %v5585, %v5604
    %vm5627 = vcmp.ge.s32.totalorder %v5587, 30
    %vm5628 = vcmp.ge.s32.totalorder %v5588, 30
    %vm5629 = vcmp.ge.s32.totalorder %v5589, 30
    %vm5630 = vcmp.ge.s32.totalorder %v5590, 30
    %v5631 = vrot.slane %v5578, 2
    %v5632 = vrot.slane %v5579, 2
    %v5633 = vrot.slane %v5580, 2
    %v5634 = vrot.slane %v5581, 2
    %v5635 = vrot.slane %v5582, 2
    %v5636 = vrot.slane %v5583, 2
    %v5637 = vrot.slane %v5584, 2
    %v5638 = vrot.slane %v5585, 2
    %vm5639 = vcmp.lt.s32.totalorder %v5587, 6
    %v5640 = vsel %vm5639, %v5635, %v5637
    %v5641 = vsel %vm5639, %v5636, %v5638
    %v5642 = vsel %vm5639, %v5633, %v5635
    %v5643 = vsel %vm5639, %v5634, %v5636
    %v5644 = vsel %vm5639, %v5631, %v5633
    %v5645 = vsel %vm5639, %v5632, %v5634
    %v5646 = vsel %vm5639, %v5637, %v5631
    %v5647 = vsel %vm5639, %v5638, %v5632
    %v5648 = vsel %vm5627, 1, 0
    %v5649 = vsel %vm5628, 1, 0
    %v5650 = vsel %vm5629, 1, 0
    %v5651 = vsel %vm5630, 1, 0
    %vm5652 = vcmp.eq.s32.totalorder %v5648, 1
    %vm5653 = vcmp.eq.s32.totalorder %v5649, 1
    %vm5654 = vcmp.eq.s32.totalorder %v5650, 1
    %vm5655 = vcmp.eq.s32.totalorder %v5651, 1
    %v5656 = vsel %vm5652, %v5578, %v5644
    %v5657 = vsel %vm5652, %v5579, %v5645
    %v5658 = vsel %vm5653, %v5580, %v5642
    %v5659 = vsel %vm5653, %v5581, %v5643
    %v5660 = vsel %vm5654, %v5582, %v5640
    %v5661 = vsel %vm5654, %v5583, %v5641
    %v5662 = vsel %vm5655, %v5584, %v5646
    %v5663 = vsel %vm5655, %v5585, %v5647
    %v5664 = vadd.f32 %v5619, %v5656
    %v5665 = vadd.f32 %v5620, %v5657
    %v5666 = vadd.f32 %v5621, %v5658
    %v5667 = vadd.f32 %v5622, %v5659
    %v5668 = vadd.f32 %v5623, %v5660
    %v5669 = vadd.f32 %v5624, %v5661
    %v5670 = vadd.f32 %v5625, %v5662
    %v5671 = vadd.f32 %v5626, %v5663
    %v5672 = vmul.f32 %v5664, 0.5
    %v5673 = vmul.f32 %v5665, 0.5
    %v5674 = vmul.f32 %v5666, 0.5
    %v5675 = vmul.f32 %v5667, 0.5
    %v5676 = vmul.f32 %v5668, 0.5
    %v5677 = vmul.f32 %v5669, 0.5
    %v5678 = vmul.f32 %v5670, 0.5
    %v5679 = vmul.f32 %v5671, 0.5
    %s5680 = smul.u32 %s5573, 32
    %s5681 = sshra.s32 %s5680, 3
    %s5682 = sand.u32 %s5680, 7
    %s5683 = smul.u32 %s5681, 4
    %s5684 = smul.addr %s5683, 8
    %s5685 = scalar_lea.vmem [#allocation2], %s5684
    %v5686 = vld [vmem:[%s5685] sm:$0xff]
    %v5687 = vld [vmem:[%s5685 + $0x8] sm:$0xff]
    %v5688 = vld [vmem:[%s5685 + $0x10] sm:$0xff]
    %v5689 = vld [vmem:[%s5685 + $0x18] sm:$0xff]
    %v5690 = vld [vmem:[%s5685 + $0x20] sm:$0xff]
    %v5691 = vld [vmem:[%s5685 + $0x28] sm:$0xff]
    %v5692 = vld [vmem:[%s5685 + $0x30] sm:$0xff]
    %v5693 = vld [vmem:[%s5685 + $0x38] sm:$0xff]
    %v5694 = vld [vmem:[%s5685 + $0x40] sm:$0xff]
    %v5695 = vld [vmem:[%s5685 + $0x48] sm:$0xff]
    %v5696 = vld [vmem:[%s5685 + $0x50] sm:$0xff]
    %v5697 = vld [vmem:[%s5685 + $0x58] sm:$0xff]
    %v5698 = vld [vmem:[%s5685 + $0x60] sm:$0xff]
    %v5699 = vld [vmem:[%s5685 + $0x68] sm:$0xff]
    %v5700 = vld [vmem:[%s5685 + $0x70] sm:$0xff]
    %v5701 = vld [vmem:[%s5685 + $0x78] sm:$0xff]
    %v5702 = vld [vmem:[%s3] sm:$0xff]
    %v5703 = vld [vmem:[%s3 + $0x8] sm:$0xff]
    %v5704 = vld [vmem:[%s3 + $0x10] sm:$0xff]
    %v5705 = vld [vmem:[%s3 + $0x18] sm:$0xff]
    %v5706 = vld [vmem:[%s3 + $0x20] sm:$0xff]
    %v5707 = vld [vmem:[%s3 + $0x28] sm:$0xff]
    %v5708 = vld [vmem:[%s3 + $0x30] sm:$0xff]
    %v5709 = vld [vmem:[%s3 + $0x38] sm:$0xff]
    %v5710 = vld [vmem:[%s3 + $0x40] sm:$0xff]
    %v5711 = vld [vmem:[%s3 + $0x48] sm:$0xff]
    %v5712 = vld [vmem:[%s3 + $0x50] sm:$0xff]
    %v5713 = vld [vmem:[%s3 + $0x58] sm:$0xff]
    %v5714 = vld [vmem:[%s3 + $0x60] sm:$0xff]
    %v5715 = vld [vmem:[%s3 + $0x68] sm:$0xff]
    %v5716 = vld [vmem:[%s3 + $0x70] sm:$0xff]
    %v5717 = vld [vmem:[%s3 + $0x78] sm:$0xff]
    %v5718 = vld [vmem:[%s3 + $0x80] sm:$0xff]
    %v5719 = vld [vmem:[%s3 + $0x88] sm:$0xff]
    %v5720 = vld [vmem:[%s3 + $0x90] sm:$0xff]
    %v5721 = vld [vmem:[%s3 + $0x98] sm:$0xff]
    %v5722 = vld [vmem:[%s3 + $0xa0] sm:$0xff]
    %v5723 = vld [vmem:[%s3 + $0xa8] sm:$0xff]
    %v5724 = vld [vmem:[%s3 + $0xb0] sm:$0xff]
    %v5725 = vld [vmem:[%s3 + $0xb8] sm:$0xff]
    %v5726 = vld [vmem:[%s3 + $0xc0] sm:$0xff]
    %v5727 = vld [vmem:[%s3 + $0xc8] sm:$0xff]
    %v5728 = vld [vmem:[%s3 + $0xd0] sm:$0xff]
    %v5729 = vld [vmem:[%s3 + $0xd8] sm:$0xff]
    %v5730 = vld [vmem:[%s3 + $0xe0] sm:$0xff]
    %v5731 = vld [vmem:[%s3 + $0xe8] sm:$0xff]
    %v5732 = vld [vmem:[%s3 + $0xf0] sm:$0xff]
    %v5733 = vld [vmem:[%s3 + $0xf8] sm:$0xff]
    %v5734 = vld [vmem:[%s3 + $0x100] sm:$0xff]
    %v5735 = vld [vmem:[%s3 + $0x108] sm:$0xff]
    %v5736 = vld [vmem:[%s3 + $0x110] sm:$0xff]
    %v5737 = vld [vmem:[%s3 + $0x118] sm:$0xff]
    %v5738 = vld [vmem:[%s3 + $0x120] sm:$0xff]
    %v5739 = vld [vmem:[%s3 + $0x128] sm:$0xff]
    %v5740 = vld [vmem:[%s3 + $0x130] sm:$0xff]
    %v5741 = vld [vmem:[%s3 + $0x138] sm:$0xff]
    %v5742 = vld [vmem:[%s3 + $0x140] sm:$0xff]
    %v5743 = vld [vmem:[%s3 + $0x148] sm:$0xff]
    %v5744 = vld [vmem:[%s3 + $0x150] sm:$0xff]
    %v5745 = vld [vmem:[%s3 + $0x158] sm:$0xff]
    %v5746 = vld [vmem:[%s3 + $0x160] sm:$0xff]
    %v5747 = vld [vmem:[%s3 + $0x168] sm:$0xff]
    %v5748 = vld [vmem:[%s3 + $0x170] sm:$0xff]
    %v5749 = vld [vmem:[%s3 + $0x178] sm:$0xff]
    %v5750 = vld [vmem:[%s3 + $0x180] sm:$0xff]
    %v5751 = vld [vmem:[%s3 + $0x188] sm:$0xff]
    %v5752 = vld [vmem:[%s3 + $0x190] sm:$0xff]
    %v5753 = vld [vmem:[%s3 + $0x198] sm:$0xff]
    %v5754 = vld [vmem:[%s3 + $0x1a0] sm:$0xff]
    %v5755 = vld [vmem:[%s3 + $0x1a8] sm:$0xff]
    %v5756 = vld [vmem:[%s3 + $0x1b0] sm:$0xff]
    %v5757 = vld [vmem:[%s3 + $0x1b8] sm:$0xff]
    %v5758 = vld [vmem:[%s3 + $0x1c0] sm:$0xff]
    %v5759 = vld [vmem:[%s3 + $0x1c8] sm:$0xff]
    %v5760 = vld [vmem:[%s3 + $0x1d0] sm:$0xff]
    %v5761 = vld [vmem:[%s3 + $0x1d8] sm:$0xff]
    %v5762 = vld [vmem:[%s3 + $0x1e0] sm:$0xff]
    %v5763 = vld [vmem:[%s3 + $0x1e8] sm:$0xff]
    %v5764 = vld [vmem:[%s3 + $0x1f0] sm:$0xff]
    %v5765 = vld [vmem:[%s3 + $0x1f8] sm:$0xff]
    %5766 = vmatprep.subr.mxu0 %v5703
    %5767 = vmatpush1.msra.mxu0 %v5702
    %5768 = vmatprep.subr.mxu0 %v5707
    %5769 = vmatpush1.msra.mxu0 %v5706
    %5770 = vmatprep.subr.mxu0 %v5711
    %5771 = vmatpush1.msra.mxu0 %v5710
    %5772 = vmatprep.subr.mxu0 %v5715
    %5773 = vmatpush1.msra.mxu0 %v5714
    %5774 = vmatprep.subr.mxu0 %v5719
    %5775 = vmatpush1.msra.mxu0 %v5718
    %5776 = vmatprep.subr.mxu0 %v5723
    %5777 = vmatpush1.msra.mxu0 %v5722
    %5778 = vmatprep.subr.mxu0 %v5727
    %5779 = vmatpush1.msra.mxu0 %v5726
    %5780 = vmatprep.subr.mxu0 %v5731
    %5781 = vmatpush1.msra.mxu0 %v5730
    %5782 = vmatprep.subr.mxu0 %v5735
    %5783 = vmatpush1.msra.mxu0 %v5734
    %5784 = vmatprep.subr.mxu0 %v5739
    %5785 = vmatpush1.msra.mxu0 %v5738
    %5786 = vmatprep.subr.mxu0 %v5743
    %5787 = vmatpush1.msra.mxu0 %v5742
    %5788 = vmatprep.subr.mxu0 %v5747
    %5789 = vmatpush1.msra.mxu0 %v5746
    %5790 = vmatprep.subr.mxu0 %v5751
    %5791 = vmatpush1.msra.mxu0 %v5750
    %5792 = vmatprep.subr.mxu0 %v5755
    %5793 = vmatpush1.msra.mxu0 %v5754
    %5794 = vmatprep.subr.mxu0 %v5759
    %5795 = vmatpush1.msra.mxu0 %v5758
    %5796 = vmatprep.subr.mxu0 %v5763
    %5797 = vmatpush1.msra.mxu0 %v5762
    %5798 = vmatprep.subr.mxu0 0.0
    %5799 = vmatpush1.msra.mxu0 0.0
    %5800 = vmatprep.subr.mxu0 0.0
    %5801 = vmatpush1.msra.mxu0 0.0
    %5802 = vmatprep.subr.mxu0 0.0
    %5803 = vmatpush1.msra.mxu0 0.0
    %5804 = vmatprep.subr.mxu0 0.0
    %5805 = vmatpush1.msra.mxu0 0.0
    %5806 = vmatprep.subr.mxu0 0.0
    %5807 = vmatpush1.msra.mxu0 0.0
    %5808 = vmatprep.subr.mxu0 0.0
    %5809 = vmatpush1.msra.mxu0 0.0
    %5810 = vmatprep.subr.mxu0 0.0
    %5811 = vmatpush1.msra.mxu0 0.0
    %5812 = vmatprep.subr.mxu0 0.0
    %5813 = vmatpush1.msra.mxu0 0.0
    %5814 = vmatprep.subr.mxu0 0.0
    %5815 = vmatpush1.msra.mxu0 0.0
    %5816 = vmatprep.subr.mxu0 0.0
    %5817 = vmatpush1.msra.mxu0 0.0
    %5818 = vmatprep.subr.mxu0 0.0
    %5819 = vmatpush1.msra.mxu0 0.0
    %5820 = vmatprep.subr.mxu0 0.0
    %5821 = vmatpush1.msra.mxu0 0.0
    %5822 = vmatprep.subr.mxu0 0.0
    %5823 = vmatpush1.msra.mxu0 0.0
    %5824 = vmatprep.subr.mxu0 0.0
    %5825 = vmatpush1.msra.mxu0 0.0
    %5826 = vmatprep.subr.mxu0 0.0
    %5827 = vmatpush1.msra.mxu0 0.0
    %5828 = vmatprep.subr.mxu0 0.0
    %5829 = vmatpush1.msra.mxu0 0.0
    %5830 = vmatprep.mubr.f32.mxu0 0.0
    %5831 = vmatmul.mubr.f32.gmra.mrb[0].mxu0 %v5672
    %v5832 = vpop.f32.mrb[0].mxu0
    %v5833 = vadd.f32 0.0, %v5832
    %v5834 = vpop.f32.mrb[0].mxu0
    %v5835 = vadd.f32 0.0, %v5834
    %5836 = vmatprep.mubr.f32.mxu0 0.0
    %5837 = vmatmul.mubr.f32.gmra.mrb[0].mxu0 %v5674
    %v5838 = vpop.f32.mrb[0].mxu0
    %v5839 = vadd.f32 0.0, %v5838
    %v5840 = vpop.f32.mrb[0].mxu0
    %v5841 = vadd.f32 0.0, %v5840
    %5842 = vmatprep.mubr.f32.mxu0 0.0
    %5843 = vmatmul.mubr.f32.gmra.mrb[0].mxu0 %v5676
    %v5844 = vpop.f32.mrb[0].mxu0
    %v5845 = vadd.f32 0.0, %v5844
    %v5846 = vpop.f32.mrb[0].mxu0
    %v5847 = vadd.f32 0.0, %v5846
    %5848 = vmatprep.mubr.f32.mxu0 0.0
    %5849 = vmatmul.mubr.f32.gmra.mrb[0].mxu0 %v5678
    %v5850 = vpop.f32.mrb[0].mxu0
    %v5851 = vadd.f32 0.0, %v5850
    %v5852 = vpop.f32.mrb[0].mxu0
    %v5853 = vadd.f32 0.0, %v5852
    %5854 = vdwg.mxu0
    %5855 = vmatprep.subr.mxu0 %v5705
    %5856 = vmatpush1.msra.mxu0 %v5704
    %5857 = vmatprep.subr.mxu0 %v5709
    %5858 = vmatpush1.msra.mxu0 %v5708
    %5859 = vmatprep.subr.mxu0 %v5713
    %5860 = vmatpush1.msra.mxu0 %v5712
    %5861 = vmatprep.subr.mxu0 %v5717
    %5862 = vmatpush1.msra.mxu0 %v5716
    %5863 = vmatprep.subr.mxu0 %v5721
    %5864 = vmatpush1.msra.mxu0 %v5720
    %5865 = vmatprep.subr.mxu0 %v5725
    %5866 = vmatpush1.msra.mxu0 %v5724
    %5867 = vmatprep.subr.mxu0 %v5729
    %5868 = vmatpush1.msra.mxu0 %v5728
    %5869 = vmatprep.subr.mxu0 %v5733
    %5870 = vmatpush1.msra.mxu0 %v5732
    %5871 = vmatprep.subr.mxu0 %v5737
    %5872 = vmatpush1.msra.mxu0 %v5736
    %5873 = vmatprep.subr.mxu0 %v5741
    %5874 = vmatpush1.msra.mxu0 %v5740
    %5875 = vmatprep.subr.mxu0 %v5745
    %5876 = vmatpush1.msra.mxu0 %v5744
    %5877 = vmatprep.subr.mxu0 %v5749
    %5878 = vmatpush1.msra.mxu0 %v5748
    %5879 = vmatprep.subr.mxu0 %v5753
    %5880 = vmatpush1.msra.mxu0 %v5752
    %5881 = vmatprep.subr.mxu0 %v5757
    %5882 = vmatpush1.msra.mxu0 %v5756
    %5883 = vmatprep.subr.mxu0 %v5761
    %5884 = vmatpush1.msra.mxu0 %v5760
    %5885 = vmatprep.subr.mxu0 %v5765
    %5886 = vmatpush1.msra.mxu0 %v5764
    %5887 = vmatprep.subr.mxu0 0.0
    %5888 = vmatpush1.msra.mxu0 0.0
    %5889 = vmatprep.subr.mxu0 0.0
    %5890 = vmatpush1.msra.mxu0 0.0
    %5891 = vmatprep.subr.mxu0 0.0
    %5892 = vmatpush1.msra.mxu0 0.0
    %5893 = vmatprep.subr.mxu0 0.0
    %5894 = vmatpush1.msra.mxu0 0.0
    %5895 = vmatprep.subr.mxu0 0.0
    %5896 = vmatpush1.msra.mxu0 0.0
    %5897 = vmatprep.subr.mxu0 0.0
    %5898 = vmatpush1.msra.mxu0 0.0
    %5899 = vmatprep.subr.mxu0 0.0
    %5900 = vmatpush1.msra.mxu0 0.0
    %5901 = vmatprep.subr.mxu0 0.0
    %5902 = vmatpush1.msra.mxu0 0.0
    %5903 = vmatprep.subr.mxu0 0.0
    %5904 = vmatpush1.msra.mxu0 0.0
    %5905 = vmatprep.subr.mxu0 0.0
    %5906 = vmatpush1.msra.mxu0 0.0
    %5907 = vmatprep.subr.mxu0 0.0
    %5908 = vmatpush1.msra.mxu0 0.0
    %5909 = vmatprep.subr.mxu0 0.0
    %5910 = vmatpush1.msra.mxu0 0.0
    %5911 = vmatprep.subr.mxu0 0.0
    %5912 = vmatpush1.msra.mxu0 0.0
    %5913 = vmatprep.subr.mxu0 0.0
    %5914 = vmatpush1.msra.mxu0 0.0
    %5915 = vmatprep.subr.mxu0 0.0
    %5916 = vmatpush1.msra.mxu0 0.0
    %5917 = vmatprep.subr.mxu0 0.0
    %5918 = vmatpush1.msra.mxu0 0.0
    %5919 = vmatprep.mubr.f32.mxu0 0.0
    %5920 = vmatmul.mubr.f32.gmra.mrb[0].mxu0 %v5672
    %v5921 = vpop.f32.mrb[0].mxu0
    %v5922 = vadd.f32 0.0, %v5921
    %v5923 = vpop.f32.mrb[0].mxu0
    %v5924 = vadd.f32 0.0, %v5923
    %5925 = vmatprep.mubr.f32.mxu0 0.0
    %5926 = vmatmul.mubr.f32.gmra.mrb[0].mxu0 %v5674
    %v5927 = vpop.f32.mrb[0].mxu0
    %v5928 = vadd.f32 0.0, %v5927
    %v5929 = vpop.f32.mrb[0].mxu0
    %v5930 = vadd.f32 0.0, %v5929
    %5931 = vmatprep.mubr.f32.mxu0 0.0
    %5932 = vmatmul.mubr.f32.gmra.mrb[0].mxu0 %v5676
    %v5933 = vpop.f32.mrb[0].mxu0
    %v5934 = vadd.f32 0.0, %v5933
    %v5935 = vpop.f32.mrb[0].mxu0
    %v5936 = vadd.f32 0.0, %v5935
    %5937 = vmatprep.mubr.f32.mxu0 0.0
    %5938 = vmatmul.mubr.f32.gmra.mrb[0].mxu0 %v5678
    %v5939 = vpop.f32.mrb[0].mxu0
    %v5940 = vadd.f32 0.0, %v5939
    %v5941 = vpop.f32.mrb[0].mxu0
    %v5942 = vadd.f32 0.0, %v5941
    %5943 = vdwg.mxu0
    %v5944 = vadd.f32 %v5686, %v5833
    %v5945 = vadd.f32 %v5687, %v5835
    %v5946 = vadd.f32 %v5688, %v5922
    %v5947 = vadd.f32 %v5689, %v5924
    %v5948 = vadd.f32 %v5690, %v5839
    %v5949 = vadd.f32 %v5691, %v5841
    %v5950 = vadd.f32 %v5692, %v5928
    %v5951 = vadd.f32 %v5693, %v5930
    %v5952 = vadd.f32 %v5694, %v5845
    %v5953 = vadd.f32 %v5695, %v5847
    %v5954 = vadd.f32 %v5696, %v5934
    %v5955 = vadd.f32 %v5697, %v5936
    %v5956 = vadd.f32 %v5698, %v5851
    %v5957 = vadd.f32 %v5699, %v5853
    %v5958 = vadd.f32 %v5700, %v5940
    %v5959 = vadd.f32 %v5701, %v5942
    %v5960 = vxor.u32 %v5944, 2147483648
    %v5961 = vxor.u32 %v5948, 2147483648
    %v5962 = vxor.u32 %v5952, 2147483648
    %v5963 = vxor.u32 %v5956, 2147483648
    %v5964 = vmul.f32 %v5960, 1.442695
    %v5965 = vpow.pop %v5964
    %v5966 = vmul.f32 %v5961, 1.442695
    %v5967 = vpow.pop %v5966
    %v5968 = vmul.f32 %v5962, 1.442695
    %v5969 = vpow.pop %v5968
    %v5970 = vmul.f32 %v5963, 1.442695
    %v5971 = vpow.pop %v5970
    %v5972 = vadd.f32 %v5965, 1.0
    %v5973 = vadd.f32 %v5967, 1.0
    %v5974 = vadd.f32 %v5969, 1.0
    %v5975 = vadd.f32 %v5971, 1.0
    %v5976 = vrcp.pop %v5972
    %v5977 = vmul.f32 1.0, %v5976
    %v5978 = vrcp.pop %v5973
    %v5979 = vmul.f32 1.0, %v5978
    %v5980 = vrcp.pop %v5974
    %v5981 = vmul.f32 1.0, %v5980
    %v5982 = vrcp.pop %v5975
    %v5983 = vmul.f32 1.0, %v5982
    %v5984 = vxor.u32 %v5945, 2147483648
    %v5985 = vxor.u32 %v5949, 2147483648
    %v5986 = vxor.u32 %v5953, 2147483648
    %v5987 = vxor.u32 %v5957, 2147483648
    %v5988 = vmul.f32 %v5984, 1.442695
    %v5989 = vpow.pop %v5988
    %v5990 = vmul.f32 %v5985, 1.442695
    %v5991 = vpow.pop %v5990
    %v5992 = vmul.f32 %v5986, 1.442695
    %v5993 = vpow.pop %v5992
    %v5994 = vmul.f32 %v5987, 1.442695
    %v5995 = vpow.pop %v5994
    %v5996 = vadd.f32 %v5989, 1.0
    %v5997 = vadd.f32 %v5991, 1.0
    %v5998 = vadd.f32 %v5993, 1.0
    %v5999 = vadd.f32 %v5995, 1.0
    %v6000 = vrcp.pop %v5996
    %v6001 = vmul.f32 1.0, %v6000
    %v6002 = vrcp.pop %v5997
    %v6003 = vmul.f32 1.0, %v6002
    %v6004 = vrcp.pop %v5998
    %v6005 = vmul.f32 1.0, %v6004
    %v6006 = vrcp.pop %v5999
    %v6007 = vmul.f32 1.0, %v6006
    %v6008 = vtanh.pop %v5946
    %v6009 = vtanh.pop %v5950
    %v6010 = vtanh.pop %v5954
    %v6011 = vtanh.pop %v5958
    %v6012 = vxor.u32 %v5947, 2147483648
    %v6013 = vxor.u32 %v5951, 2147483648
    %v6014 = vxor.u32 %v5955, 2147483648
    %v6015 = vxor.u32 %v5959, 2147483648
    %v6016 = vmul.f32 %v6012, 1.442695
    %v6017 = vpow.pop %v6016
    %v6018 = vmul.f32 %v6013, 1.442695
    %v6019 = vpow.pop %v6018
    %v6020 = vmul.f32 %v6014, 1.442695
    %v6021 = vpow.pop %v6020
    %v6022 = vmul.f32 %v6015, 1.442695
    %v6023 = vpow.pop %v6022
    %v6024 = vadd.f32 %v6017, 1.0
    %v6025 = vadd.f32 %v6019, 1.0
    %v6026 = vadd.f32 %v6021, 1.0
    %v6027 = vadd.f32 %v6023, 1.0
    %v6028 = vrcp.pop %v6024
    %v6029 = vmul.f32 1.0, %v6028
    %v6030 = vrcp.pop %v6025
    %v6031 = vmul.f32 1.0, %v6030
    %v6032 = vrcp.pop %v6026
    %v6033 = vmul.f32 1.0, %v6032
    %v6034 = vrcp.pop %v6027
    %v6035 = vmul.f32 1.0, %v6034
    %v6036 = vmul.f32 %v6001, %v5673
    %v6037 = vmul.f32 %v6003, %v5675
    %v6038 = vmul.f32 %v6005, %v5677
    %v6039 = vmul.f32 %v6007, %v5679
    %v6040 = vmul.f32 %v5977, %v6008
    %v6041 = vmul.f32 %v5979, %v6009
    %v6042 = vmul.f32 %v5981, %v6010
    %v6043 = vmul.f32 %v5983, %v6011
    %v6044 = vadd.f32 %v6036, %v6040
    %v6045 = vadd.f32 %v6037, %v6041
    %v6046 = vadd.f32 %v6038, %v6042
    %v6047 = vadd.f32 %v6039, %v6043
    %v6048 = vtanh.pop %v6044
    %v6049 = vtanh.pop %v6045
    %v6050 = vtanh.pop %v6046
    %v6051 = vtanh.pop %v6047
    %v6052 = vmul.f32 %v6029, %v6048
    %v6053 = vmul.f32 %v6031, %v6049
    %v6054 = vmul.f32 %v6033, %v6050
    %v6055 = vmul.f32 %v6035, %v6051
    %6056 = vst [vmem:[#allocation4] sm:$0xff] %v6052
    %6057 = vst [vmem:[#allocation4 + $0x10] sm:$0xff] %v6053
    %6058 = vst [vmem:[#allocation4 + $0x20] sm:$0xff] %v6054
    %6059 = vst [vmem:[#allocation4 + $0x30] sm:$0xff] %v6055
    %6060 = vst [vmem:[#allocation4 + $0x8] sm:$0xff] %v6044
    %6061 = vst [vmem:[#allocation4 + $0x18] sm:$0xff] %v6045
    %6062 = vst [vmem:[#allocation4 + $0x28] sm:$0xff] %v6046
    %6063 = vst [vmem:[#allocation4 + $0x38] sm:$0xff] %v6047
    %s6064 = scalar_lea.vmem [#allocation3], %s5680
    %6065 = vst [vmem:[%s6064] sm:$0xff] %v6052
    %6066 = vst [vmem:[%s6064 + $0x8] sm:$0xff] %v6053
    %6067 = vst [vmem:[%s6064 + $0x10] sm:$0xff] %v6054
    %6068 = vst [vmem:[%s6064 + $0x18] sm:$0xff] %v6055
  $region30: #{pyramid_lstm_layer.1} parent=0 // loop_footer
    %s5577 = sadd.s32 1, %s5573
  $region31: #{pyramid_lstm_layer.1} parent=0 // loop_footer_branch
    %5572 = sbr.rel target = $region27
  $region32: #{pyramid_lstm_layer.1} parent=0 // loop_exit
    _
  %v6069 = vld [vmem:[#allocation3] sm:$0xff]
  %v6070 = vld [vmem:[#allocation3 + $0x8] sm:$0xff]
  %v6071 = vld [vmem:[#allocation3 + $0x10] sm:$0xff]
  %v6072 = vld [vmem:[#allocation3 + $0x18] sm:$0xff]
  %v6073 = vld [vmem:[#allocation3 + $0x20] sm:$0xff]
  %v6074 = vld [vmem:[#allocation3 + $0x28] sm:$0xff]
  %v6075 = vld [vmem:[#allocation3 + $0x30] sm:$0xff]
  %v6076 = vld [vmem:[#allocation3 + $0x38] sm:$0xff]
  %v6077 = vld [vmem:[#allocation3 + $0x40] sm:$0xff]
  %v6078 = vld [vmem:[#allocation3 + $0x48] sm:$0xff]
  %v6079 = vld [vmem:[#allocation3 + $0x50] sm:$0xff]
  %v6080 = vld [vmem:[#allocation3 + $0x58] sm:$0xff]
  %v6081 = vld [vmem:[#allocation3 + $0x60] sm:$0xff]
  %v6082 = vld [vmem:[#allocation3 + $0x68] sm:$0xff]
  %v6083 = vld [vmem:[#allocation3 + $0x70] sm:$0xff]
  %v6084 = vld [vmem:[#allocation3 + $0x78] sm:$0xff]
  %v6085 = vld [vmem:[#allocation3 + $0x80] sm:$0xff]
  %v6086 = vld [vmem:[#allocation3 + $0x88] sm:$0xff]
  %v6087 = vld [vmem:[#allocation3 + $0x90] sm:$0xff]
  %v6088 = vld [vmem:[#allocation3 + $0x98] sm:$0xff]
  %v6089 = vld [vmem:[#allocation3 + $0xa0] sm:$0xff]
  %v6090 = vld [vmem:[#allocation3 + $0xa8] sm:$0xff]
  %v6091 = vld [vmem:[#allocation3 + $0xb0] sm:$0xff]
  %v6092 = vld [vmem:[#allocation3 + $0xb8] sm:$0xff]
  %v6093 = vld [vmem:[#allocation3 + $0xc0] sm:$0xff]
  %v6094 = vld [vmem:[#allocation3 + $0xc8] sm:$0xff]
  %v6095 = vld [vmem:[#allocation3 + $0xd0] sm:$0xff]
  %v6096 = vld [vmem:[#allocation3 + $0xd8] sm:$0xff]
  %v6097 = vld [vmem:[#allocation3 + $0xe0] sm:$0xff]
  %v6098 = vld [vmem:[#allocation3 + $0xe8] sm:$0xff]
  %v6099 = vld [vmem:[#allocation3 + $0xf0] sm:$0xff]
  %v6100 = vld [vmem:[#allocation3 + $0xf8] sm:$0xff]
  %v6101 = vld [vmem:[#allocation3 + $0x100] sm:$0xff]
  %v6102 = vld [vmem:[#allocation3 + $0x108] sm:$0xff]
  %v6103 = vld [vmem:[#allocation3 + $0x110] sm:$0xff]
  %v6104 = vld [vmem:[#allocation3 + $0x118] sm:$0xff]
  %v6105 = vld [vmem:[#allocation3 + $0x120] sm:$0xff]
  %v6106 = vld [vmem:[#allocation3 + $0x128] sm:$0xff]
  %v6107 = vld [vmem:[#allocation3 + $0x130] sm:$0xff]
  %v6108 = vld [vmem:[#allocation3 + $0x138] sm:$0xff]
  %v6109 = vld [vmem:[#allocation3 + $0x140] sm:$0xff]
  %v6110 = vld [vmem:[#allocation3 + $0x148] sm:$0xff]
  %v6111 = vld [vmem:[#allocation3 + $0x150] sm:$0xff]
  %v6112 = vld [vmem:[#allocation3 + $0x158] sm:$0xff]
  %v6113 = vld [vmem:[#allocation3 + $0x160] sm:$0xff]
  %v6114 = vld [vmem:[#allocation3 + $0x168] sm:$0xff]
  %v6115 = vld [vmem:[#allocation3 + $0x170] sm:$0xff]
  %v6116 = vld [vmem:[#allocation3 + $0x178] sm:$0xff]
  %v6117 = vld [vmem:[#allocation3 + $0x180] sm:$0xff]
  %v6118 = vld [vmem:[#allocation3 + $0x188] sm:$0xff]
  %v6119 = vld [vmem:[#allocation3 + $0x190] sm:$0xff]
  %v6120 = vld [vmem:[#allocation3 + $0x198] sm:$0xff]
  %v6121 = vld [vmem:[#allocation3 + $0x1a0] sm:$0xff]
  %v6122 = vld [vmem:[#allocation3 + $0x1a8] sm:$0xff]
  %v6123 = vld [vmem:[#allocation3 + $0x1b0] sm:$0xff]
  %v6124 = vld [vmem:[#allocation3 + $0x1b8] sm:$0xff]
  %v6125 = vld [vmem:[#allocation3 + $0x1c0] sm:$0xff]
  %v6126 = vld [vmem:[#allocation3 + $0x1c8] sm:$0xff]
  %v6127 = vld [vmem:[#allocation3 + $0x1d0] sm:$0xff]
  %v6128 = vld [vmem:[#allocation3 + $0x1d8] sm:$0xff]
  %v6129 = vld [vmem:[#allocation3 + $0x1e0] sm:$0xff]
  %v6130 = vld [vmem:[#allocation3 + $0x1e8] sm:$0xff]
  %v6131 = vld [vmem:[#allocation3 + $0x1f0] sm:$0xff]
  %v6132 = vld [vmem:[#allocation3 + $0x1f8] sm:$0xff]
  %v6133 = vld [vmem:[%s4] sm:$0xff]
  %v6134 = vld [vmem:[%s4 + $0x8] sm:$0xff]
  %v6135 = vld [vmem:[%s4 + $0x10] sm:$0xff]
  %v6136 = vld [vmem:[%s4 + $0x18] sm:$0xff]
  %v6137 = vld [vmem:[%s4 + $0x20] sm:$0xff]
  %v6138 = vld [vmem:[%s4 + $0x28] sm:$0xff]
  %v6139 = vld [vmem:[%s4 + $0x30] sm:$0xff]
  %v6140 = vld [vmem:[%s4 + $0x38] sm:$0xff]
  %v6141 = vld [vmem:[%s4 + $0x40] sm:$0xff]
  %v6142 = vld [vmem:[%s4 + $0x48] sm:$0xff]
  %v6143 = vld [vmem:[%s4 + $0x50] sm:$0xff]
  %v6144 = vld [vmem:[%s4 + $0x58] sm:$0xff]
  %v6145 = vld [vmem:[%s4 + $0x60] sm:$0xff]
  %v6146 = vld [vmem:[%s4 + $0x68] sm:$0xff]
  %v6147 = vld [vmem:[%s4 + $0x70] sm:$0xff]
  %v6148 = vld [vmem:[%s4 + $0x78] sm:$0xff]
  %v6149 = vld [vmem:[%s5] sm:$0x1]
  %v6151 = vlaneseq
  %v6152 = vshrl.u32 %v6151, 7
  %v6153 = vsub.s32 0, %v6152
  %v6154 = vrot.slane %v6149, %v6153
  %6156 = vmatprep.subr.mxu0 0.0
  %6157 = vmatpush1.msra.mxu0 %v6133
  %6158 = vmatprep.subr.mxu0 0.0
  %6159 = vmatpush1.msra.mxu0 %v6134
  %6160 = vmatprep.subr.mxu0 0.0
  %6161 = vmatpush1.msra.mxu0 %v6135
  %6162 = vmatprep.subr.mxu0 0.0
  %6163 = vmatpush1.msra.mxu0 %v6136
  %6164 = vmatprep.subr.mxu0 0.0
  %6165 = vmatpush1.msra.mxu0 %v6137
  %6166 = vmatprep.subr.mxu0 0.0
  %6167 = vmatpush1.msra.mxu0 %v6138
  %6168 = vmatprep.subr.mxu0 0.0
  %6169 = vmatpush1.msra.mxu0 %v6139
  %6170 = vmatprep.subr.mxu0 0.0
  %6171 = vmatpush1.msra.mxu0 %v6140
  %6172 = vmatprep.subr.mxu0 0.0
  %6173 = vmatpush1.msra.mxu0 %v6141
  %6174 = vmatprep.subr.mxu0 0.0
  %6175 = vmatpush1.msra.mxu0 %v6142
  %6176 = vmatprep.subr.mxu0 0.0
  %6177 = vmatpush1.msra.mxu0 %v6143
  %6178 = vmatprep.subr.mxu0 0.0
  %6179 = vmatpush1.msra.mxu0 %v6144
  %6180 = vmatprep.subr.mxu0 0.0
  %6181 = vmatpush1.msra.mxu0 %v6145
  %6182 = vmatprep.subr.mxu0 0.0
  %6183 = vmatpush1.msra.mxu0 %v6146
  %6184 = vmatprep.subr.mxu0 0.0
  %6185 = vmatpush1.msra.mxu0 %v6147
  %6186 = vmatprep.subr.mxu0 0.0
  %6187 = vmatpush1.msra.mxu0 %v6148
  %6188 = vmatprep.subr.mxu0 0.0
  %6189 = vmatpush1.msra.mxu0 0.0
  %6190 = vmatprep.subr.mxu0 0.0
  %6191 = vmatpush1.msra.mxu0 0.0
  %6192 = vmatprep.subr.mxu0 0.0
  %6193 = vmatpush1.msra.mxu0 0.0
  %6194 = vmatprep.subr.mxu0 0.0
  %6195 = vmatpush1.msra.mxu0 0.0
  %6196 = vmatprep.subr.mxu0 0.0
  %6197 = vmatpush1.msra.mxu0 0.0
  %6198 = vmatprep.subr.mxu0 0.0
  %6199 = vmatpush1.msra.mxu0 0.0
  %6200 = vmatprep.subr.mxu0 0.0
  %6201 = vmatpush1.msra.mxu0 0.0
  %6202 = vmatprep.subr.mxu0 0.0
  %6203 = vmatpush1.msra.mxu0 0.0
  %6204 = vmatprep.subr.mxu0 0.0
  %6205 = vmatpush1.msra.mxu0 0.0
  %6206 = vmatprep.subr.mxu0 0.0
  %6207 = vmatpush1.msra.mxu0 0.0
  %6208 = vmatprep.subr.mxu0 0.0
  %6209 = vmatpush1.msra.mxu0 0.0
  %6210 = vmatprep.subr.mxu0 0.0
  %6211 = vmatpush1.msra.mxu0 0.0
  %6212 = vmatprep.subr.mxu0 0.0
  %6213 = vmatpush1.msra.mxu0 0.0
  %6214 = vmatprep.subr.mxu0 0.0
  %6215 = vmatpush1.msra.mxu0 0.0
  %6216 = vmatprep.subr.mxu0 0.0
  %6217 = vmatpush1.msra.mxu0 0.0
  %6218 = vmatprep.subr.mxu0 0.0
  %6219 = vmatpush1.msra.mxu0 0.0
  %6220 = vmatprep.mubr.f32.mxu0 0.0
  %6221 = vmatmul.mubr.f32.gmra.mrb[0].mxu0 %v6069
  %v6222 = vpop.f32.mrb[0].mxu0
  %v6223 = vadd.f32 %v6154, %v6222
  %v6224 = vpop.f32.mrb[0].mxu0
  %6225 = vmatprep.mubr.f32.mxu0 0.0
  %6226 = vmatmul.mubr.f32.gmra.mrb[0].mxu0 %v6070
  %v6227 = vpop.f32.mrb[0].mxu0
  %v6228 = vadd.f32 %v6154, %v6227
  %v6229 = vpop.f32.mrb[0].mxu0
  %6230 = vmatprep.mubr.f32.mxu0 0.0
  %6231 = vmatmul.mubr.f32.gmra.mrb[0].mxu0 %v6071
  %v6232 = vpop.f32.mrb[0].mxu0
  %v6233 = vadd.f32 %v6154, %v6232
  %v6234 = vpop.f32.mrb[0].mxu0
  %6235 = vmatprep.mubr.f32.mxu0 0.0
  %6236 = vmatmul.mubr.f32.gmra.mrb[0].mxu0 %v6072
  %v6237 = vpop.f32.mrb[0].mxu0
  %v6238 = vadd.f32 %v6154, %v6237
  %v6239 = vpop.f32.mrb[0].mxu0
  %6240 = vmatprep.mubr.f32.mxu0 0.0
  %6241 = vmatmul.mubr.f32.gmra.mrb[0].mxu0 %v6073
  %v6242 = vpop.f32.mrb[0].mxu0
  %v6243 = vadd.f32 %v6154, %v6242
  %v6244 = vpop.f32.mrb[0].mxu0
  %6245 = vmatprep.mubr.f32.mxu0 0.0
  %6246 = vmatmul.mubr.f32.gmra.mrb[0].mxu0 %v6074
  %v6247 = vpop.f32.mrb[0].mxu0
  %v6248 = vadd.f32 %v6154, %v6247
  %v6249 = vpop.f32.mrb[0].mxu0
  %6250 = vmatprep.mubr.f32.mxu0 0.0
  %6251 = vmatmul.mubr.f32.gmra.mrb[0].mxu0 %v6075
  %v6252 = vpop.f32.mrb[0].mxu0
  %v6253 = vadd.f32 %v6154, %v6252
  %v6254 = vpop.f32.mrb[0].mxu0
  %6255 = vmatprep.mubr.f32.mxu0 0.0
  %6256 = vmatmul.mubr.f32.gmra.mrb[0].mxu0 %v6076
  %v6257 = vpop.f32.mrb[0].mxu0
  %v6258 = vadd.f32 %v6154, %v6257
  %v6259 = vpop.f32.mrb[0].mxu0
  %6260 = vmatprep.mubr.f32.mxu0 0.0
  %6261 = vmatmul.mubr.f32.gmra.mrb[0].mxu0 %v6077
  %v6262 = vpop.f32.mrb[0].mxu0
  %v6263 = vadd.f32 %v6154, %v6262
  %v6264 = vpop.f32.mrb[0].mxu0
  %6265 = vmatprep.mubr.f32.mxu0 0.0
  %6266 = vmatmul.mubr.f32.gmra.mrb[0].mxu0 %v6078
  %v6267 = vpop.f32.mrb[0].mxu0
  %v6268 = vadd.f32 %v6154, %v6267
  %v6269 = vpop.f32.mrb[0].mxu0
  %6270 = vmatprep.mubr.f32.mxu0 0.0
  %6271 = vmatmul.mubr.f32.gmra.mrb[0].mxu0 %v6079
  %v6272 = vpop.f32.mrb[0].mxu0
  %v6273 = vadd.f32 %v6154, %v6272
  %v6274 = vpop.f32.mrb[0].mxu0
  %6275 = vmatprep.mubr.f32.mxu0 0.0
  %6276 = vmatmul.mubr.f32.gmra.mrb[0].mxu0 %v6080
  %v6277 = vpop.f32.mrb[0].mxu0
  %v6278 = vadd.f32 %v6154, %v6277
  %v6279 = vpop.f32.mrb[0].mxu0
  %6280 = vmatprep.mubr.f32.mxu0 0.0
  %6281 = vmatmul.mubr.f32.gmra.mrb[0].mxu0 %v6081
  %v6282 = vpop.f32.mrb[0].mxu0
  %v6283 = vadd.f32 %v6154, %v6282
  %v6284 = vpop.f32.mrb[0].mxu0
  %6285 = vmatprep.mubr.f32.mxu0 0.0
  %6286 = vmatmul.mubr.f32.gmra.mrb[0].mxu0 %v6082
  %v6287 = vpop.f32.mrb[0].mxu0
  %v6288 = vadd.f32 %v6154, %v6287
  %v6289 = vpop.f32.mrb[0].mxu0
  %6290 = vmatprep.mubr.f32.mxu0 0.0
  %6291 = vmatmul.mubr.f32.gmra.mrb[0].mxu0 %v6083
  %v6292 = vpop.f32.mrb[0].mxu0
  %v6293 = vadd.f32 %v6154, %v6292
  %v6294 = vpop.f32.mrb[0].mxu0
  %6295 = vmatprep.mubr.f32.mxu0 0.0
  %6296 = vmatmul.mubr.f32.gmra.mrb[0].mxu0 %v6084
  %v6297 = vpop.f32.mrb[0].mxu0
  %v6298 = vadd.f32 %v6154, %v6297
  %v6299 = vpop.f32.mrb[0].mxu0
  %6300 = vmatprep.mubr.f32.mxu0 0.0
  %6301 = vmatmul.mubr.f32.gmra.mrb[0].mxu0 %v6085
  %v6302 = vpop.f32.mrb[0].mxu0
  %v6303 = vadd.f32 %v6154, %v6302
  %v6304 = vpop.f32.mrb[0].mxu0
  %6305 = vmatprep.mubr.f32.mxu0 0.0
  %6306 = vmatmul.mubr.f32.gmra.mrb[0].mxu0 %v6086
  %v6307 = vpop.f32.mrb[0].mxu0
  %v6308 = vadd.f32 %v6154, %v6307
  %v6309 = vpop.f32.mrb[0].mxu0
  %6310 = vmatprep.mubr.f32.mxu0 0.0
  %6311 = vmatmul.mubr.f32.gmra.mrb[0].mxu0 %v6087
  %v6312 = vpop.f32.mrb[0].mxu0
  %v6313 = vadd.f32 %v6154, %v6312
  %v6314 = vpop.f32.mrb[0].mxu0
  %6315 = vmatprep.mubr.f32.mxu0 0.0
  %6316 = vmatmul.mubr.f32.gmra.mrb[0].mxu0 %v6088
  %v6317 = vpop.f32.mrb[0].mxu0
  %v6318 = vadd.f32 %v6154, %v6317
  %v6319 = vpop.f32.mrb[0].mxu0
  %6320 = vmatprep.mubr.f32.mxu0 0.0
  %6321 = vmatmul.mubr.f32.gmra.mrb[0].mxu0 %v6089
  %v6322 = vpop.f32.mrb[0].mxu0
  %v6323 = vadd.f32 %v6154, %v6322
  %v6324 = vpop.f32.mrb[0].mxu0
  %6325 = vmatprep.mubr.f32.mxu0 0.0
  %6326 = vmatmul.mubr.f32.gmra.mrb[0].mxu0 %v6090
  %v6327 = vpop.f32.mrb[0].mxu0
  %v6328 = vadd.f32 %v6154, %v6327
  %v6329 = vpop.f32.mrb[0].mxu0
  %6330 = vmatprep.mubr.f32.mxu0 0.0
  %6331 = vmatmul.mubr.f32.gmra.mrb[0].mxu0 %v6091
  %v6332 = vpop.f32.mrb[0].mxu0
  %v6333 = vadd.f32 %v6154, %v6332
  %v6334 = vpop.f32.mrb[0].mxu0
  %6335 = vmatprep.mubr.f32.mxu0 0.0
  %6336 = vmatmul.mubr.f32.gmra.mrb[0].mxu0 %v6092
  %v6337 = vpop.f32.mrb[0].mxu0
  %v6338 = vadd.f32 %v6154, %v6337
  %v6339 = vpop.f32.mrb[0].mxu0
  %6340 = vmatprep.mubr.f32.mxu0 0.0
  %6341 = vmatmul.mubr.f32.gmra.mrb[0].mxu0 %v6093
  %v6342 = vpop.f32.mrb[0].mxu0
  %v6343 = vadd.f32 %v6154, %v6342
  %v6344 = vpop.f32.mrb[0].mxu0
  %6345 = vmatprep.mubr.f32.mxu0 0.0
  %6346 = vmatmul.mubr.f32.gmra.mrb[0].mxu0 %v6094
  %v6347 = vpop.f32.mrb[0].mxu0
  %v6348 = vadd.f32 %v6154, %v6347
  %v6349 = vpop.f32.mrb[0].mxu0
  %6350 = vmatprep.mubr.f32.mxu0 0.0
  %6351 = vmatmul.mubr.f32.gmra.mrb[0].mxu0 %v6095
  %v6352 = vpop.f32.mrb[0].mxu0
  %v6353 = vadd.f32 %v6154, %v6352
  %v6354 = vpop.f32.mrb[0].mxu0
  %6355 = vmatprep.mubr.f32.mxu0 0.0
  %6356 = vmatmul.mubr.f32.gmra.mrb[0].mxu0 %v6096
  %v6357 = vpop.f32.mrb[0].mxu0
  %v6358 = vadd.f32 %v6154, %v6357
  %v6359 = vpop.f32.mrb[0].mxu0
  %6360 = vmatprep.mubr.f32.mxu0 0.0
  %6361 = vmatmul.mubr.f32.gmra.mrb[0].mxu0 %v6097
  %v6362 = vpop.f32.mrb[0].mxu0
  %v6363 = vadd.f32 %v6154, %v6362
  %v6364 = vpop.f32.mrb[0].mxu0
  %6365 = vmatprep.mubr.f32.mxu0 0.0
  %6366 = vmatmul.mubr.f32.gmra.mrb[0].mxu0 %v6098
  %v6367 = vpop.f32.mrb[0].mxu0
  %v6368 = vadd.f32 %v6154, %v6367
  %v6369 = vpop.f32.mrb[0].mxu0
  %6370 = vmatprep.mubr.f32.mxu0 0.0
  %6371 = vmatmul.mubr.f32.gmra.mrb[0].mxu0 %v6099
  %v6372 = vpop.f32.mrb[0].mxu0
  %v6373 = vadd.f32 %v6154, %v6372
  %v6374 = vpop.f32.mrb[0].mxu0
  %6375 = vmatprep.mubr.f32.mxu0 0.0
  %6376 = vmatmul.mubr.f32.gmra.mrb[0].mxu0 %v6100
  %v6377 = vpop.f32.mrb[0].mxu0
  %v6378 = vadd.f32 %v6154, %v6377
  %v6379 = vpop.f32.mrb[0].mxu0
  %6380 = vmatprep.mubr.f32.mxu0 0.0
  %6381 = vmatmul.mubr.f32.gmra.mrb[0].mxu0 %v6101
  %v6382 = vpop.f32.mrb[0].mxu0
  %v6383 = vadd.f32 %v6154, %v6382
  %v6384 = vpop.f32.mrb[0].mxu0
  %6385 = vmatprep.mubr.f32.mxu0 0.0
  %6386 = vmatmul.mubr.f32.gmra.mrb[0].mxu0 %v6102
  %v6387 = vpop.f32.mrb[0].mxu0
  %v6388 = vadd.f32 %v6154, %v6387
  %v6389 = vpop.f32.mrb[0].mxu0
  %6390 = vmatprep.mubr.f32.mxu0 0.0
  %6391 = vmatmul.mubr.f32.gmra.mrb[0].mxu0 %v6103
  %v6392 = vpop.f32.mrb[0].mxu0
  %v6393 = vadd.f32 %v6154, %v6392
  %v6394 = vpop.f32.mrb[0].mxu0
  %6395 = vmatprep.mubr.f32.mxu0 0.0
  %6396 = vmatmul.mubr.f32.gmra.mrb[0].mxu0 %v6104
  %v6397 = vpop.f32.mrb[0].mxu0
  %v6398 = vadd.f32 %v6154, %v6397
  %v6399 = vpop.f32.mrb[0].mxu0
  %6400 = vmatprep.mubr.f32.mxu0 0.0
  %6401 = vmatmul.mubr.f32.gmra.mrb[0].mxu0 %v6105
  %v6402 = vpop.f32.mrb[0].mxu0
  %v6403 = vadd.f32 %v6154, %v6402
  %v6404 = vpop.f32.mrb[0].mxu0
  %6405 = vmatprep.mubr.f32.mxu0 0.0
  %6406 = vmatmul.mubr.f32.gmra.mrb[0].mxu0 %v6106
  %v6407 = vpop.f32.mrb[0].mxu0
  %v6408 = vadd.f32 %v6154, %v6407
  %v6409 = vpop.f32.mrb[0].mxu0
  %6410 = vmatprep.mubr.f32.mxu0 0.0
  %6411 = vmatmul.mubr.f32.gmra.mrb[0].mxu0 %v6107
  %v6412 = vpop.f32.mrb[0].mxu0
  %v6413 = vadd.f32 %v6154, %v6412
  %v6414 = vpop.f32.mrb[0].mxu0
  %6415 = vmatprep.mubr.f32.mxu0 0.0
  %6416 = vmatmul.mubr.f32.gmra.mrb[0].mxu0 %v6108
  %v6417 = vpop.f32.mrb[0].mxu0
  %v6418 = vadd.f32 %v6154, %v6417
  %v6419 = vpop.f32.mrb[0].mxu0
  %6420 = vmatprep.mubr.f32.mxu0 0.0
  %6421 = vmatmul.mubr.f32.gmra.mrb[0].mxu0 %v6109
  %v6422 = vpop.f32.mrb[0].mxu0
  %v6423 = vadd.f32 %v6154, %v6422
  %v6424 = vpop.f32.mrb[0].mxu0
  %6425 = vmatprep.mubr.f32.mxu0 0.0
  %6426 = vmatmul.mubr.f32.gmra.mrb[0].mxu0 %v6110
  %v6427 = vpop.f32.mrb[0].mxu0
  %v6428 = vadd.f32 %v6154, %v6427
  %v6429 = vpop.f32.mrb[0].mxu0
  %6430 = vmatprep.mubr.f32.mxu0 0.0
  %6431 = vmatmul.mubr.f32.gmra.mrb[0].mxu0 %v6111
  %v6432 = vpop.f32.mrb[0].mxu0
  %v6433 = vadd.f32 %v6154, %v6432
  %v6434 = vpop.f32.mrb[0].mxu0
  %6435 = vmatprep.mubr.f32.mxu0 0.0
  %6436 = vmatmul.mubr.f32.gmra.mrb[0].mxu0 %v6112
  %v6437 = vpop.f32.mrb[0].mxu0
  %v6438 = vadd.f32 %v6154, %v6437
  %v6439 = vpop.f32.mrb[0].mxu0
  %6440 = vmatprep.mubr.f32.mxu0 0.0
  %6441 = vmatmul.mubr.f32.gmra.mrb[0].mxu0 %v6113
  %v6442 = vpop.f32.mrb[0].mxu0
  %v6443 = vadd.f32 %v6154, %v6442
  %v6444 = vpop.f32.mrb[0].mxu0
  %6445 = vmatprep.mubr.f32.mxu0 0.0
  %6446 = vmatmul.mubr.f32.gmra.mrb[0].mxu0 %v6114
  %v6447 = vpop.f32.mrb[0].mxu0
  %v6448 = vadd.f32 %v6154, %v6447
  %v6449 = vpop.f32.mrb[0].mxu0
  %6450 = vmatprep.mubr.f32.mxu0 0.0
  %6451 = vmatmul.mubr.f32.gmra.mrb[0].mxu0 %v6115
  %v6452 = vpop.f32.mrb[0].mxu0
  %v6453 = vadd.f32 %v6154, %v6452
  %v6454 = vpop.f32.mrb[0].mxu0
  %6455 = vmatprep.mubr.f32.mxu0 0.0
  %6456 = vmatmul.mubr.f32.gmra.mrb[0].mxu0 %v6116
  %v6457 = vpop.f32.mrb[0].mxu0
  %v6458 = vadd.f32 %v6154, %v6457
  %v6459 = vpop.f32.mrb[0].mxu0
  %6460 = vmatprep.mubr.f32.mxu0 0.0
  %6461 = vmatmul.mubr.f32.gmra.mrb[0].mxu0 %v6117
  %v6462 = vpop.f32.mrb[0].mxu0
  %v6463 = vadd.f32 %v6154, %v6462
  %v6464 = vpop.f32.mrb[0].mxu0
  %6465 = vmatprep.mubr.f32.mxu0 0.0
  %6466 = vmatmul.mubr.f32.gmra.mrb[0].mxu0 %v6118
  %v6467 = vpop.f32.mrb[0].mxu0
  %v6468 = vadd.f32 %v6154, %v6467
  %v6469 = vpop.f32.mrb[0].mxu0
  %6470 = vmatprep.mubr.f32.mxu0 0.0
  %6471 = vmatmul.mubr.f32.gmra.mrb[0].mxu0 %v6119
  %v6472 = vpop.f32.mrb[0].mxu0
  %v6473 = vadd.f32 %v6154, %v6472
  %v6474 = vpop.f32.mrb[0].mxu0
  %6475 = vmatprep.mubr.f32.mxu0 0.0
  %6476 = vmatmul.mubr.f32.gmra.mrb[0].mxu0 %v6120
  %v6477 = vpop.f32.mrb[0].mxu0
  %v6478 = vadd.f32 %v6154, %v6477
  %v6479 = vpop.f32.mrb[0].mxu0
  %6480 = vmatprep.mubr.f32.mxu0 0.0
  %6481 = vmatmul.mubr.f32.gmra.mrb[0].mxu0 %v6121
  %v6482 = vpop.f32.mrb[0].mxu0
  %v6483 = vadd.f32 %v6154, %v6482
  %v6484 = vpop.f32.mrb[0].mxu0
  %6485 = vmatprep.mubr.f32.mxu0 0.0
  %6486 = vmatmul.mubr.f32.gmra.mrb[0].mxu0 %v6122
  %v6487 = vpop.f32.mrb[0].mxu0
  %v6488 = vadd.f32 %v6154, %v6487
  %v6489 = vpop.f32.mrb[0].mxu0
  %6490 = vmatprep.mubr.f32.mxu0 0.0
  %6491 = vmatmul.mubr.f32.gmra.mrb[0].mxu0 %v6123
  %v6492 = vpop.f32.mrb[0].mxu0
  %v6493 = vadd.f32 %v6154, %v6492
  %v6494 = vpop.f32.mrb[0].mxu0
  %6495 = vmatprep.mubr.f32.mxu0 0.0
  %6496 = vmatmul.mubr.f32.gmra.mrb[0].mxu0 %v6124
  %v6497 = vpop.f32.mrb[0].mxu0
  %v6498 = vadd.f32 %v6154, %v6497
  %v6499 = vpop.f32.mrb[0].mxu0
  %6500 = vmatprep.mubr.f32.mxu0 0.0
  %6501 = vmatmul.mubr.f32.gmra.mrb[0].mxu0 %v6125
  %v6502 = vpop.f32.mrb[0].mxu0
  %v6503 = vadd.f32 %v6154, %v6502
  %v6504 = vpop.f32.mrb[0].mxu0
  %6505 = vmatprep.mubr.f32.mxu0 0.0
  %6506 = vmatmul.mubr.f32.gmra.mrb[0].mxu0 %v6126
  %v6507 = vpop.f32.mrb[0].mxu0
  %v6508 = vadd.f32 %v6154, %v6507
  %v6509 = vpop.f32.mrb[0].mxu0
  %6510 = vmatprep.mubr.f32.mxu0 0.0
  %6511 = vmatmul.mubr.f32.gmra.mrb[0].mxu0 %v6127
  %v6512 = vpop.f32.mrb[0].mxu0
  %v6513 = vadd.f32 %v6154, %v6512
  %v6514 = vpop.f32.mrb[0].mxu0
  %6515 = vmatprep.mubr.f32.mxu0 0.0
  %6516 = vmatmul.mubr.f32.gmra.mrb[0].mxu0 %v6128
  %v6517 = vpop.f32.mrb[0].mxu0
  %v6518 = vadd.f32 %v6154, %v6517
  %v6519 = vpop.f32.mrb[0].mxu0
  %6520 = vmatprep.mubr.f32.mxu0 0.0
  %6521 = vmatmul.mubr.f32.gmra.mrb[0].mxu0 %v6129
  %v6522 = vpop.f32.mrb[0].mxu0
  %v6523 = vadd.f32 %v6154, %v6522
  %v6524 = vpop.f32.mrb[0].mxu0
  %6525 = vmatprep.mubr.f32.mxu0 0.0
  %6526 = vmatmul.mubr.f32.gmra.mrb[0].mxu0 %v6130
  %v6527 = vpop.f32.mrb[0].mxu0
  %v6528 = vadd.f32 %v6154, %v6527
  %v6529 = vpop.f32.mrb[0].mxu0
  %6530 = vmatprep.mubr.f32.mxu0 0.0
  %6531 = vmatmul.mubr.f32.gmra.mrb[0].mxu0 %v6131
  %v6532 = vpop.f32.mrb[0].mxu0
  %v6533 = vadd.f32 %v6154, %v6532
  %v6534 = vpop.f32.mrb[0].mxu0
  %6535 = vmatprep.mubr.f32.mxu0 0.0
  %6536 = vmatmul.mubr.f32.gmra.mrb[0].mxu0 %v6132
  %v6537 = vpop.f32.mrb[0].mxu0
  %v6538 = vadd.f32 %v6154, %v6537
  %v6539 = vpop.f32.mrb[0].mxu0
  %6540 = vdwg.mxu0
  %vm6541 = vcmask 64512
  %6542 = vst.msk [vmem:[%s6] sm:$0xff] %vm6541, %v6223
  %6543 = vst.msk [vmem:[%s6 + $0x8] sm:$0xff] %vm6541, %v6228
  %6544 = vst.msk [vmem:[%s6 + $0x10] sm:$0xff] %vm6541, %v6233
  %6545 = vst.msk [vmem:[%s6 + $0x18] sm:$0xff] %vm6541, %v6238
  %6546 = vst.msk [vmem:[%s6 + $0x20] sm:$0xff] %vm6541, %v6243
  %6547 = vst.msk [vmem:[%s6 + $0x28] sm:$0xff] %vm6541, %v6248
  %6548 = vst.msk [vmem:[%s6 + $0x30] sm:$0xff] %vm6541, %v6253
  %6549 = vst.msk [vmem:[%s6 + $0x38] sm:$0xff] %vm6541, %v6258
  %6550 = vst.msk [vmem:[%s6 + $0x40] sm:$0xff] %vm6541, %v6263
  %6551 = vst.msk [vmem:[%s6 + $0x48] sm:$0xff] %vm6541, %v6268
  %6552 = vst.msk [vmem:[%s6 + $0x50] sm:$0xff] %vm6541, %v6273
  %6553 = vst.msk [vmem:[%s6 + $0x58] sm:$0xff] %vm6541, %v6278
  %6554 = vst.msk [vmem:[%s6 + $0x60] sm:$0xff] %vm6541, %v6283
  %6555 = vst.msk [vmem:[%s6 + $0x68] sm:$0xff] %vm6541, %v6288
  %6556 = vst.msk [vmem:[%s6 + $0x70] sm:$0xff] %vm6541, %v6293
  %6557 = vst.msk [vmem:[%s6 + $0x78] sm:$0xff] %vm6541, %v6298
  %6558 = vst.msk [vmem:[%s6 + $0x80] sm:$0xff] %vm6541, %v6303
  %6559 = vst.msk [vmem:[%s6 + $0x88] sm:$0xff] %vm6541, %v6308
  %6560 = vst.msk [vmem:[%s6 + $0x90] sm:$0xff] %vm6541, %v6313
  %6561 = vst.msk [vmem:[%s6 + $0x98] sm:$0xff] %vm6541, %v6318
  %6562 = vst.msk [vmem:[%s6 + $0xa0] sm:$0xff] %vm6541, %v6323
  %6563 = vst.msk [vmem:[%s6 + $0xa8] sm:$0xff] %vm6541, %v6328
  %6564 = vst.msk [vmem:[%s6 + $0xb0] sm:$0xff] %vm6541, %v6333
  %6565 = vst.msk [vmem:[%s6 + $0xb8] sm:$0xff] %vm6541, %v6338
  %6566 = vst.msk [vmem:[%s6 + $0xc0] sm:$0xff] %vm6541, %v6343
  %6567 = vst.msk [vmem:[%s6 + $0xc8] sm:$0xff] %vm6541, %v6348
  %6568 = vst.msk [vmem:[%s6 + $0xd0] sm:$0xff] %vm6541, %v6353
  %6569 = vst.msk [vmem:[%s6 + $0xd8] sm:$0xff] %vm6541, %v6358
  %6570 = vst.msk [vmem:[%s6 + $0xe0] sm:$0xff] %vm6541, %v6363
  %6571 = vst.msk [vmem:[%s6 + $0xe8] sm:$0xff] %vm6541, %v6368
  %6572 = vst.msk [vmem:[%s6 + $0xf0] sm:$0xff] %vm6541, %v6373
  %6573 = vst.msk [vmem:[%s6 + $0xf8] sm:$0xff] %vm6541, %v6378
  %6574 = vst.msk [vmem:[%s6 + $0x100] sm:$0xff] %vm6541, %v6383
  %6575 = vst.msk [vmem:[%s6 + $0x108] sm:$0xff] %vm6541, %v6388
  %6576 = vst.msk [vmem:[%s6 + $0x110] sm:$0xff] %vm6541, %v6393
  %6577 = vst.msk [vmem:[%s6 + $0x118] sm:$0xff] %vm6541, %v6398
  %6578 = vst.msk [vmem:[%s6 + $0x120] sm:$0xff] %vm6541, %v6403
  %6579 = vst.msk [vmem:[%s6 + $0x128] sm:$0xff] %vm6541, %v6408
  %6580 = vst.msk [vmem:[%s6 + $0x130] sm:$0xff] %vm6541, %v6413
  %6581 = vst.msk [vmem:[%s6 + $0x138] sm:$0xff] %vm6541, %v6418
  %6582 = vst.msk [vmem:[%s6 + $0x140] sm:$0xff] %vm6541, %v6423
  %6583 = vst.msk [vmem:[%s6 + $0x148] sm:$0xff] %vm6541, %v6428
  %6584 = vst.msk [vmem:[%s6 + $0x150] sm:$0xff] %vm6541, %v6433
  %6585 = vst.msk [vmem:[%s6 + $0x158] sm:$0xff] %vm6541, %v6438
  %6586 = vst.msk [vmem:[%s6 + $0x160] sm:$0xff] %vm6541, %v6443
  %6587 = vst.msk [vmem:[%s6 + $0x168] sm:$0xff] %vm6541, %v6448
  %6588 = vst.msk [vmem:[%s6 + $0x170] sm:$0xff] %vm6541, %v6453
  %6589 = vst.msk [vmem:[%s6 + $0x178] sm:$0xff] %vm6541, %v6458
  %6590 = vst.msk [vmem:[%s6 + $0x180] sm:$0xff] %vm6541, %v6463
  %6591 = vst.msk [vmem:[%s6 + $0x188] sm:$0xff] %vm6541, %v6468
  %6592 = vst.msk [vmem:[%s6 + $0x190] sm:$0xff] %vm6541, %v6473
  %6593 = vst.msk [vmem:[%s6 + $0x198] sm:$0xff] %vm6541, %v6478
  %6594 = vst.msk [vmem:[%s6 + $0x1a0] sm:$0xff] %vm6541, %v6483
  %6595 = vst.msk [vmem:[%s6 + $0x1a8] sm:$0xff] %vm6541, %v6488
  %6596 = vst.msk [vmem:[%s6 + $0x1b0] sm:$0xff] %vm6541, %v6493
  %6597 = vst.msk [vmem:[%s6 + $0x1b8] sm:$0xff] %vm6541, %v6498
  %6598 = vst.msk [vmem:[%s6 + $0x1c0] sm:$0xff] %vm6541, %v6503
  %6599 = vst.msk [vmem:[%s6 + $0x1c8] sm:$0xff] %vm6541, %v6508
  %6600 = vst.msk [vmem:[%s6 + $0x1d0] sm:$0xff] %vm6541, %v6513
  %6601 = vst.msk [vmem:[%s6 + $0x1d8] sm:$0xff] %vm6541, %v6518
  %6602 = vst.msk [vmem:[%s6 + $0x1e0] sm:$0xff] %vm6541, %v6523
  %6603 = vst.msk [vmem:[%s6 + $0x1e8] sm:$0xff] %vm6541, %v6528
  %6604 = vst.msk [vmem:[%s6 + $0x1f0] sm:$0xff] %vm6541, %v6533
  %6605 = vst.msk [vmem:[%s6 + $0x1f8] sm:$0xff] %vm6541, %v6538
  // Predicated region
  $region33: #{pyramid_lstm_layer.1} parent=0 // pred_check
    _
  $region34: #{pyramid_lstm_layer.1} parent=0 // pred_check_branch
    %6607 = sbr.rel (0) target = $region36
  $region35: #{pyramid_lstm_layer.1} parent=0 // pred_region
    _
  $region36: #{pyramid_lstm_layer.1} parent=0 // pred_fallthru
    _
  // Predicated region
  $region37: #{pyramid_lstm_layer.1} parent=0 // pred_check
    _
  $region38: #{pyramid_lstm_layer.1} parent=0 // pred_check_branch
    %6609 = sbr.rel (0) target = $region40
  $region39: #{pyramid_lstm_layer.1} parent=0 // pred_region
    _
  $region40: #{pyramid_lstm_layer.1} parent=0 // pred_fallthru
    _

</llo_original>
